<compile_context>
chip_gen: v6e
topology: v6e:2x2x1
jax: 0.10.0
libtpu: 0.0.40
codegen_flags: <defaults>
</compile_context>

<pallas_src>
import functools

import numpy as np
import jax
import jax.numpy as jnp
from jax.experimental import pallas as pl
from jax.experimental.pallas import tpu as pltpu

BOARD = 5                  # config['Game']['board_size']
NCH = 32                   # config['NN']['num_channels']
NUM_ACTIONS = 128          # len(Util.get_all_actions('move')) assumed = 128
EPS = 1e-5                 # BatchNorm eps (PyTorch default)
P = BOARD * BOARD          # 25 spatial positions

F_IN = 3 * P               # 75 logical input features (C,H,W flatten)
F_IN_PAD = 128             # padded to one lane tile
H = NCH * P                # 800 conv / flatten width
H_PAD = 896                # 800 -> next multiple of 128
FC1 = 1024
FC2 = 512
HEAD_PAD = 256             # lane-dense head: 128 policy + 1 value + 127 pad


# ---------------------------------------------------------------------------
# Weight preparation (init-time, host side)
# ---------------------------------------------------------------------------

def conv3x3_to_dense(w):
    """Fold a 3x3 same-padding conv on a 5x5 board into a dense matmul.

    w: (3, 3, Cin, Cout).  Returns (Cin*25, Cout*25) with channel-major
    (c, h, w) flattening on both sides (identical to PyTorch's .view()).
    """
    w = np.asarray(w, np.float32)
    cin, cout = w.shape[2], w.shape[3]
    dense = np.zeros((cin * P, cout * P), np.float32)
    for oy in range(BOARD):
        for ox in range(BOARD):
            opos = oy * BOARD + ox
            for ky in range(3):
                for kx in range(3):
                    iy, ix = oy + ky - 1, ox + kx - 1
                    if 0 <= iy < BOARD and 0 <= ix < BOARD:
                        ipos = iy * BOARD + ix
                        dense[ipos::P, opos::P] = w[ky, kx]
    return jnp.asarray(dense)


def _bn_fold(key, c, bias):
    """Eval-mode BatchNorm (running stats) folded with preceding layer bias."""
    k1, k2, k3, k4 = jax.random.split(key, 4)
    gamma = 1.0 + 0.01 * jax.random.normal(k1, (c,), jnp.float32)
    beta = 0.01 * jax.random.normal(k2, (c,), jnp.float32)
    mean = 0.01 * jax.random.normal(k3, (c,), jnp.float32)
    var = 1.0 + jnp.abs(0.01 * jax.random.normal(k4, (c,), jnp.float32))
    scale = gamma / jnp.sqrt(var + EPS)
    shift = beta + (bias - mean) * scale
    return scale, shift


def _pad2(a, rows, cols):
    return jnp.pad(a, ((0, rows - a.shape[0]), (0, cols - a.shape[1])))


def init_params(key):
    ks = jax.random.split(key, 16)
    n = lambda k, shp, s=0.05: s * jax.random.normal(k, shp, jnp.float32)

    # conv1: 3 -> NCH (BN folded into dense-matrix columns), padded (128, 896)
    wc1 = n(ks[0], (3, 3, 3, NCH))
    s1, sh1 = _bn_fold(ks[2], NCH, n(ks[1], (NCH,)))
    w1 = _pad2(conv3x3_to_dense(wc1) * jnp.repeat(s1, P)[None, :], F_IN_PAD, H_PAD)
    b1 = _pad2(jnp.repeat(sh1, P)[None, :], 1, H_PAD)

    # conv2: NCH -> NCH, padded (896, 896)
    wc2 = n(ks[3], (3, 3, NCH, NCH))
    s2, sh2 = _bn_fold(ks[5], NCH, n(ks[4], (NCH,)))
    w2 = _pad2(conv3x3_to_dense(wc2) * jnp.repeat(s2, P)[None, :], H_PAD, H_PAD)
    b2 = _pad2(jnp.repeat(sh2, P)[None, :], 1, H_PAD)

    # fc1: 800 -> 1024, padded K to 896
    wf1 = n(ks[6], (H, FC1))
    s3, sh3 = _bn_fold(ks[8], FC1, n(ks[7], (FC1,)))
    w3 = _pad2(wf1 * s3[None, :], H_PAD, FC1)
    b3 = sh3[None, :]

    # fc2: 1024 -> 512
    wf2 = n(ks[9], (FC1, FC2))
    s4, sh4 = _bn_fold(ks[11], FC2, n(ks[10], (FC2,)))
    w4 = wf2 * s4[None, :]
    b4 = sh4[None, :]

    # Fused policy/value head: cols 0..127 = fc3, col 128 = fc4, rest zero pad.
    wf3 = n(ks[12], (FC2, NUM_ACTIONS))
    bf3 = n(ks[13], (NUM_ACTIONS,))
    wf4 = n(ks[14], (FC2, 1))
    bf4 = n(ks[15], (1,))
    wh = _pad2(jnp.concatenate([wf3, wf4], axis=1), FC2, HEAD_PAD)   # (512, 256)
    bh = _pad2(jnp.concatenate([bf3, bf4])[None, :], 1, HEAD_PAD)    # (1, 256)

    # Matmul operands in bf16 (halves weight HBM/VMEM bytes); shifts stay f32.
    # TODO(synk): on v7x store w3/w4 in fp8 (per-column scale folded into the
    # f32 shift) to halve the dominant weight bytes; not portable to v5e/v6e.
    bf16 = lambda a: a.astype(jnp.bfloat16)
    return dict(w1=bf16(w1), b1=b1, w2=bf16(w2), b2=b2,
                w3=bf16(w3), b3=b3, w4=bf16(w4), b4=b4,
                wh=bf16(wh), bh=bh)


# ---------------------------------------------------------------------------
# Fused kernel
# ---------------------------------------------------------------------------

def fused_forward_kernel(x_ref, w1_ref, b1_ref, w2_ref, b2_ref,
                         w3_ref, b3_ref, w4_ref, b4_ref,
                         wh_ref, bh_ref, out_ref):
    """One batch tile: 5 bf16 MXU matmuls + f32 elementwise, all in VMEM."""

    def mmb(act_bf16, w_ref, b_ref):
        y = jnp.dot(act_bf16, w_ref[...], preferred_element_type=jnp.float32)
        return y + b_ref[...]

    a = jnp.maximum(mmb(x_ref[...], w1_ref, b1_ref), 0.0)                 # conv1+bn1+relu (M,896)
    a = jnp.maximum(mmb(a.astype(jnp.bfloat16), w2_ref, b2_ref), 0.0)     # conv2+bn2+relu (M,896)
    a = jnp.maximum(mmb(a.astype(jnp.bfloat16), w3_ref, b3_ref), 0.0)     # fc1+bn+relu    (M,1024)
    a = jnp.maximum(mmb(a.astype(jnp.bfloat16), w4_ref, b4_ref), 0.0)     # fc2+bn+relu    (M,512)
    h = mmb(a.astype(jnp.bfloat16), wh_ref, bh_ref)                       # heads          (M,256)

    pi = h[:, :NUM_ACTIONS]                                               # aligned 128-lane slice
    m = jnp.max(pi, axis=-1, keepdims=True)
    z = pi - m
    out_ref[:, :NUM_ACTIONS] = z - jnp.log(jnp.sum(jnp.exp(z), axis=-1, keepdims=True))
    # Lane 128 is the value head; lanes 129..255 are zero weights -> tanh(0)=0.
    out_ref[:, NUM_ACTIONS:] = jnp.tanh(h[:, NUM_ACTIONS:])
    # TODO(synk): training-mode dropout / batch-stat BatchNorm not implemented
    # (this kernel matches the eval-mode semantics of the PyTorch module).


def fused_forward(x_flat, params, m_tile=256):
    B = x_flat.shape[0]
    if B < m_tile:
        m_tile = max(8, ((B + 7) // 8) * 8)          # small-batch latency path
    B_pad = ((B + m_tile - 1) // m_tile) * m_tile
    if B_pad != B:
        x_flat = jnp.pad(x_flat, ((0, B_pad - B), (0, 0)))

    p = params
    const2 = lambda shape: pl.BlockSpec(shape, lambda i: (0, 0))  # VMEM-resident weights

    out = pl.pallas_call(
        fused_forward_kernel,
        out_shape=jax.ShapeDtypeStruct((B_pad, HEAD_PAD), jnp.float32),
        grid_spec=pltpu.PrefetchScalarGridSpec(
            num_scalar_prefetch=0,
            grid=(B_pad // m_tile,),
            in_specs=[
                pl.BlockSpec((m_tile, F_IN_PAD), lambda i: (i, 0)),
                const2(p['w1'].shape), const2(p['b1'].shape),
                const2(p['w2'].shape), const2(p['b2'].shape),
                const2(p['w3'].shape), const2(p['b3'].shape),
                const2(p['w4'].shape), const2(p['b4'].shape),
                const2(p['wh'].shape), const2(p['bh'].shape),
            ],
            out_specs=pl.BlockSpec((m_tile, HEAD_PAD), lambda i: (i, 0)),
        ),
        compiler_params=pltpu.CompilerParams(
            dimension_semantics=("parallel",),            # megacore batch split on v7x
            vmem_limit_bytes=32 * 1024 * 1024,            # ~14 MB worst case, v7x-safe
        ),
    )(x_flat, p['w1'], p['b1'], p['w2'], p['b2'],
      p['w3'], p['b3'], p['w4'], p['b4'], p['wh'], p['bh'])

    return out[:B, :NUM_ACTIONS], out[:B, NUM_ACTIONS:NUM_ACTIONS + 1]


def santorini_forward(x, params, m_tile=256):
    """x: (B, 3, board, board) float32, NCHW like the PyTorch module."""
    B = x.shape[0]
    # Contiguous (C,H,W) flatten (matches s.view(-1, C*H*W)), cast once to bf16,
    # pad feature dim 75 -> 128 so the first matmul K edge is tile-aligned.
    x_flat = x.reshape(B, F_IN).astype(jnp.bfloat16)
    x_flat = jnp.pad(x_flat, ((0, 0), (0, F_IN_PAD - F_IN)))
    return fused_forward(x_flat, params, m_tile=m_tile)


# ---------------------------------------------------------------------------
# Pure-JAX reference (same bf16 weights, f32 accumulation) for tolerance check
# ---------------------------------------------------------------------------

def reference_forward(x, params):
    B = x.shape[0]
    a = jnp.pad(x.reshape(B, F_IN).astype(jnp.bfloat16),
                ((0, 0), (0, F_IN_PAD - F_IN)))
    p = params

    def mmb(a, w, b):
        return jnp.dot(a.astype(jnp.bfloat16), w,
                       preferred_element_type=jnp.float32) + b

    a = jnp.maximum(mmb(a, p['w1'], p['b1']), 0.0)
    a = jnp.maximum(mmb(a, p['w2'], p['b2']), 0.0)
    a = jnp.maximum(mmb(a, p['w3'], p['b3']), 0.0)
    a = jnp.maximum(mmb(a, p['w4'], p['b4']), 0.0)
    h = mmb(a, p['wh'], p['bh'])
    log_pi = jax.nn.log_softmax(h[:, :NUM_ACTIONS], axis=-1)
    v = jnp.tanh(h[:, NUM_ACTIONS:NUM_ACTIONS + 1])
    return log_pi, v


if __name__ == "__main__":
    key = jax.random.PRNGKey(0)
    k_params, k_x, k_x2 = jax.random.split(key, 3)
    params = init_params(k_params)

    # Small latency-path batch (matches the module's typical single-position use).
    batch = 2
    x = jax.random.normal(k_x, (batch, 3, BOARD, BOARD), jnp.float32)

    fwd = jax.jit(functools.partial(santorini_forward, params=params))
    log_pi, v = fwd(x)
    jax.block_until_ready((log_pi, v))

    assert log_pi.shape == (batch, NUM_ACTIONS)
    assert v.shape == (batch, 1)
    assert bool(jnp.all(jnp.isfinite(log_pi)))
    assert bool(jnp.all(jnp.abs(jnp.sum(jnp.exp(log_pi), axis=1) - 1.0) < 1e-4))
    assert bool(jnp.all(jnp.abs(v) <= 1.0))

    # Tolerance check against the pure-JAX reference (identical bf16 weights).
    ref_pi, ref_v = reference_forward(x, params)
    assert bool(jnp.max(jnp.abs(log_pi - ref_pi)) < 5e-2)
    assert bool(jnp.max(jnp.abs(v - ref_v)) < 5e-2)

    # Batched throughput path: exercises the batch grid (2 tiles of 256)
    # and the parallel (megacore) dimension semantics.
    xb = jax.random.normal(k_x2, (512, 3, BOARD, BOARD), jnp.float32)
    lp_b, v_b = fwd(xb)
    jax.block_until_ready((lp_b, v_b))
    assert lp_b.shape == (512, NUM_ACTIONS) and v_b.shape == (512, 1)
    assert bool(jnp.all(jnp.isfinite(lp_b)))
    assert bool(jnp.all(jnp.abs(v_b) <= 1.0))

    print("KERNEL_OK")
</pallas_src>

<mosaic_0001>
module attributes {stable_mosaic.version = 11 : i64} {
  func.func @fused_forward_kernel(%arg0: i32, %arg1: memref<8x128xbf16, #tpu.memory_space<vmem>>, %arg2: memref<128x896xbf16, #tpu.memory_space<vmem>>, %arg3: memref<1x896xf32, #tpu.memory_space<vmem>>, %arg4: memref<896x896xbf16, #tpu.memory_space<vmem>>, %arg5: memref<1x896xf32, #tpu.memory_space<vmem>>, %arg6: memref<896x1024xbf16, #tpu.memory_space<vmem>>, %arg7: memref<1x1024xf32, #tpu.memory_space<vmem>>, %arg8: memref<1024x512xbf16, #tpu.memory_space<vmem>>, %arg9: memref<1x512xf32, #tpu.memory_space<vmem>>, %arg10: memref<512x256xbf16, #tpu.memory_space<vmem>>, %arg11: memref<1x256xf32, #tpu.memory_space<vmem>>, %arg12: memref<8x256xf32, #tpu.memory_space<vmem>>) attributes {dimension_semantics = [#tpu.dimension_semantics<parallel>], iteration_bounds = array<i64: 1>, scalar_prefetch = 0 : i64, scratch_operands = 0 : i64, tpu.core_type = #tpu.core_type<tc>, window_params = [{transform_indices = @transform_0, window_bounds = array<i64: 8, 128>}, {pipeline_mode = #tpu.pipeline_mode<synchronous>, transform_indices = @transform_1, window_bounds = array<i64: 128, 896>}, {pipeline_mode = #tpu.pipeline_mode<synchronous>, transform_indices = @transform_2, window_bounds = array<i64: 1, 896>}, {pipeline_mode = #tpu.pipeline_mode<synchronous>, transform_indices = @transform_3, window_bounds = array<i64: 896, 896>}, {pipeline_mode = #tpu.pipeline_mode<synchronous>, transform_indices = @transform_4, window_bounds = array<i64: 1, 896>}, {pipeline_mode = #tpu.pipeline_mode<synchronous>, transform_indices = @transform_5, window_bounds = array<i64: 896, 1024>}, {pipeline_mode = #tpu.pipeline_mode<synchronous>, transform_indices = @transform_6, window_bounds = array<i64: 1, 1024>}, {pipeline_mode = #tpu.pipeline_mode<synchronous>, transform_indices = @transform_7, window_bounds = array<i64: 1024, 512>}, {pipeline_mode = #tpu.pipeline_mode<synchronous>, transform_indices = @transform_8, window_bounds = array<i64: 1, 512>}, {pipeline_mode = #tpu.pipeline_mode<synchronous>, transform_indices = @transform_9, window_bounds = array<i64: 512, 256>}, {pipeline_mode = #tpu.pipeline_mode<synchronous>, transform_indices = @transform_10, window_bounds = array<i64: 1, 256>}, {transform_indices = @transform_11, window_bounds = array<i64: 8, 256>}]} {
    %c0 = arith.constant 0 : index
    %c0_0 = arith.constant 0 : index
    %0 = vector.load %arg1[%c0, %c0_0] : memref<8x128xbf16, #tpu.memory_space<vmem>>, vector<8x128xbf16>
    %c0_1 = arith.constant 0 : index
    %c0_2 = arith.constant 0 : index
    %1 = vector.load %arg2[%c0_1, %c0_2] : memref<128x896xbf16, #tpu.memory_space<vmem>>, vector<128x896xbf16>
    %cst = arith.constant dense<0.000000e+00> : vector<8x896xf32>
    %2 = tpu.matmul %0, %1, %cst {dimension_numbers = #tpu.dot_dimension_numbers<[1], [0], [0], [1], [0, 0, 1, 1], [], []>} : vector<8x128xbf16>, vector<128x896xbf16>, vector<8x896xf32> -> vector<8x896xf32>
    %c0_3 = arith.constant 0 : index
    %c0_4 = arith.constant 0 : index
    %3 = vector.load %arg3[%c0_3, %c0_4] : memref<1x896xf32, #tpu.memory_space<vmem>>, vector<1x896xf32>
    %4 = vector.broadcast %3 : vector<1x896xf32> to vector<8x896xf32>
    %5 = arith.addf %2, %4 : vector<8x896xf32>
    %cst_5 = arith.constant 0.000000e+00 : f32
    %6 = vector.broadcast %cst_5 : f32 to vector<8x896xf32>
    %7 = arith.maximumf %5, %6 : vector<8x896xf32>
    %8 = arith.truncf %7 : vector<8x896xf32> to vector<8x896xbf16>
    %c0_6 = arith.constant 0 : index
    %c0_7 = arith.constant 0 : index
    %9 = vector.load %arg4[%c0_6, %c0_7] : memref<896x896xbf16, #tpu.memory_space<vmem>>, vector<896x896xbf16>
    %cst_8 = arith.constant dense<0.000000e+00> : vector<8x896xf32>
    %10 = tpu.matmul %8, %9, %cst_8 {dimension_numbers = #tpu.dot_dimension_numbers<[1], [0], [0], [1], [0, 0, 1, 1], [], []>} : vector<8x896xbf16>, vector<896x896xbf16>, vector<8x896xf32> -> vector<8x896xf32>
    %c0_9 = arith.constant 0 : index
    %c0_10 = arith.constant 0 : index
    %11 = vector.load %arg5[%c0_9, %c0_10] : memref<1x896xf32, #tpu.memory_space<vmem>>, vector<1x896xf32>
    %12 = vector.broadcast %11 : vector<1x896xf32> to vector<8x896xf32>
    %13 = arith.addf %10, %12 : vector<8x896xf32>
    %cst_11 = arith.constant 0.000000e+00 : f32
    %14 = vector.broadcast %cst_11 : f32 to vector<8x896xf32>
    %15 = arith.maximumf %13, %14 : vector<8x896xf32>
    %16 = arith.truncf %15 : vector<8x896xf32> to vector<8x896xbf16>
    %c0_12 = arith.constant 0 : index
    %c0_13 = arith.constant 0 : index
    %17 = vector.load %arg6[%c0_12, %c0_13] : memref<896x1024xbf16, #tpu.memory_space<vmem>>, vector<896x1024xbf16>
    %cst_14 = arith.constant dense<0.000000e+00> : vector<8x1024xf32>
    %18 = tpu.matmul %16, %17, %cst_14 {dimension_numbers = #tpu.dot_dimension_numbers<[1], [0], [0], [1], [0, 0, 1, 1], [], []>} : vector<8x896xbf16>, vector<896x1024xbf16>, vector<8x1024xf32> -> vector<8x1024xf32>
    %c0_15 = arith.constant 0 : index
    %c0_16 = arith.constant 0 : index
    %19 = vector.load %arg7[%c0_15, %c0_16] : memref<1x1024xf32, #tpu.memory_space<vmem>>, vector<1x1024xf32>
    %20 = vector.broadcast %19 : vector<1x1024xf32> to vector<8x1024xf32>
    %21 = arith.addf %18, %20 : vector<8x1024xf32>
    %cst_17 = arith.constant 0.000000e+00 : f32
    %22 = vector.broadcast %cst_17 : f32 to vector<8x1024xf32>
    %23 = arith.maximumf %21, %22 : vector<8x1024xf32>
    %24 = arith.truncf %23 : vector<8x1024xf32> to vector<8x1024xbf16>
    %c0_18 = arith.constant 0 : index
    %c0_19 = arith.constant 0 : index
    %25 = vector.load %arg8[%c0_18, %c0_19] : memref<1024x512xbf16, #tpu.memory_space<vmem>>, vector<1024x512xbf16>
    %cst_20 = arith.constant dense<0.000000e+00> : vector<8x512xf32>
    %26 = tpu.matmul %24, %25, %cst_20 {dimension_numbers = #tpu.dot_dimension_numbers<[1], [0], [0], [1], [0, 0, 1, 1], [], []>} : vector<8x1024xbf16>, vector<1024x512xbf16>, vector<8x512xf32> -> vector<8x512xf32>
    %c0_21 = arith.constant 0 : index
    %c0_22 = arith.constant 0 : index
    %27 = vector.load %arg9[%c0_21, %c0_22] : memref<1x512xf32, #tpu.memory_space<vmem>>, vector<1x512xf32>
    %28 = vector.broadcast %27 : vector<1x512xf32> to vector<8x512xf32>
    %29 = arith.addf %26, %28 : vector<8x512xf32>
    %cst_23 = arith.constant 0.000000e+00 : f32
    %30 = vector.broadcast %cst_23 : f32 to vector<8x512xf32>
    %31 = arith.maximumf %29, %30 : vector<8x512xf32>
    %32 = arith.truncf %31 : vector<8x512xf32> to vector<8x512xbf16>
    %c0_24 = arith.constant 0 : index
    %c0_25 = arith.constant 0 : index
    %33 = vector.load %arg10[%c0_24, %c0_25] : memref<512x256xbf16, #tpu.memory_space<vmem>>, vector<512x256xbf16>
    %cst_26 = arith.constant dense<0.000000e+00> : vector<8x256xf32>
    %34 = tpu.matmul %32, %33, %cst_26 {dimension_numbers = #tpu.dot_dimension_numbers<[1], [0], [0], [1], [0, 0, 1, 1], [], []>} : vector<8x512xbf16>, vector<512x256xbf16>, vector<8x256xf32> -> vector<8x256xf32>
    %c0_27 = arith.constant 0 : index
    %c0_28 = arith.constant 0 : index
    %35 = vector.load %arg11[%c0_27, %c0_28] : memref<1x256xf32, #tpu.memory_space<vmem>>, vector<1x256xf32>
    %36 = vector.broadcast %35 : vector<1x256xf32> to vector<8x256xf32>
    %37 = arith.addf %34, %36 : vector<8x256xf32>
    %38 = vector.extract_strided_slice %37 {offsets = [0, 0], sizes = [8, 128], strides = [1, 1]} : vector<8x256xf32> to vector<8x128xf32>
    %cst_29 = arith.constant dense<0xFF800000> : vector<8xf32>
    %39 = vector.multi_reduction <maximumf>, %38, %cst_29 [1] : vector<8x128xf32> to vector<8xf32>
    %40 = vector.shape_cast %39 : vector<8xf32> to vector<8x1xf32>
    %41 = vector.broadcast %40 : vector<8x1xf32> to vector<8x128xf32>
    %42 = arith.subf %38, %41 : vector<8x128xf32>
    %43 = math.exp %42 : vector<8x128xf32>
    %cst_30 = arith.constant dense<0.000000e+00> : vector<8xf32>
    %44 = vector.multi_reduction <add>, %43, %cst_30 [1] : vector<8x128xf32> to vector<8xf32>
    %45 = vector.shape_cast %44 : vector<8xf32> to vector<8x1xf32>
    %46 = math.log %45 : vector<8x1xf32>
    %47 = vector.broadcast %46 : vector<8x1xf32> to vector<8x128xf32>
    %48 = arith.subf %42, %47 : vector<8x128xf32>
    %c0_31 = arith.constant 0 : index
    %c0_32 = arith.constant 0 : index
    %49 = vector.load %arg12[%c0_31, %c0_32] : memref<8x256xf32, #tpu.memory_space<vmem>>, vector<8x128xf32>
    tpu.vector_store %arg12[%c0_31, %c0_32], %48 {strides = array<i32>} : memref<8x256xf32, #tpu.memory_space<vmem>>, vector<8x128xf32>,
    %50 = vector.extract_strided_slice %37 {offsets = [0, 128], sizes = [8, 128], strides = [1, 1]} : vector<8x256xf32> to vector<8x128xf32>
    %51 = math.tanh %50 : vector<8x128xf32>
    %c0_33 = arith.constant 0 : index
    %c128 = arith.constant 128 : index
    %52 = vector.load %arg12[%c0_33, %c128] : memref<8x256xf32, #tpu.memory_space<vmem>>, vector<8x128xf32>
    tpu.vector_store %arg12[%c0_33, %c128], %51 {strides = array<i32>} : memref<8x256xf32, #tpu.memory_space<vmem>>, vector<8x128xf32>,
    return
  }
  func.func @transform_0(%arg0: i32) -> (i32, i32) {
    %c0_i32 = arith.constant 0 : i32
    %c0_i32_0 = arith.constant 0 : i32
    return %arg0, %c0_i32 : i32, i32
  }
  func.func @transform_1(%arg0: i32) -> (i32, i32) {
    %c0_i32 = arith.constant 0 : i32
    %c0_i32_0 = arith.constant 0 : i32
    %c0_i32_1 = arith.constant 0 : i32
    return %c0_i32, %c0_i32_0 : i32, i32
  }
  func.func @transform_2(%arg0: i32) -> (i32, i32) {
    %c0_i32 = arith.constant 0 : i32
    %c0_i32_0 = arith.constant 0 : i32
    %c0_i32_1 = arith.constant 0 : i32
    return %c0_i32, %c0_i32_0 : i32, i32
  }
  func.func @transform_3(%arg0: i32) -> (i32, i32) {
    %c0_i32 = arith.constant 0 : i32
    %c0_i32_0 = arith.constant 0 : i32
    %c0_i32_1 = arith.constant 0 : i32
    return %c0_i32, %c0_i32_0 : i32, i32
  }
  func.func @transform_4(%arg0: i32) -> (i32, i32) {
    %c0_i32 = arith.constant 0 : i32
    %c0_i32_0 = arith.constant 0 : i32
    %c0_i32_1 = arith.constant 0 : i32
    return %c0_i32, %c0_i32_0 : i32, i32
  }
  func.func @transform_5(%arg0: i32) -> (i32, i32) {
    %c0_i32 = arith.constant 0 : i32
    %c0_i32_0 = arith.constant 0 : i32
    %c0_i32_1 = arith.constant 0 : i32
    return %c0_i32, %c0_i32_0 : i32, i32
  }
  func.func @transform_6(%arg0: i32) -> (i32, i32) {
    %c0_i32 = arith.constant 0 : i32
    %c0_i32_0 = arith.constant 0 : i32
    %c0_i32_1 = arith.constant 0 : i32
    return %c0_i32, %c0_i32_0 : i32, i32
  }
  func.func @transform_7(%arg0: i32) -> (i32, i32) {
    %c0_i32 = arith.constant 0 : i32
    %c0_i32_0 = arith.constant 0 : i32
    %c0_i32_1 = arith.constant 0 : i32
    return %c0_i32, %c0_i32_0 : i32, i32
  }
  func.func @transform_8(%arg0: i32) -> (i32, i32) {
    %c0_i32 = arith.constant 0 : i32
    %c0_i32_0 = arith.constant 0 : i32
    %c0_i32_1 = arith.constant 0 : i32
    return %c0_i32, %c0_i32_0 : i32, i32
  }
  func.func @transform_9(%arg0: i32) -> (i32, i32) {
    %c0_i32 = arith.constant 0 : i32
    %c0_i32_0 = arith.constant 0 : i32
    %c0_i32_1 = arith.constant 0 : i32
    return %c0_i32, %c0_i32_0 : i32, i32
  }
  func.func @transform_10(%arg0: i32) -> (i32, i32) {
    %c0_i32 = arith.constant 0 : i32
    %c0_i32_0 = arith.constant 0 : i32
    %c0_i32_1 = arith.constant 0 : i32
    return %c0_i32, %c0_i32_0 : i32, i32
  }
  func.func @transform_11(%arg0: i32) -> (i32, i32) {
    %c0_i32 = arith.constant 0 : i32
    %c0_i32_0 = arith.constant 0 : i32
    return %arg0, %c0_i32 : i32, i32
  }
}

</mosaic_0001>

<llo_original>
// kernel: santorini_forward.1
$region0: #{santorini_forward.1}
  #allocation0 [shape = 'u32[]', space=smem, size = 0x4, offset = 0x4, fixed_abs, tag = 'smem constant byte address 0x4 - core index']
  #allocation1 [shape = 'u32[144,128]{1,0:T(1,128)}', space=vmem, size = 0x12000, scoped, tag = 'internal scratch']
  %s0 = inlined_call_operand.vmem [shape: bf16[8,128], index: 0, kind: input, shape index: {}]
  %s1 = inlined_call_operand.hbm [shape: bf16[128,896], index: 1, kind: input, shape index: {}]
  %s2 = inlined_call_operand.hbm [shape: f32[1,896], index: 2, kind: input, shape index: {}]
  %s3 = inlined_call_operand.hbm [shape: bf16[896,896], index: 3, kind: input, shape index: {}]
  %s4 = inlined_call_operand.hbm [shape: f32[1,896], index: 4, kind: input, shape index: {}]
  %s5 = inlined_call_operand.hbm [shape: bf16[896,1024], index: 5, kind: input, shape index: {}]
  %s6 = inlined_call_operand.hbm [shape: f32[1,1024], index: 6, kind: input, shape index: {}]
  %s7 = inlined_call_operand.hbm [shape: bf16[1024,512], index: 7, kind: input, shape index: {}]
  %s8 = inlined_call_operand.hbm [shape: f32[1,512], index: 8, kind: input, shape index: {}]
  %s9 = inlined_call_operand.hbm [shape: bf16[512,256], index: 9, kind: input, shape index: {}]
  %s10 = inlined_call_operand.hbm [shape: f32[1,256], index: 10, kind: input, shape index: {}]
  %s11 = inlined_call_operand.vmem [shape: f32[8,256], index: 11, kind: output, shape index: {}]
  %s12 = sld [smem:[#allocation0]]
  $region94: #{santorini_forward.1} parent=0
    _
  %s14 = ssub.s32 1, %s12
  %s15 = scalar_select 0, %s14, %s12
  $region1: #{santorini_forward.1} parent=0
    #allocation2 [shape = 'u8[229376]{0}', space=vmem, size = 0x38000, scoped, tag = 'input window, operand 1, single buffered']
    #allocation3 [shape = 's32[1]{0}', space=sflag, size = 0x4, scoped, tag = 'scoped memory for santorini_forward.1']
    #allocation4 [shape = 'u8[3584]{0}', space=vmem, size = 0x1000, scoped, tag = 'input window, operand 2, single buffered']
    #allocation5 [shape = 's32[1]{0}', space=sflag, size = 0x4, scoped, tag = 'scoped memory for santorini_forward.1']
    #allocation6 [shape = 'u8[1605632]{0}', space=vmem, size = 0x188000, scoped, tag = 'input window, operand 3, single buffered']
    #allocation7 [shape = 'u8[3584]{0}', space=vmem, size = 0x1000, scoped, tag = 'input window, operand 4, single buffered']
    #allocation8 [shape = 's32[1]{0}', space=sflag, size = 0x4, scoped, tag = 'scoped memory for santorini_forward.1']
    #allocation9 [shape = 'u8[1835008]{0}', space=vmem, size = 0x1c0000, scoped, tag = 'input window, operand 5, single buffered']
    #allocation10 [shape = 'u8[4096]{0}', space=vmem, size = 0x1000, scoped, tag = 'input window, operand 6, single buffered']
    #allocation11 [shape = 's32[1]{0}', space=sflag, size = 0x4, scoped, tag = 'scoped memory for santorini_forward.1']
    #allocation12 [shape = 'u8[1048576]{0}', space=vmem, size = 0x100000, scoped, tag = 'input window, operand 7, single buffered']
    #allocation13 [shape = 'u8[2048]{0}', space=vmem, size = 0x800, scoped, tag = 'input window, operand 8, single buffered']
    #allocation14 [shape = 's32[1]{0}', space=sflag, size = 0x4, scoped, tag = 'scoped memory for santorini_forward.1']
    #allocation15 [shape = 'u8[262144]{0}', space=vmem, size = 0x40000, scoped, tag = 'input window, operand 9, single buffered']
    #allocation16 [shape = 'u8[1024]{0}', space=vmem, size = 0x400, scoped, tag = 'input window, operand 10, single buffered']
    #allocation17 [shape = 's32[1]{0}', space=sflag, size = 0x4, scoped, tag = 'scoped memory for santorini_forward.1']
    %16 = vsyncpa [#allocation3], 0
    %17 = vsyncpa [#allocation5], 0
    %18 = vsyncpa [#allocation8], 0
    %19 = vsyncpa [#allocation11], 0
    %20 = vsyncpa [#allocation14], 0
    %21 = vsyncpa [#allocation17], 0
    // Predicated region
    $region2: #{santorini_forward.1} parent=1 // pred_check
      _
    $region3: #{santorini_forward.1} parent=1 // pred_check_branch
      %23 = sbr.rel (0) target = $region5
    $region4: #{santorini_forward.1} parent=1 // pred_region
      _
    $region5: #{santorini_forward.1} parent=1 // pred_fallthru
      _
    // Predicated region
    $region6: #{santorini_forward.1} parent=1 // pred_check
      _
    $region7: #{santorini_forward.1} parent=1 // pred_check_branch
      %25 = sbr.rel (0) target = $region9
    $region8: #{santorini_forward.1} parent=1 // pred_region
      %s27 = ssub.s32 7168, 7168
      %28 = vsyncadd [#allocation3], %s27
      %s29 = sshll.u32 [#allocation2], 4
      %s30 = int_to_ptr.vmem [resolvable:$true] %s29
      %35 = dma.hbm_to_vmem [thread:$0]  %s1, 7168, %s30, [#allocation3], 448, 448, 28
    $region9: #{santorini_forward.1} parent=1 // pred_fallthru
      _
    // Predicated region
    $region10: #{santorini_forward.1} parent=1 // pred_check
      _
    $region11: #{santorini_forward.1} parent=1 // pred_check_branch
      %37 = sbr.rel (0) target = $region13
    $region12: #{santorini_forward.1} parent=1 // pred_region
      %s39 = ssub.s32 112, 112
      %40 = vsyncadd [#allocation5], %s39
      %s42 = sshll.u32 [#allocation4], 4
      %s43 = int_to_ptr.vmem [resolvable:$true] %s42
      %45 = dma.hbm_to_vmem [thread:$0]  %s2, 112, %s43, [#allocation5]
    $region13: #{santorini_forward.1} parent=1 // pred_fallthru
      _
    // Predicated region
    $region14: #{santorini_forward.1} parent=1 // pred_check
      _
    $region15: #{santorini_forward.1} parent=1 // pred_check_branch
      %47 = sbr.rel (0) target = $region17
    $region16: #{santorini_forward.1} parent=1 // pred_region
      %s49 = ssub.s32 50176, 50176
      %50 = vsyncadd [#allocation5], %s49
      %s51 = sshll.u32 [#allocation6], 4
      %s52 = int_to_ptr.vmem [resolvable:$true] %s51
      %57 = dma.hbm_to_vmem [thread:$0]  %s3, 50176, %s52, [#allocation5], 448, 448, 28
    $region17: #{santorini_forward.1} parent=1 // pred_fallthru
      _
    // Predicated region
    $region18: #{santorini_forward.1} parent=1 // pred_check
      _
    $region19: #{santorini_forward.1} parent=1 // pred_check_branch
      %59 = sbr.rel (0) target = $region21
    $region20: #{santorini_forward.1} parent=1 // pred_region
      %s61 = ssub.s32 112, 112
      %62 = vsyncadd [#allocation8], %s61
      %s64 = sshll.u32 [#allocation7], 4
      %s65 = int_to_ptr.vmem [resolvable:$true] %s64
      %67 = dma.hbm_to_vmem [thread:$0]  %s4, 112, %s65, [#allocation8]
    $region21: #{santorini_forward.1} parent=1 // pred_fallthru
      _
    // Predicated region
    $region22: #{santorini_forward.1} parent=1 // pred_check
      _
    $region23: #{santorini_forward.1} parent=1 // pred_check_branch
      %69 = sbr.rel (0) target = $region25
    $region24: #{santorini_forward.1} parent=1 // pred_region
      %s71 = ssub.s32 57344, 57344
      %72 = vsyncadd [#allocation8], %s71
      %s73 = sshll.u32 [#allocation9], 4
      %s74 = int_to_ptr.vmem [resolvable:$true] %s73
      %79 = dma.hbm_to_vmem [thread:$0]  %s5, 57344, %s74, [#allocation8], 512, 512, 32
    $region25: #{santorini_forward.1} parent=1 // pred_fallthru
      _
    // Predicated region
    $region26: #{santorini_forward.1} parent=1 // pred_check
      _
    $region27: #{santorini_forward.1} parent=1 // pred_check_branch
      %81 = sbr.rel (0) target = $region29
    $region28: #{santorini_forward.1} parent=1 // pred_region
      %s83 = ssub.s32 128, 128
      %84 = vsyncadd [#allocation11], %s83
      %s86 = sshll.u32 [#allocation10], 4
      %s87 = int_to_ptr.vmem [resolvable:$true] %s86
      %89 = dma.hbm_to_vmem [thread:$0]  %s6, 128, %s87, [#allocation11]
    $region29: #{santorini_forward.1} parent=1 // pred_fallthru
      _
    // Predicated region
    $region30: #{santorini_forward.1} parent=1 // pred_check
      _
    $region31: #{santorini_forward.1} parent=1 // pred_check_branch
      %91 = sbr.rel (0) target = $region33
    $region32: #{santorini_forward.1} parent=1 // pred_region
      %s93 = ssub.s32 32768, 32768
      %94 = vsyncadd [#allocation11], %s93
      %s95 = sshll.u32 [#allocation12], 4
      %s96 = int_to_ptr.vmem [resolvable:$true] %s95
      %101 = dma.hbm_to_vmem [thread:$0]  %s7, 32768, %s96, [#allocation11], 256, 256, 16
    $region33: #{santorini_forward.1} parent=1 // pred_fallthru
      _
    // Predicated region
    $region34: #{santorini_forward.1} parent=1 // pred_check
      _
    $region35: #{santorini_forward.1} parent=1 // pred_check_branch
      %103 = sbr.rel (0) target = $region37
    $region36: #{santorini_forward.1} parent=1 // pred_region
      %s105 = ssub.s32 64, 64
      %106 = vsyncadd [#allocation14], %s105
      %s108 = sshll.u32 [#allocation13], 4
      %s109 = int_to_ptr.vmem [resolvable:$true] %s108
      %111 = dma.hbm_to_vmem [thread:$0]  %s8, 64, %s109, [#allocation14]
    $region37: #{santorini_forward.1} parent=1 // pred_fallthru
      _
    // Predicated region
    $region38: #{santorini_forward.1} parent=1 // pred_check
      _
    $region39: #{santorini_forward.1} parent=1 // pred_check_branch
      %113 = sbr.rel (0) target = $region41
    $region40: #{santorini_forward.1} parent=1 // pred_region
      %s115 = ssub.s32 8192, 8192
      %116 = vsyncadd [#allocation14], %s115
      %s117 = sshll.u32 [#allocation15], 4
      %s118 = int_to_ptr.vmem [resolvable:$true] %s117
      %123 = dma.hbm_to_vmem [thread:$0]  %s9, 8192, %s118, [#allocation14], 128, 128, 8
    $region41: #{santorini_forward.1} parent=1 // pred_fallthru
      _
    // Predicated region
    $region42: #{santorini_forward.1} parent=1 // pred_check
      _
    $region43: #{santorini_forward.1} parent=1 // pred_check_branch
      %125 = sbr.rel (0) target = $region45
    $region44: #{santorini_forward.1} parent=1 // pred_region
      %s127 = ssub.s32 32, 32
      %128 = vsyncadd [#allocation17], %s127
      %s130 = sshll.u32 [#allocation16], 4
      %s131 = int_to_ptr.vmem [resolvable:$true] %s130
      %133 = dma.hbm_to_vmem [thread:$0]  %s10, 32, %s131, [#allocation17]
    $region45: #{santorini_forward.1} parent=1 // pred_fallthru
      _
    // Predicated region
    $region46: #{santorini_forward.1} parent=1 // pred_check
      _
    $region47: #{santorini_forward.1} parent=1 // pred_check_branch
      %135 = sbr.rel (0) target = $region49
    $region48: #{santorini_forward.1} parent=1 // pred_region
      %136 = dma.done [#allocation3], 7168
    $region49: #{santorini_forward.1} parent=1 // pred_fallthru
      _
    // Predicated region
    $region50: #{santorini_forward.1} parent=1 // pred_check
      _
    $region51: #{santorini_forward.1} parent=1 // pred_check_branch
      %138 = sbr.rel (0) target = $region53
    $region52: #{santorini_forward.1} parent=1 // pred_region
      %139 = dma.done [#allocation5], 112
    $region53: #{santorini_forward.1} parent=1 // pred_fallthru
      _
    // Predicated region
    $region54: #{santorini_forward.1} parent=1 // pred_check
      _
    $region55: #{santorini_forward.1} parent=1 // pred_check_branch
      %141 = sbr.rel (0) target = $region57
    $region56: #{santorini_forward.1} parent=1 // pred_region
      %142 = dma.done [#allocation5], 50176
    $region57: #{santorini_forward.1} parent=1 // pred_fallthru
      _
    // Predicated region
    $region58: #{santorini_forward.1} parent=1 // pred_check
      _
    $region59: #{santorini_forward.1} parent=1 // pred_check_branch
      %144 = sbr.rel (0) target = $region61
    $region60: #{santorini_forward.1} parent=1 // pred_region
      %145 = dma.done [#allocation8], 112
    $region61: #{santorini_forward.1} parent=1 // pred_fallthru
      _
    // Predicated region
    $region62: #{santorini_forward.1} parent=1 // pred_check
      _
    $region63: #{santorini_forward.1} parent=1 // pred_check_branch
      %147 = sbr.rel (0) target = $region65
    $region64: #{santorini_forward.1} parent=1 // pred_region
      %148 = dma.done [#allocation8], 57344
    $region65: #{santorini_forward.1} parent=1 // pred_fallthru
      _
    // Predicated region
    $region66: #{santorini_forward.1} parent=1 // pred_check
      _
    $region67: #{santorini_forward.1} parent=1 // pred_check_branch
      %150 = sbr.rel (0) target = $region69
    $region68: #{santorini_forward.1} parent=1 // pred_region
      %151 = dma.done [#allocation11], 128
    $region69: #{santorini_forward.1} parent=1 // pred_fallthru
      _
    // Predicated region
    $region70: #{santorini_forward.1} parent=1 // pred_check
      _
    $region71: #{santorini_forward.1} parent=1 // pred_check_branch
      %153 = sbr.rel (0) target = $region73
    $region72: #{santorini_forward.1} parent=1 // pred_region
      %154 = dma.done [#allocation11], 32768
    $region73: #{santorini_forward.1} parent=1 // pred_fallthru
      _
    // Predicated region
    $region74: #{santorini_forward.1} parent=1 // pred_check
      _
    $region75: #{santorini_forward.1} parent=1 // pred_check_branch
      %156 = sbr.rel (0) target = $region77
    $region76: #{santorini_forward.1} parent=1 // pred_region
      %157 = dma.done [#allocation14], 64
    $region77: #{santorini_forward.1} parent=1 // pred_fallthru
      _
    // Predicated region
    $region78: #{santorini_forward.1} parent=1 // pred_check
      _
    $region79: #{santorini_forward.1} parent=1 // pred_check_branch
      %159 = sbr.rel (0) target = $region81
    $region80: #{santorini_forward.1} parent=1 // pred_region
      %160 = dma.done [#allocation14], 8192
    $region81: #{santorini_forward.1} parent=1 // pred_fallthru
      _
    // Predicated region
    $region82: #{santorini_forward.1} parent=1 // pred_check
      _
    $region83: #{santorini_forward.1} parent=1 // pred_check_branch
      %162 = sbr.rel (0) target = $region85
    $region84: #{santorini_forward.1} parent=1 // pred_region
      %163 = dma.done [#allocation17], 32
    $region85: #{santorini_forward.1} parent=1 // pred_fallthru
      _
    %v165 = vld [vmem:[%s0] sm:$0xf]
    %v166 = vld [vmem:[#allocation2] sm:$0xff]
    %v167 = vld [vmem:[#allocation2 + $0x8] sm:$0xff]
    %v168 = vld [vmem:[#allocation2 + $0x10] sm:$0xff]
    %v169 = vld [vmem:[#allocation2 + $0x18] sm:$0xf]
    %v170 = vld [vmem:[#allocation2 + $0x1c] sm:$0xff]
    %v171 = vld [vmem:[#allocation2 + $0x24] sm:$0xff]
    %v172 = vld [vmem:[#allocation2 + $0x2c] sm:$0xff]
    %v173 = vld [vmem:[#allocation2 + $0x34] sm:$0xf]
    %v174 = vld [vmem:[#allocation2 + $0x38] sm:$0xff]
    %v175 = vld [vmem:[#allocation2 + $0x40] sm:$0xff]
    %v176 = vld [vmem:[#allocation2 + $0x48] sm:$0xff]
    %v177 = vld [vmem:[#allocation2 + $0x50] sm:$0xf]
    %v178 = vld [vmem:[#allocation2 + $0x54] sm:$0xff]
    %v179 = vld [vmem:[#allocation2 + $0x5c] sm:$0xff]
    %v180 = vld [vmem:[#allocation2 + $0x64] sm:$0xff]
    %v181 = vld [vmem:[#allocation2 + $0x6c] sm:$0xf]
    %v182 = vld [vmem:[#allocation2 + $0x70] sm:$0xff]
    %v183 = vld [vmem:[#allocation2 + $0x78] sm:$0xff]
    %v184 = vld [vmem:[#allocation2 + $0x80] sm:$0xff]
    %v185 = vld [vmem:[#allocation2 + $0x88] sm:$0xf]
    %v186 = vld [vmem:[#allocation2 + $0x8c] sm:$0xff]
    %v187 = vld [vmem:[#allocation2 + $0x94] sm:$0xff]
    %v188 = vld [vmem:[#allocation2 + $0x9c] sm:$0xff]
    %v189 = vld [vmem:[#allocation2 + $0xa4] sm:$0xf]
    %v190 = vld [vmem:[#allocation2 + $0xa8] sm:$0xff]
    %v191 = vld [vmem:[#allocation2 + $0xb0] sm:$0xff]
    %v192 = vld [vmem:[#allocation2 + $0xb8] sm:$0xff]
    %v193 = vld [vmem:[#allocation2 + $0xc0] sm:$0xf]
    %v194 = vld [vmem:[#allocation2 + $0xc4] sm:$0xff]
    %v195 = vld [vmem:[#allocation2 + $0xcc] sm:$0xff]
    %v196 = vld [vmem:[#allocation2 + $0xd4] sm:$0xff]
    %v197 = vld [vmem:[#allocation2 + $0xdc] sm:$0xf]
    %v198 = vld [vmem:[#allocation2 + $0xe0] sm:$0xff]
    %v199 = vld [vmem:[#allocation2 + $0xe8] sm:$0xff]
    %v200 = vld [vmem:[#allocation2 + $0xf0] sm:$0xff]
    %v201 = vld [vmem:[#allocation2 + $0xf8] sm:$0xf]
    %v202 = vld [vmem:[#allocation2 + $0xfc] sm:$0xff]
    %v203 = vld [vmem:[#allocation2 + $0x104] sm:$0xff]
    %v204 = vld [vmem:[#allocation2 + $0x10c] sm:$0xff]
    %v205 = vld [vmem:[#allocation2 + $0x114] sm:$0xf]
    %v206 = vld [vmem:[#allocation2 + $0x118] sm:$0xff]
    %v207 = vld [vmem:[#allocation2 + $0x120] sm:$0xff]
    %v208 = vld [vmem:[#allocation2 + $0x128] sm:$0xff]
    %v209 = vld [vmem:[#allocation2 + $0x130] sm:$0xf]
    %v210 = vld [vmem:[#allocation2 + $0x134] sm:$0xff]
    %v211 = vld [vmem:[#allocation2 + $0x13c] sm:$0xff]
    %v212 = vld [vmem:[#allocation2 + $0x144] sm:$0xff]
    %v213 = vld [vmem:[#allocation2 + $0x14c] sm:$0xf]
    %v214 = vld [vmem:[#allocation2 + $0x150] sm:$0xff]
    %v215 = vld [vmem:[#allocation2 + $0x158] sm:$0xff]
    %v216 = vld [vmem:[#allocation2 + $0x160] sm:$0xff]
    %v217 = vld [vmem:[#allocation2 + $0x168] sm:$0xf]
    %v218 = vld [vmem:[#allocation2 + $0x16c] sm:$0xff]
    %v219 = vld [vmem:[#allocation2 + $0x174] sm:$0xff]
    %v220 = vld [vmem:[#allocation2 + $0x17c] sm:$0xff]
    %v221 = vld [vmem:[#allocation2 + $0x184] sm:$0xf]
    %v222 = vld [vmem:[#allocation2 + $0x188] sm:$0xff]
    %v223 = vld [vmem:[#allocation2 + $0x190] sm:$0xff]
    %v224 = vld [vmem:[#allocation2 + $0x198] sm:$0xff]
    %v225 = vld [vmem:[#allocation2 + $0x1a0] sm:$0xf]
    %v226 = vld [vmem:[#allocation2 + $0x1a4] sm:$0xff]
    %v227 = vld [vmem:[#allocation2 + $0x1ac] sm:$0xff]
    %v228 = vld [vmem:[#allocation2 + $0x1b4] sm:$0xff]
    %v229 = vld [vmem:[#allocation2 + $0x1bc] sm:$0xf]
    %v230 = vld [vmem:[#allocation4] sm:$0xff]
    %v232 = vlaneseq
    %v233 = vshrl.u32 %v232, 7
    %v234 = vsub.s32 0, %v233
    %v235 = vrot.slane %v230, %v234
    %v236 = vlaneseq
    %v237 = vshrl.u32 %v236, 7
    %v238 = vsub.s32 1, %v237
    %v239 = vrot.slane %v230, %v238
    %v240 = vlaneseq
    %v241 = vshrl.u32 %v240, 7
    %v242 = vsub.s32 2, %v241
    %v243 = vrot.slane %v230, %v242
    %v244 = vlaneseq
    %v245 = vshrl.u32 %v244, 7
    %v246 = vsub.s32 3, %v245
    %v247 = vrot.slane %v230, %v246
    %v248 = vlaneseq
    %v249 = vshrl.u32 %v248, 7
    %v250 = vsub.s32 4, %v249
    %v251 = vrot.slane %v230, %v250
    %v252 = vlaneseq
    %v253 = vshrl.u32 %v252, 7
    %v254 = vsub.s32 5, %v253
    %v255 = vrot.slane %v230, %v254
    %v256 = vlaneseq
    %v257 = vshrl.u32 %v256, 7
    %v258 = vsub.s32 6, %v257
    %v259 = vrot.slane %v230, %v258
    %v331 = vunpack.c.l.b16 %v166
    %v332 = vunpack.c.h.b16 %v166
    %v333 = vunpack.c.l.b16 %v167
    %v334 = vunpack.c.h.b16 %v167
    %v335 = vunpack.c.l.b16 %v168
    %v336 = vunpack.c.h.b16 %v168
    %v337 = vunpack.c.l.b16 %v169
    %v338 = vunpack.c.l.b16 %v170
    %v339 = vunpack.c.h.b16 %v170
    %v340 = vunpack.c.l.b16 %v171
    %v341 = vunpack.c.h.b16 %v171
    %v342 = vunpack.c.l.b16 %v172
    %v343 = vunpack.c.h.b16 %v172
    %v344 = vunpack.c.l.b16 %v173
    %v345 = vunpack.c.l.b16 %v174
    %v346 = vunpack.c.h.b16 %v174
    %v347 = vunpack.c.l.b16 %v175
    %v348 = vunpack.c.h.b16 %v175
    %v349 = vunpack.c.l.b16 %v176
    %v350 = vunpack.c.h.b16 %v176
    %v351 = vunpack.c.l.b16 %v177
    %v352 = vunpack.c.l.b16 %v178
    %v353 = vunpack.c.h.b16 %v178
    %v354 = vunpack.c.l.b16 %v179
    %v355 = vunpack.c.h.b16 %v179
    %v356 = vunpack.c.l.b16 %v180
    %v357 = vunpack.c.h.b16 %v180
    %v358 = vunpack.c.l.b16 %v181
    %v359 = vunpack.c.l.b16 %v182
    %v360 = vunpack.c.h.b16 %v182
    %v361 = vunpack.c.l.b16 %v183
    %v362 = vunpack.c.h.b16 %v183
    %v363 = vunpack.c.l.b16 %v184
    %v364 = vunpack.c.h.b16 %v184
    %v365 = vunpack.c.l.b16 %v185
    %v366 = vunpack.c.l.b16 %v186
    %v367 = vunpack.c.h.b16 %v186
    %v368 = vunpack.c.l.b16 %v187
    %v369 = vunpack.c.h.b16 %v187
    %v370 = vunpack.c.l.b16 %v188
    %v371 = vunpack.c.h.b16 %v188
    %v372 = vunpack.c.l.b16 %v189
    %v373 = vunpack.c.l.b16 %v190
    %v374 = vunpack.c.h.b16 %v190
    %v375 = vunpack.c.l.b16 %v191
    %v376 = vunpack.c.h.b16 %v191
    %v377 = vunpack.c.l.b16 %v192
    %v378 = vunpack.c.h.b16 %v192
    %v379 = vunpack.c.l.b16 %v193
    %v380 = vunpack.c.l.b16 %v194
    %v381 = vunpack.c.h.b16 %v194
    %v382 = vunpack.c.l.b16 %v195
    %v383 = vunpack.c.h.b16 %v195
    %v384 = vunpack.c.l.b16 %v196
    %v385 = vunpack.c.h.b16 %v196
    %v386 = vunpack.c.l.b16 %v197
    %v387 = vunpack.c.l.b16 %v198
    %v388 = vunpack.c.h.b16 %v198
    %v389 = vunpack.c.l.b16 %v199
    %v390 = vunpack.c.h.b16 %v199
    %v391 = vunpack.c.l.b16 %v200
    %v392 = vunpack.c.h.b16 %v200
    %v393 = vunpack.c.l.b16 %v201
    %v394 = vunpack.c.l.b16 %v202
    %v395 = vunpack.c.h.b16 %v202
    %v396 = vunpack.c.l.b16 %v203
    %v397 = vunpack.c.h.b16 %v203
    %v398 = vunpack.c.l.b16 %v204
    %v399 = vunpack.c.h.b16 %v204
    %v400 = vunpack.c.l.b16 %v205
    %v401 = vunpack.c.l.b16 %v206
    %v402 = vunpack.c.h.b16 %v206
    %v403 = vunpack.c.l.b16 %v207
    %v404 = vunpack.c.h.b16 %v207
    %v405 = vunpack.c.l.b16 %v208
    %v406 = vunpack.c.h.b16 %v208
    %v407 = vunpack.c.l.b16 %v209
    %v408 = vunpack.c.l.b16 %v210
    %v409 = vunpack.c.h.b16 %v210
    %v410 = vunpack.c.l.b16 %v211
    %v411 = vunpack.c.h.b16 %v211
    %v412 = vunpack.c.l.b16 %v212
    %v413 = vunpack.c.h.b16 %v212
    %v414 = vunpack.c.l.b16 %v213
    %v415 = vunpack.c.l.b16 %v214
    %v416 = vunpack.c.h.b16 %v214
    %v417 = vunpack.c.l.b16 %v215
    %v418 = vunpack.c.h.b16 %v215
    %v419 = vunpack.c.l.b16 %v216
    %v420 = vunpack.c.h.b16 %v216
    %v421 = vunpack.c.l.b16 %v217
    %v422 = vunpack.c.l.b16 %v218
    %v423 = vunpack.c.h.b16 %v218
    %v424 = vunpack.c.l.b16 %v219
    %v425 = vunpack.c.h.b16 %v219
    %v426 = vunpack.c.l.b16 %v220
    %v427 = vunpack.c.h.b16 %v220
    %v428 = vunpack.c.l.b16 %v221
    %v429 = vunpack.c.l.b16 %v222
    %v430 = vunpack.c.h.b16 %v222
    %v431 = vunpack.c.l.b16 %v223
    %v432 = vunpack.c.h.b16 %v223
    %v433 = vunpack.c.l.b16 %v224
    %v434 = vunpack.c.h.b16 %v224
    %v435 = vunpack.c.l.b16 %v225
    %v436 = vunpack.c.l.b16 %v226
    %v437 = vunpack.c.h.b16 %v226
    %v438 = vunpack.c.l.b16 %v227
    %v439 = vunpack.c.h.b16 %v227
    %v440 = vunpack.c.l.b16 %v228
    %v441 = vunpack.c.h.b16 %v228
    %v442 = vunpack.c.l.b16 %v229
    %v443 = vpack.c.b16 %v338, %v331
    %v444 = vpack.c.b16 %v339, %v332
    %v445 = vpack.c.b16 %v340, %v333
    %v446 = vpack.c.b16 %v341, %v334
    %v447 = vpack.c.b16 %v342, %v335
    %v448 = vpack.c.b16 %v343, %v336
    %v449 = vpack.c.b16 %v344, %v337
    %v450 = vpack.c.b16 %v352, %v345
    %v451 = vpack.c.b16 %v353, %v346
    %v452 = vpack.c.b16 %v354, %v347
    %v453 = vpack.c.b16 %v355, %v348
    %v454 = vpack.c.b16 %v356, %v349
    %v455 = vpack.c.b16 %v357, %v350
    %v456 = vpack.c.b16 %v358, %v351
    %v457 = vpack.c.b16 %v366, %v359
    %v458 = vpack.c.b16 %v367, %v360
    %v459 = vpack.c.b16 %v368, %v361
    %v460 = vpack.c.b16 %v369, %v362
    %v461 = vpack.c.b16 %v370, %v363
    %v462 = vpack.c.b16 %v371, %v364
    %v463 = vpack.c.b16 %v372, %v365
    %v464 = vpack.c.b16 %v380, %v373
    %v465 = vpack.c.b16 %v381, %v374
    %v466 = vpack.c.b16 %v382, %v375
    %v467 = vpack.c.b16 %v383, %v376
    %v468 = vpack.c.b16 %v384, %v377
    %v469 = vpack.c.b16 %v385, %v378
    %v470 = vpack.c.b16 %v386, %v379
    %v471 = vpack.c.b16 %v394, %v387
    %v472 = vpack.c.b16 %v395, %v388
    %v473 = vpack.c.b16 %v396, %v389
    %v474 = vpack.c.b16 %v397, %v390
    %v475 = vpack.c.b16 %v398, %v391
    %v476 = vpack.c.b16 %v399, %v392
    %v477 = vpack.c.b16 %v400, %v393
    %v478 = vpack.c.b16 %v408, %v401
    %v479 = vpack.c.b16 %v409, %v402
    %v480 = vpack.c.b16 %v410, %v403
    %v481 = vpack.c.b16 %v411, %v404
    %v482 = vpack.c.b16 %v412, %v405
    %v483 = vpack.c.b16 %v413, %v406
    %v484 = vpack.c.b16 %v414, %v407
    %v485 = vpack.c.b16 %v422, %v415
    %v486 = vpack.c.b16 %v423, %v416
    %v487 = vpack.c.b16 %v424, %v417
    %v488 = vpack.c.b16 %v425, %v418
    %v489 = vpack.c.b16 %v426, %v419
    %v490 = vpack.c.b16 %v427, %v420
    %v491 = vpack.c.b16 %v428, %v421
    %v492 = vpack.c.b16 %v436, %v429
    %v493 = vpack.c.b16 %v437, %v430
    %v494 = vpack.c.b16 %v438, %v431
    %v495 = vpack.c.b16 %v439, %v432
    %v496 = vpack.c.b16 %v440, %v433
    %v497 = vpack.c.b16 %v441, %v434
    %v498 = vpack.c.b16 %v442, %v435
    %555 = vmatprep.subr.bf16.mxu0 %v493
    %556 = vmatpush1.bf16.msra.mxu0 %v492
    %557 = vmatprep.subr.bf16.mxu0 %v486
    %558 = vmatpush1.bf16.msra.mxu0 %v485
    %559 = vmatprep.subr.bf16.mxu0 %v479
    %560 = vmatpush1.bf16.msra.mxu0 %v478
    %561 = vmatprep.subr.bf16.mxu0 %v472
    %562 = vmatpush1.bf16.msra.mxu0 %v471
    %563 = vmatprep.subr.bf16.mxu0 %v465
    %564 = vmatpush1.bf16.msra.mxu0 %v464
    %565 = vmatprep.subr.bf16.mxu0 %v458
    %566 = vmatpush1.bf16.msra.mxu0 %v457
    %567 = vmatprep.subr.bf16.mxu0 %v451
    %568 = vmatpush1.bf16.msra.mxu0 %v450
    %569 = vmatprep.subr.bf16.mxu0 %v444
    %570 = vmatpush1.bf16.msra.mxu0 %v443
    %571 = vmatprep.subr.bf16.mxu0 0
    %572 = vmatpush2.bf16.msra.mxu0 0
    %573 = vmatprep.subr.bf16.mxu0 0
    %574 = vmatpush2.bf16.msra.mxu0 0
    %575 = vmatprep.subr.bf16.mxu0 0
    %576 = vmatpush2.bf16.msra.mxu0 0
    %577 = vmatprep.subr.bf16.mxu0 0
    %578 = vmatpush2.bf16.msra.mxu0 0
    %579 = vmatprep.subr.bf16.mxu0 0
    %580 = vmatpush2.bf16.msra.mxu0 0
    %581 = vmatprep.subr.bf16.mxu0 0
    %582 = vmatpush2.bf16.msra.mxu0 0
    %583 = vmatprep.subr.bf16.mxu0 0
    %584 = vmatpush2.bf16.msra.mxu0 0
    %585 = vmatprep.subr.bf16.mxu0 0
    %586 = vmatpush2.bf16.msra.mxu0 0
    %587 = vmatprep.mubr.bf16.mxu0 0
    %588 = vmatmul.mubr.bf16.gmra.mxu0 %v165
    %v589 = vpop.f32.mrf.mxu0
    %v590 = vadd.f32 %v235, %v589
    %v591 = vpop.f32.mrf.mxu0
    %v592 = vadd.f32 %v239, %v591
    %v593 = vpop.f32.mrf.mxu0
    %v594 = vpop.f32.mrf.mxu0
    %595 = vdwg.mxu0
    %596 = vmatprep.subr.bf16.mxu0 %v495
    %597 = vmatpush1.bf16.msra.mxu0 %v494
    %598 = vmatprep.subr.bf16.mxu0 %v488
    %599 = vmatpush1.bf16.msra.mxu0 %v487
    %600 = vmatprep.subr.bf16.mxu0 %v481
    %601 = vmatpush1.bf16.msra.mxu0 %v480
    %602 = vmatprep.subr.bf16.mxu0 %v474
    %603 = vmatpush1.bf16.msra.mxu0 %v473
    %604 = vmatprep.subr.bf16.mxu0 %v467
    %605 = vmatpush1.bf16.msra.mxu0 %v466
    %606 = vmatprep.subr.bf16.mxu0 %v460
    %607 = vmatpush1.bf16.msra.mxu0 %v459
    %608 = vmatprep.subr.bf16.mxu0 %v453
    %609 = vmatpush1.bf16.msra.mxu0 %v452
    %610 = vmatprep.subr.bf16.mxu0 %v446
    %611 = vmatpush1.bf16.msra.mxu0 %v445
    %612 = vmatprep.subr.bf16.mxu0 0
    %613 = vmatpush2.bf16.msra.mxu0 0
    %614 = vmatprep.subr.bf16.mxu0 0
    %615 = vmatpush2.bf16.msra.mxu0 0
    %616 = vmatprep.subr.bf16.mxu0 0
    %617 = vmatpush2.bf16.msra.mxu0 0
    %618 = vmatprep.subr.bf16.mxu0 0
    %619 = vmatpush2.bf16.msra.mxu0 0
    %620 = vmatprep.subr.bf16.mxu0 0
    %621 = vmatpush2.bf16.msra.mxu0 0
    %622 = vmatprep.subr.bf16.mxu0 0
    %623 = vmatpush2.bf16.msra.mxu0 0
    %624 = vmatprep.subr.bf16.mxu0 0
    %625 = vmatpush2.bf16.msra.mxu0 0
    %626 = vmatprep.subr.bf16.mxu0 0
    %627 = vmatpush2.bf16.msra.mxu0 0
    %628 = vmatprep.mubr.bf16.mxu0 0
    %629 = vmatmul.mubr.bf16.gmra.mxu0 %v165
    %v630 = vpop.f32.mrf.mxu0
    %v631 = vadd.f32 %v243, %v630
    %v632 = vpop.f32.mrf.mxu0
    %v633 = vadd.f32 %v247, %v632
    %v634 = vpop.f32.mrf.mxu0
    %v635 = vpop.f32.mrf.mxu0
    %636 = vdwg.mxu0
    %637 = vmatprep.subr.bf16.mxu0 %v497
    %638 = vmatpush1.bf16.msra.mxu0 %v496
    %639 = vmatprep.subr.bf16.mxu0 %v490
    %640 = vmatpush1.bf16.msra.mxu0 %v489
    %641 = vmatprep.subr.bf16.mxu0 %v483
    %642 = vmatpush1.bf16.msra.mxu0 %v482
    %643 = vmatprep.subr.bf16.mxu0 %v476
    %644 = vmatpush1.bf16.msra.mxu0 %v475
    %645 = vmatprep.subr.bf16.mxu0 %v469
    %646 = vmatpush1.bf16.msra.mxu0 %v468
    %647 = vmatprep.subr.bf16.mxu0 %v462
    %648 = vmatpush1.bf16.msra.mxu0 %v461
    %649 = vmatprep.subr.bf16.mxu0 %v455
    %650 = vmatpush1.bf16.msra.mxu0 %v454
    %651 = vmatprep.subr.bf16.mxu0 %v448
    %652 = vmatpush1.bf16.msra.mxu0 %v447
    %653 = vmatprep.subr.bf16.mxu0 0
    %654 = vmatpush2.bf16.msra.mxu0 0
    %655 = vmatprep.subr.bf16.mxu0 0
    %656 = vmatpush2.bf16.msra.mxu0 0
    %657 = vmatprep.subr.bf16.mxu0 0
    %658 = vmatpush2.bf16.msra.mxu0 0
    %659 = vmatprep.subr.bf16.mxu0 0
    %660 = vmatpush2.bf16.msra.mxu0 0
    %661 = vmatprep.subr.bf16.mxu0 0
    %662 = vmatpush2.bf16.msra.mxu0 0
    %663 = vmatprep.subr.bf16.mxu0 0
    %664 = vmatpush2.bf16.msra.mxu0 0
    %665 = vmatprep.subr.bf16.mxu0 0
    %666 = vmatpush2.bf16.msra.mxu0 0
    %667 = vmatprep.subr.bf16.mxu0 0
    %668 = vmatpush2.bf16.msra.mxu0 0
    %669 = vmatprep.mubr.bf16.mxu0 0
    %670 = vmatmul.mubr.bf16.gmra.mxu0 %v165
    %v671 = vpop.f32.mrf.mxu0
    %v672 = vadd.f32 %v251, %v671
    %v673 = vpop.f32.mrf.mxu0
    %v674 = vadd.f32 %v255, %v673
    %v675 = vpop.f32.mrf.mxu0
    %v676 = vpop.f32.mrf.mxu0
    %677 = vdwg.mxu0
    %678 = vmatprep.subr.bf16.mxu0 0
    %679 = vmatpush1.bf16.msra.mxu0 %v498
    %680 = vmatprep.subr.bf16.mxu0 0
    %681 = vmatpush1.bf16.msra.mxu0 %v491
    %682 = vmatprep.subr.bf16.mxu0 0
    %683 = vmatpush1.bf16.msra.mxu0 %v484
    %684 = vmatprep.subr.bf16.mxu0 0
    %685 = vmatpush1.bf16.msra.mxu0 %v477
    %686 = vmatprep.subr.bf16.mxu0 0
    %687 = vmatpush1.bf16.msra.mxu0 %v470
    %688 = vmatprep.subr.bf16.mxu0 0
    %689 = vmatpush1.bf16.msra.mxu0 %v463
    %690 = vmatprep.subr.bf16.mxu0 0
    %691 = vmatpush1.bf16.msra.mxu0 %v456
    %692 = vmatprep.subr.bf16.mxu0 0
    %693 = vmatpush1.bf16.msra.mxu0 %v449
    %694 = vmatprep.subr.bf16.mxu0 0
    %695 = vmatpush2.bf16.msra.mxu0 0
    %696 = vmatprep.subr.bf16.mxu0 0
    %697 = vmatpush2.bf16.msra.mxu0 0
    %698 = vmatprep.subr.bf16.mxu0 0
    %699 = vmatpush2.bf16.msra.mxu0 0
    %700 = vmatprep.subr.bf16.mxu0 0
    %701 = vmatpush2.bf16.msra.mxu0 0
    %702 = vmatprep.subr.bf16.mxu0 0
    %703 = vmatpush2.bf16.msra.mxu0 0
    %704 = vmatprep.subr.bf16.mxu0 0
    %705 = vmatpush2.bf16.msra.mxu0 0
    %706 = vmatprep.subr.bf16.mxu0 0
    %707 = vmatpush2.bf16.msra.mxu0 0
    %708 = vmatprep.subr.bf16.mxu0 0
    %709 = vmatpush2.bf16.msra.mxu0 0
    %710 = vmatprep.mubr.bf16.mxu0 0
    %711 = vmatmul.mubr.bf16.gmra.mxu0 %v165
    %v712 = vpop.f32.mrf.mxu0
    %v713 = vadd.f32 %v259, %v712
    %v714 = vpop.f32.mrf.mxu0
    %v715 = vpop.f32.mrf.mxu0
    %v716 = vpop.f32.mrf.mxu0
    %717 = vdwg.mxu0
    %v718 = vmax.f32 %v590, 0.0
    %v719 = vmax.f32 %v592, 0.0
    %v720 = vmax.f32 %v631, 0.0
    %v721 = vmax.f32 %v633, 0.0
    %v722 = vmax.f32 %v672, 0.0
    %v723 = vmax.f32 %v674, 0.0
    %v724 = vmax.f32 %v713, 0.0
    %v725 = vpack.c.bf16 %v718, %v718
    %v726 = vpack.c.bf16 %v719, %v719
    %v727 = vpack.c.bf16 %v720, %v720
    %v728 = vpack.c.bf16 %v721, %v721
    %v729 = vpack.c.bf16 %v722, %v722
    %v730 = vpack.c.bf16 %v723, %v723
    %v731 = vpack.c.bf16 %v724, %v724
    %v732 = vld [vmem:[#allocation6] sm:$0xff]
    %v733 = vld [vmem:[#allocation6 + $0x8] sm:$0xff]
    %v734 = vld [vmem:[#allocation6 + $0x10] sm:$0xff]
    %v735 = vld [vmem:[#allocation6 + $0x18] sm:$0xf]
    %v736 = vld [vmem:[#allocation6 + $0x1c] sm:$0xff]
    %v737 = vld [vmem:[#allocation6 + $0x24] sm:$0xff]
    %v738 = vld [vmem:[#allocation6 + $0x2c] sm:$0xff]
    %v739 = vld [vmem:[#allocation6 + $0x34] sm:$0xf]
    %v740 = vld [vmem:[#allocation6 + $0x38] sm:$0xff]
    %v741 = vld [vmem:[#allocation6 + $0x40] sm:$0xff]
    %v742 = vld [vmem:[#allocation6 + $0x48] sm:$0xff]
    %v743 = vld [vmem:[#allocation6 + $0x50] sm:$0xf]
    %v744 = vld [vmem:[#allocation6 + $0x54] sm:$0xff]
    %v745 = vld [vmem:[#allocation6 + $0x5c] sm:$0xff]
    %v746 = vld [vmem:[#allocation6 + $0x64] sm:$0xff]
    %v747 = vld [vmem:[#allocation6 + $0x6c] sm:$0xf]
    %v748 = vld [vmem:[#allocation6 + $0x70] sm:$0xff]
    %v749 = vld [vmem:[#allocation6 + $0x78] sm:$0xff]
    %v750 = vld [vmem:[#allocation6 + $0x80] sm:$0xff]
    %v751 = vld [vmem:[#allocation6 + $0x88] sm:$0xf]
    %v752 = vld [vmem:[#allocation6 + $0x8c] sm:$0xff]
    %v753 = vld [vmem:[#allocation6 + $0x94] sm:$0xff]
    %v754 = vld [vmem:[#allocation6 + $0x9c] sm:$0xff]
    %v755 = vld [vmem:[#allocation6 + $0xa4] sm:$0xf]
    %v756 = vld [vmem:[#allocation6 + $0xa8] sm:$0xff]
    %v757 = vld [vmem:[#allocation6 + $0xb0] sm:$0xff]
    %v758 = vld [vmem:[#allocation6 + $0xb8] sm:$0xff]
    %v759 = vld [vmem:[#allocation6 + $0xc0] sm:$0xf]
    %v760 = vld [vmem:[#allocation6 + $0xc4] sm:$0xff]
    %v761 = vld [vmem:[#allocation6 + $0xcc] sm:$0xff]
    %v762 = vld [vmem:[#allocation6 + $0xd4] sm:$0xff]
    %v763 = vld [vmem:[#allocation6 + $0xdc] sm:$0xf]
    %v764 = vld [vmem:[#allocation6 + $0xe0] sm:$0xff]
    %v765 = vld [vmem:[#allocation6 + $0xe8] sm:$0xff]
    %v766 = vld [vmem:[#allocation6 + $0xf0] sm:$0xff]
    %v767 = vld [vmem:[#allocation6 + $0xf8] sm:$0xf]
    %v768 = vld [vmem:[#allocation6 + $0xfc] sm:$0xff]
    %v769 = vld [vmem:[#allocation6 + $0x104] sm:$0xff]
    %v770 = vld [vmem:[#allocation6 + $0x10c] sm:$0xff]
    %v771 = vld [vmem:[#allocation6 + $0x114] sm:$0xf]
    %v772 = vld [vmem:[#allocation6 + $0x118] sm:$0xff]
    %v773 = vld [vmem:[#allocation6 + $0x120] sm:$0xff]
    %v774 = vld [vmem:[#allocation6 + $0x128] sm:$0xff]
    %v775 = vld [vmem:[#allocation6 + $0x130] sm:$0xf]
    %v776 = vld [vmem:[#allocation6 + $0x134] sm:$0xff]
    %v777 = vld [vmem:[#allocation6 + $0x13c] sm:$0xff]
    %v778 = vld [vmem:[#allocation6 + $0x144] sm:$0xff]
    %v779 = vld [vmem:[#allocation6 + $0x14c] sm:$0xf]
    %v780 = vld [vmem:[#allocation6 + $0x150] sm:$0xff]
    %v781 = vld [vmem:[#allocation6 + $0x158] sm:$0xff]
    %v782 = vld [vmem:[#allocation6 + $0x160] sm:$0xff]
    %v783 = vld [vmem:[#allocation6 + $0x168] sm:$0xf]
    %v784 = vld [vmem:[#allocation6 + $0x16c] sm:$0xff]
    %v785 = vld [vmem:[#allocation6 + $0x174] sm:$0xff]
    %v786 = vld [vmem:[#allocation6 + $0x17c] sm:$0xff]
    %v787 = vld [vmem:[#allocation6 + $0x184] sm:$0xf]
    %v788 = vld [vmem:[#allocation6 + $0x188] sm:$0xff]
    %v789 = vld [vmem:[#allocation6 + $0x190] sm:$0xff]
    %v790 = vld [vmem:[#allocation6 + $0x198] sm:$0xff]
    %v791 = vld [vmem:[#allocation6 + $0x1a0] sm:$0xf]
    %v792 = vld [vmem:[#allocation6 + $0x1a4] sm:$0xff]
    %v793 = vld [vmem:[#allocation6 + $0x1ac] sm:$0xff]
    %v794 = vld [vmem:[#allocation6 + $0x1b4] sm:$0xff]
    %v795 = vld [vmem:[#allocation6 + $0x1bc] sm:$0xf]
    %v796 = vld [vmem:[#allocation6 + $0x1c0] sm:$0xff]
    %v797 = vld [vmem:[#allocation6 + $0x1c8] sm:$0xff]
    %v798 = vld [vmem:[#allocation6 + $0x1d0] sm:$0xff]
    %v799 = vld [vmem:[#allocation6 + $0x1d8] sm:$0xf]
    %v800 = vld [vmem:[#allocation6 + $0x1dc] sm:$0xff]
    %v801 = vld [vmem:[#allocation6 + $0x1e4] sm:$0xff]
    %v802 = vld [vmem:[#allocation6 + $0x1ec] sm:$0xff]
    %v803 = vld [vmem:[#allocation6 + $0x1f4] sm:$0xf]
    %v804 = vld [vmem:[#allocation6 + $0x1f8] sm:$0xff]
    %v805 = vld [vmem:[#allocation6 + $0x200] sm:$0xff]
    %v806 = vld [vmem:[#allocation6 + $0x208] sm:$0xff]
    %v807 = vld [vmem:[#allocation6 + $0x210] sm:$0xf]
    %v808 = vld [vmem:[#allocation6 + $0x214] sm:$0xff]
    %v809 = vld [vmem:[#allocation6 + $0x21c] sm:$0xff]
    %v810 = vld [vmem:[#allocation6 + $0x224] sm:$0xff]
    %v811 = vld [vmem:[#allocation6 + $0x22c] sm:$0xf]
    %v812 = vld [vmem:[#allocation6 + $0x230] sm:$0xff]
    %v813 = vld [vmem:[#allocation6 + $0x238] sm:$0xff]
    %v814 = vld [vmem:[#allocation6 + $0x240] sm:$0xff]
    %v815 = vld [vmem:[#allocation6 + $0x248] sm:$0xf]
    %v816 = vld [vmem:[#allocation6 + $0x24c] sm:$0xff]
    %v817 = vld [vmem:[#allocation6 + $0x254] sm:$0xff]
    %v818 = vld [vmem:[#allocation6 + $0x25c] sm:$0xff]
    %v819 = vld [vmem:[#allocation6 + $0x264] sm:$0xf]
    %v820 = vld [vmem:[#allocation6 + $0x268] sm:$0xff]
    %v821 = vld [vmem:[#allocation6 + $0x270] sm:$0xff]
    %v822 = vld [vmem:[#allocation6 + $0x278] sm:$0xff]
    %v823 = vld [vmem:[#allocation6 + $0x280] sm:$0xf]
    %v824 = vld [vmem:[#allocation6 + $0x284] sm:$0xff]
    %v825 = vld [vmem:[#allocation6 + $0x28c] sm:$0xff]
    %v826 = vld [vmem:[#allocation6 + $0x294] sm:$0xff]
    %v827 = vld [vmem:[#allocation6 + $0x29c] sm:$0xf]
    %v828 = vld [vmem:[#allocation6 + $0x2a0] sm:$0xff]
    %v829 = vld [vmem:[#allocation6 + $0x2a8] sm:$0xff]
    %v830 = vld [vmem:[#allocation6 + $0x2b0] sm:$0xff]
    %v831 = vld [vmem:[#allocation6 + $0x2b8] sm:$0xf]
    %v832 = vld [vmem:[#allocation6 + $0x2bc] sm:$0xff]
    %v833 = vld [vmem:[#allocation6 + $0x2c4] sm:$0xff]
    %v834 = vld [vmem:[#allocation6 + $0x2cc] sm:$0xff]
    %v835 = vld [vmem:[#allocation6 + $0x2d4] sm:$0xf]
    %v836 = vld [vmem:[#allocation6 + $0x2d8] sm:$0xff]
    %v837 = vld [vmem:[#allocation6 + $0x2e0] sm:$0xff]
    %v838 = vld [vmem:[#allocation6 + $0x2e8] sm:$0xff]
    %v839 = vld [vmem:[#allocation6 + $0x2f0] sm:$0xf]
    %v840 = vld [vmem:[#allocation6 + $0x2f4] sm:$0xff]
    %v841 = vld [vmem:[#allocation6 + $0x2fc] sm:$0xff]
    %v842 = vld [vmem:[#allocation6 + $0x304] sm:$0xff]
    %v843 = vld [vmem:[#allocation6 + $0x30c] sm:$0xf]
    %v844 = vld [vmem:[#allocation6 + $0x310] sm:$0xff]
    %v845 = vld [vmem:[#allocation6 + $0x318] sm:$0xff]
    %v846 = vld [vmem:[#allocation6 + $0x320] sm:$0xff]
    %v847 = vld [vmem:[#allocation6 + $0x328] sm:$0xf]
    %v848 = vld [vmem:[#allocation6 + $0x32c] sm:$0xff]
    %v849 = vld [vmem:[#allocation6 + $0x334] sm:$0xff]
    %v850 = vld [vmem:[#allocation6 + $0x33c] sm:$0xff]
    %v851 = vld [vmem:[#allocation6 + $0x344] sm:$0xf]
    %v852 = vld [vmem:[#allocation6 + $0x348] sm:$0xff]
    %v853 = vld [vmem:[#allocation6 + $0x350] sm:$0xff]
    %v854 = vld [vmem:[#allocation6 + $0x358] sm:$0xff]
    %v855 = vld [vmem:[#allocation6 + $0x360] sm:$0xf]
    %v856 = vld [vmem:[#allocation6 + $0x364] sm:$0xff]
    %v857 = vld [vmem:[#allocation6 + $0x36c] sm:$0xff]
    %v858 = vld [vmem:[#allocation6 + $0x374] sm:$0xff]
    %v859 = vld [vmem:[#allocation6 + $0x37c] sm:$0xf]
    %v860 = vld [vmem:[#allocation6 + $0x380] sm:$0xff]
    %v861 = vld [vmem:[#allocation6 + $0x388] sm:$0xff]
    %v862 = vld [vmem:[#allocation6 + $0x390] sm:$0xff]
    %v863 = vld [vmem:[#allocation6 + $0x398] sm:$0xf]
    %v864 = vld [vmem:[#allocation6 + $0x39c] sm:$0xff]
    %v865 = vld [vmem:[#allocation6 + $0x3a4] sm:$0xff]
    %v866 = vld [vmem:[#allocation6 + $0x3ac] sm:$0xff]
    %v867 = vld [vmem:[#allocation6 + $0x3b4] sm:$0xf]
    %v868 = vld [vmem:[#allocation6 + $0x3b8] sm:$0xff]
    %v869 = vld [vmem:[#allocation6 + $0x3c0] sm:$0xff]
    %v870 = vld [vmem:[#allocation6 + $0x3c8] sm:$0xff]
    %v871 = vld [vmem:[#allocation6 + $0x3d0] sm:$0xf]
    %v872 = vld [vmem:[#allocation6 + $0x3d4] sm:$0xff]
    %v873 = vld [vmem:[#allocation6 + $0x3dc] sm:$0xff]
    %v874 = vld [vmem:[#allocation6 + $0x3e4] sm:$0xff]
    %v875 = vld [vmem:[#allocation6 + $0x3ec] sm:$0xf]
    %v876 = vld [vmem:[#allocation6 + $0x3f0] sm:$0xff]
    %v877 = vld [vmem:[#allocation6 + $0x3f8] sm:$0xff]
    %v878 = vld [vmem:[#allocation6 + $0x400] sm:$0xff]
    %v879 = vld [vmem:[#allocation6 + $0x408] sm:$0xf]
    %v880 = vld [vmem:[#allocation6 + $0x40c] sm:$0xff]
    %v881 = vld [vmem:[#allocation6 + $0x414] sm:$0xff]
    %v882 = vld [vmem:[#allocation6 + $0x41c] sm:$0xff]
    %v883 = vld [vmem:[#allocation6 + $0x424] sm:$0xf]
    %v884 = vld [vmem:[#allocation6 + $0x428] sm:$0xff]
    %v885 = vld [vmem:[#allocation6 + $0x430] sm:$0xff]
    %v886 = vld [vmem:[#allocation6 + $0x438] sm:$0xff]
    %v887 = vld [vmem:[#allocation6 + $0x440] sm:$0xf]
    %v888 = vld [vmem:[#allocation6 + $0x444] sm:$0xff]
    %v889 = vld [vmem:[#allocation6 + $0x44c] sm:$0xff]
    %v890 = vld [vmem:[#allocation6 + $0x454] sm:$0xff]
    %v891 = vld [vmem:[#allocation6 + $0x45c] sm:$0xf]
    %v892 = vld [vmem:[#allocation6 + $0x460] sm:$0xff]
    %v893 = vld [vmem:[#allocation6 + $0x468] sm:$0xff]
    %v894 = vld [vmem:[#allocation6 + $0x470] sm:$0xff]
    %v895 = vld [vmem:[#allocation6 + $0x478] sm:$0xf]
    %v896 = vld [vmem:[#allocation6 + $0x47c] sm:$0xff]
    %v897 = vld [vmem:[#allocation6 + $0x484] sm:$0xff]
    %v898 = vld [vmem:[#allocation6 + $0x48c] sm:$0xff]
    %v899 = vld [vmem:[#allocation6 + $0x494] sm:$0xf]
    %v900 = vld [vmem:[#allocation6 + $0x498] sm:$0xff]
    %v901 = vld [vmem:[#allocation6 + $0x4a0] sm:$0xff]
    %v902 = vld [vmem:[#allocation6 + $0x4a8] sm:$0xff]
    %v903 = vld [vmem:[#allocation6 + $0x4b0] sm:$0xf]
    %v904 = vld [vmem:[#allocation6 + $0x4b4] sm:$0xff]
    %v905 = vld [vmem:[#allocation6 + $0x4bc] sm:$0xff]
    %v906 = vld [vmem:[#allocation6 + $0x4c4] sm:$0xff]
    %v907 = vld [vmem:[#allocation6 + $0x4cc] sm:$0xf]
    %v908 = vld [vmem:[#allocation6 + $0x4d0] sm:$0xff]
    %v909 = vld [vmem:[#allocation6 + $0x4d8] sm:$0xff]
    %v910 = vld [vmem:[#allocation6 + $0x4e0] sm:$0xff]
    %v911 = vld [vmem:[#allocation6 + $0x4e8] sm:$0xf]
    %v912 = vld [vmem:[#allocation6 + $0x4ec] sm:$0xff]
    %v913 = vld [vmem:[#allocation6 + $0x4f4] sm:$0xff]
    %v914 = vld [vmem:[#allocation6 + $0x4fc] sm:$0xff]
    %v915 = vld [vmem:[#allocation6 + $0x504] sm:$0xf]
    %v916 = vld [vmem:[#allocation6 + $0x508] sm:$0xff]
    %v917 = vld [vmem:[#allocation6 + $0x510] sm:$0xff]
    %v918 = vld [vmem:[#allocation6 + $0x518] sm:$0xff]
    %v919 = vld [vmem:[#allocation6 + $0x520] sm:$0xf]
    %v920 = vld [vmem:[#allocation6 + $0x524] sm:$0xff]
    %v921 = vld [vmem:[#allocation6 + $0x52c] sm:$0xff]
    %v922 = vld [vmem:[#allocation6 + $0x534] sm:$0xff]
    %v923 = vld [vmem:[#allocation6 + $0x53c] sm:$0xf]
    %v924 = vld [vmem:[#allocation6 + $0x540] sm:$0xff]
    %v925 = vld [vmem:[#allocation6 + $0x548] sm:$0xff]
    %v926 = vld [vmem:[#allocation6 + $0x550] sm:$0xff]
    %v927 = vld [vmem:[#allocation6 + $0x558] sm:$0xf]
    %v928 = vld [vmem:[#allocation6 + $0x55c] sm:$0xff]
    %v929 = vld [vmem:[#allocation6 + $0x564] sm:$0xff]
    %v930 = vld [vmem:[#allocation6 + $0x56c] sm:$0xff]
    %v931 = vld [vmem:[#allocation6 + $0x574] sm:$0xf]
    %v932 = vld [vmem:[#allocation6 + $0x578] sm:$0xff]
    %v933 = vld [vmem:[#allocation6 + $0x580] sm:$0xff]
    %v934 = vld [vmem:[#allocation6 + $0x588] sm:$0xff]
    %v935 = vld [vmem:[#allocation6 + $0x590] sm:$0xf]
    %v936 = vld [vmem:[#allocation6 + $0x594] sm:$0xff]
    %v937 = vld [vmem:[#allocation6 + $0x59c] sm:$0xff]
    %v938 = vld [vmem:[#allocation6 + $0x5a4] sm:$0xff]
    %v939 = vld [vmem:[#allocation6 + $0x5ac] sm:$0xf]
    %v940 = vld [vmem:[#allocation6 + $0x5b0] sm:$0xff]
    %v941 = vld [vmem:[#allocation6 + $0x5b8] sm:$0xff]
    %v942 = vld [vmem:[#allocation6 + $0x5c0] sm:$0xff]
    %v943 = vld [vmem:[#allocation6 + $0x5c8] sm:$0xf]
    %v944 = vld [vmem:[#allocation6 + $0x5cc] sm:$0xff]
    %v945 = vld [vmem:[#allocation6 + $0x5d4] sm:$0xff]
    %v946 = vld [vmem:[#allocation6 + $0x5dc] sm:$0xff]
    %v947 = vld [vmem:[#allocation6 + $0x5e4] sm:$0xf]
    %v948 = vld [vmem:[#allocation6 + $0x5e8] sm:$0xff]
    %v949 = vld [vmem:[#allocation6 + $0x5f0] sm:$0xff]
    %v950 = vld [vmem:[#allocation6 + $0x5f8] sm:$0xff]
    %v951 = vld [vmem:[#allocation6 + $0x600] sm:$0xf]
    %v952 = vld [vmem:[#allocation6 + $0x604] sm:$0xff]
    %v953 = vld [vmem:[#allocation6 + $0x60c] sm:$0xff]
    %v954 = vld [vmem:[#allocation6 + $0x614] sm:$0xff]
    %v955 = vld [vmem:[#allocation6 + $0x61c] sm:$0xf]
    %v956 = vld [vmem:[#allocation6 + $0x620] sm:$0xff]
    %v957 = vld [vmem:[#allocation6 + $0x628] sm:$0xff]
    %v958 = vld [vmem:[#allocation6 + $0x630] sm:$0xff]
    %v959 = vld [vmem:[#allocation6 + $0x638] sm:$0xf]
    %v960 = vld [vmem:[#allocation6 + $0x63c] sm:$0xff]
    %v961 = vld [vmem:[#allocation6 + $0x644] sm:$0xff]
    %v962 = vld [vmem:[#allocation6 + $0x64c] sm:$0xff]
    %v963 = vld [vmem:[#allocation6 + $0x654] sm:$0xf]
    %v964 = vld [vmem:[#allocation6 + $0x658] sm:$0xff]
    %v965 = vld [vmem:[#allocation6 + $0x660] sm:$0xff]
    %v966 = vld [vmem:[#allocation6 + $0x668] sm:$0xff]
    %v967 = vld [vmem:[#allocation6 + $0x670] sm:$0xf]
    %v968 = vld [vmem:[#allocation6 + $0x674] sm:$0xff]
    %v969 = vld [vmem:[#allocation6 + $0x67c] sm:$0xff]
    %v970 = vld [vmem:[#allocation6 + $0x684] sm:$0xff]
    %v971 = vld [vmem:[#allocation6 + $0x68c] sm:$0xf]
    %v972 = vld [vmem:[#allocation6 + $0x690] sm:$0xff]
    %v973 = vld [vmem:[#allocation6 + $0x698] sm:$0xff]
    %v974 = vld [vmem:[#allocation6 + $0x6a0] sm:$0xff]
    %v975 = vld [vmem:[#allocation6 + $0x6a8] sm:$0xf]
    %v976 = vld [vmem:[#allocation6 + $0x6ac] sm:$0xff]
    %v977 = vld [vmem:[#allocation6 + $0x6b4] sm:$0xff]
    %v978 = vld [vmem:[#allocation6 + $0x6bc] sm:$0xff]
    %v979 = vld [vmem:[#allocation6 + $0x6c4] sm:$0xf]
    %v980 = vld [vmem:[#allocation6 + $0x6c8] sm:$0xff]
    %v981 = vld [vmem:[#allocation6 + $0x6d0] sm:$0xff]
    %v982 = vld [vmem:[#allocation6 + $0x6d8] sm:$0xff]
    %v983 = vld [vmem:[#allocation6 + $0x6e0] sm:$0xf]
    %v984 = vld [vmem:[#allocation6 + $0x6e4] sm:$0xff]
    %v985 = vld [vmem:[#allocation6 + $0x6ec] sm:$0xff]
    %v986 = vld [vmem:[#allocation6 + $0x6f4] sm:$0xff]
    %v987 = vld [vmem:[#allocation6 + $0x6fc] sm:$0xf]
    %v988 = vld [vmem:[#allocation6 + $0x700] sm:$0xff]
    %v989 = vld [vmem:[#allocation6 + $0x708] sm:$0xff]
    %v990 = vld [vmem:[#allocation6 + $0x710] sm:$0xff]
    %v991 = vld [vmem:[#allocation6 + $0x718] sm:$0xf]
    %v992 = vld [vmem:[#allocation6 + $0x71c] sm:$0xff]
    %v993 = vld [vmem:[#allocation6 + $0x724] sm:$0xff]
    %v994 = vld [vmem:[#allocation6 + $0x72c] sm:$0xff]
    %v995 = vld [vmem:[#allocation6 + $0x734] sm:$0xf]
    %v996 = vld [vmem:[#allocation6 + $0x738] sm:$0xff]
    %v997 = vld [vmem:[#allocation6 + $0x740] sm:$0xff]
    %v998 = vld [vmem:[#allocation6 + $0x748] sm:$0xff]
    %v999 = vld [vmem:[#allocation6 + $0x750] sm:$0xf]
    %v1000 = vld [vmem:[#allocation6 + $0x754] sm:$0xff]
    %v1001 = vld [vmem:[#allocation6 + $0x75c] sm:$0xff]
    %v1002 = vld [vmem:[#allocation6 + $0x764] sm:$0xff]
    %v1003 = vld [vmem:[#allocation6 + $0x76c] sm:$0xf]
    %v1004 = vld [vmem:[#allocation6 + $0x770] sm:$0xff]
    %v1005 = vld [vmem:[#allocation6 + $0x778] sm:$0xff]
    %v1006 = vld [vmem:[#allocation6 + $0x780] sm:$0xff]
    %v1007 = vld [vmem:[#allocation6 + $0x788] sm:$0xf]
    %v1008 = vld [vmem:[#allocation6 + $0x78c] sm:$0xff]
    %v1009 = vld [vmem:[#allocation6 + $0x794] sm:$0xff]
    %v1010 = vld [vmem:[#allocation6 + $0x79c] sm:$0xff]
    %v1011 = vld [vmem:[#allocation6 + $0x7a4] sm:$0xf]
    %v1012 = vld [vmem:[#allocation6 + $0x7a8] sm:$0xff]
    %v1013 = vld [vmem:[#allocation6 + $0x7b0] sm:$0xff]
    %v1014 = vld [vmem:[#allocation6 + $0x7b8] sm:$0xff]
    %v1015 = vld [vmem:[#allocation6 + $0x7c0] sm:$0xf]
    %v1016 = vld [vmem:[#allocation6 + $0x7c4] sm:$0xff]
    %v1017 = vld [vmem:[#allocation6 + $0x7cc] sm:$0xff]
    %v1018 = vld [vmem:[#allocation6 + $0x7d4] sm:$0xff]
    %v1019 = vld [vmem:[#allocation6 + $0x7dc] sm:$0xf]
    %v1020 = vld [vmem:[#allocation6 + $0x7e0] sm:$0xff]
    %v1021 = vld [vmem:[#allocation6 + $0x7e8] sm:$0xff]
    %v1022 = vld [vmem:[#allocation6 + $0x7f0] sm:$0xff]
    %v1023 = vld [vmem:[#allocation6 + $0x7f8] sm:$0xf]
    %v1024 = vld [vmem:[#allocation6 + $0x7fc] sm:$0xff]
    %v1025 = vld [vmem:[#allocation6 + $0x804] sm:$0xff]
    %v1026 = vld [vmem:[#allocation6 + $0x80c] sm:$0xff]
    %v1027 = vld [vmem:[#allocation6 + $0x814] sm:$0xf]
    %v1028 = vld [vmem:[#allocation6 + $0x818] sm:$0xff]
    %v1029 = vld [vmem:[#allocation6 + $0x820] sm:$0xff]
    %v1030 = vld [vmem:[#allocation6 + $0x828] sm:$0xff]
    %v1031 = vld [vmem:[#allocation6 + $0x830] sm:$0xf]
    %v1032 = vld [vmem:[#allocation6 + $0x834] sm:$0xff]
    %v1033 = vld [vmem:[#allocation6 + $0x83c] sm:$0xff]
    %v1034 = vld [vmem:[#allocation6 + $0x844] sm:$0xff]
    %v1035 = vld [vmem:[#allocation6 + $0x84c] sm:$0xf]
    %v1036 = vld [vmem:[#allocation6 + $0x850] sm:$0xff]
    %v1037 = vld [vmem:[#allocation6 + $0x858] sm:$0xff]
    %v1038 = vld [vmem:[#allocation6 + $0x860] sm:$0xff]
    %v1039 = vld [vmem:[#allocation6 + $0x868] sm:$0xf]
    %v1040 = vld [vmem:[#allocation6 + $0x86c] sm:$0xff]
    %v1041 = vld [vmem:[#allocation6 + $0x874] sm:$0xff]
    %v1042 = vld [vmem:[#allocation6 + $0x87c] sm:$0xff]
    %v1043 = vld [vmem:[#allocation6 + $0x884] sm:$0xf]
    %v1044 = vld [vmem:[#allocation6 + $0x888] sm:$0xff]
    %v1045 = vld [vmem:[#allocation6 + $0x890] sm:$0xff]
    %v1046 = vld [vmem:[#allocation6 + $0x898] sm:$0xff]
    %v1047 = vld [vmem:[#allocation6 + $0x8a0] sm:$0xf]
    %v1048 = vld [vmem:[#allocation6 + $0x8a4] sm:$0xff]
    %v1049 = vld [vmem:[#allocation6 + $0x8ac] sm:$0xff]
    %v1050 = vld [vmem:[#allocation6 + $0x8b4] sm:$0xff]
    %v1051 = vld [vmem:[#allocation6 + $0x8bc] sm:$0xf]
    %v1052 = vld [vmem:[#allocation6 + $0x8c0] sm:$0xff]
    %v1053 = vld [vmem:[#allocation6 + $0x8c8] sm:$0xff]
    %v1054 = vld [vmem:[#allocation6 + $0x8d0] sm:$0xff]
    %v1055 = vld [vmem:[#allocation6 + $0x8d8] sm:$0xf]
    %v1056 = vld [vmem:[#allocation6 + $0x8dc] sm:$0xff]
    %v1057 = vld [vmem:[#allocation6 + $0x8e4] sm:$0xff]
    %v1058 = vld [vmem:[#allocation6 + $0x8ec] sm:$0xff]
    %v1059 = vld [vmem:[#allocation6 + $0x8f4] sm:$0xf]
    %v1060 = vld [vmem:[#allocation6 + $0x8f8] sm:$0xff]
    %v1061 = vld [vmem:[#allocation6 + $0x900] sm:$0xff]
    %v1062 = vld [vmem:[#allocation6 + $0x908] sm:$0xff]
    %v1063 = vld [vmem:[#allocation6 + $0x910] sm:$0xf]
    %v1064 = vld [vmem:[#allocation6 + $0x914] sm:$0xff]
    %v1065 = vld [vmem:[#allocation6 + $0x91c] sm:$0xff]
    %v1066 = vld [vmem:[#allocation6 + $0x924] sm:$0xff]
    %v1067 = vld [vmem:[#allocation6 + $0x92c] sm:$0xf]
    %v1068 = vld [vmem:[#allocation6 + $0x930] sm:$0xff]
    %v1069 = vld [vmem:[#allocation6 + $0x938] sm:$0xff]
    %v1070 = vld [vmem:[#allocation6 + $0x940] sm:$0xff]
    %v1071 = vld [vmem:[#allocation6 + $0x948] sm:$0xf]
    %v1072 = vld [vmem:[#allocation6 + $0x94c] sm:$0xff]
    %v1073 = vld [vmem:[#allocation6 + $0x954] sm:$0xff]
    %v1074 = vld [vmem:[#allocation6 + $0x95c] sm:$0xff]
    %v1075 = vld [vmem:[#allocation6 + $0x964] sm:$0xf]
    %v1076 = vld [vmem:[#allocation6 + $0x968] sm:$0xff]
    %v1077 = vld [vmem:[#allocation6 + $0x970] sm:$0xff]
    %v1078 = vld [vmem:[#allocation6 + $0x978] sm:$0xff]
    %v1079 = vld [vmem:[#allocation6 + $0x980] sm:$0xf]
    %v1080 = vld [vmem:[#allocation6 + $0x984] sm:$0xff]
    %v1081 = vld [vmem:[#allocation6 + $0x98c] sm:$0xff]
    %v1082 = vld [vmem:[#allocation6 + $0x994] sm:$0xff]
    %v1083 = vld [vmem:[#allocation6 + $0x99c] sm:$0xf]
    %v1084 = vld [vmem:[#allocation6 + $0x9a0] sm:$0xff]
    %v1085 = vld [vmem:[#allocation6 + $0x9a8] sm:$0xff]
    %v1086 = vld [vmem:[#allocation6 + $0x9b0] sm:$0xff]
    %v1087 = vld [vmem:[#allocation6 + $0x9b8] sm:$0xf]
    %v1088 = vld [vmem:[#allocation6 + $0x9bc] sm:$0xff]
    %v1089 = vld [vmem:[#allocation6 + $0x9c4] sm:$0xff]
    %v1090 = vld [vmem:[#allocation6 + $0x9cc] sm:$0xff]
    %v1091 = vld [vmem:[#allocation6 + $0x9d4] sm:$0xf]
    %v1092 = vld [vmem:[#allocation6 + $0x9d8] sm:$0xff]
    %v1093 = vld [vmem:[#allocation6 + $0x9e0] sm:$0xff]
    %v1094 = vld [vmem:[#allocation6 + $0x9e8] sm:$0xff]
    %v1095 = vld [vmem:[#allocation6 + $0x9f0] sm:$0xf]
    %v1096 = vld [vmem:[#allocation6 + $0x9f4] sm:$0xff]
    %v1097 = vld [vmem:[#allocation6 + $0x9fc] sm:$0xff]
    %v1098 = vld [vmem:[#allocation6 + $0xa04] sm:$0xff]
    %v1099 = vld [vmem:[#allocation6 + $0xa0c] sm:$0xf]
    %v1100 = vld [vmem:[#allocation6 + $0xa10] sm:$0xff]
    %v1101 = vld [vmem:[#allocation6 + $0xa18] sm:$0xff]
    %v1102 = vld [vmem:[#allocation6 + $0xa20] sm:$0xff]
    %v1103 = vld [vmem:[#allocation6 + $0xa28] sm:$0xf]
    %v1104 = vld [vmem:[#allocation6 + $0xa2c] sm:$0xff]
    %v1105 = vld [vmem:[#allocation6 + $0xa34] sm:$0xff]
    %v1106 = vld [vmem:[#allocation6 + $0xa3c] sm:$0xff]
    %v1107 = vld [vmem:[#allocation6 + $0xa44] sm:$0xf]
    %v1108 = vld [vmem:[#allocation6 + $0xa48] sm:$0xff]
    %v1109 = vld [vmem:[#allocation6 + $0xa50] sm:$0xff]
    %v1110 = vld [vmem:[#allocation6 + $0xa58] sm:$0xff]
    %v1111 = vld [vmem:[#allocation6 + $0xa60] sm:$0xf]
    %v1112 = vld [vmem:[#allocation6 + $0xa64] sm:$0xff]
    %v1113 = vld [vmem:[#allocation6 + $0xa6c] sm:$0xff]
    %v1114 = vld [vmem:[#allocation6 + $0xa74] sm:$0xff]
    %v1115 = vld [vmem:[#allocation6 + $0xa7c] sm:$0xf]
    %v1116 = vld [vmem:[#allocation6 + $0xa80] sm:$0xff]
    %v1117 = vld [vmem:[#allocation6 + $0xa88] sm:$0xff]
    %v1118 = vld [vmem:[#allocation6 + $0xa90] sm:$0xff]
    %v1119 = vld [vmem:[#allocation6 + $0xa98] sm:$0xf]
    %v1120 = vld [vmem:[#allocation6 + $0xa9c] sm:$0xff]
    %v1121 = vld [vmem:[#allocation6 + $0xaa4] sm:$0xff]
    %v1122 = vld [vmem:[#allocation6 + $0xaac] sm:$0xff]
    %v1123 = vld [vmem:[#allocation6 + $0xab4] sm:$0xf]
    %v1124 = vld [vmem:[#allocation6 + $0xab8] sm:$0xff]
    %v1125 = vld [vmem:[#allocation6 + $0xac0] sm:$0xff]
    %v1126 = vld [vmem:[#allocation6 + $0xac8] sm:$0xff]
    %v1127 = vld [vmem:[#allocation6 + $0xad0] sm:$0xf]
    %v1128 = vld [vmem:[#allocation6 + $0xad4] sm:$0xff]
    %v1129 = vld [vmem:[#allocation6 + $0xadc] sm:$0xff]
    %v1130 = vld [vmem:[#allocation6 + $0xae4] sm:$0xff]
    %v1131 = vld [vmem:[#allocation6 + $0xaec] sm:$0xf]
    %v1132 = vld [vmem:[#allocation6 + $0xaf0] sm:$0xff]
    %v1133 = vld [vmem:[#allocation6 + $0xaf8] sm:$0xff]
    %v1134 = vld [vmem:[#allocation6 + $0xb00] sm:$0xff]
    %v1135 = vld [vmem:[#allocation6 + $0xb08] sm:$0xf]
    %v1136 = vld [vmem:[#allocation6 + $0xb0c] sm:$0xff]
    %v1137 = vld [vmem:[#allocation6 + $0xb14] sm:$0xff]
    %v1138 = vld [vmem:[#allocation6 + $0xb1c] sm:$0xff]
    %v1139 = vld [vmem:[#allocation6 + $0xb24] sm:$0xf]
    %v1140 = vld [vmem:[#allocation6 + $0xb28] sm:$0xff]
    %v1141 = vld [vmem:[#allocation6 + $0xb30] sm:$0xff]
    %v1142 = vld [vmem:[#allocation6 + $0xb38] sm:$0xff]
    %v1143 = vld [vmem:[#allocation6 + $0xb40] sm:$0xf]
    %v1144 = vld [vmem:[#allocation6 + $0xb44] sm:$0xff]
    %v1145 = vld [vmem:[#allocation6 + $0xb4c] sm:$0xff]
    %v1146 = vld [vmem:[#allocation6 + $0xb54] sm:$0xff]
    %v1147 = vld [vmem:[#allocation6 + $0xb5c] sm:$0xf]
    %v1148 = vld [vmem:[#allocation6 + $0xb60] sm:$0xff]
    %v1149 = vld [vmem:[#allocation6 + $0xb68] sm:$0xff]
    %v1150 = vld [vmem:[#allocation6 + $0xb70] sm:$0xff]
    %v1151 = vld [vmem:[#allocation6 + $0xb78] sm:$0xf]
    %v1152 = vld [vmem:[#allocation6 + $0xb7c] sm:$0xff]
    %v1153 = vld [vmem:[#allocation6 + $0xb84] sm:$0xff]
    %v1154 = vld [vmem:[#allocation6 + $0xb8c] sm:$0xff]
    %v1155 = vld [vmem:[#allocation6 + $0xb94] sm:$0xf]
    %v1156 = vld [vmem:[#allocation6 + $0xb98] sm:$0xff]
    %v1157 = vld [vmem:[#allocation6 + $0xba0] sm:$0xff]
    %v1158 = vld [vmem:[#allocation6 + $0xba8] sm:$0xff]
    %v1159 = vld [vmem:[#allocation6 + $0xbb0] sm:$0xf]
    %v1160 = vld [vmem:[#allocation6 + $0xbb4] sm:$0xff]
    %v1161 = vld [vmem:[#allocation6 + $0xbbc] sm:$0xff]
    %v1162 = vld [vmem:[#allocation6 + $0xbc4] sm:$0xff]
    %v1163 = vld [vmem:[#allocation6 + $0xbcc] sm:$0xf]
    %v1164 = vld [vmem:[#allocation6 + $0xbd0] sm:$0xff]
    %v1165 = vld [vmem:[#allocation6 + $0xbd8] sm:$0xff]
    %v1166 = vld [vmem:[#allocation6 + $0xbe0] sm:$0xff]
    %v1167 = vld [vmem:[#allocation6 + $0xbe8] sm:$0xf]
    %v1168 = vld [vmem:[#allocation6 + $0xbec] sm:$0xff]
    %v1169 = vld [vmem:[#allocation6 + $0xbf4] sm:$0xff]
    %v1170 = vld [vmem:[#allocation6 + $0xbfc] sm:$0xff]
    %v1171 = vld [vmem:[#allocation6 + $0xc04] sm:$0xf]
    %v1172 = vld [vmem:[#allocation6 + $0xc08] sm:$0xff]
    %v1173 = vld [vmem:[#allocation6 + $0xc10] sm:$0xff]
    %v1174 = vld [vmem:[#allocation6 + $0xc18] sm:$0xff]
    %v1175 = vld [vmem:[#allocation6 + $0xc20] sm:$0xf]
    %v1176 = vld [vmem:[#allocation6 + $0xc24] sm:$0xff]
    %v1177 = vld [vmem:[#allocation6 + $0xc2c] sm:$0xff]
    %v1178 = vld [vmem:[#allocation6 + $0xc34] sm:$0xff]
    %v1179 = vld [vmem:[#allocation6 + $0xc3c] sm:$0xf]
    %v1180 = vld [vmem:[#allocation7] sm:$0xff]
    %v1182 = vlaneseq
    %v1183 = vshrl.u32 %v1182, 7
    %v1184 = vsub.s32 0, %v1183
    %v1185 = vrot.slane %v1180, %v1184
    %v1186 = vlaneseq
    %v1187 = vshrl.u32 %v1186, 7
    %v1188 = vsub.s32 1, %v1187
    %v1189 = vrot.slane %v1180, %v1188
    %v1190 = vlaneseq
    %v1191 = vshrl.u32 %v1190, 7
    %v1192 = vsub.s32 2, %v1191
    %v1193 = vrot.slane %v1180, %v1192
    %v1194 = vlaneseq
    %v1195 = vshrl.u32 %v1194, 7
    %v1196 = vsub.s32 3, %v1195
    %v1197 = vrot.slane %v1180, %v1196
    %v1198 = vlaneseq
    %v1199 = vshrl.u32 %v1198, 7
    %v1200 = vsub.s32 4, %v1199
    %v1201 = vrot.slane %v1180, %v1200
    %v1202 = vlaneseq
    %v1203 = vshrl.u32 %v1202, 7
    %v1204 = vsub.s32 5, %v1203
    %v1205 = vrot.slane %v1180, %v1204
    %v1206 = vlaneseq
    %v1207 = vshrl.u32 %v1206, 7
    %v1208 = vsub.s32 6, %v1207
    %v1209 = vrot.slane %v1180, %v1208
    %v1665 = vunpack.c.l.b16 %v732
    %v1666 = vunpack.c.h.b16 %v732
    %v1667 = vunpack.c.l.b16 %v733
    %v1668 = vunpack.c.h.b16 %v733
    %v1669 = vunpack.c.l.b16 %v734
    %v1670 = vunpack.c.h.b16 %v734
    %v1671 = vunpack.c.l.b16 %v735
    %v1672 = vunpack.c.l.b16 %v736
    %v1673 = vunpack.c.h.b16 %v736
    %v1674 = vunpack.c.l.b16 %v737
    %v1675 = vunpack.c.h.b16 %v737
    %v1676 = vunpack.c.l.b16 %v738
    %v1677 = vunpack.c.h.b16 %v738
    %v1678 = vunpack.c.l.b16 %v739
    %v1679 = vunpack.c.l.b16 %v740
    %v1680 = vunpack.c.h.b16 %v740
    %v1681 = vunpack.c.l.b16 %v741
    %v1682 = vunpack.c.h.b16 %v741
    %v1683 = vunpack.c.l.b16 %v742
    %v1684 = vunpack.c.h.b16 %v742
    %v1685 = vunpack.c.l.b16 %v743
    %v1686 = vunpack.c.l.b16 %v744
    %v1687 = vunpack.c.h.b16 %v744
    %v1688 = vunpack.c.l.b16 %v745
    %v1689 = vunpack.c.h.b16 %v745
    %v1690 = vunpack.c.l.b16 %v746
    %v1691 = vunpack.c.h.b16 %v746
    %v1692 = vunpack.c.l.b16 %v747
    %v1693 = vunpack.c.l.b16 %v748
    %v1694 = vunpack.c.h.b16 %v748
    %v1695 = vunpack.c.l.b16 %v749
    %v1696 = vunpack.c.h.b16 %v749
    %v1697 = vunpack.c.l.b16 %v750
    %v1698 = vunpack.c.h.b16 %v750
    %v1699 = vunpack.c.l.b16 %v751
    %v1700 = vunpack.c.l.b16 %v752
    %v1701 = vunpack.c.h.b16 %v752
    %v1702 = vunpack.c.l.b16 %v753
    %v1703 = vunpack.c.h.b16 %v753
    %v1704 = vunpack.c.l.b16 %v754
    %v1705 = vunpack.c.h.b16 %v754
    %v1706 = vunpack.c.l.b16 %v755
    %v1707 = vunpack.c.l.b16 %v756
    %v1708 = vunpack.c.h.b16 %v756
    %v1709 = vunpack.c.l.b16 %v757
    %v1710 = vunpack.c.h.b16 %v757
    %v1711 = vunpack.c.l.b16 %v758
    %v1712 = vunpack.c.h.b16 %v758
    %v1713 = vunpack.c.l.b16 %v759
    %v1714 = vunpack.c.l.b16 %v760
    %v1715 = vunpack.c.h.b16 %v760
    %v1716 = vunpack.c.l.b16 %v761
    %v1717 = vunpack.c.h.b16 %v761
    %v1718 = vunpack.c.l.b16 %v762
    %v1719 = vunpack.c.h.b16 %v762
    %v1720 = vunpack.c.l.b16 %v763
    %v1721 = vunpack.c.l.b16 %v764
    %v1722 = vunpack.c.h.b16 %v764
    %v1723 = vunpack.c.l.b16 %v765
    %v1724 = vunpack.c.h.b16 %v765
    %v1725 = vunpack.c.l.b16 %v766
    %v1726 = vunpack.c.h.b16 %v766
    %v1727 = vunpack.c.l.b16 %v767
    %v1728 = vunpack.c.l.b16 %v768
    %v1729 = vunpack.c.h.b16 %v768
    %v1730 = vunpack.c.l.b16 %v769
    %v1731 = vunpack.c.h.b16 %v769
    %v1732 = vunpack.c.l.b16 %v770
    %v1733 = vunpack.c.h.b16 %v770
    %v1734 = vunpack.c.l.b16 %v771
    %v1735 = vunpack.c.l.b16 %v772
    %v1736 = vunpack.c.h.b16 %v772
    %v1737 = vunpack.c.l.b16 %v773
    %v1738 = vunpack.c.h.b16 %v773
    %v1739 = vunpack.c.l.b16 %v774
    %v1740 = vunpack.c.h.b16 %v774
    %v1741 = vunpack.c.l.b16 %v775
    %v1742 = vunpack.c.l.b16 %v776
    %v1743 = vunpack.c.h.b16 %v776
    %v1744 = vunpack.c.l.b16 %v777
    %v1745 = vunpack.c.h.b16 %v777
    %v1746 = vunpack.c.l.b16 %v778
    %v1747 = vunpack.c.h.b16 %v778
    %v1748 = vunpack.c.l.b16 %v779
    %v1749 = vunpack.c.l.b16 %v780
    %v1750 = vunpack.c.h.b16 %v780
    %v1751 = vunpack.c.l.b16 %v781
    %v1752 = vunpack.c.h.b16 %v781
    %v1753 = vunpack.c.l.b16 %v782
    %v1754 = vunpack.c.h.b16 %v782
    %v1755 = vunpack.c.l.b16 %v783
    %v1756 = vunpack.c.l.b16 %v784
    %v1757 = vunpack.c.h.b16 %v784
    %v1758 = vunpack.c.l.b16 %v785
    %v1759 = vunpack.c.h.b16 %v785
    %v1760 = vunpack.c.l.b16 %v786
    %v1761 = vunpack.c.h.b16 %v786
    %v1762 = vunpack.c.l.b16 %v787
    %v1763 = vunpack.c.l.b16 %v788
    %v1764 = vunpack.c.h.b16 %v788
    %v1765 = vunpack.c.l.b16 %v789
    %v1766 = vunpack.c.h.b16 %v789
    %v1767 = vunpack.c.l.b16 %v790
    %v1768 = vunpack.c.h.b16 %v790
    %v1769 = vunpack.c.l.b16 %v791
    %v1770 = vunpack.c.l.b16 %v792
    %v1771 = vunpack.c.h.b16 %v792
    %v1772 = vunpack.c.l.b16 %v793
    %v1773 = vunpack.c.h.b16 %v793
    %v1774 = vunpack.c.l.b16 %v794
    %v1775 = vunpack.c.h.b16 %v794
    %v1776 = vunpack.c.l.b16 %v795
    %v1777 = vunpack.c.l.b16 %v796
    %v1778 = vunpack.c.h.b16 %v796
    %v1779 = vunpack.c.l.b16 %v797
    %v1780 = vunpack.c.h.b16 %v797
    %v1781 = vunpack.c.l.b16 %v798
    %v1782 = vunpack.c.h.b16 %v798
    %v1783 = vunpack.c.l.b16 %v799
    %v1784 = vunpack.c.l.b16 %v800
    %v1785 = vunpack.c.h.b16 %v800
    %v1786 = vunpack.c.l.b16 %v801
    %v1787 = vunpack.c.h.b16 %v801
    %v1788 = vunpack.c.l.b16 %v802
    %v1789 = vunpack.c.h.b16 %v802
    %v1790 = vunpack.c.l.b16 %v803
    %v1791 = vunpack.c.l.b16 %v804
    %v1792 = vunpack.c.h.b16 %v804
    %v1793 = vunpack.c.l.b16 %v805
    %v1794 = vunpack.c.h.b16 %v805
    %v1795 = vunpack.c.l.b16 %v806
    %v1796 = vunpack.c.h.b16 %v806
    %v1797 = vunpack.c.l.b16 %v807
    %v1798 = vunpack.c.l.b16 %v808
    %v1799 = vunpack.c.h.b16 %v808
    %v1800 = vunpack.c.l.b16 %v809
    %v1801 = vunpack.c.h.b16 %v809
    %v1802 = vunpack.c.l.b16 %v810
    %v1803 = vunpack.c.h.b16 %v810
    %v1804 = vunpack.c.l.b16 %v811
    %v1805 = vunpack.c.l.b16 %v812
    %v1806 = vunpack.c.h.b16 %v812
    %v1807 = vunpack.c.l.b16 %v813
    %v1808 = vunpack.c.h.b16 %v813
    %v1809 = vunpack.c.l.b16 %v814
    %v1810 = vunpack.c.h.b16 %v814
    %v1811 = vunpack.c.l.b16 %v815
    %v1812 = vunpack.c.l.b16 %v816
    %v1813 = vunpack.c.h.b16 %v816
    %v1814 = vunpack.c.l.b16 %v817
    %v1815 = vunpack.c.h.b16 %v817
    %v1816 = vunpack.c.l.b16 %v818
    %v1817 = vunpack.c.h.b16 %v818
    %v1818 = vunpack.c.l.b16 %v819
    %v1819 = vunpack.c.l.b16 %v820
    %v1820 = vunpack.c.h.b16 %v820
    %v1821 = vunpack.c.l.b16 %v821
    %v1822 = vunpack.c.h.b16 %v821
    %v1823 = vunpack.c.l.b16 %v822
    %v1824 = vunpack.c.h.b16 %v822
    %v1825 = vunpack.c.l.b16 %v823
    %v1826 = vunpack.c.l.b16 %v824
    %v1827 = vunpack.c.h.b16 %v824
    %v1828 = vunpack.c.l.b16 %v825
    %v1829 = vunpack.c.h.b16 %v825
    %v1830 = vunpack.c.l.b16 %v826
    %v1831 = vunpack.c.h.b16 %v826
    %v1832 = vunpack.c.l.b16 %v827
    %v1833 = vunpack.c.l.b16 %v828
    %v1834 = vunpack.c.h.b16 %v828
    %v1835 = vunpack.c.l.b16 %v829
    %v1836 = vunpack.c.h.b16 %v829
    %v1837 = vunpack.c.l.b16 %v830
    %v1838 = vunpack.c.h.b16 %v830
    %v1839 = vunpack.c.l.b16 %v831
    %v1840 = vunpack.c.l.b16 %v832
    %v1841 = vunpack.c.h.b16 %v832
    %v1842 = vunpack.c.l.b16 %v833
    %v1843 = vunpack.c.h.b16 %v833
    %v1844 = vunpack.c.l.b16 %v834
    %v1845 = vunpack.c.h.b16 %v834
    %v1846 = vunpack.c.l.b16 %v835
    %v1847 = vunpack.c.l.b16 %v836
    %v1848 = vunpack.c.h.b16 %v836
    %v1849 = vunpack.c.l.b16 %v837
    %v1850 = vunpack.c.h.b16 %v837
    %v1851 = vunpack.c.l.b16 %v838
    %v1852 = vunpack.c.h.b16 %v838
    %v1853 = vunpack.c.l.b16 %v839
    %v1854 = vunpack.c.l.b16 %v840
    %v1855 = vunpack.c.h.b16 %v840
    %v1856 = vunpack.c.l.b16 %v841
    %v1857 = vunpack.c.h.b16 %v841
    %v1858 = vunpack.c.l.b16 %v842
    %v1859 = vunpack.c.h.b16 %v842
    %v1860 = vunpack.c.l.b16 %v843
    %v1861 = vunpack.c.l.b16 %v844
    %v1862 = vunpack.c.h.b16 %v844
    %v1863 = vunpack.c.l.b16 %v845
    %v1864 = vunpack.c.h.b16 %v845
    %v1865 = vunpack.c.l.b16 %v846
    %v1866 = vunpack.c.h.b16 %v846
    %v1867 = vunpack.c.l.b16 %v847
    %v1868 = vunpack.c.l.b16 %v848
    %v1869 = vunpack.c.h.b16 %v848
    %v1870 = vunpack.c.l.b16 %v849
    %v1871 = vunpack.c.h.b16 %v849
    %v1872 = vunpack.c.l.b16 %v850
    %v1873 = vunpack.c.h.b16 %v850
    %v1874 = vunpack.c.l.b16 %v851
    %v1875 = vunpack.c.l.b16 %v852
    %v1876 = vunpack.c.h.b16 %v852
    %v1877 = vunpack.c.l.b16 %v853
    %v1878 = vunpack.c.h.b16 %v853
    %v1879 = vunpack.c.l.b16 %v854
    %v1880 = vunpack.c.h.b16 %v854
    %v1881 = vunpack.c.l.b16 %v855
    %v1882 = vunpack.c.l.b16 %v856
    %v1883 = vunpack.c.h.b16 %v856
    %v1884 = vunpack.c.l.b16 %v857
    %v1885 = vunpack.c.h.b16 %v857
    %v1886 = vunpack.c.l.b16 %v858
    %v1887 = vunpack.c.h.b16 %v858
    %v1888 = vunpack.c.l.b16 %v859
    %v1889 = vunpack.c.l.b16 %v860
    %v1890 = vunpack.c.h.b16 %v860
    %v1891 = vunpack.c.l.b16 %v861
    %v1892 = vunpack.c.h.b16 %v861
    %v1893 = vunpack.c.l.b16 %v862
    %v1894 = vunpack.c.h.b16 %v862
    %v1895 = vunpack.c.l.b16 %v863
    %v1896 = vunpack.c.l.b16 %v864
    %v1897 = vunpack.c.h.b16 %v864
    %v1898 = vunpack.c.l.b16 %v865
    %v1899 = vunpack.c.h.b16 %v865
    %v1900 = vunpack.c.l.b16 %v866
    %v1901 = vunpack.c.h.b16 %v866
    %v1902 = vunpack.c.l.b16 %v867
    %v1903 = vunpack.c.l.b16 %v868
    %v1904 = vunpack.c.h.b16 %v868
    %v1905 = vunpack.c.l.b16 %v869
    %v1906 = vunpack.c.h.b16 %v869
    %v1907 = vunpack.c.l.b16 %v870
    %v1908 = vunpack.c.h.b16 %v870
    %v1909 = vunpack.c.l.b16 %v871
    %v1910 = vunpack.c.l.b16 %v872
    %v1911 = vunpack.c.h.b16 %v872
    %v1912 = vunpack.c.l.b16 %v873
    %v1913 = vunpack.c.h.b16 %v873
    %v1914 = vunpack.c.l.b16 %v874
    %v1915 = vunpack.c.h.b16 %v874
    %v1916 = vunpack.c.l.b16 %v875
    %v1917 = vunpack.c.l.b16 %v876
    %v1918 = vunpack.c.h.b16 %v876
    %v1919 = vunpack.c.l.b16 %v877
    %v1920 = vunpack.c.h.b16 %v877
    %v1921 = vunpack.c.l.b16 %v878
    %v1922 = vunpack.c.h.b16 %v878
    %v1923 = vunpack.c.l.b16 %v879
    %v1924 = vunpack.c.l.b16 %v880
    %v1925 = vunpack.c.h.b16 %v880
    %v1926 = vunpack.c.l.b16 %v881
    %v1927 = vunpack.c.h.b16 %v881
    %v1928 = vunpack.c.l.b16 %v882
    %v1929 = vunpack.c.h.b16 %v882
    %v1930 = vunpack.c.l.b16 %v883
    %v1931 = vunpack.c.l.b16 %v884
    %v1932 = vunpack.c.h.b16 %v884
    %v1933 = vunpack.c.l.b16 %v885
    %v1934 = vunpack.c.h.b16 %v885
    %v1935 = vunpack.c.l.b16 %v886
    %v1936 = vunpack.c.h.b16 %v886
    %v1937 = vunpack.c.l.b16 %v887
    %v1938 = vunpack.c.l.b16 %v888
    %v1939 = vunpack.c.h.b16 %v888
    %v1940 = vunpack.c.l.b16 %v889
    %v1941 = vunpack.c.h.b16 %v889
    %v1942 = vunpack.c.l.b16 %v890
    %v1943 = vunpack.c.h.b16 %v890
    %v1944 = vunpack.c.l.b16 %v891
    %v1945 = vunpack.c.l.b16 %v892
    %v1946 = vunpack.c.h.b16 %v892
    %v1947 = vunpack.c.l.b16 %v893
    %v1948 = vunpack.c.h.b16 %v893
    %v1949 = vunpack.c.l.b16 %v894
    %v1950 = vunpack.c.h.b16 %v894
    %v1951 = vunpack.c.l.b16 %v895
    %v1952 = vunpack.c.l.b16 %v896
    %v1953 = vunpack.c.h.b16 %v896
    %v1954 = vunpack.c.l.b16 %v897
    %v1955 = vunpack.c.h.b16 %v897
    %v1956 = vunpack.c.l.b16 %v898
    %v1957 = vunpack.c.h.b16 %v898
    %v1958 = vunpack.c.l.b16 %v899
    %v1959 = vunpack.c.l.b16 %v900
    %v1960 = vunpack.c.h.b16 %v900
    %v1961 = vunpack.c.l.b16 %v901
    %v1962 = vunpack.c.h.b16 %v901
    %v1963 = vunpack.c.l.b16 %v902
    %v1964 = vunpack.c.h.b16 %v902
    %v1965 = vunpack.c.l.b16 %v903
    %v1966 = vunpack.c.l.b16 %v904
    %v1967 = vunpack.c.h.b16 %v904
    %v1968 = vunpack.c.l.b16 %v905
    %v1969 = vunpack.c.h.b16 %v905
    %v1970 = vunpack.c.l.b16 %v906
    %v1971 = vunpack.c.h.b16 %v906
    %v1972 = vunpack.c.l.b16 %v907
    %v1973 = vunpack.c.l.b16 %v908
    %v1974 = vunpack.c.h.b16 %v908
    %v1975 = vunpack.c.l.b16 %v909
    %v1976 = vunpack.c.h.b16 %v909
    %v1977 = vunpack.c.l.b16 %v910
    %v1978 = vunpack.c.h.b16 %v910
    %v1979 = vunpack.c.l.b16 %v911
    %v1980 = vunpack.c.l.b16 %v912
    %v1981 = vunpack.c.h.b16 %v912
    %v1982 = vunpack.c.l.b16 %v913
    %v1983 = vunpack.c.h.b16 %v913
    %v1984 = vunpack.c.l.b16 %v914
    %v1985 = vunpack.c.h.b16 %v914
    %v1986 = vunpack.c.l.b16 %v915
    %v1987 = vunpack.c.l.b16 %v916
    %v1988 = vunpack.c.h.b16 %v916
    %v1989 = vunpack.c.l.b16 %v917
    %v1990 = vunpack.c.h.b16 %v917
    %v1991 = vunpack.c.l.b16 %v918
    %v1992 = vunpack.c.h.b16 %v918
    %v1993 = vunpack.c.l.b16 %v919
    %v1994 = vunpack.c.l.b16 %v920
    %v1995 = vunpack.c.h.b16 %v920
    %v1996 = vunpack.c.l.b16 %v921
    %v1997 = vunpack.c.h.b16 %v921
    %v1998 = vunpack.c.l.b16 %v922
    %v1999 = vunpack.c.h.b16 %v922
    %v2000 = vunpack.c.l.b16 %v923
    %v2001 = vunpack.c.l.b16 %v924
    %v2002 = vunpack.c.h.b16 %v924
    %v2003 = vunpack.c.l.b16 %v925
    %v2004 = vunpack.c.h.b16 %v925
    %v2005 = vunpack.c.l.b16 %v926
    %v2006 = vunpack.c.h.b16 %v926
    %v2007 = vunpack.c.l.b16 %v927
    %v2008 = vunpack.c.l.b16 %v928
    %v2009 = vunpack.c.h.b16 %v928
    %v2010 = vunpack.c.l.b16 %v929
    %v2011 = vunpack.c.h.b16 %v929
    %v2012 = vunpack.c.l.b16 %v930
    %v2013 = vunpack.c.h.b16 %v930
    %v2014 = vunpack.c.l.b16 %v931
    %v2015 = vunpack.c.l.b16 %v932
    %v2016 = vunpack.c.h.b16 %v932
    %v2017 = vunpack.c.l.b16 %v933
    %v2018 = vunpack.c.h.b16 %v933
    %v2019 = vunpack.c.l.b16 %v934
    %v2020 = vunpack.c.h.b16 %v934
    %v2021 = vunpack.c.l.b16 %v935
    %v2022 = vunpack.c.l.b16 %v936
    %v2023 = vunpack.c.h.b16 %v936
    %v2024 = vunpack.c.l.b16 %v937
    %v2025 = vunpack.c.h.b16 %v937
    %v2026 = vunpack.c.l.b16 %v938
    %v2027 = vunpack.c.h.b16 %v938
    %v2028 = vunpack.c.l.b16 %v939
    %v2029 = vunpack.c.l.b16 %v940
    %v2030 = vunpack.c.h.b16 %v940
    %v2031 = vunpack.c.l.b16 %v941
    %v2032 = vunpack.c.h.b16 %v941
    %v2033 = vunpack.c.l.b16 %v942
    %v2034 = vunpack.c.h.b16 %v942
    %v2035 = vunpack.c.l.b16 %v943
    %v2036 = vunpack.c.l.b16 %v944
    %v2037 = vunpack.c.h.b16 %v944
    %v2038 = vunpack.c.l.b16 %v945
    %v2039 = vunpack.c.h.b16 %v945
    %v2040 = vunpack.c.l.b16 %v946
    %v2041 = vunpack.c.h.b16 %v946
    %v2042 = vunpack.c.l.b16 %v947
    %v2043 = vunpack.c.l.b16 %v948
    %v2044 = vunpack.c.h.b16 %v948
    %v2045 = vunpack.c.l.b16 %v949
    %v2046 = vunpack.c.h.b16 %v949
    %v2047 = vunpack.c.l.b16 %v950
    %v2048 = vunpack.c.h.b16 %v950
    %v2049 = vunpack.c.l.b16 %v951
    %v2050 = vunpack.c.l.b16 %v952
    %v2051 = vunpack.c.h.b16 %v952
    %v2052 = vunpack.c.l.b16 %v953
    %v2053 = vunpack.c.h.b16 %v953
    %v2054 = vunpack.c.l.b16 %v954
    %v2055 = vunpack.c.h.b16 %v954
    %v2056 = vunpack.c.l.b16 %v955
    %v2057 = vunpack.c.l.b16 %v956
    %v2058 = vunpack.c.h.b16 %v956
    %v2059 = vunpack.c.l.b16 %v957
    %v2060 = vunpack.c.h.b16 %v957
    %v2061 = vunpack.c.l.b16 %v958
    %v2062 = vunpack.c.h.b16 %v958
    %v2063 = vunpack.c.l.b16 %v959
    %v2064 = vunpack.c.l.b16 %v960
    %v2065 = vunpack.c.h.b16 %v960
    %v2066 = vunpack.c.l.b16 %v961
    %v2067 = vunpack.c.h.b16 %v961
    %v2068 = vunpack.c.l.b16 %v962
    %v2069 = vunpack.c.h.b16 %v962
    %v2070 = vunpack.c.l.b16 %v963
    %v2071 = vunpack.c.l.b16 %v964
    %v2072 = vunpack.c.h.b16 %v964
    %v2073 = vunpack.c.l.b16 %v965
    %v2074 = vunpack.c.h.b16 %v965
    %v2075 = vunpack.c.l.b16 %v966
    %v2076 = vunpack.c.h.b16 %v966
    %v2077 = vunpack.c.l.b16 %v967
    %v2078 = vunpack.c.l.b16 %v968
    %v2079 = vunpack.c.h.b16 %v968
    %v2080 = vunpack.c.l.b16 %v969
    %v2081 = vunpack.c.h.b16 %v969
    %v2082 = vunpack.c.l.b16 %v970
    %v2083 = vunpack.c.h.b16 %v970
    %v2084 = vunpack.c.l.b16 %v971
    %v2085 = vunpack.c.l.b16 %v972
    %v2086 = vunpack.c.h.b16 %v972
    %v2087 = vunpack.c.l.b16 %v973
    %v2088 = vunpack.c.h.b16 %v973
    %v2089 = vunpack.c.l.b16 %v974
    %v2090 = vunpack.c.h.b16 %v974
    %v2091 = vunpack.c.l.b16 %v975
    %v2092 = vunpack.c.l.b16 %v976
    %v2093 = vunpack.c.h.b16 %v976
    %v2094 = vunpack.c.l.b16 %v977
    %v2095 = vunpack.c.h.b16 %v977
    %v2096 = vunpack.c.l.b16 %v978
    %v2097 = vunpack.c.h.b16 %v978
    %v2098 = vunpack.c.l.b16 %v979
    %v2099 = vunpack.c.l.b16 %v980
    %v2100 = vunpack.c.h.b16 %v980
    %v2101 = vunpack.c.l.b16 %v981
    %v2102 = vunpack.c.h.b16 %v981
    %v2103 = vunpack.c.l.b16 %v982
    %v2104 = vunpack.c.h.b16 %v982
    %v2105 = vunpack.c.l.b16 %v983
    %v2106 = vunpack.c.l.b16 %v984
    %v2107 = vunpack.c.h.b16 %v984
    %v2108 = vunpack.c.l.b16 %v985
    %v2109 = vunpack.c.h.b16 %v985
    %v2110 = vunpack.c.l.b16 %v986
    %v2111 = vunpack.c.h.b16 %v986
    %v2112 = vunpack.c.l.b16 %v987
    %v2113 = vunpack.c.l.b16 %v988
    %v2114 = vunpack.c.h.b16 %v988
    %v2115 = vunpack.c.l.b16 %v989
    %v2116 = vunpack.c.h.b16 %v989
    %v2117 = vunpack.c.l.b16 %v990
    %v2118 = vunpack.c.h.b16 %v990
    %v2119 = vunpack.c.l.b16 %v991
    %v2120 = vunpack.c.l.b16 %v992
    %v2121 = vunpack.c.h.b16 %v992
    %v2122 = vunpack.c.l.b16 %v993
    %v2123 = vunpack.c.h.b16 %v993
    %v2124 = vunpack.c.l.b16 %v994
    %v2125 = vunpack.c.h.b16 %v994
    %v2126 = vunpack.c.l.b16 %v995
    %v2127 = vunpack.c.l.b16 %v996
    %v2128 = vunpack.c.h.b16 %v996
    %v2129 = vunpack.c.l.b16 %v997
    %v2130 = vunpack.c.h.b16 %v997
    %v2131 = vunpack.c.l.b16 %v998
    %v2132 = vunpack.c.h.b16 %v998
    %v2133 = vunpack.c.l.b16 %v999
    %v2134 = vunpack.c.l.b16 %v1000
    %v2135 = vunpack.c.h.b16 %v1000
    %v2136 = vunpack.c.l.b16 %v1001
    %v2137 = vunpack.c.h.b16 %v1001
    %v2138 = vunpack.c.l.b16 %v1002
    %v2139 = vunpack.c.h.b16 %v1002
    %v2140 = vunpack.c.l.b16 %v1003
    %v2141 = vunpack.c.l.b16 %v1004
    %v2142 = vunpack.c.h.b16 %v1004
    %v2143 = vunpack.c.l.b16 %v1005
    %v2144 = vunpack.c.h.b16 %v1005
    %v2145 = vunpack.c.l.b16 %v1006
    %v2146 = vunpack.c.h.b16 %v1006
    %v2147 = vunpack.c.l.b16 %v1007
    %v2148 = vunpack.c.l.b16 %v1008
    %v2149 = vunpack.c.h.b16 %v1008
    %v2150 = vunpack.c.l.b16 %v1009
    %v2151 = vunpack.c.h.b16 %v1009
    %v2152 = vunpack.c.l.b16 %v1010
    %v2153 = vunpack.c.h.b16 %v1010
    %v2154 = vunpack.c.l.b16 %v1011
    %v2155 = vunpack.c.l.b16 %v1012
    %v2156 = vunpack.c.h.b16 %v1012
    %v2157 = vunpack.c.l.b16 %v1013
    %v2158 = vunpack.c.h.b16 %v1013
    %v2159 = vunpack.c.l.b16 %v1014
    %v2160 = vunpack.c.h.b16 %v1014
    %v2161 = vunpack.c.l.b16 %v1015
    %v2162 = vunpack.c.l.b16 %v1016
    %v2163 = vunpack.c.h.b16 %v1016
    %v2164 = vunpack.c.l.b16 %v1017
    %v2165 = vunpack.c.h.b16 %v1017
    %v2166 = vunpack.c.l.b16 %v1018
    %v2167 = vunpack.c.h.b16 %v1018
    %v2168 = vunpack.c.l.b16 %v1019
    %v2169 = vunpack.c.l.b16 %v1020
    %v2170 = vunpack.c.h.b16 %v1020
    %v2171 = vunpack.c.l.b16 %v1021
    %v2172 = vunpack.c.h.b16 %v1021
    %v2173 = vunpack.c.l.b16 %v1022
    %v2174 = vunpack.c.h.b16 %v1022
    %v2175 = vunpack.c.l.b16 %v1023
    %v2176 = vunpack.c.l.b16 %v1024
    %v2177 = vunpack.c.h.b16 %v1024
    %v2178 = vunpack.c.l.b16 %v1025
    %v2179 = vunpack.c.h.b16 %v1025
    %v2180 = vunpack.c.l.b16 %v1026
    %v2181 = vunpack.c.h.b16 %v1026
    %v2182 = vunpack.c.l.b16 %v1027
    %v2183 = vunpack.c.l.b16 %v1028
    %v2184 = vunpack.c.h.b16 %v1028
    %v2185 = vunpack.c.l.b16 %v1029
    %v2186 = vunpack.c.h.b16 %v1029
    %v2187 = vunpack.c.l.b16 %v1030
    %v2188 = vunpack.c.h.b16 %v1030
    %v2189 = vunpack.c.l.b16 %v1031
    %v2190 = vunpack.c.l.b16 %v1032
    %v2191 = vunpack.c.h.b16 %v1032
    %v2192 = vunpack.c.l.b16 %v1033
    %v2193 = vunpack.c.h.b16 %v1033
    %v2194 = vunpack.c.l.b16 %v1034
    %v2195 = vunpack.c.h.b16 %v1034
    %v2196 = vunpack.c.l.b16 %v1035
    %v2197 = vunpack.c.l.b16 %v1036
    %v2198 = vunpack.c.h.b16 %v1036
    %v2199 = vunpack.c.l.b16 %v1037
    %v2200 = vunpack.c.h.b16 %v1037
    %v2201 = vunpack.c.l.b16 %v1038
    %v2202 = vunpack.c.h.b16 %v1038
    %v2203 = vunpack.c.l.b16 %v1039
    %v2204 = vunpack.c.l.b16 %v1040
    %v2205 = vunpack.c.h.b16 %v1040
    %v2206 = vunpack.c.l.b16 %v1041
    %v2207 = vunpack.c.h.b16 %v1041
    %v2208 = vunpack.c.l.b16 %v1042
    %v2209 = vunpack.c.h.b16 %v1042
    %v2210 = vunpack.c.l.b16 %v1043
    %v2211 = vunpack.c.l.b16 %v1044
    %v2212 = vunpack.c.h.b16 %v1044
    %v2213 = vunpack.c.l.b16 %v1045
    %v2214 = vunpack.c.h.b16 %v1045
    %v2215 = vunpack.c.l.b16 %v1046
    %v2216 = vunpack.c.h.b16 %v1046
    %v2217 = vunpack.c.l.b16 %v1047
    %v2218 = vunpack.c.l.b16 %v1048
    %v2219 = vunpack.c.h.b16 %v1048
    %v2220 = vunpack.c.l.b16 %v1049
    %v2221 = vunpack.c.h.b16 %v1049
    %v2222 = vunpack.c.l.b16 %v1050
    %v2223 = vunpack.c.h.b16 %v1050
    %v2224 = vunpack.c.l.b16 %v1051
    %v2225 = vunpack.c.l.b16 %v1052
    %v2226 = vunpack.c.h.b16 %v1052
    %v2227 = vunpack.c.l.b16 %v1053
    %v2228 = vunpack.c.h.b16 %v1053
    %v2229 = vunpack.c.l.b16 %v1054
    %v2230 = vunpack.c.h.b16 %v1054
    %v2231 = vunpack.c.l.b16 %v1055
    %v2232 = vunpack.c.l.b16 %v1056
    %v2233 = vunpack.c.h.b16 %v1056
    %v2234 = vunpack.c.l.b16 %v1057
    %v2235 = vunpack.c.h.b16 %v1057
    %v2236 = vunpack.c.l.b16 %v1058
    %v2237 = vunpack.c.h.b16 %v1058
    %v2238 = vunpack.c.l.b16 %v1059
    %v2239 = vunpack.c.l.b16 %v1060
    %v2240 = vunpack.c.h.b16 %v1060
    %v2241 = vunpack.c.l.b16 %v1061
    %v2242 = vunpack.c.h.b16 %v1061
    %v2243 = vunpack.c.l.b16 %v1062
    %v2244 = vunpack.c.h.b16 %v1062
    %v2245 = vunpack.c.l.b16 %v1063
    %v2246 = vunpack.c.l.b16 %v1064
    %v2247 = vunpack.c.h.b16 %v1064
    %v2248 = vunpack.c.l.b16 %v1065
    %v2249 = vunpack.c.h.b16 %v1065
    %v2250 = vunpack.c.l.b16 %v1066
    %v2251 = vunpack.c.h.b16 %v1066
    %v2252 = vunpack.c.l.b16 %v1067
    %v2253 = vunpack.c.l.b16 %v1068
    %v2254 = vunpack.c.h.b16 %v1068
    %v2255 = vunpack.c.l.b16 %v1069
    %v2256 = vunpack.c.h.b16 %v1069
    %v2257 = vunpack.c.l.b16 %v1070
    %v2258 = vunpack.c.h.b16 %v1070
    %v2259 = vunpack.c.l.b16 %v1071
    %v2260 = vunpack.c.l.b16 %v1072
    %v2261 = vunpack.c.h.b16 %v1072
    %v2262 = vunpack.c.l.b16 %v1073
    %v2263 = vunpack.c.h.b16 %v1073
    %v2264 = vunpack.c.l.b16 %v1074
    %v2265 = vunpack.c.h.b16 %v1074
    %v2266 = vunpack.c.l.b16 %v1075
    %v2267 = vunpack.c.l.b16 %v1076
    %v2268 = vunpack.c.h.b16 %v1076
    %v2269 = vunpack.c.l.b16 %v1077
    %v2270 = vunpack.c.h.b16 %v1077
    %v2271 = vunpack.c.l.b16 %v1078
    %v2272 = vunpack.c.h.b16 %v1078
    %v2273 = vunpack.c.l.b16 %v1079
    %v2274 = vunpack.c.l.b16 %v1080
    %v2275 = vunpack.c.h.b16 %v1080
    %v2276 = vunpack.c.l.b16 %v1081
    %v2277 = vunpack.c.h.b16 %v1081
    %v2278 = vunpack.c.l.b16 %v1082
    %v2279 = vunpack.c.h.b16 %v1082
    %v2280 = vunpack.c.l.b16 %v1083
    %v2281 = vunpack.c.l.b16 %v1084
    %v2282 = vunpack.c.h.b16 %v1084
    %v2283 = vunpack.c.l.b16 %v1085
    %v2284 = vunpack.c.h.b16 %v1085
    %v2285 = vunpack.c.l.b16 %v1086
    %v2286 = vunpack.c.h.b16 %v1086
    %v2287 = vunpack.c.l.b16 %v1087
    %v2288 = vunpack.c.l.b16 %v1088
    %v2289 = vunpack.c.h.b16 %v1088
    %v2290 = vunpack.c.l.b16 %v1089
    %v2291 = vunpack.c.h.b16 %v1089
    %v2292 = vunpack.c.l.b16 %v1090
    %v2293 = vunpack.c.h.b16 %v1090
    %v2294 = vunpack.c.l.b16 %v1091
    %v2295 = vunpack.c.l.b16 %v1092
    %v2296 = vunpack.c.h.b16 %v1092
    %v2297 = vunpack.c.l.b16 %v1093
    %v2298 = vunpack.c.h.b16 %v1093
    %v2299 = vunpack.c.l.b16 %v1094
    %v2300 = vunpack.c.h.b16 %v1094
    %v2301 = vunpack.c.l.b16 %v1095
    %v2302 = vunpack.c.l.b16 %v1096
    %v2303 = vunpack.c.h.b16 %v1096
    %v2304 = vunpack.c.l.b16 %v1097
    %v2305 = vunpack.c.h.b16 %v1097
    %v2306 = vunpack.c.l.b16 %v1098
    %v2307 = vunpack.c.h.b16 %v1098
    %v2308 = vunpack.c.l.b16 %v1099
    %v2309 = vunpack.c.l.b16 %v1100
    %v2310 = vunpack.c.h.b16 %v1100
    %v2311 = vunpack.c.l.b16 %v1101
    %v2312 = vunpack.c.h.b16 %v1101
    %v2313 = vunpack.c.l.b16 %v1102
    %v2314 = vunpack.c.h.b16 %v1102
    %v2315 = vunpack.c.l.b16 %v1103
    %v2316 = vunpack.c.l.b16 %v1104
    %v2317 = vunpack.c.h.b16 %v1104
    %v2318 = vunpack.c.l.b16 %v1105
    %v2319 = vunpack.c.h.b16 %v1105
    %v2320 = vunpack.c.l.b16 %v1106
    %v2321 = vunpack.c.h.b16 %v1106
    %v2322 = vunpack.c.l.b16 %v1107
    %v2323 = vunpack.c.l.b16 %v1108
    %v2324 = vunpack.c.h.b16 %v1108
    %v2325 = vunpack.c.l.b16 %v1109
    %v2326 = vunpack.c.h.b16 %v1109
    %v2327 = vunpack.c.l.b16 %v1110
    %v2328 = vunpack.c.h.b16 %v1110
    %v2329 = vunpack.c.l.b16 %v1111
    %v2330 = vunpack.c.l.b16 %v1112
    %v2331 = vunpack.c.h.b16 %v1112
    %v2332 = vunpack.c.l.b16 %v1113
    %v2333 = vunpack.c.h.b16 %v1113
    %v2334 = vunpack.c.l.b16 %v1114
    %v2335 = vunpack.c.h.b16 %v1114
    %v2336 = vunpack.c.l.b16 %v1115
    %v2337 = vunpack.c.l.b16 %v1116
    %v2338 = vunpack.c.h.b16 %v1116
    %v2339 = vunpack.c.l.b16 %v1117
    %v2340 = vunpack.c.h.b16 %v1117
    %v2341 = vunpack.c.l.b16 %v1118
    %v2342 = vunpack.c.h.b16 %v1118
    %v2343 = vunpack.c.l.b16 %v1119
    %v2344 = vunpack.c.l.b16 %v1120
    %v2345 = vunpack.c.h.b16 %v1120
    %v2346 = vunpack.c.l.b16 %v1121
    %v2347 = vunpack.c.h.b16 %v1121
    %v2348 = vunpack.c.l.b16 %v1122
    %v2349 = vunpack.c.h.b16 %v1122
    %v2350 = vunpack.c.l.b16 %v1123
    %v2351 = vunpack.c.l.b16 %v1124
    %v2352 = vunpack.c.h.b16 %v1124
    %v2353 = vunpack.c.l.b16 %v1125
    %v2354 = vunpack.c.h.b16 %v1125
    %v2355 = vunpack.c.l.b16 %v1126
    %v2356 = vunpack.c.h.b16 %v1126
    %v2357 = vunpack.c.l.b16 %v1127
    %v2358 = vunpack.c.l.b16 %v1128
    %v2359 = vunpack.c.h.b16 %v1128
    %v2360 = vunpack.c.l.b16 %v1129
    %v2361 = vunpack.c.h.b16 %v1129
    %v2362 = vunpack.c.l.b16 %v1130
    %v2363 = vunpack.c.h.b16 %v1130
    %v2364 = vunpack.c.l.b16 %v1131
    %v2365 = vunpack.c.l.b16 %v1132
    %v2366 = vunpack.c.h.b16 %v1132
    %v2367 = vunpack.c.l.b16 %v1133
    %v2368 = vunpack.c.h.b16 %v1133
    %v2369 = vunpack.c.l.b16 %v1134
    %v2370 = vunpack.c.h.b16 %v1134
    %v2371 = vunpack.c.l.b16 %v1135
    %v2372 = vunpack.c.l.b16 %v1136
    %v2373 = vunpack.c.h.b16 %v1136
    %v2374 = vunpack.c.l.b16 %v1137
    %v2375 = vunpack.c.h.b16 %v1137
    %v2376 = vunpack.c.l.b16 %v1138
    %v2377 = vunpack.c.h.b16 %v1138
    %v2378 = vunpack.c.l.b16 %v1139
    %v2379 = vunpack.c.l.b16 %v1140
    %v2380 = vunpack.c.h.b16 %v1140
    %v2381 = vunpack.c.l.b16 %v1141
    %v2382 = vunpack.c.h.b16 %v1141
    %v2383 = vunpack.c.l.b16 %v1142
    %v2384 = vunpack.c.h.b16 %v1142
    %v2385 = vunpack.c.l.b16 %v1143
    %v2386 = vunpack.c.l.b16 %v1144
    %v2387 = vunpack.c.h.b16 %v1144
    %v2388 = vunpack.c.l.b16 %v1145
    %v2389 = vunpack.c.h.b16 %v1145
    %v2390 = vunpack.c.l.b16 %v1146
    %v2391 = vunpack.c.h.b16 %v1146
    %v2392 = vunpack.c.l.b16 %v1147
    %v2393 = vunpack.c.l.b16 %v1148
    %v2394 = vunpack.c.h.b16 %v1148
    %v2395 = vunpack.c.l.b16 %v1149
    %v2396 = vunpack.c.h.b16 %v1149
    %v2397 = vunpack.c.l.b16 %v1150
    %v2398 = vunpack.c.h.b16 %v1150
    %v2399 = vunpack.c.l.b16 %v1151
    %v2400 = vunpack.c.l.b16 %v1152
    %v2401 = vunpack.c.h.b16 %v1152
    %v2402 = vunpack.c.l.b16 %v1153
    %v2403 = vunpack.c.h.b16 %v1153
    %v2404 = vunpack.c.l.b16 %v1154
    %v2405 = vunpack.c.h.b16 %v1154
    %v2406 = vunpack.c.l.b16 %v1155
    %v2407 = vunpack.c.l.b16 %v1156
    %v2408 = vunpack.c.h.b16 %v1156
    %v2409 = vunpack.c.l.b16 %v1157
    %v2410 = vunpack.c.h.b16 %v1157
    %v2411 = vunpack.c.l.b16 %v1158
    %v2412 = vunpack.c.h.b16 %v1158
    %v2413 = vunpack.c.l.b16 %v1159
    %v2414 = vunpack.c.l.b16 %v1160
    %v2415 = vunpack.c.h.b16 %v1160
    %v2416 = vunpack.c.l.b16 %v1161
    %v2417 = vunpack.c.h.b16 %v1161
    %v2418 = vunpack.c.l.b16 %v1162
    %v2419 = vunpack.c.h.b16 %v1162
    %v2420 = vunpack.c.l.b16 %v1163
    %v2421 = vunpack.c.l.b16 %v1164
    %v2422 = vunpack.c.h.b16 %v1164
    %v2423 = vunpack.c.l.b16 %v1165
    %v2424 = vunpack.c.h.b16 %v1165
    %v2425 = vunpack.c.l.b16 %v1166
    %v2426 = vunpack.c.h.b16 %v1166
    %v2427 = vunpack.c.l.b16 %v1167
    %v2428 = vunpack.c.l.b16 %v1168
    %v2429 = vunpack.c.h.b16 %v1168
    %v2430 = vunpack.c.l.b16 %v1169
    %v2431 = vunpack.c.h.b16 %v1169
    %v2432 = vunpack.c.l.b16 %v1170
    %v2433 = vunpack.c.h.b16 %v1170
    %v2434 = vunpack.c.l.b16 %v1171
    %v2435 = vunpack.c.l.b16 %v1172
    %v2436 = vunpack.c.h.b16 %v1172
    %v2437 = vunpack.c.l.b16 %v1173
    %v2438 = vunpack.c.h.b16 %v1173
    %v2439 = vunpack.c.l.b16 %v1174
    %v2440 = vunpack.c.h.b16 %v1174
    %v2441 = vunpack.c.l.b16 %v1175
    %v2442 = vunpack.c.l.b16 %v1176
    %v2443 = vunpack.c.h.b16 %v1176
    %v2444 = vunpack.c.l.b16 %v1177
    %v2445 = vunpack.c.h.b16 %v1177
    %v2446 = vunpack.c.l.b16 %v1178
    %v2447 = vunpack.c.h.b16 %v1178
    %v2448 = vunpack.c.l.b16 %v1179
    %v2449 = vpack.c.b16 %v1672, %v1665
    %v2450 = vpack.c.b16 %v1673, %v1666
    %v2451 = vpack.c.b16 %v1674, %v1667
    %v2452 = vpack.c.b16 %v1675, %v1668
    %v2453 = vpack.c.b16 %v1676, %v1669
    %v2454 = vpack.c.b16 %v1677, %v1670
    %v2455 = vpack.c.b16 %v1678, %v1671
    %v2456 = vpack.c.b16 %v1686, %v1679
    %v2457 = vpack.c.b16 %v1687, %v1680
    %v2458 = vpack.c.b16 %v1688, %v1681
    %v2459 = vpack.c.b16 %v1689, %v1682
    %v2460 = vpack.c.b16 %v1690, %v1683
    %v2461 = vpack.c.b16 %v1691, %v1684
    %v2462 = vpack.c.b16 %v1692, %v1685
    %v2463 = vpack.c.b16 %v1700, %v1693
    %v2464 = vpack.c.b16 %v1701, %v1694
    %v2465 = vpack.c.b16 %v1702, %v1695
    %v2466 = vpack.c.b16 %v1703, %v1696
    %v2467 = vpack.c.b16 %v1704, %v1697
    %v2468 = vpack.c.b16 %v1705, %v1698
    %v2469 = vpack.c.b16 %v1706, %v1699
    %v2470 = vpack.c.b16 %v1714, %v1707
    %v2471 = vpack.c.b16 %v1715, %v1708
    %v2472 = vpack.c.b16 %v1716, %v1709
    %v2473 = vpack.c.b16 %v1717, %v1710
    %v2474 = vpack.c.b16 %v1718, %v1711
    %v2475 = vpack.c.b16 %v1719, %v1712
    %v2476 = vpack.c.b16 %v1720, %v1713
    %v2477 = vpack.c.b16 %v1728, %v1721
    %v2478 = vpack.c.b16 %v1729, %v1722
    %v2479 = vpack.c.b16 %v1730, %v1723
    %v2480 = vpack.c.b16 %v1731, %v1724
    %v2481 = vpack.c.b16 %v1732, %v1725
    %v2482 = vpack.c.b16 %v1733, %v1726
    %v2483 = vpack.c.b16 %v1734, %v1727
    %v2484 = vpack.c.b16 %v1742, %v1735
    %v2485 = vpack.c.b16 %v1743, %v1736
    %v2486 = vpack.c.b16 %v1744, %v1737
    %v2487 = vpack.c.b16 %v1745, %v1738
    %v2488 = vpack.c.b16 %v1746, %v1739
    %v2489 = vpack.c.b16 %v1747, %v1740
    %v2490 = vpack.c.b16 %v1748, %v1741
    %v2491 = vpack.c.b16 %v1756, %v1749
    %v2492 = vpack.c.b16 %v1757, %v1750
    %v2493 = vpack.c.b16 %v1758, %v1751
    %v2494 = vpack.c.b16 %v1759, %v1752
    %v2495 = vpack.c.b16 %v1760, %v1753
    %v2496 = vpack.c.b16 %v1761, %v1754
    %v2497 = vpack.c.b16 %v1762, %v1755
    %v2498 = vpack.c.b16 %v1770, %v1763
    %v2499 = vpack.c.b16 %v1771, %v1764
    %v2500 = vpack.c.b16 %v1772, %v1765
    %v2501 = vpack.c.b16 %v1773, %v1766
    %v2502 = vpack.c.b16 %v1774, %v1767
    %v2503 = vpack.c.b16 %v1775, %v1768
    %v2504 = vpack.c.b16 %v1776, %v1769
    %v2505 = vpack.c.b16 %v1784, %v1777
    %v2506 = vpack.c.b16 %v1785, %v1778
    %v2507 = vpack.c.b16 %v1786, %v1779
    %v2508 = vpack.c.b16 %v1787, %v1780
    %v2509 = vpack.c.b16 %v1788, %v1781
    %v2510 = vpack.c.b16 %v1789, %v1782
    %v2511 = vpack.c.b16 %v1790, %v1783
    %v2512 = vpack.c.b16 %v1798, %v1791
    %v2513 = vpack.c.b16 %v1799, %v1792
    %v2514 = vpack.c.b16 %v1800, %v1793
    %v2515 = vpack.c.b16 %v1801, %v1794
    %v2516 = vpack.c.b16 %v1802, %v1795
    %v2517 = vpack.c.b16 %v1803, %v1796
    %v2518 = vpack.c.b16 %v1804, %v1797
    %v2519 = vpack.c.b16 %v1812, %v1805
    %v2520 = vpack.c.b16 %v1813, %v1806
    %v2521 = vpack.c.b16 %v1814, %v1807
    %v2522 = vpack.c.b16 %v1815, %v1808
    %v2523 = vpack.c.b16 %v1816, %v1809
    %v2524 = vpack.c.b16 %v1817, %v1810
    %v2525 = vpack.c.b16 %v1818, %v1811
    %v2526 = vpack.c.b16 %v1826, %v1819
    %v2527 = vpack.c.b16 %v1827, %v1820
    %v2528 = vpack.c.b16 %v1828, %v1821
    %v2529 = vpack.c.b16 %v1829, %v1822
    %v2530 = vpack.c.b16 %v1830, %v1823
    %v2531 = vpack.c.b16 %v1831, %v1824
    %v2532 = vpack.c.b16 %v1832, %v1825
    %v2533 = vpack.c.b16 %v1840, %v1833
    %v2534 = vpack.c.b16 %v1841, %v1834
    %v2535 = vpack.c.b16 %v1842, %v1835
    %v2536 = vpack.c.b16 %v1843, %v1836
    %v2537 = vpack.c.b16 %v1844, %v1837
    %v2538 = vpack.c.b16 %v1845, %v1838
    %v2539 = vpack.c.b16 %v1846, %v1839
    %v2540 = vpack.c.b16 %v1854, %v1847
    %v2541 = vpack.c.b16 %v1855, %v1848
    %v2542 = vpack.c.b16 %v1856, %v1849
    %v2543 = vpack.c.b16 %v1857, %v1850
    %v2544 = vpack.c.b16 %v1858, %v1851
    %v2545 = vpack.c.b16 %v1859, %v1852
    %v2546 = vpack.c.b16 %v1860, %v1853
    %v2547 = vpack.c.b16 %v1868, %v1861
    %v2548 = vpack.c.b16 %v1869, %v1862
    %v2549 = vpack.c.b16 %v1870, %v1863
    %v2550 = vpack.c.b16 %v1871, %v1864
    %v2551 = vpack.c.b16 %v1872, %v1865
    %v2552 = vpack.c.b16 %v1873, %v1866
    %v2553 = vpack.c.b16 %v1874, %v1867
    %v2554 = vpack.c.b16 %v1882, %v1875
    %v2555 = vpack.c.b16 %v1883, %v1876
    %v2556 = vpack.c.b16 %v1884, %v1877
    %v2557 = vpack.c.b16 %v1885, %v1878
    %v2558 = vpack.c.b16 %v1886, %v1879
    %v2559 = vpack.c.b16 %v1887, %v1880
    %v2560 = vpack.c.b16 %v1888, %v1881
    %v2561 = vpack.c.b16 %v1896, %v1889
    %v2562 = vpack.c.b16 %v1897, %v1890
    %v2563 = vpack.c.b16 %v1898, %v1891
    %v2564 = vpack.c.b16 %v1899, %v1892
    %v2565 = vpack.c.b16 %v1900, %v1893
    %v2566 = vpack.c.b16 %v1901, %v1894
    %v2567 = vpack.c.b16 %v1902, %v1895
    %v2568 = vpack.c.b16 %v1910, %v1903
    %v2569 = vpack.c.b16 %v1911, %v1904
    %v2570 = vpack.c.b16 %v1912, %v1905
    %v2571 = vpack.c.b16 %v1913, %v1906
    %v2572 = vpack.c.b16 %v1914, %v1907
    %v2573 = vpack.c.b16 %v1915, %v1908
    %v2574 = vpack.c.b16 %v1916, %v1909
    %v2575 = vpack.c.b16 %v1924, %v1917
    %v2576 = vpack.c.b16 %v1925, %v1918
    %v2577 = vpack.c.b16 %v1926, %v1919
    %v2578 = vpack.c.b16 %v1927, %v1920
    %v2579 = vpack.c.b16 %v1928, %v1921
    %v2580 = vpack.c.b16 %v1929, %v1922
    %v2581 = vpack.c.b16 %v1930, %v1923
    %v2582 = vpack.c.b16 %v1938, %v1931
    %v2583 = vpack.c.b16 %v1939, %v1932
    %v2584 = vpack.c.b16 %v1940, %v1933
    %v2585 = vpack.c.b16 %v1941, %v1934
    %v2586 = vpack.c.b16 %v1942, %v1935
    %v2587 = vpack.c.b16 %v1943, %v1936
    %v2588 = vpack.c.b16 %v1944, %v1937
    %v2589 = vpack.c.b16 %v1952, %v1945
    %v2590 = vpack.c.b16 %v1953, %v1946
    %v2591 = vpack.c.b16 %v1954, %v1947
    %v2592 = vpack.c.b16 %v1955, %v1948
    %v2593 = vpack.c.b16 %v1956, %v1949
    %v2594 = vpack.c.b16 %v1957, %v1950
    %v2595 = vpack.c.b16 %v1958, %v1951
    %v2596 = vpack.c.b16 %v1966, %v1959
    %v2597 = vpack.c.b16 %v1967, %v1960
    %v2598 = vpack.c.b16 %v1968, %v1961
    %v2599 = vpack.c.b16 %v1969, %v1962
    %v2600 = vpack.c.b16 %v1970, %v1963
    %v2601 = vpack.c.b16 %v1971, %v1964
    %v2602 = vpack.c.b16 %v1972, %v1965
    %v2603 = vpack.c.b16 %v1980, %v1973
    %v2604 = vpack.c.b16 %v1981, %v1974
    %v2605 = vpack.c.b16 %v1982, %v1975
    %v2606 = vpack.c.b16 %v1983, %v1976
    %v2607 = vpack.c.b16 %v1984, %v1977
    %v2608 = vpack.c.b16 %v1985, %v1978
    %v2609 = vpack.c.b16 %v1986, %v1979
    %v2610 = vpack.c.b16 %v1994, %v1987
    %v2611 = vpack.c.b16 %v1995, %v1988
    %v2612 = vpack.c.b16 %v1996, %v1989
    %v2613 = vpack.c.b16 %v1997, %v1990
    %v2614 = vpack.c.b16 %v1998, %v1991
    %v2615 = vpack.c.b16 %v1999, %v1992
    %v2616 = vpack.c.b16 %v2000, %v1993
    %v2617 = vpack.c.b16 %v2008, %v2001
    %v2618 = vpack.c.b16 %v2009, %v2002
    %v2619 = vpack.c.b16 %v2010, %v2003
    %v2620 = vpack.c.b16 %v2011, %v2004
    %v2621 = vpack.c.b16 %v2012, %v2005
    %v2622 = vpack.c.b16 %v2013, %v2006
    %v2623 = vpack.c.b16 %v2014, %v2007
    %v2624 = vpack.c.b16 %v2022, %v2015
    %v2625 = vpack.c.b16 %v2023, %v2016
    %v2626 = vpack.c.b16 %v2024, %v2017
    %v2627 = vpack.c.b16 %v2025, %v2018
    %v2628 = vpack.c.b16 %v2026, %v2019
    %v2629 = vpack.c.b16 %v2027, %v2020
    %v2630 = vpack.c.b16 %v2028, %v2021
    %v2631 = vpack.c.b16 %v2036, %v2029
    %v2632 = vpack.c.b16 %v2037, %v2030
    %v2633 = vpack.c.b16 %v2038, %v2031
    %v2634 = vpack.c.b16 %v2039, %v2032
    %v2635 = vpack.c.b16 %v2040, %v2033
    %v2636 = vpack.c.b16 %v2041, %v2034
    %v2637 = vpack.c.b16 %v2042, %v2035
    %v2638 = vpack.c.b16 %v2050, %v2043
    %v2639 = vpack.c.b16 %v2051, %v2044
    %v2640 = vpack.c.b16 %v2052, %v2045
    %v2641 = vpack.c.b16 %v2053, %v2046
    %v2642 = vpack.c.b16 %v2054, %v2047
    %v2643 = vpack.c.b16 %v2055, %v2048
    %v2644 = vpack.c.b16 %v2056, %v2049
    %v2645 = vpack.c.b16 %v2064, %v2057
    %v2646 = vpack.c.b16 %v2065, %v2058
    %v2647 = vpack.c.b16 %v2066, %v2059
    %v2648 = vpack.c.b16 %v2067, %v2060
    %v2649 = vpack.c.b16 %v2068, %v2061
    %v2650 = vpack.c.b16 %v2069, %v2062
    %v2651 = vpack.c.b16 %v2070, %v2063
    %v2652 = vpack.c.b16 %v2078, %v2071
    %v2653 = vpack.c.b16 %v2079, %v2072
    %v2654 = vpack.c.b16 %v2080, %v2073
    %v2655 = vpack.c.b16 %v2081, %v2074
    %v2656 = vpack.c.b16 %v2082, %v2075
    %v2657 = vpack.c.b16 %v2083, %v2076
    %v2658 = vpack.c.b16 %v2084, %v2077
    %v2659 = vpack.c.b16 %v2092, %v2085
    %v2660 = vpack.c.b16 %v2093, %v2086
    %v2661 = vpack.c.b16 %v2094, %v2087
    %v2662 = vpack.c.b16 %v2095, %v2088
    %v2663 = vpack.c.b16 %v2096, %v2089
    %v2664 = vpack.c.b16 %v2097, %v2090
    %v2665 = vpack.c.b16 %v2098, %v2091
    %v2666 = vpack.c.b16 %v2106, %v2099
    %v2667 = vpack.c.b16 %v2107, %v2100
    %v2668 = vpack.c.b16 %v2108, %v2101
    %v2669 = vpack.c.b16 %v2109, %v2102
    %v2670 = vpack.c.b16 %v2110, %v2103
    %v2671 = vpack.c.b16 %v2111, %v2104
    %v2672 = vpack.c.b16 %v2112, %v2105
    %v2673 = vpack.c.b16 %v2120, %v2113
    %v2674 = vpack.c.b16 %v2121, %v2114
    %v2675 = vpack.c.b16 %v2122, %v2115
    %v2676 = vpack.c.b16 %v2123, %v2116
    %v2677 = vpack.c.b16 %v2124, %v2117
    %v2678 = vpack.c.b16 %v2125, %v2118
    %v2679 = vpack.c.b16 %v2126, %v2119
    %v2680 = vpack.c.b16 %v2134, %v2127
    %v2681 = vpack.c.b16 %v2135, %v2128
    %v2682 = vpack.c.b16 %v2136, %v2129
    %v2683 = vpack.c.b16 %v2137, %v2130
    %v2684 = vpack.c.b16 %v2138, %v2131
    %v2685 = vpack.c.b16 %v2139, %v2132
    %v2686 = vpack.c.b16 %v2140, %v2133
    %v2687 = vpack.c.b16 %v2148, %v2141
    %v2688 = vpack.c.b16 %v2149, %v2142
    %v2689 = vpack.c.b16 %v2150, %v2143
    %v2690 = vpack.c.b16 %v2151, %v2144
    %v2691 = vpack.c.b16 %v2152, %v2145
    %v2692 = vpack.c.b16 %v2153, %v2146
    %v2693 = vpack.c.b16 %v2154, %v2147
    %v2694 = vpack.c.b16 %v2162, %v2155
    %v2695 = vpack.c.b16 %v2163, %v2156
    %v2696 = vpack.c.b16 %v2164, %v2157
    %v2697 = vpack.c.b16 %v2165, %v2158
    %v2698 = vpack.c.b16 %v2166, %v2159
    %v2699 = vpack.c.b16 %v2167, %v2160
    %v2700 = vpack.c.b16 %v2168, %v2161
    %v2701 = vpack.c.b16 %v2176, %v2169
    %v2702 = vpack.c.b16 %v2177, %v2170
    %v2703 = vpack.c.b16 %v2178, %v2171
    %v2704 = vpack.c.b16 %v2179, %v2172
    %v2705 = vpack.c.b16 %v2180, %v2173
    %v2706 = vpack.c.b16 %v2181, %v2174
    %v2707 = vpack.c.b16 %v2182, %v2175
    %v2708 = vpack.c.b16 %v2190, %v2183
    %v2709 = vpack.c.b16 %v2191, %v2184
    %v2710 = vpack.c.b16 %v2192, %v2185
    %v2711 = vpack.c.b16 %v2193, %v2186
    %v2712 = vpack.c.b16 %v2194, %v2187
    %v2713 = vpack.c.b16 %v2195, %v2188
    %v2714 = vpack.c.b16 %v2196, %v2189
    %v2715 = vpack.c.b16 %v2204, %v2197
    %v2716 = vpack.c.b16 %v2205, %v2198
    %v2717 = vpack.c.b16 %v2206, %v2199
    %v2718 = vpack.c.b16 %v2207, %v2200
    %v2719 = vpack.c.b16 %v2208, %v2201
    %v2720 = vpack.c.b16 %v2209, %v2202
    %v2721 = vpack.c.b16 %v2210, %v2203
    %v2722 = vpack.c.b16 %v2218, %v2211
    %v2723 = vpack.c.b16 %v2219, %v2212
    %v2724 = vpack.c.b16 %v2220, %v2213
    %v2725 = vpack.c.b16 %v2221, %v2214
    %v2726 = vpack.c.b16 %v2222, %v2215
    %v2727 = vpack.c.b16 %v2223, %v2216
    %v2728 = vpack.c.b16 %v2224, %v2217
    %v2729 = vpack.c.b16 %v2232, %v2225
    %v2730 = vpack.c.b16 %v2233, %v2226
    %v2731 = vpack.c.b16 %v2234, %v2227
    %v2732 = vpack.c.b16 %v2235, %v2228
    %v2733 = vpack.c.b16 %v2236, %v2229
    %v2734 = vpack.c.b16 %v2237, %v2230
    %v2735 = vpack.c.b16 %v2238, %v2231
    %v2736 = vpack.c.b16 %v2246, %v2239
    %v2737 = vpack.c.b16 %v2247, %v2240
    %v2738 = vpack.c.b16 %v2248, %v2241
    %v2739 = vpack.c.b16 %v2249, %v2242
    %v2740 = vpack.c.b16 %v2250, %v2243
    %v2741 = vpack.c.b16 %v2251, %v2244
    %v2742 = vpack.c.b16 %v2252, %v2245
    %v2743 = vpack.c.b16 %v2260, %v2253
    %v2744 = vpack.c.b16 %v2261, %v2254
    %v2745 = vpack.c.b16 %v2262, %v2255
    %v2746 = vpack.c.b16 %v2263, %v2256
    %v2747 = vpack.c.b16 %v2264, %v2257
    %v2748 = vpack.c.b16 %v2265, %v2258
    %v2749 = vpack.c.b16 %v2266, %v2259
    %v2750 = vpack.c.b16 %v2274, %v2267
    %v2751 = vpack.c.b16 %v2275, %v2268
    %v2752 = vpack.c.b16 %v2276, %v2269
    %v2753 = vpack.c.b16 %v2277, %v2270
    %v2754 = vpack.c.b16 %v2278, %v2271
    %v2755 = vpack.c.b16 %v2279, %v2272
    %v2756 = vpack.c.b16 %v2280, %v2273
    %v2757 = vpack.c.b16 %v2288, %v2281
    %v2758 = vpack.c.b16 %v2289, %v2282
    %v2759 = vpack.c.b16 %v2290, %v2283
    %v2760 = vpack.c.b16 %v2291, %v2284
    %v2761 = vpack.c.b16 %v2292, %v2285
    %v2762 = vpack.c.b16 %v2293, %v2286
    %v2763 = vpack.c.b16 %v2294, %v2287
    %v2764 = vpack.c.b16 %v2302, %v2295
    %v2765 = vpack.c.b16 %v2303, %v2296
    %v2766 = vpack.c.b16 %v2304, %v2297
    %v2767 = vpack.c.b16 %v2305, %v2298
    %v2768 = vpack.c.b16 %v2306, %v2299
    %v2769 = vpack.c.b16 %v2307, %v2300
    %v2770 = vpack.c.b16 %v2308, %v2301
    %v2771 = vpack.c.b16 %v2316, %v2309
    %v2772 = vpack.c.b16 %v2317, %v2310
    %v2773 = vpack.c.b16 %v2318, %v2311
    %v2774 = vpack.c.b16 %v2319, %v2312
    %v2775 = vpack.c.b16 %v2320, %v2313
    %v2776 = vpack.c.b16 %v2321, %v2314
    %v2777 = vpack.c.b16 %v2322, %v2315
    %v2778 = vpack.c.b16 %v2330, %v2323
    %v2779 = vpack.c.b16 %v2331, %v2324
    %v2780 = vpack.c.b16 %v2332, %v2325
    %v2781 = vpack.c.b16 %v2333, %v2326
    %v2782 = vpack.c.b16 %v2334, %v2327
    %v2783 = vpack.c.b16 %v2335, %v2328
    %v2784 = vpack.c.b16 %v2336, %v2329
    %v2785 = vpack.c.b16 %v2344, %v2337
    %v2786 = vpack.c.b16 %v2345, %v2338
    %v2787 = vpack.c.b16 %v2346, %v2339
    %v2788 = vpack.c.b16 %v2347, %v2340
    %v2789 = vpack.c.b16 %v2348, %v2341
    %v2790 = vpack.c.b16 %v2349, %v2342
    %v2791 = vpack.c.b16 %v2350, %v2343
    %v2792 = vpack.c.b16 %v2358, %v2351
    %v2793 = vpack.c.b16 %v2359, %v2352
    %v2794 = vpack.c.b16 %v2360, %v2353
    %v2795 = vpack.c.b16 %v2361, %v2354
    %v2796 = vpack.c.b16 %v2362, %v2355
    %v2797 = vpack.c.b16 %v2363, %v2356
    %v2798 = vpack.c.b16 %v2364, %v2357
    %v2799 = vpack.c.b16 %v2372, %v2365
    %v2800 = vpack.c.b16 %v2373, %v2366
    %v2801 = vpack.c.b16 %v2374, %v2367
    %v2802 = vpack.c.b16 %v2375, %v2368
    %v2803 = vpack.c.b16 %v2376, %v2369
    %v2804 = vpack.c.b16 %v2377, %v2370
    %v2805 = vpack.c.b16 %v2378, %v2371
    %v2806 = vpack.c.b16 %v2386, %v2379
    %v2807 = vpack.c.b16 %v2387, %v2380
    %v2808 = vpack.c.b16 %v2388, %v2381
    %v2809 = vpack.c.b16 %v2389, %v2382
    %v2810 = vpack.c.b16 %v2390, %v2383
    %v2811 = vpack.c.b16 %v2391, %v2384
    %v2812 = vpack.c.b16 %v2392, %v2385
    %v2813 = vpack.c.b16 %v2400, %v2393
    %v2814 = vpack.c.b16 %v2401, %v2394
    %v2815 = vpack.c.b16 %v2402, %v2395
    %v2816 = vpack.c.b16 %v2403, %v2396
    %v2817 = vpack.c.b16 %v2404, %v2397
    %v2818 = vpack.c.b16 %v2405, %v2398
    %v2819 = vpack.c.b16 %v2406, %v2399
    %v2820 = vpack.c.b16 %v2414, %v2407
    %v2821 = vpack.c.b16 %v2415, %v2408
    %v2822 = vpack.c.b16 %v2416, %v2409
    %v2823 = vpack.c.b16 %v2417, %v2410
    %v2824 = vpack.c.b16 %v2418, %v2411
    %v2825 = vpack.c.b16 %v2419, %v2412
    %v2826 = vpack.c.b16 %v2420, %v2413
    %v2827 = vpack.c.b16 %v2428, %v2421
    %v2828 = vpack.c.b16 %v2429, %v2422
    %v2829 = vpack.c.b16 %v2430, %v2423
    %v2830 = vpack.c.b16 %v2431, %v2424
    %v2831 = vpack.c.b16 %v2432, %v2425
    %v2832 = vpack.c.b16 %v2433, %v2426
    %v2833 = vpack.c.b16 %v2434, %v2427
    %v2834 = vpack.c.b16 %v2442, %v2435
    %v2835 = vpack.c.b16 %v2443, %v2436
    %v2836 = vpack.c.b16 %v2444, %v2437
    %v2837 = vpack.c.b16 %v2445, %v2438
    %v2838 = vpack.c.b16 %v2446, %v2439
    %v2839 = vpack.c.b16 %v2447, %v2440
    %v2840 = vpack.c.b16 %v2448, %v2441
    %3233 = vmatprep.subr.bf16.mxu0 %v2499
    %3234 = vmatpush1.bf16.msra.mxu0 %v2498
    %3235 = vmatprep.subr.bf16.mxu0 %v2492
    %3236 = vmatpush1.bf16.msra.mxu0 %v2491
    %3237 = vmatprep.subr.bf16.mxu0 %v2485
    %3238 = vmatpush1.bf16.msra.mxu0 %v2484
    %3239 = vmatprep.subr.bf16.mxu0 %v2478
    %3240 = vmatpush1.bf16.msra.mxu0 %v2477
    %3241 = vmatprep.subr.bf16.mxu0 %v2471
    %3242 = vmatpush1.bf16.msra.mxu0 %v2470
    %3243 = vmatprep.subr.bf16.mxu0 %v2464
    %3244 = vmatpush1.bf16.msra.mxu0 %v2463
    %3245 = vmatprep.subr.bf16.mxu0 %v2457
    %3246 = vmatpush1.bf16.msra.mxu0 %v2456
    %3247 = vmatprep.subr.bf16.mxu0 %v2450
    %3248 = vmatpush1.bf16.msra.mxu0 %v2449
    %3249 = vmatprep.subr.bf16.mxu0 %v2555
    %3250 = vmatpush2.bf16.msra.mxu0 %v2554
    %3251 = vmatprep.subr.bf16.mxu0 %v2548
    %3252 = vmatpush2.bf16.msra.mxu0 %v2547
    %3253 = vmatprep.subr.bf16.mxu0 %v2541
    %3254 = vmatpush2.bf16.msra.mxu0 %v2540
    %3255 = vmatprep.subr.bf16.mxu0 %v2534
    %3256 = vmatpush2.bf16.msra.mxu0 %v2533
    %3257 = vmatprep.subr.bf16.mxu0 %v2527
    %3258 = vmatpush2.bf16.msra.mxu0 %v2526
    %3259 = vmatprep.subr.bf16.mxu0 %v2520
    %3260 = vmatpush2.bf16.msra.mxu0 %v2519
    %3261 = vmatprep.subr.bf16.mxu0 %v2513
    %3262 = vmatpush2.bf16.msra.mxu0 %v2512
    %3263 = vmatprep.subr.bf16.mxu0 %v2506
    %3264 = vmatpush2.bf16.msra.mxu0 %v2505
    %3265 = vmatprep.mubr.bf16.mxu0 %v726
    %3266 = vmatmul.mubr.bf16.gmra.mxu0 %v725
    %v3267 = vpop.f32.mrf.mxu0
    %v3268 = vadd.f32 %v1185, %v3267
    %v3269 = vpop.f32.mrf.mxu0
    %v3270 = vadd.f32 %v1189, %v3269
    %v3271 = vpop.f32.mrf.mxu0
    %v3272 = vpop.f32.mrf.mxu0
    %3273 = vdwg.mxu0
    %3274 = vmatprep.subr.bf16.mxu0 %v2611
    %3275 = vmatpush1.bf16.msra.mxu0 %v2610
    %3276 = vmatprep.subr.bf16.mxu0 %v2604
    %3277 = vmatpush1.bf16.msra.mxu0 %v2603
    %3278 = vmatprep.subr.bf16.mxu0 %v2597
    %3279 = vmatpush1.bf16.msra.mxu0 %v2596
    %3280 = vmatprep.subr.bf16.mxu0 %v2590
    %3281 = vmatpush1.bf16.msra.mxu0 %v2589
    %3282 = vmatprep.subr.bf16.mxu0 %v2583
    %3283 = vmatpush1.bf16.msra.mxu0 %v2582
    %3284 = vmatprep.subr.bf16.mxu0 %v2576
    %3285 = vmatpush1.bf16.msra.mxu0 %v2575
    %3286 = vmatprep.subr.bf16.mxu0 %v2569
    %3287 = vmatpush1.bf16.msra.mxu0 %v2568
    %3288 = vmatprep.subr.bf16.mxu0 %v2562
    %3289 = vmatpush1.bf16.msra.mxu0 %v2561
    %3290 = vmatprep.subr.bf16.mxu0 %v2667
    %3291 = vmatpush2.bf16.msra.mxu0 %v2666
    %3292 = vmatprep.subr.bf16.mxu0 %v2660
    %3293 = vmatpush2.bf16.msra.mxu0 %v2659
    %3294 = vmatprep.subr.bf16.mxu0 %v2653
    %3295 = vmatpush2.bf16.msra.mxu0 %v2652
    %3296 = vmatprep.subr.bf16.mxu0 %v2646
    %3297 = vmatpush2.bf16.msra.mxu0 %v2645
    %3298 = vmatprep.subr.bf16.mxu0 %v2639
    %3299 = vmatpush2.bf16.msra.mxu0 %v2638
    %3300 = vmatprep.subr.bf16.mxu0 %v2632
    %3301 = vmatpush2.bf16.msra.mxu0 %v2631
    %3302 = vmatprep.subr.bf16.mxu0 %v2625
    %3303 = vmatpush2.bf16.msra.mxu0 %v2624
    %3304 = vmatprep.subr.bf16.mxu0 %v2618
    %3305 = vmatpush2.bf16.msra.mxu0 %v2617
    %3306 = vmatprep.mubr.bf16.mxu0 %v728
    %3307 = vmatmul.mubr.bf16.gmra.mxu0 %v727
    %v3308 = vpop.f32.mrf.mxu0
    %v3309 = vadd.f32 %v3268, %v3308
    %v3310 = vpop.f32.mrf.mxu0
    %v3311 = vadd.f32 %v3270, %v3310
    %v3312 = vpop.f32.mrf.mxu0
    %v3313 = vpop.f32.mrf.mxu0
    %3314 = vdwg.mxu0
    %3315 = vmatprep.subr.bf16.mxu0 %v2723
    %3316 = vmatpush1.bf16.msra.mxu0 %v2722
    %3317 = vmatprep.subr.bf16.mxu0 %v2716
    %3318 = vmatpush1.bf16.msra.mxu0 %v2715
    %3319 = vmatprep.subr.bf16.mxu0 %v2709
    %3320 = vmatpush1.bf16.msra.mxu0 %v2708
    %3321 = vmatprep.subr.bf16.mxu0 %v2702
    %3322 = vmatpush1.bf16.msra.mxu0 %v2701
    %3323 = vmatprep.subr.bf16.mxu0 %v2695
    %3324 = vmatpush1.bf16.msra.mxu0 %v2694
    %3325 = vmatprep.subr.bf16.mxu0 %v2688
    %3326 = vmatpush1.bf16.msra.mxu0 %v2687
    %3327 = vmatprep.subr.bf16.mxu0 %v2681
    %3328 = vmatpush1.bf16.msra.mxu0 %v2680
    %3329 = vmatprep.subr.bf16.mxu0 %v2674
    %3330 = vmatpush1.bf16.msra.mxu0 %v2673
    %3331 = vmatprep.subr.bf16.mxu0 %v2779
    %3332 = vmatpush2.bf16.msra.mxu0 %v2778
    %3333 = vmatprep.subr.bf16.mxu0 %v2772
    %3334 = vmatpush2.bf16.msra.mxu0 %v2771
    %3335 = vmatprep.subr.bf16.mxu0 %v2765
    %3336 = vmatpush2.bf16.msra.mxu0 %v2764
    %3337 = vmatprep.subr.bf16.mxu0 %v2758
    %3338 = vmatpush2.bf16.msra.mxu0 %v2757
    %3339 = vmatprep.subr.bf16.mxu0 %v2751
    %3340 = vmatpush2.bf16.msra.mxu0 %v2750
    %3341 = vmatprep.subr.bf16.mxu0 %v2744
    %3342 = vmatpush2.bf16.msra.mxu0 %v2743
    %3343 = vmatprep.subr.bf16.mxu0 %v2737
    %3344 = vmatpush2.bf16.msra.mxu0 %v2736
    %3345 = vmatprep.subr.bf16.mxu0 %v2730
    %3346 = vmatpush2.bf16.msra.mxu0 %v2729
    %3347 = vmatprep.mubr.bf16.mxu0 %v730
    %3348 = vmatmul.mubr.bf16.gmra.mxu0 %v729
    %v3349 = vpop.f32.mrf.mxu0
    %v3350 = vadd.f32 %v3309, %v3349
    %v3351 = vpop.f32.mrf.mxu0
    %v3352 = vadd.f32 %v3311, %v3351
    %v3353 = vpop.f32.mrf.mxu0
    %v3354 = vpop.f32.mrf.mxu0
    %3355 = vdwg.mxu0
    %3356 = vmatprep.subr.bf16.mxu0 %v2835
    %3357 = vmatpush1.bf16.msra.mxu0 %v2834
    %3358 = vmatprep.subr.bf16.mxu0 %v2828
    %3359 = vmatpush1.bf16.msra.mxu0 %v2827
    %3360 = vmatprep.subr.bf16.mxu0 %v2821
    %3361 = vmatpush1.bf16.msra.mxu0 %v2820
    %3362 = vmatprep.subr.bf16.mxu0 %v2814
    %3363 = vmatpush1.bf16.msra.mxu0 %v2813
    %3364 = vmatprep.subr.bf16.mxu0 %v2807
    %3365 = vmatpush1.bf16.msra.mxu0 %v2806
    %3366 = vmatprep.subr.bf16.mxu0 %v2800
    %3367 = vmatpush1.bf16.msra.mxu0 %v2799
    %3368 = vmatprep.subr.bf16.mxu0 %v2793
    %3369 = vmatpush1.bf16.msra.mxu0 %v2792
    %3370 = vmatprep.subr.bf16.mxu0 %v2786
    %3371 = vmatpush1.bf16.msra.mxu0 %v2785
    %3372 = vmatprep.subr.bf16.mxu0 0
    %3373 = vmatpush2.bf16.msra.mxu0 0
    %3374 = vmatprep.subr.bf16.mxu0 0
    %3375 = vmatpush2.bf16.msra.mxu0 0
    %3376 = vmatprep.subr.bf16.mxu0 0
    %3377 = vmatpush2.bf16.msra.mxu0 0
    %3378 = vmatprep.subr.bf16.mxu0 0
    %3379 = vmatpush2.bf16.msra.mxu0 0
    %3380 = vmatprep.subr.bf16.mxu0 0
    %3381 = vmatpush2.bf16.msra.mxu0 0
    %3382 = vmatprep.subr.bf16.mxu0 0
    %3383 = vmatpush2.bf16.msra.mxu0 0
    %3384 = vmatprep.subr.bf16.mxu0 0
    %3385 = vmatpush2.bf16.msra.mxu0 0
    %3386 = vmatprep.subr.bf16.mxu0 0
    %3387 = vmatpush2.bf16.msra.mxu0 0
    %3388 = vmatprep.mubr.bf16.mxu0 0
    %3389 = vmatmul.mubr.bf16.gmra.mxu0 %v731
    %v3390 = vpop.f32.mrf.mxu0
    %v3391 = vadd.f32 %v3350, %v3390
    %v3392 = vpop.f32.mrf.mxu0
    %v3393 = vadd.f32 %v3352, %v3392
    %v3394 = vpop.f32.mrf.mxu0
    %v3395 = vpop.f32.mrf.mxu0
    %3396 = vdwg.mxu0
    %3397 = vmatprep.subr.bf16.mxu0 %v2501
    %3398 = vmatpush1.bf16.msra.mxu0 %v2500
    %3399 = vmatprep.subr.bf16.mxu0 %v2494
    %3400 = vmatpush1.bf16.msra.mxu0 %v2493
    %3401 = vmatprep.subr.bf16.mxu0 %v2487
    %3402 = vmatpush1.bf16.msra.mxu0 %v2486
    %3403 = vmatprep.subr.bf16.mxu0 %v2480
    %3404 = vmatpush1.bf16.msra.mxu0 %v2479
    %3405 = vmatprep.subr.bf16.mxu0 %v2473
    %3406 = vmatpush1.bf16.msra.mxu0 %v2472
    %3407 = vmatprep.subr.bf16.mxu0 %v2466
    %3408 = vmatpush1.bf16.msra.mxu0 %v2465
    %3409 = vmatprep.subr.bf16.mxu0 %v2459
    %3410 = vmatpush1.bf16.msra.mxu0 %v2458
    %3411 = vmatprep.subr.bf16.mxu0 %v2452
    %3412 = vmatpush1.bf16.msra.mxu0 %v2451
    %3413 = vmatprep.subr.bf16.mxu0 %v2557
    %3414 = vmatpush2.bf16.msra.mxu0 %v2556
    %3415 = vmatprep.subr.bf16.mxu0 %v2550
    %3416 = vmatpush2.bf16.msra.mxu0 %v2549
    %3417 = vmatprep.subr.bf16.mxu0 %v2543
    %3418 = vmatpush2.bf16.msra.mxu0 %v2542
    %3419 = vmatprep.subr.bf16.mxu0 %v2536
    %3420 = vmatpush2.bf16.msra.mxu0 %v2535
    %3421 = vmatprep.subr.bf16.mxu0 %v2529
    %3422 = vmatpush2.bf16.msra.mxu0 %v2528
    %3423 = vmatprep.subr.bf16.mxu0 %v2522
    %3424 = vmatpush2.bf16.msra.mxu0 %v2521
    %3425 = vmatprep.subr.bf16.mxu0 %v2515
    %3426 = vmatpush2.bf16.msra.mxu0 %v2514
    %3427 = vmatprep.subr.bf16.mxu0 %v2508
    %3428 = vmatpush2.bf16.msra.mxu0 %v2507
    %3429 = vmatprep.mubr.bf16.mxu0 %v726
    %3430 = vmatmul.mubr.bf16.gmra.mxu0 %v725
    %v3431 = vpop.f32.mrf.mxu0
    %v3432 = vadd.f32 %v1193, %v3431
    %v3433 = vpop.f32.mrf.mxu0
    %v3434 = vadd.f32 %v1197, %v3433
    %v3435 = vpop.f32.mrf.mxu0
    %v3436 = vpop.f32.mrf.mxu0
    %3437 = vdwg.mxu0
    %3438 = vmatprep.subr.bf16.mxu0 %v2613
    %3439 = vmatpush1.bf16.msra.mxu0 %v2612
    %3440 = vmatprep.subr.bf16.mxu0 %v2606
    %3441 = vmatpush1.bf16.msra.mxu0 %v2605
    %3442 = vmatprep.subr.bf16.mxu0 %v2599
    %3443 = vmatpush1.bf16.msra.mxu0 %v2598
    %3444 = vmatprep.subr.bf16.mxu0 %v2592
    %3445 = vmatpush1.bf16.msra.mxu0 %v2591
    %3446 = vmatprep.subr.bf16.mxu0 %v2585
    %3447 = vmatpush1.bf16.msra.mxu0 %v2584
    %3448 = vmatprep.subr.bf16.mxu0 %v2578
    %3449 = vmatpush1.bf16.msra.mxu0 %v2577
    %3450 = vmatprep.subr.bf16.mxu0 %v2571
    %3451 = vmatpush1.bf16.msra.mxu0 %v2570
    %3452 = vmatprep.subr.bf16.mxu0 %v2564
    %3453 = vmatpush1.bf16.msra.mxu0 %v2563
    %3454 = vmatprep.subr.bf16.mxu0 %v2669
    %3455 = vmatpush2.bf16.msra.mxu0 %v2668
    %3456 = vmatprep.subr.bf16.mxu0 %v2662
    %3457 = vmatpush2.bf16.msra.mxu0 %v2661
    %3458 = vmatprep.subr.bf16.mxu0 %v2655
    %3459 = vmatpush2.bf16.msra.mxu0 %v2654
    %3460 = vmatprep.subr.bf16.mxu0 %v2648
    %3461 = vmatpush2.bf16.msra.mxu0 %v2647
    %3462 = vmatprep.subr.bf16.mxu0 %v2641
    %3463 = vmatpush2.bf16.msra.mxu0 %v2640
    %3464 = vmatprep.subr.bf16.mxu0 %v2634
    %3465 = vmatpush2.bf16.msra.mxu0 %v2633
    %3466 = vmatprep.subr.bf16.mxu0 %v2627
    %3467 = vmatpush2.bf16.msra.mxu0 %v2626
    %3468 = vmatprep.subr.bf16.mxu0 %v2620
    %3469 = vmatpush2.bf16.msra.mxu0 %v2619
    %3470 = vmatprep.mubr.bf16.mxu0 %v728
    %3471 = vmatmul.mubr.bf16.gmra.mxu0 %v727
    %v3472 = vpop.f32.mrf.mxu0
    %v3473 = vadd.f32 %v3432, %v3472
    %v3474 = vpop.f32.mrf.mxu0
    %v3475 = vadd.f32 %v3434, %v3474
    %v3476 = vpop.f32.mrf.mxu0
    %v3477 = vpop.f32.mrf.mxu0
    %3478 = vdwg.mxu0
    %3479 = vmatprep.subr.bf16.mxu0 %v2725
    %3480 = vmatpush1.bf16.msra.mxu0 %v2724
    %3481 = vmatprep.subr.bf16.mxu0 %v2718
    %3482 = vmatpush1.bf16.msra.mxu0 %v2717
    %3483 = vmatprep.subr.bf16.mxu0 %v2711
    %3484 = vmatpush1.bf16.msra.mxu0 %v2710
    %3485 = vmatprep.subr.bf16.mxu0 %v2704
    %3486 = vmatpush1.bf16.msra.mxu0 %v2703
    %3487 = vmatprep.subr.bf16.mxu0 %v2697
    %3488 = vmatpush1.bf16.msra.mxu0 %v2696
    %3489 = vmatprep.subr.bf16.mxu0 %v2690
    %3490 = vmatpush1.bf16.msra.mxu0 %v2689
    %3491 = vmatprep.subr.bf16.mxu0 %v2683
    %3492 = vmatpush1.bf16.msra.mxu0 %v2682
    %3493 = vmatprep.subr.bf16.mxu0 %v2676
    %3494 = vmatpush1.bf16.msra.mxu0 %v2675
    %3495 = vmatprep.subr.bf16.mxu0 %v2781
    %3496 = vmatpush2.bf16.msra.mxu0 %v2780
    %3497 = vmatprep.subr.bf16.mxu0 %v2774
    %3498 = vmatpush2.bf16.msra.mxu0 %v2773
    %3499 = vmatprep.subr.bf16.mxu0 %v2767
    %3500 = vmatpush2.bf16.msra.mxu0 %v2766
    %3501 = vmatprep.subr.bf16.mxu0 %v2760
    %3502 = vmatpush2.bf16.msra.mxu0 %v2759
    %3503 = vmatprep.subr.bf16.mxu0 %v2753
    %3504 = vmatpush2.bf16.msra.mxu0 %v2752
    %3505 = vmatprep.subr.bf16.mxu0 %v2746
    %3506 = vmatpush2.bf16.msra.mxu0 %v2745
    %3507 = vmatprep.subr.bf16.mxu0 %v2739
    %3508 = vmatpush2.bf16.msra.mxu0 %v2738
    %3509 = vmatprep.subr.bf16.mxu0 %v2732
    %3510 = vmatpush2.bf16.msra.mxu0 %v2731
    %3511 = vmatprep.mubr.bf16.mxu0 %v730
    %3512 = vmatmul.mubr.bf16.gmra.mxu0 %v729
    %v3513 = vpop.f32.mrf.mxu0
    %v3514 = vadd.f32 %v3473, %v3513
    %v3515 = vpop.f32.mrf.mxu0
    %v3516 = vadd.f32 %v3475, %v3515
    %v3517 = vpop.f32.mrf.mxu0
    %v3518 = vpop.f32.mrf.mxu0
    %3519 = vdwg.mxu0
    %3520 = vmatprep.subr.bf16.mxu0 %v2837
    %3521 = vmatpush1.bf16.msra.mxu0 %v2836
    %3522 = vmatprep.subr.bf16.mxu0 %v2830
    %3523 = vmatpush1.bf16.msra.mxu0 %v2829
    %3524 = vmatprep.subr.bf16.mxu0 %v2823
    %3525 = vmatpush1.bf16.msra.mxu0 %v2822
    %3526 = vmatprep.subr.bf16.mxu0 %v2816
    %3527 = vmatpush1.bf16.msra.mxu0 %v2815
    %3528 = vmatprep.subr.bf16.mxu0 %v2809
    %3529 = vmatpush1.bf16.msra.mxu0 %v2808
    %3530 = vmatprep.subr.bf16.mxu0 %v2802
    %3531 = vmatpush1.bf16.msra.mxu0 %v2801
    %3532 = vmatprep.subr.bf16.mxu0 %v2795
    %3533 = vmatpush1.bf16.msra.mxu0 %v2794
    %3534 = vmatprep.subr.bf16.mxu0 %v2788
    %3535 = vmatpush1.bf16.msra.mxu0 %v2787
    %3536 = vmatprep.subr.bf16.mxu0 0
    %3537 = vmatpush2.bf16.msra.mxu0 0
    %3538 = vmatprep.subr.bf16.mxu0 0
    %3539 = vmatpush2.bf16.msra.mxu0 0
    %3540 = vmatprep.subr.bf16.mxu0 0
    %3541 = vmatpush2.bf16.msra.mxu0 0
    %3542 = vmatprep.subr.bf16.mxu0 0
    %3543 = vmatpush2.bf16.msra.mxu0 0
    %3544 = vmatprep.subr.bf16.mxu0 0
    %3545 = vmatpush2.bf16.msra.mxu0 0
    %3546 = vmatprep.subr.bf16.mxu0 0
    %3547 = vmatpush2.bf16.msra.mxu0 0
    %3548 = vmatprep.subr.bf16.mxu0 0
    %3549 = vmatpush2.bf16.msra.mxu0 0
    %3550 = vmatprep.subr.bf16.mxu0 0
    %3551 = vmatpush2.bf16.msra.mxu0 0
    %3552 = vmatprep.mubr.bf16.mxu0 0
    %3553 = vmatmul.mubr.bf16.gmra.mxu0 %v731
    %v3554 = vpop.f32.mrf.mxu0
    %v3555 = vadd.f32 %v3514, %v3554
    %v3556 = vpop.f32.mrf.mxu0
    %v3557 = vadd.f32 %v3516, %v3556
    %v3558 = vpop.f32.mrf.mxu0
    %v3559 = vpop.f32.mrf.mxu0
    %3560 = vdwg.mxu0
    %3561 = vmatprep.subr.bf16.mxu0 %v2503
    %3562 = vmatpush1.bf16.msra.mxu0 %v2502
    %3563 = vmatprep.subr.bf16.mxu0 %v2496
    %3564 = vmatpush1.bf16.msra.mxu0 %v2495
    %3565 = vmatprep.subr.bf16.mxu0 %v2489
    %3566 = vmatpush1.bf16.msra.mxu0 %v2488
    %3567 = vmatprep.subr.bf16.mxu0 %v2482
    %3568 = vmatpush1.bf16.msra.mxu0 %v2481
    %3569 = vmatprep.subr.bf16.mxu0 %v2475
    %3570 = vmatpush1.bf16.msra.mxu0 %v2474
    %3571 = vmatprep.subr.bf16.mxu0 %v2468
    %3572 = vmatpush1.bf16.msra.mxu0 %v2467
    %3573 = vmatprep.subr.bf16.mxu0 %v2461
    %3574 = vmatpush1.bf16.msra.mxu0 %v2460
    %3575 = vmatprep.subr.bf16.mxu0 %v2454
    %3576 = vmatpush1.bf16.msra.mxu0 %v2453
    %3577 = vmatprep.subr.bf16.mxu0 %v2559
    %3578 = vmatpush2.bf16.msra.mxu0 %v2558
    %3579 = vmatprep.subr.bf16.mxu0 %v2552
    %3580 = vmatpush2.bf16.msra.mxu0 %v2551
    %3581 = vmatprep.subr.bf16.mxu0 %v2545
    %3582 = vmatpush2.bf16.msra.mxu0 %v2544
    %3583 = vmatprep.subr.bf16.mxu0 %v2538
    %3584 = vmatpush2.bf16.msra.mxu0 %v2537
    %3585 = vmatprep.subr.bf16.mxu0 %v2531
    %3586 = vmatpush2.bf16.msra.mxu0 %v2530
    %3587 = vmatprep.subr.bf16.mxu0 %v2524
    %3588 = vmatpush2.bf16.msra.mxu0 %v2523
    %3589 = vmatprep.subr.bf16.mxu0 %v2517
    %3590 = vmatpush2.bf16.msra.mxu0 %v2516
    %3591 = vmatprep.subr.bf16.mxu0 %v2510
    %3592 = vmatpush2.bf16.msra.mxu0 %v2509
    %3593 = vmatprep.mubr.bf16.mxu0 %v726
    %3594 = vmatmul.mubr.bf16.gmra.mxu0 %v725
    %v3595 = vpop.f32.mrf.mxu0
    %v3596 = vadd.f32 %v1201, %v3595
    %v3597 = vpop.f32.mrf.mxu0
    %v3598 = vadd.f32 %v1205, %v3597
    %v3599 = vpop.f32.mrf.mxu0
    %v3600 = vpop.f32.mrf.mxu0
    %3601 = vdwg.mxu0
    %3602 = vmatprep.subr.bf16.mxu0 %v2615
    %3603 = vmatpush1.bf16.msra.mxu0 %v2614
    %3604 = vmatprep.subr.bf16.mxu0 %v2608
    %3605 = vmatpush1.bf16.msra.mxu0 %v2607
    %3606 = vmatprep.subr.bf16.mxu0 %v2601
    %3607 = vmatpush1.bf16.msra.mxu0 %v2600
    %3608 = vmatprep.subr.bf16.mxu0 %v2594
    %3609 = vmatpush1.bf16.msra.mxu0 %v2593
    %3610 = vmatprep.subr.bf16.mxu0 %v2587
    %3611 = vmatpush1.bf16.msra.mxu0 %v2586
    %3612 = vmatprep.subr.bf16.mxu0 %v2580
    %3613 = vmatpush1.bf16.msra.mxu0 %v2579
    %3614 = vmatprep.subr.bf16.mxu0 %v2573
    %3615 = vmatpush1.bf16.msra.mxu0 %v2572
    %3616 = vmatprep.subr.bf16.mxu0 %v2566
    %3617 = vmatpush1.bf16.msra.mxu0 %v2565
    %3618 = vmatprep.subr.bf16.mxu0 %v2671
    %3619 = vmatpush2.bf16.msra.mxu0 %v2670
    %3620 = vmatprep.subr.bf16.mxu0 %v2664
    %3621 = vmatpush2.bf16.msra.mxu0 %v2663
    %3622 = vmatprep.subr.bf16.mxu0 %v2657
    %3623 = vmatpush2.bf16.msra.mxu0 %v2656
    %3624 = vmatprep.subr.bf16.mxu0 %v2650
    %3625 = vmatpush2.bf16.msra.mxu0 %v2649
    %3626 = vmatprep.subr.bf16.mxu0 %v2643
    %3627 = vmatpush2.bf16.msra.mxu0 %v2642
    %3628 = vmatprep.subr.bf16.mxu0 %v2636
    %3629 = vmatpush2.bf16.msra.mxu0 %v2635
    %3630 = vmatprep.subr.bf16.mxu0 %v2629
    %3631 = vmatpush2.bf16.msra.mxu0 %v2628
    %3632 = vmatprep.subr.bf16.mxu0 %v2622
    %3633 = vmatpush2.bf16.msra.mxu0 %v2621
    %3634 = vmatprep.mubr.bf16.mxu0 %v728
    %3635 = vmatmul.mubr.bf16.gmra.mxu0 %v727
    %v3636 = vpop.f32.mrf.mxu0
    %v3637 = vadd.f32 %v3596, %v3636
    %v3638 = vpop.f32.mrf.mxu0
    %v3639 = vadd.f32 %v3598, %v3638
    %v3640 = vpop.f32.mrf.mxu0
    %v3641 = vpop.f32.mrf.mxu0
    %3642 = vdwg.mxu0
    %3643 = vmatprep.subr.bf16.mxu0 %v2727
    %3644 = vmatpush1.bf16.msra.mxu0 %v2726
    %3645 = vmatprep.subr.bf16.mxu0 %v2720
    %3646 = vmatpush1.bf16.msra.mxu0 %v2719
    %3647 = vmatprep.subr.bf16.mxu0 %v2713
    %3648 = vmatpush1.bf16.msra.mxu0 %v2712
    %3649 = vmatprep.subr.bf16.mxu0 %v2706
    %3650 = vmatpush1.bf16.msra.mxu0 %v2705
    %3651 = vmatprep.subr.bf16.mxu0 %v2699
    %3652 = vmatpush1.bf16.msra.mxu0 %v2698
    %3653 = vmatprep.subr.bf16.mxu0 %v2692
    %3654 = vmatpush1.bf16.msra.mxu0 %v2691
    %3655 = vmatprep.subr.bf16.mxu0 %v2685
    %3656 = vmatpush1.bf16.msra.mxu0 %v2684
    %3657 = vmatprep.subr.bf16.mxu0 %v2678
    %3658 = vmatpush1.bf16.msra.mxu0 %v2677
    %3659 = vmatprep.subr.bf16.mxu0 %v2783
    %3660 = vmatpush2.bf16.msra.mxu0 %v2782
    %3661 = vmatprep.subr.bf16.mxu0 %v2776
    %3662 = vmatpush2.bf16.msra.mxu0 %v2775
    %3663 = vmatprep.subr.bf16.mxu0 %v2769
    %3664 = vmatpush2.bf16.msra.mxu0 %v2768
    %3665 = vmatprep.subr.bf16.mxu0 %v2762
    %3666 = vmatpush2.bf16.msra.mxu0 %v2761
    %3667 = vmatprep.subr.bf16.mxu0 %v2755
    %3668 = vmatpush2.bf16.msra.mxu0 %v2754
    %3669 = vmatprep.subr.bf16.mxu0 %v2748
    %3670 = vmatpush2.bf16.msra.mxu0 %v2747
    %3671 = vmatprep.subr.bf16.mxu0 %v2741
    %3672 = vmatpush2.bf16.msra.mxu0 %v2740
    %3673 = vmatprep.subr.bf16.mxu0 %v2734
    %3674 = vmatpush2.bf16.msra.mxu0 %v2733
    %3675 = vmatprep.mubr.bf16.mxu0 %v730
    %3676 = vmatmul.mubr.bf16.gmra.mxu0 %v729
    %v3677 = vpop.f32.mrf.mxu0
    %v3678 = vadd.f32 %v3637, %v3677
    %v3679 = vpop.f32.mrf.mxu0
    %v3680 = vadd.f32 %v3639, %v3679
    %v3681 = vpop.f32.mrf.mxu0
    %v3682 = vpop.f32.mrf.mxu0
    %3683 = vdwg.mxu0
    %3684 = vmatprep.subr.bf16.mxu0 %v2839
    %3685 = vmatpush1.bf16.msra.mxu0 %v2838
    %3686 = vmatprep.subr.bf16.mxu0 %v2832
    %3687 = vmatpush1.bf16.msra.mxu0 %v2831
    %3688 = vmatprep.subr.bf16.mxu0 %v2825
    %3689 = vmatpush1.bf16.msra.mxu0 %v2824
    %3690 = vmatprep.subr.bf16.mxu0 %v2818
    %3691 = vmatpush1.bf16.msra.mxu0 %v2817
    %3692 = vmatprep.subr.bf16.mxu0 %v2811
    %3693 = vmatpush1.bf16.msra.mxu0 %v2810
    %3694 = vmatprep.subr.bf16.mxu0 %v2804
    %3695 = vmatpush1.bf16.msra.mxu0 %v2803
    %3696 = vmatprep.subr.bf16.mxu0 %v2797
    %3697 = vmatpush1.bf16.msra.mxu0 %v2796
    %3698 = vmatprep.subr.bf16.mxu0 %v2790
    %3699 = vmatpush1.bf16.msra.mxu0 %v2789
    %3700 = vmatprep.subr.bf16.mxu0 0
    %3701 = vmatpush2.bf16.msra.mxu0 0
    %3702 = vmatprep.subr.bf16.mxu0 0
    %3703 = vmatpush2.bf16.msra.mxu0 0
    %3704 = vmatprep.subr.bf16.mxu0 0
    %3705 = vmatpush2.bf16.msra.mxu0 0
    %3706 = vmatprep.subr.bf16.mxu0 0
    %3707 = vmatpush2.bf16.msra.mxu0 0
    %3708 = vmatprep.subr.bf16.mxu0 0
    %3709 = vmatpush2.bf16.msra.mxu0 0
    %3710 = vmatprep.subr.bf16.mxu0 0
    %3711 = vmatpush2.bf16.msra.mxu0 0
    %3712 = vmatprep.subr.bf16.mxu0 0
    %3713 = vmatpush2.bf16.msra.mxu0 0
    %3714 = vmatprep.subr.bf16.mxu0 0
    %3715 = vmatpush2.bf16.msra.mxu0 0
    %3716 = vmatprep.mubr.bf16.mxu0 0
    %3717 = vmatmul.mubr.bf16.gmra.mxu0 %v731
    %v3718 = vpop.f32.mrf.mxu0
    %v3719 = vadd.f32 %v3678, %v3718
    %v3720 = vpop.f32.mrf.mxu0
    %v3721 = vadd.f32 %v3680, %v3720
    %v3722 = vpop.f32.mrf.mxu0
    %v3723 = vpop.f32.mrf.mxu0
    %3724 = vdwg.mxu0
    %3725 = vmatprep.subr.bf16.mxu0 0
    %3726 = vmatpush1.bf16.msra.mxu0 %v2504
    %3727 = vmatprep.subr.bf16.mxu0 0
    %3728 = vmatpush1.bf16.msra.mxu0 %v2497
    %3729 = vmatprep.subr.bf16.mxu0 0
    %3730 = vmatpush1.bf16.msra.mxu0 %v2490
    %3731 = vmatprep.subr.bf16.mxu0 0
    %3732 = vmatpush1.bf16.msra.mxu0 %v2483
    %3733 = vmatprep.subr.bf16.mxu0 0
    %3734 = vmatpush1.bf16.msra.mxu0 %v2476
    %3735 = vmatprep.subr.bf16.mxu0 0
    %3736 = vmatpush1.bf16.msra.mxu0 %v2469
    %3737 = vmatprep.subr.bf16.mxu0 0
    %3738 = vmatpush1.bf16.msra.mxu0 %v2462
    %3739 = vmatprep.subr.bf16.mxu0 0
    %3740 = vmatpush1.bf16.msra.mxu0 %v2455
    %3741 = vmatprep.subr.bf16.mxu0 0
    %3742 = vmatpush2.bf16.msra.mxu0 %v2560
    %3743 = vmatprep.subr.bf16.mxu0 0
    %3744 = vmatpush2.bf16.msra.mxu0 %v2553
    %3745 = vmatprep.subr.bf16.mxu0 0
    %3746 = vmatpush2.bf16.msra.mxu0 %v2546
    %3747 = vmatprep.subr.bf16.mxu0 0
    %3748 = vmatpush2.bf16.msra.mxu0 %v2539
    %3749 = vmatprep.subr.bf16.mxu0 0
    %3750 = vmatpush2.bf16.msra.mxu0 %v2532
    %3751 = vmatprep.subr.bf16.mxu0 0
    %3752 = vmatpush2.bf16.msra.mxu0 %v2525
    %3753 = vmatprep.subr.bf16.mxu0 0
    %3754 = vmatpush2.bf16.msra.mxu0 %v2518
    %3755 = vmatprep.subr.bf16.mxu0 0
    %3756 = vmatpush2.bf16.msra.mxu0 %v2511
    %3757 = vmatprep.mubr.bf16.mxu0 %v726
    %3758 = vmatmul.mubr.bf16.gmra.mxu0 %v725
    %v3759 = vpop.f32.mrf.mxu0
    %v3760 = vadd.f32 %v1209, %v3759
    %v3761 = vpop.f32.mrf.mxu0
    %v3762 = vpop.f32.mrf.mxu0
    %v3763 = vpop.f32.mrf.mxu0
    %3764 = vdwg.mxu0
    %3765 = vmatprep.subr.bf16.mxu0 0
    %3766 = vmatpush1.bf16.msra.mxu0 %v2616
    %3767 = vmatprep.subr.bf16.mxu0 0
    %3768 = vmatpush1.bf16.msra.mxu0 %v2609
    %3769 = vmatprep.subr.bf16.mxu0 0
    %3770 = vmatpush1.bf16.msra.mxu0 %v2602
    %3771 = vmatprep.subr.bf16.mxu0 0
    %3772 = vmatpush1.bf16.msra.mxu0 %v2595
    %3773 = vmatprep.subr.bf16.mxu0 0
    %3774 = vmatpush1.bf16.msra.mxu0 %v2588
    %3775 = vmatprep.subr.bf16.mxu0 0
    %3776 = vmatpush1.bf16.msra.mxu0 %v2581
    %3777 = vmatprep.subr.bf16.mxu0 0
    %3778 = vmatpush1.bf16.msra.mxu0 %v2574
    %3779 = vmatprep.subr.bf16.mxu0 0
    %3780 = vmatpush1.bf16.msra.mxu0 %v2567
    %3781 = vmatprep.subr.bf16.mxu0 0
    %3782 = vmatpush2.bf16.msra.mxu0 %v2672
    %3783 = vmatprep.subr.bf16.mxu0 0
    %3784 = vmatpush2.bf16.msra.mxu0 %v2665
    %3785 = vmatprep.subr.bf16.mxu0 0
    %3786 = vmatpush2.bf16.msra.mxu0 %v2658
    %3787 = vmatprep.subr.bf16.mxu0 0
    %3788 = vmatpush2.bf16.msra.mxu0 %v2651
    %3789 = vmatprep.subr.bf16.mxu0 0
    %3790 = vmatpush2.bf16.msra.mxu0 %v2644
    %3791 = vmatprep.subr.bf16.mxu0 0
    %3792 = vmatpush2.bf16.msra.mxu0 %v2637
    %3793 = vmatprep.subr.bf16.mxu0 0
    %3794 = vmatpush2.bf16.msra.mxu0 %v2630
    %3795 = vmatprep.subr.bf16.mxu0 0
    %3796 = vmatpush2.bf16.msra.mxu0 %v2623
    %3797 = vmatprep.mubr.bf16.mxu0 %v728
    %3798 = vmatmul.mubr.bf16.gmra.mxu0 %v727
    %v3799 = vpop.f32.mrf.mxu0
    %v3800 = vadd.f32 %v3760, %v3799
    %v3801 = vpop.f32.mrf.mxu0
    %v3802 = vpop.f32.mrf.mxu0
    %v3803 = vpop.f32.mrf.mxu0
    %3804 = vdwg.mxu0
    %3805 = vmatprep.subr.bf16.mxu0 0
    %3806 = vmatpush1.bf16.msra.mxu0 %v2728
    %3807 = vmatprep.subr.bf16.mxu0 0
    %3808 = vmatpush1.bf16.msra.mxu0 %v2721
    %3809 = vmatprep.subr.bf16.mxu0 0
    %3810 = vmatpush1.bf16.msra.mxu0 %v2714
    %3811 = vmatprep.subr.bf16.mxu0 0
    %3812 = vmatpush1.bf16.msra.mxu0 %v2707
    %3813 = vmatprep.subr.bf16.mxu0 0
    %3814 = vmatpush1.bf16.msra.mxu0 %v2700
    %3815 = vmatprep.subr.bf16.mxu0 0
    %3816 = vmatpush1.bf16.msra.mxu0 %v2693
    %3817 = vmatprep.subr.bf16.mxu0 0
    %3818 = vmatpush1.bf16.msra.mxu0 %v2686
    %3819 = vmatprep.subr.bf16.mxu0 0
    %3820 = vmatpush1.bf16.msra.mxu0 %v2679
    %3821 = vmatprep.subr.bf16.mxu0 0
    %3822 = vmatpush2.bf16.msra.mxu0 %v2784
    %3823 = vmatprep.subr.bf16.mxu0 0
    %3824 = vmatpush2.bf16.msra.mxu0 %v2777
    %3825 = vmatprep.subr.bf16.mxu0 0
    %3826 = vmatpush2.bf16.msra.mxu0 %v2770
    %3827 = vmatprep.subr.bf16.mxu0 0
    %3828 = vmatpush2.bf16.msra.mxu0 %v2763
    %3829 = vmatprep.subr.bf16.mxu0 0
    %3830 = vmatpush2.bf16.msra.mxu0 %v2756
    %3831 = vmatprep.subr.bf16.mxu0 0
    %3832 = vmatpush2.bf16.msra.mxu0 %v2749
    %3833 = vmatprep.subr.bf16.mxu0 0
    %3834 = vmatpush2.bf16.msra.mxu0 %v2742
    %3835 = vmatprep.subr.bf16.mxu0 0
    %3836 = vmatpush2.bf16.msra.mxu0 %v2735
    %3837 = vmatprep.mubr.bf16.mxu0 %v730
    %3838 = vmatmul.mubr.bf16.gmra.mxu0 %v729
    %v3839 = vpop.f32.mrf.mxu0
    %v3840 = vadd.f32 %v3800, %v3839
    %v3841 = vpop.f32.mrf.mxu0
    %v3842 = vpop.f32.mrf.mxu0
    %v3843 = vpop.f32.mrf.mxu0
    %3844 = vdwg.mxu0
    %3845 = vmatprep.subr.bf16.mxu0 0
    %3846 = vmatpush1.bf16.msra.mxu0 %v2840
    %3847 = vmatprep.subr.bf16.mxu0 0
    %3848 = vmatpush1.bf16.msra.mxu0 %v2833
    %3849 = vmatprep.subr.bf16.mxu0 0
    %3850 = vmatpush1.bf16.msra.mxu0 %v2826
    %3851 = vmatprep.subr.bf16.mxu0 0
    %3852 = vmatpush1.bf16.msra.mxu0 %v2819
    %3853 = vmatprep.subr.bf16.mxu0 0
    %3854 = vmatpush1.bf16.msra.mxu0 %v2812
    %3855 = vmatprep.subr.bf16.mxu0 0
    %3856 = vmatpush1.bf16.msra.mxu0 %v2805
    %3857 = vmatprep.subr.bf16.mxu0 0
    %3858 = vmatpush1.bf16.msra.mxu0 %v2798
    %3859 = vmatprep.subr.bf16.mxu0 0
    %3860 = vmatpush1.bf16.msra.mxu0 %v2791
    %3861 = vmatprep.subr.bf16.mxu0 0
    %3862 = vmatpush2.bf16.msra.mxu0 0
    %3863 = vmatprep.subr.bf16.mxu0 0
    %3864 = vmatpush2.bf16.msra.mxu0 0
    %3865 = vmatprep.subr.bf16.mxu0 0
    %3866 = vmatpush2.bf16.msra.mxu0 0
    %3867 = vmatprep.subr.bf16.mxu0 0
    %3868 = vmatpush2.bf16.msra.mxu0 0
    %3869 = vmatprep.subr.bf16.mxu0 0
    %3870 = vmatpush2.bf16.msra.mxu0 0
    %3871 = vmatprep.subr.bf16.mxu0 0
    %3872 = vmatpush2.bf16.msra.mxu0 0
    %3873 = vmatprep.subr.bf16.mxu0 0
    %3874 = vmatpush2.bf16.msra.mxu0 0
    %3875 = vmatprep.subr.bf16.mxu0 0
    %3876 = vmatpush2.bf16.msra.mxu0 0
    %3877 = vmatprep.mubr.bf16.mxu0 0
    %3878 = vmatmul.mubr.bf16.gmra.mxu0 %v731
    %v3879 = vpop.f32.mrf.mxu0
    %v3880 = vadd.f32 %v3840, %v3879
    %v3881 = vpop.f32.mrf.mxu0
    %v3882 = vpop.f32.mrf.mxu0
    %v3883 = vpop.f32.mrf.mxu0
    %3884 = vdwg.mxu0
    %v3885 = vmax.f32 %v3391, 0.0
    %v3886 = vmax.f32 %v3393, 0.0
    %v3887 = vmax.f32 %v3555, 0.0
    %v3888 = vmax.f32 %v3557, 0.0
    %v3889 = vmax.f32 %v3719, 0.0
    %v3890 = vmax.f32 %v3721, 0.0
    %v3891 = vmax.f32 %v3880, 0.0
    %v3892 = vpack.c.bf16 %v3885, %v3885
    %v3893 = vpack.c.bf16 %v3886, %v3886
    %v3894 = vpack.c.bf16 %v3887, %v3887
    %v3895 = vpack.c.bf16 %v3888, %v3888
    %v3896 = vpack.c.bf16 %v3889, %v3889
    %v3897 = vpack.c.bf16 %v3890, %v3890
    %v3898 = vpack.c.bf16 %v3891, %v3891
    %v3899 = vld [vmem:[#allocation9] sm:$0xff]
    %v3900 = vld [vmem:[#allocation9 + $0x8] sm:$0xff]
    %v3901 = vld [vmem:[#allocation9 + $0x10] sm:$0xff]
    %v3902 = vld [vmem:[#allocation9 + $0x18] sm:$0xff]
    %v3903 = vld [vmem:[#allocation9 + $0x20] sm:$0xff]
    %v3904 = vld [vmem:[#allocation9 + $0x28] sm:$0xff]
    %v3905 = vld [vmem:[#allocation9 + $0x30] sm:$0xff]
    %v3906 = vld [vmem:[#allocation9 + $0x38] sm:$0xff]
    %v3907 = vld [vmem:[#allocation9 + $0x40] sm:$0xff]
    %v3908 = vld [vmem:[#allocation9 + $0x48] sm:$0xff]
    %v3909 = vld [vmem:[#allocation9 + $0x50] sm:$0xff]
    %v3910 = vld [vmem:[#allocation9 + $0x58] sm:$0xff]
    %v3911 = vld [vmem:[#allocation9 + $0x60] sm:$0xff]
    %v3912 = vld [vmem:[#allocation9 + $0x68] sm:$0xff]
    %v3913 = vld [vmem:[#allocation9 + $0x70] sm:$0xff]
    %v3914 = vld [vmem:[#allocation9 + $0x78] sm:$0xff]
    %v3915 = vld [vmem:[#allocation9 + $0x80] sm:$0xff]
    %v3916 = vld [vmem:[#allocation9 + $0x88] sm:$0xff]
    %v3917 = vld [vmem:[#allocation9 + $0x90] sm:$0xff]
    %v3918 = vld [vmem:[#allocation9 + $0x98] sm:$0xff]
    %v3919 = vld [vmem:[#allocation9 + $0xa0] sm:$0xff]
    %v3920 = vld [vmem:[#allocation9 + $0xa8] sm:$0xff]
    %v3921 = vld [vmem:[#allocation9 + $0xb0] sm:$0xff]
    %v3922 = vld [vmem:[#allocation9 + $0xb8] sm:$0xff]
    %v3923 = vld [vmem:[#allocation9 + $0xc0] sm:$0xff]
    %v3924 = vld [vmem:[#allocation9 + $0xc8] sm:$0xff]
    %v3925 = vld [vmem:[#allocation9 + $0xd0] sm:$0xff]
    %v3926 = vld [vmem:[#allocation9 + $0xd8] sm:$0xff]
    %v3927 = vld [vmem:[#allocation9 + $0xe0] sm:$0xff]
    %v3928 = vld [vmem:[#allocation9 + $0xe8] sm:$0xff]
    %v3929 = vld [vmem:[#allocation9 + $0xf0] sm:$0xff]
    %v3930 = vld [vmem:[#allocation9 + $0xf8] sm:$0xff]
    %v3931 = vld [vmem:[#allocation9 + $0x100] sm:$0xff]
    %v3932 = vld [vmem:[#allocation9 + $0x108] sm:$0xff]
    %v3933 = vld [vmem:[#allocation9 + $0x110] sm:$0xff]
    %v3934 = vld [vmem:[#allocation9 + $0x118] sm:$0xff]
    %v3935 = vld [vmem:[#allocation9 + $0x120] sm:$0xff]
    %v3936 = vld [vmem:[#allocation9 + $0x128] sm:$0xff]
    %v3937 = vld [vmem:[#allocation9 + $0x130] sm:$0xff]
    %v3938 = vld [vmem:[#allocation9 + $0x138] sm:$0xff]
    %v3939 = vld [vmem:[#allocation9 + $0x140] sm:$0xff]
    %v3940 = vld [vmem:[#allocation9 + $0x148] sm:$0xff]
    %v3941 = vld [vmem:[#allocation9 + $0x150] sm:$0xff]
    %v3942 = vld [vmem:[#allocation9 + $0x158] sm:$0xff]
    %v3943 = vld [vmem:[#allocation9 + $0x160] sm:$0xff]
    %v3944 = vld [vmem:[#allocation9 + $0x168] sm:$0xff]
    %v3945 = vld [vmem:[#allocation9 + $0x170] sm:$0xff]
    %v3946 = vld [vmem:[#allocation9 + $0x178] sm:$0xff]
    %v3947 = vld [vmem:[#allocation9 + $0x180] sm:$0xff]
    %v3948 = vld [vmem:[#allocation9 + $0x188] sm:$0xff]
    %v3949 = vld [vmem:[#allocation9 + $0x190] sm:$0xff]
    %v3950 = vld [vmem:[#allocation9 + $0x198] sm:$0xff]
    %v3951 = vld [vmem:[#allocation9 + $0x1a0] sm:$0xff]
    %v3952 = vld [vmem:[#allocation9 + $0x1a8] sm:$0xff]
    %v3953 = vld [vmem:[#allocation9 + $0x1b0] sm:$0xff]
    %v3954 = vld [vmem:[#allocation9 + $0x1b8] sm:$0xff]
    %v3955 = vld [vmem:[#allocation9 + $0x1c0] sm:$0xff]
    %v3956 = vld [vmem:[#allocation9 + $0x1c8] sm:$0xff]
    %v3957 = vld [vmem:[#allocation9 + $0x1d0] sm:$0xff]
    %v3958 = vld [vmem:[#allocation9 + $0x1d8] sm:$0xff]
    %v3959 = vld [vmem:[#allocation9 + $0x1e0] sm:$0xff]
    %v3960 = vld [vmem:[#allocation9 + $0x1e8] sm:$0xff]
    %v3961 = vld [vmem:[#allocation9 + $0x1f0] sm:$0xff]
    %v3962 = vld [vmem:[#allocation9 + $0x1f8] sm:$0xff]
    %v3963 = vld [vmem:[#allocation9 + $0x200] sm:$0xff]
    %v3964 = vld [vmem:[#allocation9 + $0x208] sm:$0xff]
    %v3965 = vld [vmem:[#allocation9 + $0x210] sm:$0xff]
    %v3966 = vld [vmem:[#allocation9 + $0x218] sm:$0xff]
    %v3967 = vld [vmem:[#allocation9 + $0x220] sm:$0xff]
    %v3968 = vld [vmem:[#allocation9 + $0x228] sm:$0xff]
    %v3969 = vld [vmem:[#allocation9 + $0x230] sm:$0xff]
    %v3970 = vld [vmem:[#allocation9 + $0x238] sm:$0xff]
    %v3971 = vld [vmem:[#allocation9 + $0x240] sm:$0xff]
    %v3972 = vld [vmem:[#allocation9 + $0x248] sm:$0xff]
    %v3973 = vld [vmem:[#allocation9 + $0x250] sm:$0xff]
    %v3974 = vld [vmem:[#allocation9 + $0x258] sm:$0xff]
    %v3975 = vld [vmem:[#allocation9 + $0x260] sm:$0xff]
    %v3976 = vld [vmem:[#allocation9 + $0x268] sm:$0xff]
    %v3977 = vld [vmem:[#allocation9 + $0x270] sm:$0xff]
    %v3978 = vld [vmem:[#allocation9 + $0x278] sm:$0xff]
    %v3979 = vld [vmem:[#allocation9 + $0x280] sm:$0xff]
    %v3980 = vld [vmem:[#allocation9 + $0x288] sm:$0xff]
    %v3981 = vld [vmem:[#allocation9 + $0x290] sm:$0xff]
    %v3982 = vld [vmem:[#allocation9 + $0x298] sm:$0xff]
    %v3983 = vld [vmem:[#allocation9 + $0x2a0] sm:$0xff]
    %v3984 = vld [vmem:[#allocation9 + $0x2a8] sm:$0xff]
    %v3985 = vld [vmem:[#allocation9 + $0x2b0] sm:$0xff]
    %v3986 = vld [vmem:[#allocation9 + $0x2b8] sm:$0xff]
    %v3987 = vld [vmem:[#allocation9 + $0x2c0] sm:$0xff]
    %v3988 = vld [vmem:[#allocation9 + $0x2c8] sm:$0xff]
    %v3989 = vld [vmem:[#allocation9 + $0x2d0] sm:$0xff]
    %v3990 = vld [vmem:[#allocation9 + $0x2d8] sm:$0xff]
    %v3991 = vld [vmem:[#allocation9 + $0x2e0] sm:$0xff]
    %v3992 = vld [vmem:[#allocation9 + $0x2e8] sm:$0xff]
    %v3993 = vld [vmem:[#allocation9 + $0x2f0] sm:$0xff]
    %v3994 = vld [vmem:[#allocation9 + $0x2f8] sm:$0xff]
    %v3995 = vld [vmem:[#allocation9 + $0x300] sm:$0xff]
    %v3996 = vld [vmem:[#allocation9 + $0x308] sm:$0xff]
    %v3997 = vld [vmem:[#allocation9 + $0x310] sm:$0xff]
    %v3998 = vld [vmem:[#allocation9 + $0x318] sm:$0xff]
    %v3999 = vld [vmem:[#allocation9 + $0x320] sm:$0xff]
    %v4000 = vld [vmem:[#allocation9 + $0x328] sm:$0xff]
    %v4001 = vld [vmem:[#allocation9 + $0x330] sm:$0xff]
    %v4002 = vld [vmem:[#allocation9 + $0x338] sm:$0xff]
    %v4003 = vld [vmem:[#allocation9 + $0x340] sm:$0xff]
    %v4004 = vld [vmem:[#allocation9 + $0x348] sm:$0xff]
    %v4005 = vld [vmem:[#allocation9 + $0x350] sm:$0xff]
    %v4006 = vld [vmem:[#allocation9 + $0x358] sm:$0xff]
    %v4007 = vld [vmem:[#allocation9 + $0x360] sm:$0xff]
    %v4008 = vld [vmem:[#allocation9 + $0x368] sm:$0xff]
    %v4009 = vld [vmem:[#allocation9 + $0x370] sm:$0xff]
    %v4010 = vld [vmem:[#allocation9 + $0x378] sm:$0xff]
    %v4011 = vld [vmem:[#allocation9 + $0x380] sm:$0xff]
    %v4012 = vld [vmem:[#allocation9 + $0x388] sm:$0xff]
    %v4013 = vld [vmem:[#allocation9 + $0x390] sm:$0xff]
    %v4014 = vld [vmem:[#allocation9 + $0x398] sm:$0xff]
    %v4015 = vld [vmem:[#allocation9 + $0x3a0] sm:$0xff]
    %v4016 = vld [vmem:[#allocation9 + $0x3a8] sm:$0xff]
    %v4017 = vld [vmem:[#allocation9 + $0x3b0] sm:$0xff]
    %v4018 = vld [vmem:[#allocation9 + $0x3b8] sm:$0xff]
    %v4019 = vld [vmem:[#allocation9 + $0x3c0] sm:$0xff]
    %v4020 = vld [vmem:[#allocation9 + $0x3c8] sm:$0xff]
    %v4021 = vld [vmem:[#allocation9 + $0x3d0] sm:$0xff]
    %v4022 = vld [vmem:[#allocation9 + $0x3d8] sm:$0xff]
    %v4023 = vld [vmem:[#allocation9 + $0x3e0] sm:$0xff]
    %v4024 = vld [vmem:[#allocation9 + $0x3e8] sm:$0xff]
    %v4025 = vld [vmem:[#allocation9 + $0x3f0] sm:$0xff]
    %v4026 = vld [vmem:[#allocation9 + $0x3f8] sm:$0xff]
    %v4027 = vld [vmem:[#allocation9 + $0x400] sm:$0xff]
    %v4028 = vld [vmem:[#allocation9 + $0x408] sm:$0xff]
    %v4029 = vld [vmem:[#allocation9 + $0x410] sm:$0xff]
    %v4030 = vld [vmem:[#allocation9 + $0x418] sm:$0xff]
    %v4031 = vld [vmem:[#allocation9 + $0x420] sm:$0xff]
    %v4032 = vld [vmem:[#allocation9 + $0x428] sm:$0xff]
    %v4033 = vld [vmem:[#allocation9 + $0x430] sm:$0xff]
    %v4034 = vld [vmem:[#allocation9 + $0x438] sm:$0xff]
    %v4035 = vld [vmem:[#allocation9 + $0x440] sm:$0xff]
    %v4036 = vld [vmem:[#allocation9 + $0x448] sm:$0xff]
    %v4037 = vld [vmem:[#allocation9 + $0x450] sm:$0xff]
    %v4038 = vld [vmem:[#allocation9 + $0x458] sm:$0xff]
    %v4039 = vld [vmem:[#allocation9 + $0x460] sm:$0xff]
    %v4040 = vld [vmem:[#allocation9 + $0x468] sm:$0xff]
    %v4041 = vld [vmem:[#allocation9 + $0x470] sm:$0xff]
    %v4042 = vld [vmem:[#allocation9 + $0x478] sm:$0xff]
    %v4043 = vld [vmem:[#allocation9 + $0x480] sm:$0xff]
    %v4044 = vld [vmem:[#allocation9 + $0x488] sm:$0xff]
    %v4045 = vld [vmem:[#allocation9 + $0x490] sm:$0xff]
    %v4046 = vld [vmem:[#allocation9 + $0x498] sm:$0xff]
    %v4047 = vld [vmem:[#allocation9 + $0x4a0] sm:$0xff]
    %v4048 = vld [vmem:[#allocation9 + $0x4a8] sm:$0xff]
    %v4049 = vld [vmem:[#allocation9 + $0x4b0] sm:$0xff]
    %v4050 = vld [vmem:[#allocation9 + $0x4b8] sm:$0xff]
    %v4051 = vld [vmem:[#allocation9 + $0x4c0] sm:$0xff]
    %v4052 = vld [vmem:[#allocation9 + $0x4c8] sm:$0xff]
    %v4053 = vld [vmem:[#allocation9 + $0x4d0] sm:$0xff]
    %v4054 = vld [vmem:[#allocation9 + $0x4d8] sm:$0xff]
    %v4055 = vld [vmem:[#allocation9 + $0x4e0] sm:$0xff]
    %v4056 = vld [vmem:[#allocation9 + $0x4e8] sm:$0xff]
    %v4057 = vld [vmem:[#allocation9 + $0x4f0] sm:$0xff]
    %v4058 = vld [vmem:[#allocation9 + $0x4f8] sm:$0xff]
    %v4059 = vld [vmem:[#allocation9 + $0x500] sm:$0xff]
    %v4060 = vld [vmem:[#allocation9 + $0x508] sm:$0xff]
    %v4061 = vld [vmem:[#allocation9 + $0x510] sm:$0xff]
    %v4062 = vld [vmem:[#allocation9 + $0x518] sm:$0xff]
    %v4063 = vld [vmem:[#allocation9 + $0x520] sm:$0xff]
    %v4064 = vld [vmem:[#allocation9 + $0x528] sm:$0xff]
    %v4065 = vld [vmem:[#allocation9 + $0x530] sm:$0xff]
    %v4066 = vld [vmem:[#allocation9 + $0x538] sm:$0xff]
    %v4067 = vld [vmem:[#allocation9 + $0x540] sm:$0xff]
    %v4068 = vld [vmem:[#allocation9 + $0x548] sm:$0xff]
    %v4069 = vld [vmem:[#allocation9 + $0x550] sm:$0xff]
    %v4070 = vld [vmem:[#allocation9 + $0x558] sm:$0xff]
    %v4071 = vld [vmem:[#allocation9 + $0x560] sm:$0xff]
    %v4072 = vld [vmem:[#allocation9 + $0x568] sm:$0xff]
    %v4073 = vld [vmem:[#allocation9 + $0x570] sm:$0xff]
    %v4074 = vld [vmem:[#allocation9 + $0x578] sm:$0xff]
    %v4075 = vld [vmem:[#allocation9 + $0x580] sm:$0xff]
    %v4076 = vld [vmem:[#allocation9 + $0x588] sm:$0xff]
    %v4077 = vld [vmem:[#allocation9 + $0x590] sm:$0xff]
    %v4078 = vld [vmem:[#allocation9 + $0x598] sm:$0xff]
    %v4079 = vld [vmem:[#allocation9 + $0x5a0] sm:$0xff]
    %v4080 = vld [vmem:[#allocation9 + $0x5a8] sm:$0xff]
    %v4081 = vld [vmem:[#allocation9 + $0x5b0] sm:$0xff]
    %v4082 = vld [vmem:[#allocation9 + $0x5b8] sm:$0xff]
    %v4083 = vld [vmem:[#allocation9 + $0x5c0] sm:$0xff]
    %v4084 = vld [vmem:[#allocation9 + $0x5c8] sm:$0xff]
    %v4085 = vld [vmem:[#allocation9 + $0x5d0] sm:$0xff]
    %v4086 = vld [vmem:[#allocation9 + $0x5d8] sm:$0xff]
    %v4087 = vld [vmem:[#allocation9 + $0x5e0] sm:$0xff]
    %v4088 = vld [vmem:[#allocation9 + $0x5e8] sm:$0xff]
    %v4089 = vld [vmem:[#allocation9 + $0x5f0] sm:$0xff]
    %v4090 = vld [vmem:[#allocation9 + $0x5f8] sm:$0xff]
    %v4091 = vld [vmem:[#allocation9 + $0x600] sm:$0xff]
    %v4092 = vld [vmem:[#allocation9 + $0x608] sm:$0xff]
    %v4093 = vld [vmem:[#allocation9 + $0x610] sm:$0xff]
    %v4094 = vld [vmem:[#allocation9 + $0x618] sm:$0xff]
    %v4095 = vld [vmem:[#allocation9 + $0x620] sm:$0xff]
    %v4096 = vld [vmem:[#allocation9 + $0x628] sm:$0xff]
    %v4097 = vld [vmem:[#allocation9 + $0x630] sm:$0xff]
    %v4098 = vld [vmem:[#allocation9 + $0x638] sm:$0xff]
    %v4099 = vld [vmem:[#allocation9 + $0x640] sm:$0xff]
    %v4100 = vld [vmem:[#allocation9 + $0x648] sm:$0xff]
    %v4101 = vld [vmem:[#allocation9 + $0x650] sm:$0xff]
    %v4102 = vld [vmem:[#allocation9 + $0x658] sm:$0xff]
    %v4103 = vld [vmem:[#allocation9 + $0x660] sm:$0xff]
    %v4104 = vld [vmem:[#allocation9 + $0x668] sm:$0xff]
    %v4105 = vld [vmem:[#allocation9 + $0x670] sm:$0xff]
    %v4106 = vld [vmem:[#allocation9 + $0x678] sm:$0xff]
    %v4107 = vld [vmem:[#allocation9 + $0x680] sm:$0xff]
    %v4108 = vld [vmem:[#allocation9 + $0x688] sm:$0xff]
    %v4109 = vld [vmem:[#allocation9 + $0x690] sm:$0xff]
    %v4110 = vld [vmem:[#allocation9 + $0x698] sm:$0xff]
    %v4111 = vld [vmem:[#allocation9 + $0x6a0] sm:$0xff]
    %v4112 = vld [vmem:[#allocation9 + $0x6a8] sm:$0xff]
    %v4113 = vld [vmem:[#allocation9 + $0x6b0] sm:$0xff]
    %v4114 = vld [vmem:[#allocation9 + $0x6b8] sm:$0xff]
    %v4115 = vld [vmem:[#allocation9 + $0x6c0] sm:$0xff]
    %v4116 = vld [vmem:[#allocation9 + $0x6c8] sm:$0xff]
    %v4117 = vld [vmem:[#allocation9 + $0x6d0] sm:$0xff]
    %v4118 = vld [vmem:[#allocation9 + $0x6d8] sm:$0xff]
    %v4119 = vld [vmem:[#allocation9 + $0x6e0] sm:$0xff]
    %v4120 = vld [vmem:[#allocation9 + $0x6e8] sm:$0xff]
    %v4121 = vld [vmem:[#allocation9 + $0x6f0] sm:$0xff]
    %v4122 = vld [vmem:[#allocation9 + $0x6f8] sm:$0xff]
    %v4123 = vld [vmem:[#allocation9 + $0x700] sm:$0xff]
    %v4124 = vld [vmem:[#allocation9 + $0x708] sm:$0xff]
    %v4125 = vld [vmem:[#allocation9 + $0x710] sm:$0xff]
    %v4126 = vld [vmem:[#allocation9 + $0x718] sm:$0xff]
    %v4127 = vld [vmem:[#allocation9 + $0x720] sm:$0xff]
    %v4128 = vld [vmem:[#allocation9 + $0x728] sm:$0xff]
    %v4129 = vld [vmem:[#allocation9 + $0x730] sm:$0xff]
    %v4130 = vld [vmem:[#allocation9 + $0x738] sm:$0xff]
    %v4131 = vld [vmem:[#allocation9 + $0x740] sm:$0xff]
    %v4132 = vld [vmem:[#allocation9 + $0x748] sm:$0xff]
    %v4133 = vld [vmem:[#allocation9 + $0x750] sm:$0xff]
    %v4134 = vld [vmem:[#allocation9 + $0x758] sm:$0xff]
    %v4135 = vld [vmem:[#allocation9 + $0x760] sm:$0xff]
    %v4136 = vld [vmem:[#allocation9 + $0x768] sm:$0xff]
    %v4137 = vld [vmem:[#allocation9 + $0x770] sm:$0xff]
    %v4138 = vld [vmem:[#allocation9 + $0x778] sm:$0xff]
    %v4139 = vld [vmem:[#allocation9 + $0x780] sm:$0xff]
    %v4140 = vld [vmem:[#allocation9 + $0x788] sm:$0xff]
    %v4141 = vld [vmem:[#allocation9 + $0x790] sm:$0xff]
    %v4142 = vld [vmem:[#allocation9 + $0x798] sm:$0xff]
    %v4143 = vld [vmem:[#allocation9 + $0x7a0] sm:$0xff]
    %v4144 = vld [vmem:[#allocation9 + $0x7a8] sm:$0xff]
    %v4145 = vld [vmem:[#allocation9 + $0x7b0] sm:$0xff]
    %v4146 = vld [vmem:[#allocation9 + $0x7b8] sm:$0xff]
    %v4147 = vld [vmem:[#allocation9 + $0x7c0] sm:$0xff]
    %v4148 = vld [vmem:[#allocation9 + $0x7c8] sm:$0xff]
    %v4149 = vld [vmem:[#allocation9 + $0x7d0] sm:$0xff]
    %v4150 = vld [vmem:[#allocation9 + $0x7d8] sm:$0xff]
    %v4151 = vld [vmem:[#allocation9 + $0x7e0] sm:$0xff]
    %v4152 = vld [vmem:[#allocation9 + $0x7e8] sm:$0xff]
    %v4153 = vld [vmem:[#allocation9 + $0x7f0] sm:$0xff]
    %v4154 = vld [vmem:[#allocation9 + $0x7f8] sm:$0xff]
    %v4155 = vld [vmem:[#allocation9 + $0x800] sm:$0xff]
    %v4156 = vld [vmem:[#allocation9 + $0x808] sm:$0xff]
    %v4157 = vld [vmem:[#allocation9 + $0x810] sm:$0xff]
    %v4158 = vld [vmem:[#allocation9 + $0x818] sm:$0xff]
    %v4159 = vld [vmem:[#allocation9 + $0x820] sm:$0xff]
    %v4160 = vld [vmem:[#allocation9 + $0x828] sm:$0xff]
    %v4161 = vld [vmem:[#allocation9 + $0x830] sm:$0xff]
    %v4162 = vld [vmem:[#allocation9 + $0x838] sm:$0xff]
    %v4163 = vld [vmem:[#allocation9 + $0x840] sm:$0xff]
    %v4164 = vld [vmem:[#allocation9 + $0x848] sm:$0xff]
    %v4165 = vld [vmem:[#allocation9 + $0x850] sm:$0xff]
    %v4166 = vld [vmem:[#allocation9 + $0x858] sm:$0xff]
    %v4167 = vld [vmem:[#allocation9 + $0x860] sm:$0xff]
    %v4168 = vld [vmem:[#allocation9 + $0x868] sm:$0xff]
    %v4169 = vld [vmem:[#allocation9 + $0x870] sm:$0xff]
    %v4170 = vld [vmem:[#allocation9 + $0x878] sm:$0xff]
    %v4171 = vld [vmem:[#allocation9 + $0x880] sm:$0xff]
    %v4172 = vld [vmem:[#allocation9 + $0x888] sm:$0xff]
    %v4173 = vld [vmem:[#allocation9 + $0x890] sm:$0xff]
    %v4174 = vld [vmem:[#allocation9 + $0x898] sm:$0xff]
    %v4175 = vld [vmem:[#allocation9 + $0x8a0] sm:$0xff]
    %v4176 = vld [vmem:[#allocation9 + $0x8a8] sm:$0xff]
    %v4177 = vld [vmem:[#allocation9 + $0x8b0] sm:$0xff]
    %v4178 = vld [vmem:[#allocation9 + $0x8b8] sm:$0xff]
    %v4179 = vld [vmem:[#allocation9 + $0x8c0] sm:$0xff]
    %v4180 = vld [vmem:[#allocation9 + $0x8c8] sm:$0xff]
    %v4181 = vld [vmem:[#allocation9 + $0x8d0] sm:$0xff]
    %v4182 = vld [vmem:[#allocation9 + $0x8d8] sm:$0xff]
    %v4183 = vld [vmem:[#allocation9 + $0x8e0] sm:$0xff]
    %v4184 = vld [vmem:[#allocation9 + $0x8e8] sm:$0xff]
    %v4185 = vld [vmem:[#allocation9 + $0x8f0] sm:$0xff]
    %v4186 = vld [vmem:[#allocation9 + $0x8f8] sm:$0xff]
    %v4187 = vld [vmem:[#allocation9 + $0x900] sm:$0xff]
    %v4188 = vld [vmem:[#allocation9 + $0x908] sm:$0xff]
    %v4189 = vld [vmem:[#allocation9 + $0x910] sm:$0xff]
    %v4190 = vld [vmem:[#allocation9 + $0x918] sm:$0xff]
    %v4191 = vld [vmem:[#allocation9 + $0x920] sm:$0xff]
    %v4192 = vld [vmem:[#allocation9 + $0x928] sm:$0xff]
    %v4193 = vld [vmem:[#allocation9 + $0x930] sm:$0xff]
    %v4194 = vld [vmem:[#allocation9 + $0x938] sm:$0xff]
    %v4195 = vld [vmem:[#allocation9 + $0x940] sm:$0xff]
    %v4196 = vld [vmem:[#allocation9 + $0x948] sm:$0xff]
    %v4197 = vld [vmem:[#allocation9 + $0x950] sm:$0xff]
    %v4198 = vld [vmem:[#allocation9 + $0x958] sm:$0xff]
    %v4199 = vld [vmem:[#allocation9 + $0x960] sm:$0xff]
    %v4200 = vld [vmem:[#allocation9 + $0x968] sm:$0xff]
    %v4201 = vld [vmem:[#allocation9 + $0x970] sm:$0xff]
    %v4202 = vld [vmem:[#allocation9 + $0x978] sm:$0xff]
    %v4203 = vld [vmem:[#allocation9 + $0x980] sm:$0xff]
    %v4204 = vld [vmem:[#allocation9 + $0x988] sm:$0xff]
    %v4205 = vld [vmem:[#allocation9 + $0x990] sm:$0xff]
    %v4206 = vld [vmem:[#allocation9 + $0x998] sm:$0xff]
    %v4207 = vld [vmem:[#allocation9 + $0x9a0] sm:$0xff]
    %v4208 = vld [vmem:[#allocation9 + $0x9a8] sm:$0xff]
    %v4209 = vld [vmem:[#allocation9 + $0x9b0] sm:$0xff]
    %v4210 = vld [vmem:[#allocation9 + $0x9b8] sm:$0xff]
    %v4211 = vld [vmem:[#allocation9 + $0x9c0] sm:$0xff]
    %v4212 = vld [vmem:[#allocation9 + $0x9c8] sm:$0xff]
    %v4213 = vld [vmem:[#allocation9 + $0x9d0] sm:$0xff]
    %v4214 = vld [vmem:[#allocation9 + $0x9d8] sm:$0xff]
    %v4215 = vld [vmem:[#allocation9 + $0x9e0] sm:$0xff]
    %v4216 = vld [vmem:[#allocation9 + $0x9e8] sm:$0xff]
    %v4217 = vld [vmem:[#allocation9 + $0x9f0] sm:$0xff]
    %v4218 = vld [vmem:[#allocation9 + $0x9f8] sm:$0xff]
    %v4219 = vld [vmem:[#allocation9 + $0xa00] sm:$0xff]
    %v4220 = vld [vmem:[#allocation9 + $0xa08] sm:$0xff]
    %v4221 = vld [vmem:[#allocation9 + $0xa10] sm:$0xff]
    %v4222 = vld [vmem:[#allocation9 + $0xa18] sm:$0xff]
    %v4223 = vld [vmem:[#allocation9 + $0xa20] sm:$0xff]
    %v4224 = vld [vmem:[#allocation9 + $0xa28] sm:$0xff]
    %v4225 = vld [vmem:[#allocation9 + $0xa30] sm:$0xff]
    %v4226 = vld [vmem:[#allocation9 + $0xa38] sm:$0xff]
    %v4227 = vld [vmem:[#allocation9 + $0xa40] sm:$0xff]
    %v4228 = vld [vmem:[#allocation9 + $0xa48] sm:$0xff]
    %v4229 = vld [vmem:[#allocation9 + $0xa50] sm:$0xff]
    %v4230 = vld [vmem:[#allocation9 + $0xa58] sm:$0xff]
    %v4231 = vld [vmem:[#allocation9 + $0xa60] sm:$0xff]
    %v4232 = vld [vmem:[#allocation9 + $0xa68] sm:$0xff]
    %v4233 = vld [vmem:[#allocation9 + $0xa70] sm:$0xff]
    %v4234 = vld [vmem:[#allocation9 + $0xa78] sm:$0xff]
    %v4235 = vld [vmem:[#allocation9 + $0xa80] sm:$0xff]
    %v4236 = vld [vmem:[#allocation9 + $0xa88] sm:$0xff]
    %v4237 = vld [vmem:[#allocation9 + $0xa90] sm:$0xff]
    %v4238 = vld [vmem:[#allocation9 + $0xa98] sm:$0xff]
    %v4239 = vld [vmem:[#allocation9 + $0xaa0] sm:$0xff]
    %v4240 = vld [vmem:[#allocation9 + $0xaa8] sm:$0xff]
    %v4241 = vld [vmem:[#allocation9 + $0xab0] sm:$0xff]
    %v4242 = vld [vmem:[#allocation9 + $0xab8] sm:$0xff]
    %v4243 = vld [vmem:[#allocation9 + $0xac0] sm:$0xff]
    %v4244 = vld [vmem:[#allocation9 + $0xac8] sm:$0xff]
    %v4245 = vld [vmem:[#allocation9 + $0xad0] sm:$0xff]
    %v4246 = vld [vmem:[#allocation9 + $0xad8] sm:$0xff]
    %v4247 = vld [vmem:[#allocation9 + $0xae0] sm:$0xff]
    %v4248 = vld [vmem:[#allocation9 + $0xae8] sm:$0xff]
    %v4249 = vld [vmem:[#allocation9 + $0xaf0] sm:$0xff]
    %v4250 = vld [vmem:[#allocation9 + $0xaf8] sm:$0xff]
    %v4251 = vld [vmem:[#allocation9 + $0xb00] sm:$0xff]
    %v4252 = vld [vmem:[#allocation9 + $0xb08] sm:$0xff]
    %v4253 = vld [vmem:[#allocation9 + $0xb10] sm:$0xff]
    %v4254 = vld [vmem:[#allocation9 + $0xb18] sm:$0xff]
    %v4255 = vld [vmem:[#allocation9 + $0xb20] sm:$0xff]
    %v4256 = vld [vmem:[#allocation9 + $0xb28] sm:$0xff]
    %v4257 = vld [vmem:[#allocation9 + $0xb30] sm:$0xff]
    %v4258 = vld [vmem:[#allocation9 + $0xb38] sm:$0xff]
    %v4259 = vld [vmem:[#allocation9 + $0xb40] sm:$0xff]
    %v4260 = vld [vmem:[#allocation9 + $0xb48] sm:$0xff]
    %v4261 = vld [vmem:[#allocation9 + $0xb50] sm:$0xff]
    %v4262 = vld [vmem:[#allocation9 + $0xb58] sm:$0xff]
    %v4263 = vld [vmem:[#allocation9 + $0xb60] sm:$0xff]
    %v4264 = vld [vmem:[#allocation9 + $0xb68] sm:$0xff]
    %v4265 = vld [vmem:[#allocation9 + $0xb70] sm:$0xff]
    %v4266 = vld [vmem:[#allocation9 + $0xb78] sm:$0xff]
    %v4267 = vld [vmem:[#allocation9 + $0xb80] sm:$0xff]
    %v4268 = vld [vmem:[#allocation9 + $0xb88] sm:$0xff]
    %v4269 = vld [vmem:[#allocation9 + $0xb90] sm:$0xff]
    %v4270 = vld [vmem:[#allocation9 + $0xb98] sm:$0xff]
    %v4271 = vld [vmem:[#allocation9 + $0xba0] sm:$0xff]
    %v4272 = vld [vmem:[#allocation9 + $0xba8] sm:$0xff]
    %v4273 = vld [vmem:[#allocation9 + $0xbb0] sm:$0xff]
    %v4274 = vld [vmem:[#allocation9 + $0xbb8] sm:$0xff]
    %v4275 = vld [vmem:[#allocation9 + $0xbc0] sm:$0xff]
    %v4276 = vld [vmem:[#allocation9 + $0xbc8] sm:$0xff]
    %v4277 = vld [vmem:[#allocation9 + $0xbd0] sm:$0xff]
    %v4278 = vld [vmem:[#allocation9 + $0xbd8] sm:$0xff]
    %v4279 = vld [vmem:[#allocation9 + $0xbe0] sm:$0xff]
    %v4280 = vld [vmem:[#allocation9 + $0xbe8] sm:$0xff]
    %v4281 = vld [vmem:[#allocation9 + $0xbf0] sm:$0xff]
    %v4282 = vld [vmem:[#allocation9 + $0xbf8] sm:$0xff]
    %v4283 = vld [vmem:[#allocation9 + $0xc00] sm:$0xff]
    %v4284 = vld [vmem:[#allocation9 + $0xc08] sm:$0xff]
    %v4285 = vld [vmem:[#allocation9 + $0xc10] sm:$0xff]
    %v4286 = vld [vmem:[#allocation9 + $0xc18] sm:$0xff]
    %v4287 = vld [vmem:[#allocation9 + $0xc20] sm:$0xff]
    %v4288 = vld [vmem:[#allocation9 + $0xc28] sm:$0xff]
    %v4289 = vld [vmem:[#allocation9 + $0xc30] sm:$0xff]
    %v4290 = vld [vmem:[#allocation9 + $0xc38] sm:$0xff]
    %v4291 = vld [vmem:[#allocation9 + $0xc40] sm:$0xff]
    %v4292 = vld [vmem:[#allocation9 + $0xc48] sm:$0xff]
    %v4293 = vld [vmem:[#allocation9 + $0xc50] sm:$0xff]
    %v4294 = vld [vmem:[#allocation9 + $0xc58] sm:$0xff]
    %v4295 = vld [vmem:[#allocation9 + $0xc60] sm:$0xff]
    %v4296 = vld [vmem:[#allocation9 + $0xc68] sm:$0xff]
    %v4297 = vld [vmem:[#allocation9 + $0xc70] sm:$0xff]
    %v4298 = vld [vmem:[#allocation9 + $0xc78] sm:$0xff]
    %v4299 = vld [vmem:[#allocation9 + $0xc80] sm:$0xff]
    %v4300 = vld [vmem:[#allocation9 + $0xc88] sm:$0xff]
    %v4301 = vld [vmem:[#allocation9 + $0xc90] sm:$0xff]
    %v4302 = vld [vmem:[#allocation9 + $0xc98] sm:$0xff]
    %v4303 = vld [vmem:[#allocation9 + $0xca0] sm:$0xff]
    %v4304 = vld [vmem:[#allocation9 + $0xca8] sm:$0xff]
    %v4305 = vld [vmem:[#allocation9 + $0xcb0] sm:$0xff]
    %v4306 = vld [vmem:[#allocation9 + $0xcb8] sm:$0xff]
    %v4307 = vld [vmem:[#allocation9 + $0xcc0] sm:$0xff]
    %v4308 = vld [vmem:[#allocation9 + $0xcc8] sm:$0xff]
    %v4309 = vld [vmem:[#allocation9 + $0xcd0] sm:$0xff]
    %v4310 = vld [vmem:[#allocation9 + $0xcd8] sm:$0xff]
    %v4311 = vld [vmem:[#allocation9 + $0xce0] sm:$0xff]
    %v4312 = vld [vmem:[#allocation9 + $0xce8] sm:$0xff]
    %v4313 = vld [vmem:[#allocation9 + $0xcf0] sm:$0xff]
    %v4314 = vld [vmem:[#allocation9 + $0xcf8] sm:$0xff]
    %v4315 = vld [vmem:[#allocation9 + $0xd00] sm:$0xff]
    %v4316 = vld [vmem:[#allocation9 + $0xd08] sm:$0xff]
    %v4317 = vld [vmem:[#allocation9 + $0xd10] sm:$0xff]
    %v4318 = vld [vmem:[#allocation9 + $0xd18] sm:$0xff]
    %v4319 = vld [vmem:[#allocation9 + $0xd20] sm:$0xff]
    %v4320 = vld [vmem:[#allocation9 + $0xd28] sm:$0xff]
    %v4321 = vld [vmem:[#allocation9 + $0xd30] sm:$0xff]
    %v4322 = vld [vmem:[#allocation9 + $0xd38] sm:$0xff]
    %v4323 = vld [vmem:[#allocation9 + $0xd40] sm:$0xff]
    %v4324 = vld [vmem:[#allocation9 + $0xd48] sm:$0xff]
    %v4325 = vld [vmem:[#allocation9 + $0xd50] sm:$0xff]
    %v4326 = vld [vmem:[#allocation9 + $0xd58] sm:$0xff]
    %v4327 = vld [vmem:[#allocation9 + $0xd60] sm:$0xff]
    %v4328 = vld [vmem:[#allocation9 + $0xd68] sm:$0xff]
    %v4329 = vld [vmem:[#allocation9 + $0xd70] sm:$0xff]
    %v4330 = vld [vmem:[#allocation9 + $0xd78] sm:$0xff]
    %v4331 = vld [vmem:[#allocation9 + $0xd80] sm:$0xff]
    %v4332 = vld [vmem:[#allocation9 + $0xd88] sm:$0xff]
    %v4333 = vld [vmem:[#allocation9 + $0xd90] sm:$0xff]
    %v4334 = vld [vmem:[#allocation9 + $0xd98] sm:$0xff]
    %v4335 = vld [vmem:[#allocation9 + $0xda0] sm:$0xff]
    %v4336 = vld [vmem:[#allocation9 + $0xda8] sm:$0xff]
    %v4337 = vld [vmem:[#allocation9 + $0xdb0] sm:$0xff]
    %v4338 = vld [vmem:[#allocation9 + $0xdb8] sm:$0xff]
    %v4339 = vld [vmem:[#allocation9 + $0xdc0] sm:$0xff]
    %v4340 = vld [vmem:[#allocation9 + $0xdc8] sm:$0xff]
    %v4341 = vld [vmem:[#allocation9 + $0xdd0] sm:$0xff]
    %v4342 = vld [vmem:[#allocation9 + $0xdd8] sm:$0xff]
    %v4343 = vld [vmem:[#allocation9 + $0xde0] sm:$0xff]
    %v4344 = vld [vmem:[#allocation9 + $0xde8] sm:$0xff]
    %v4345 = vld [vmem:[#allocation9 + $0xdf0] sm:$0xff]
    %v4346 = vld [vmem:[#allocation9 + $0xdf8] sm:$0xff]
    %v4347 = vld [vmem:[#allocation10] sm:$0xff]
    %v4349 = vlaneseq
    %v4350 = vshrl.u32 %v4349, 7
    %v4351 = vsub.s32 0, %v4350
    %v4352 = vrot.slane %v4347, %v4351
    %v4353 = vlaneseq
    %v4354 = vshrl.u32 %v4353, 7
    %v4355 = vsub.s32 1, %v4354
    %v4356 = vrot.slane %v4347, %v4355
    %v4357 = vlaneseq
    %v4358 = vshrl.u32 %v4357, 7
    %v4359 = vsub.s32 2, %v4358
    %v4360 = vrot.slane %v4347, %v4359
    %v4361 = vlaneseq
    %v4362 = vshrl.u32 %v4361, 7
    %v4363 = vsub.s32 3, %v4362
    %v4364 = vrot.slane %v4347, %v4363
    %v4365 = vlaneseq
    %v4366 = vshrl.u32 %v4365, 7
    %v4367 = vsub.s32 4, %v4366
    %v4368 = vrot.slane %v4347, %v4367
    %v4369 = vlaneseq
    %v4370 = vshrl.u32 %v4369, 7
    %v4371 = vsub.s32 5, %v4370
    %v4372 = vrot.slane %v4347, %v4371
    %v4373 = vlaneseq
    %v4374 = vshrl.u32 %v4373, 7
    %v4375 = vsub.s32 6, %v4374
    %v4376 = vrot.slane %v4347, %v4375
    %v4377 = vlaneseq
    %v4378 = vshrl.u32 %v4377, 7
    %v4379 = vsub.s32 7, %v4378
    %v4380 = vrot.slane %v4347, %v4379
    %v4837 = vunpack.c.l.b16 %v3899
    %v4838 = vunpack.c.h.b16 %v3899
    %v4839 = vunpack.c.l.b16 %v3900
    %v4840 = vunpack.c.h.b16 %v3900
    %v4841 = vunpack.c.l.b16 %v3901
    %v4842 = vunpack.c.h.b16 %v3901
    %v4843 = vunpack.c.l.b16 %v3902
    %v4844 = vunpack.c.h.b16 %v3902
    %v4845 = vunpack.c.l.b16 %v3903
    %v4846 = vunpack.c.h.b16 %v3903
    %v4847 = vunpack.c.l.b16 %v3904
    %v4848 = vunpack.c.h.b16 %v3904
    %v4849 = vunpack.c.l.b16 %v3905
    %v4850 = vunpack.c.h.b16 %v3905
    %v4851 = vunpack.c.l.b16 %v3906
    %v4852 = vunpack.c.h.b16 %v3906
    %v4853 = vunpack.c.l.b16 %v3907
    %v4854 = vunpack.c.h.b16 %v3907
    %v4855 = vunpack.c.l.b16 %v3908
    %v4856 = vunpack.c.h.b16 %v3908
    %v4857 = vunpack.c.l.b16 %v3909
    %v4858 = vunpack.c.h.b16 %v3909
    %v4859 = vunpack.c.l.b16 %v3910
    %v4860 = vunpack.c.h.b16 %v3910
    %v4861 = vunpack.c.l.b16 %v3911
    %v4862 = vunpack.c.h.b16 %v3911
    %v4863 = vunpack.c.l.b16 %v3912
    %v4864 = vunpack.c.h.b16 %v3912
    %v4865 = vunpack.c.l.b16 %v3913
    %v4866 = vunpack.c.h.b16 %v3913
    %v4867 = vunpack.c.l.b16 %v3914
    %v4868 = vunpack.c.h.b16 %v3914
    %v4869 = vunpack.c.l.b16 %v3915
    %v4870 = vunpack.c.h.b16 %v3915
    %v4871 = vunpack.c.l.b16 %v3916
    %v4872 = vunpack.c.h.b16 %v3916
    %v4873 = vunpack.c.l.b16 %v3917
    %v4874 = vunpack.c.h.b16 %v3917
    %v4875 = vunpack.c.l.b16 %v3918
    %v4876 = vunpack.c.h.b16 %v3918
    %v4877 = vunpack.c.l.b16 %v3919
    %v4878 = vunpack.c.h.b16 %v3919
    %v4879 = vunpack.c.l.b16 %v3920
    %v4880 = vunpack.c.h.b16 %v3920
    %v4881 = vunpack.c.l.b16 %v3921
    %v4882 = vunpack.c.h.b16 %v3921
    %v4883 = vunpack.c.l.b16 %v3922
    %v4884 = vunpack.c.h.b16 %v3922
    %v4885 = vunpack.c.l.b16 %v3923
    %v4886 = vunpack.c.h.b16 %v3923
    %v4887 = vunpack.c.l.b16 %v3924
    %v4888 = vunpack.c.h.b16 %v3924
    %v4889 = vunpack.c.l.b16 %v3925
    %v4890 = vunpack.c.h.b16 %v3925
    %v4891 = vunpack.c.l.b16 %v3926
    %v4892 = vunpack.c.h.b16 %v3926
    %v4893 = vunpack.c.l.b16 %v3927
    %v4894 = vunpack.c.h.b16 %v3927
    %v4895 = vunpack.c.l.b16 %v3928
    %v4896 = vunpack.c.h.b16 %v3928
    %v4897 = vunpack.c.l.b16 %v3929
    %v4898 = vunpack.c.h.b16 %v3929
    %v4899 = vunpack.c.l.b16 %v3930
    %v4900 = vunpack.c.h.b16 %v3930
    %v4901 = vunpack.c.l.b16 %v3931
    %v4902 = vunpack.c.h.b16 %v3931
    %v4903 = vunpack.c.l.b16 %v3932
    %v4904 = vunpack.c.h.b16 %v3932
    %v4905 = vunpack.c.l.b16 %v3933
    %v4906 = vunpack.c.h.b16 %v3933
    %v4907 = vunpack.c.l.b16 %v3934
    %v4908 = vunpack.c.h.b16 %v3934
    %v4909 = vunpack.c.l.b16 %v3935
    %v4910 = vunpack.c.h.b16 %v3935
    %v4911 = vunpack.c.l.b16 %v3936
    %v4912 = vunpack.c.h.b16 %v3936
    %v4913 = vunpack.c.l.b16 %v3937
    %v4914 = vunpack.c.h.b16 %v3937
    %v4915 = vunpack.c.l.b16 %v3938
    %v4916 = vunpack.c.h.b16 %v3938
    %v4917 = vunpack.c.l.b16 %v3939
    %v4918 = vunpack.c.h.b16 %v3939
    %v4919 = vunpack.c.l.b16 %v3940
    %v4920 = vunpack.c.h.b16 %v3940
    %v4921 = vunpack.c.l.b16 %v3941
    %v4922 = vunpack.c.h.b16 %v3941
    %v4923 = vunpack.c.l.b16 %v3942
    %v4924 = vunpack.c.h.b16 %v3942
    %v4925 = vunpack.c.l.b16 %v3943
    %v4926 = vunpack.c.h.b16 %v3943
    %v4927 = vunpack.c.l.b16 %v3944
    %v4928 = vunpack.c.h.b16 %v3944
    %v4929 = vunpack.c.l.b16 %v3945
    %v4930 = vunpack.c.h.b16 %v3945
    %v4931 = vunpack.c.l.b16 %v3946
    %v4932 = vunpack.c.h.b16 %v3946
    %v4933 = vunpack.c.l.b16 %v3947
    %v4934 = vunpack.c.h.b16 %v3947
    %v4935 = vunpack.c.l.b16 %v3948
    %v4936 = vunpack.c.h.b16 %v3948
    %v4937 = vunpack.c.l.b16 %v3949
    %v4938 = vunpack.c.h.b16 %v3949
    %v4939 = vunpack.c.l.b16 %v3950
    %v4940 = vunpack.c.h.b16 %v3950
    %v4941 = vunpack.c.l.b16 %v3951
    %v4942 = vunpack.c.h.b16 %v3951
    %v4943 = vunpack.c.l.b16 %v3952
    %v4944 = vunpack.c.h.b16 %v3952
    %v4945 = vunpack.c.l.b16 %v3953
    %v4946 = vunpack.c.h.b16 %v3953
    %v4947 = vunpack.c.l.b16 %v3954
    %v4948 = vunpack.c.h.b16 %v3954
    %v4949 = vunpack.c.l.b16 %v3955
    %v4950 = vunpack.c.h.b16 %v3955
    %v4951 = vunpack.c.l.b16 %v3956
    %v4952 = vunpack.c.h.b16 %v3956
    %v4953 = vunpack.c.l.b16 %v3957
    %v4954 = vunpack.c.h.b16 %v3957
    %v4955 = vunpack.c.l.b16 %v3958
    %v4956 = vunpack.c.h.b16 %v3958
    %v4957 = vunpack.c.l.b16 %v3959
    %v4958 = vunpack.c.h.b16 %v3959
    %v4959 = vunpack.c.l.b16 %v3960
    %v4960 = vunpack.c.h.b16 %v3960
    %v4961 = vunpack.c.l.b16 %v3961
    %v4962 = vunpack.c.h.b16 %v3961
    %v4963 = vunpack.c.l.b16 %v3962
    %v4964 = vunpack.c.h.b16 %v3962
    %v4965 = vunpack.c.l.b16 %v3963
    %v4966 = vunpack.c.h.b16 %v3963
    %v4967 = vunpack.c.l.b16 %v3964
    %v4968 = vunpack.c.h.b16 %v3964
    %v4969 = vunpack.c.l.b16 %v3965
    %v4970 = vunpack.c.h.b16 %v3965
    %v4971 = vunpack.c.l.b16 %v3966
    %v4972 = vunpack.c.h.b16 %v3966
    %v4973 = vunpack.c.l.b16 %v3967
    %v4974 = vunpack.c.h.b16 %v3967
    %v4975 = vunpack.c.l.b16 %v3968
    %v4976 = vunpack.c.h.b16 %v3968
    %v4977 = vunpack.c.l.b16 %v3969
    %v4978 = vunpack.c.h.b16 %v3969
    %v4979 = vunpack.c.l.b16 %v3970
    %v4980 = vunpack.c.h.b16 %v3970
    %v4981 = vunpack.c.l.b16 %v3971
    %v4982 = vunpack.c.h.b16 %v3971
    %v4983 = vunpack.c.l.b16 %v3972
    %v4984 = vunpack.c.h.b16 %v3972
    %v4985 = vunpack.c.l.b16 %v3973
    %v4986 = vunpack.c.h.b16 %v3973
    %v4987 = vunpack.c.l.b16 %v3974
    %v4988 = vunpack.c.h.b16 %v3974
    %v4989 = vunpack.c.l.b16 %v3975
    %v4990 = vunpack.c.h.b16 %v3975
    %v4991 = vunpack.c.l.b16 %v3976
    %v4992 = vunpack.c.h.b16 %v3976
    %v4993 = vunpack.c.l.b16 %v3977
    %v4994 = vunpack.c.h.b16 %v3977
    %v4995 = vunpack.c.l.b16 %v3978
    %v4996 = vunpack.c.h.b16 %v3978
    %v4997 = vunpack.c.l.b16 %v3979
    %v4998 = vunpack.c.h.b16 %v3979
    %v4999 = vunpack.c.l.b16 %v3980
    %v5000 = vunpack.c.h.b16 %v3980
    %v5001 = vunpack.c.l.b16 %v3981
    %v5002 = vunpack.c.h.b16 %v3981
    %v5003 = vunpack.c.l.b16 %v3982
    %v5004 = vunpack.c.h.b16 %v3982
    %v5005 = vunpack.c.l.b16 %v3983
    %v5006 = vunpack.c.h.b16 %v3983
    %v5007 = vunpack.c.l.b16 %v3984
    %v5008 = vunpack.c.h.b16 %v3984
    %v5009 = vunpack.c.l.b16 %v3985
    %v5010 = vunpack.c.h.b16 %v3985
    %v5011 = vunpack.c.l.b16 %v3986
    %v5012 = vunpack.c.h.b16 %v3986
    %v5013 = vunpack.c.l.b16 %v3987
    %v5014 = vunpack.c.h.b16 %v3987
    %v5015 = vunpack.c.l.b16 %v3988
    %v5016 = vunpack.c.h.b16 %v3988
    %v5017 = vunpack.c.l.b16 %v3989
    %v5018 = vunpack.c.h.b16 %v3989
    %v5019 = vunpack.c.l.b16 %v3990
    %v5020 = vunpack.c.h.b16 %v3990
    %v5021 = vunpack.c.l.b16 %v3991
    %v5022 = vunpack.c.h.b16 %v3991
    %v5023 = vunpack.c.l.b16 %v3992
    %v5024 = vunpack.c.h.b16 %v3992
    %v5025 = vunpack.c.l.b16 %v3993
    %v5026 = vunpack.c.h.b16 %v3993
    %v5027 = vunpack.c.l.b16 %v3994
    %v5028 = vunpack.c.h.b16 %v3994
    %v5029 = vunpack.c.l.b16 %v3995
    %v5030 = vunpack.c.h.b16 %v3995
    %v5031 = vunpack.c.l.b16 %v3996
    %v5032 = vunpack.c.h.b16 %v3996
    %v5033 = vunpack.c.l.b16 %v3997
    %v5034 = vunpack.c.h.b16 %v3997
    %v5035 = vunpack.c.l.b16 %v3998
    %v5036 = vunpack.c.h.b16 %v3998
    %v5037 = vunpack.c.l.b16 %v3999
    %v5038 = vunpack.c.h.b16 %v3999
    %v5039 = vunpack.c.l.b16 %v4000
    %v5040 = vunpack.c.h.b16 %v4000
    %v5041 = vunpack.c.l.b16 %v4001
    %v5042 = vunpack.c.h.b16 %v4001
    %v5043 = vunpack.c.l.b16 %v4002
    %v5044 = vunpack.c.h.b16 %v4002
    %v5045 = vunpack.c.l.b16 %v4003
    %v5046 = vunpack.c.h.b16 %v4003
    %v5047 = vunpack.c.l.b16 %v4004
    %v5048 = vunpack.c.h.b16 %v4004
    %v5049 = vunpack.c.l.b16 %v4005
    %v5050 = vunpack.c.h.b16 %v4005
    %v5051 = vunpack.c.l.b16 %v4006
    %v5052 = vunpack.c.h.b16 %v4006
    %v5053 = vunpack.c.l.b16 %v4007
    %v5054 = vunpack.c.h.b16 %v4007
    %v5055 = vunpack.c.l.b16 %v4008
    %v5056 = vunpack.c.h.b16 %v4008
    %v5057 = vunpack.c.l.b16 %v4009
    %v5058 = vunpack.c.h.b16 %v4009
    %v5059 = vunpack.c.l.b16 %v4010
    %v5060 = vunpack.c.h.b16 %v4010
    %v5061 = vunpack.c.l.b16 %v4011
    %v5062 = vunpack.c.h.b16 %v4011
    %v5063 = vunpack.c.l.b16 %v4012
    %v5064 = vunpack.c.h.b16 %v4012
    %v5065 = vunpack.c.l.b16 %v4013
    %v5066 = vunpack.c.h.b16 %v4013
    %v5067 = vunpack.c.l.b16 %v4014
    %v5068 = vunpack.c.h.b16 %v4014
    %v5069 = vunpack.c.l.b16 %v4015
    %v5070 = vunpack.c.h.b16 %v4015
    %v5071 = vunpack.c.l.b16 %v4016
    %v5072 = vunpack.c.h.b16 %v4016
    %v5073 = vunpack.c.l.b16 %v4017
    %v5074 = vunpack.c.h.b16 %v4017
    %v5075 = vunpack.c.l.b16 %v4018
    %v5076 = vunpack.c.h.b16 %v4018
    %v5077 = vunpack.c.l.b16 %v4019
    %v5078 = vunpack.c.h.b16 %v4019
    %v5079 = vunpack.c.l.b16 %v4020
    %v5080 = vunpack.c.h.b16 %v4020
    %v5081 = vunpack.c.l.b16 %v4021
    %v5082 = vunpack.c.h.b16 %v4021
    %v5083 = vunpack.c.l.b16 %v4022
    %v5084 = vunpack.c.h.b16 %v4022
    %v5085 = vunpack.c.l.b16 %v4023
    %v5086 = vunpack.c.h.b16 %v4023
    %v5087 = vunpack.c.l.b16 %v4024
    %v5088 = vunpack.c.h.b16 %v4024
    %v5089 = vunpack.c.l.b16 %v4025
    %v5090 = vunpack.c.h.b16 %v4025
    %v5091 = vunpack.c.l.b16 %v4026
    %v5092 = vunpack.c.h.b16 %v4026
    %v5093 = vunpack.c.l.b16 %v4027
    %v5094 = vunpack.c.h.b16 %v4027
    %v5095 = vunpack.c.l.b16 %v4028
    %v5096 = vunpack.c.h.b16 %v4028
    %v5097 = vunpack.c.l.b16 %v4029
    %v5098 = vunpack.c.h.b16 %v4029
    %v5099 = vunpack.c.l.b16 %v4030
    %v5100 = vunpack.c.h.b16 %v4030
    %v5101 = vunpack.c.l.b16 %v4031
    %v5102 = vunpack.c.h.b16 %v4031
    %v5103 = vunpack.c.l.b16 %v4032
    %v5104 = vunpack.c.h.b16 %v4032
    %v5105 = vunpack.c.l.b16 %v4033
    %v5106 = vunpack.c.h.b16 %v4033
    %v5107 = vunpack.c.l.b16 %v4034
    %v5108 = vunpack.c.h.b16 %v4034
    %v5109 = vunpack.c.l.b16 %v4035
    %v5110 = vunpack.c.h.b16 %v4035
    %v5111 = vunpack.c.l.b16 %v4036
    %v5112 = vunpack.c.h.b16 %v4036
    %v5113 = vunpack.c.l.b16 %v4037
    %v5114 = vunpack.c.h.b16 %v4037
    %v5115 = vunpack.c.l.b16 %v4038
    %v5116 = vunpack.c.h.b16 %v4038
    %v5117 = vunpack.c.l.b16 %v4039
    %v5118 = vunpack.c.h.b16 %v4039
    %v5119 = vunpack.c.l.b16 %v4040
    %v5120 = vunpack.c.h.b16 %v4040
    %v5121 = vunpack.c.l.b16 %v4041
    %v5122 = vunpack.c.h.b16 %v4041
    %v5123 = vunpack.c.l.b16 %v4042
    %v5124 = vunpack.c.h.b16 %v4042
    %v5125 = vunpack.c.l.b16 %v4043
    %v5126 = vunpack.c.h.b16 %v4043
    %v5127 = vunpack.c.l.b16 %v4044
    %v5128 = vunpack.c.h.b16 %v4044
    %v5129 = vunpack.c.l.b16 %v4045
    %v5130 = vunpack.c.h.b16 %v4045
    %v5131 = vunpack.c.l.b16 %v4046
    %v5132 = vunpack.c.h.b16 %v4046
    %v5133 = vunpack.c.l.b16 %v4047
    %v5134 = vunpack.c.h.b16 %v4047
    %v5135 = vunpack.c.l.b16 %v4048
    %v5136 = vunpack.c.h.b16 %v4048
    %v5137 = vunpack.c.l.b16 %v4049
    %v5138 = vunpack.c.h.b16 %v4049
    %v5139 = vunpack.c.l.b16 %v4050
    %v5140 = vunpack.c.h.b16 %v4050
    %v5141 = vunpack.c.l.b16 %v4051
    %v5142 = vunpack.c.h.b16 %v4051
    %v5143 = vunpack.c.l.b16 %v4052
    %v5144 = vunpack.c.h.b16 %v4052
    %v5145 = vunpack.c.l.b16 %v4053
    %v5146 = vunpack.c.h.b16 %v4053
    %v5147 = vunpack.c.l.b16 %v4054
    %v5148 = vunpack.c.h.b16 %v4054
    %v5149 = vunpack.c.l.b16 %v4055
    %v5150 = vunpack.c.h.b16 %v4055
    %v5151 = vunpack.c.l.b16 %v4056
    %v5152 = vunpack.c.h.b16 %v4056
    %v5153 = vunpack.c.l.b16 %v4057
    %v5154 = vunpack.c.h.b16 %v4057
    %v5155 = vunpack.c.l.b16 %v4058
    %v5156 = vunpack.c.h.b16 %v4058
    %v5157 = vunpack.c.l.b16 %v4059
    %v5158 = vunpack.c.h.b16 %v4059
    %v5159 = vunpack.c.l.b16 %v4060
    %v5160 = vunpack.c.h.b16 %v4060
    %v5161 = vunpack.c.l.b16 %v4061
    %v5162 = vunpack.c.h.b16 %v4061
    %v5163 = vunpack.c.l.b16 %v4062
    %v5164 = vunpack.c.h.b16 %v4062
    %v5165 = vunpack.c.l.b16 %v4063
    %v5166 = vunpack.c.h.b16 %v4063
    %v5167 = vunpack.c.l.b16 %v4064
    %v5168 = vunpack.c.h.b16 %v4064
    %v5169 = vunpack.c.l.b16 %v4065
    %v5170 = vunpack.c.h.b16 %v4065
    %v5171 = vunpack.c.l.b16 %v4066
    %v5172 = vunpack.c.h.b16 %v4066
    %v5173 = vunpack.c.l.b16 %v4067
    %v5174 = vunpack.c.h.b16 %v4067
    %v5175 = vunpack.c.l.b16 %v4068
    %v5176 = vunpack.c.h.b16 %v4068
    %v5177 = vunpack.c.l.b16 %v4069
    %v5178 = vunpack.c.h.b16 %v4069
    %v5179 = vunpack.c.l.b16 %v4070
    %v5180 = vunpack.c.h.b16 %v4070
    %v5181 = vunpack.c.l.b16 %v4071
    %v5182 = vunpack.c.h.b16 %v4071
    %v5183 = vunpack.c.l.b16 %v4072
    %v5184 = vunpack.c.h.b16 %v4072
    %v5185 = vunpack.c.l.b16 %v4073
    %v5186 = vunpack.c.h.b16 %v4073
    %v5187 = vunpack.c.l.b16 %v4074
    %v5188 = vunpack.c.h.b16 %v4074
    %v5189 = vunpack.c.l.b16 %v4075
    %v5190 = vunpack.c.h.b16 %v4075
    %v5191 = vunpack.c.l.b16 %v4076
    %v5192 = vunpack.c.h.b16 %v4076
    %v5193 = vunpack.c.l.b16 %v4077
    %v5194 = vunpack.c.h.b16 %v4077
    %v5195 = vunpack.c.l.b16 %v4078
    %v5196 = vunpack.c.h.b16 %v4078
    %v5197 = vunpack.c.l.b16 %v4079
    %v5198 = vunpack.c.h.b16 %v4079
    %v5199 = vunpack.c.l.b16 %v4080
    %v5200 = vunpack.c.h.b16 %v4080
    %v5201 = vunpack.c.l.b16 %v4081
    %v5202 = vunpack.c.h.b16 %v4081
    %v5203 = vunpack.c.l.b16 %v4082
    %v5204 = vunpack.c.h.b16 %v4082
    %v5205 = vunpack.c.l.b16 %v4083
    %v5206 = vunpack.c.h.b16 %v4083
    %v5207 = vunpack.c.l.b16 %v4084
    %v5208 = vunpack.c.h.b16 %v4084
    %v5209 = vunpack.c.l.b16 %v4085
    %v5210 = vunpack.c.h.b16 %v4085
    %v5211 = vunpack.c.l.b16 %v4086
    %v5212 = vunpack.c.h.b16 %v4086
    %v5213 = vunpack.c.l.b16 %v4087
    %v5214 = vunpack.c.h.b16 %v4087
    %v5215 = vunpack.c.l.b16 %v4088
    %v5216 = vunpack.c.h.b16 %v4088
    %v5217 = vunpack.c.l.b16 %v4089
    %v5218 = vunpack.c.h.b16 %v4089
    %v5219 = vunpack.c.l.b16 %v4090
    %v5220 = vunpack.c.h.b16 %v4090
    %v5221 = vunpack.c.l.b16 %v4091
    %v5222 = vunpack.c.h.b16 %v4091
    %v5223 = vunpack.c.l.b16 %v4092
    %v5224 = vunpack.c.h.b16 %v4092
    %v5225 = vunpack.c.l.b16 %v4093
    %v5226 = vunpack.c.h.b16 %v4093
    %v5227 = vunpack.c.l.b16 %v4094
    %v5228 = vunpack.c.h.b16 %v4094
    %v5229 = vunpack.c.l.b16 %v4095
    %v5230 = vunpack.c.h.b16 %v4095
    %v5231 = vunpack.c.l.b16 %v4096
    %v5232 = vunpack.c.h.b16 %v4096
    %v5233 = vunpack.c.l.b16 %v4097
    %v5234 = vunpack.c.h.b16 %v4097
    %v5235 = vunpack.c.l.b16 %v4098
    %v5236 = vunpack.c.h.b16 %v4098
    %v5237 = vunpack.c.l.b16 %v4099
    %v5238 = vunpack.c.h.b16 %v4099
    %v5239 = vunpack.c.l.b16 %v4100
    %v5240 = vunpack.c.h.b16 %v4100
    %v5241 = vunpack.c.l.b16 %v4101
    %v5242 = vunpack.c.h.b16 %v4101
    %v5243 = vunpack.c.l.b16 %v4102
    %v5244 = vunpack.c.h.b16 %v4102
    %v5245 = vunpack.c.l.b16 %v4103
    %v5246 = vunpack.c.h.b16 %v4103
    %v5247 = vunpack.c.l.b16 %v4104
    %v5248 = vunpack.c.h.b16 %v4104
    %v5249 = vunpack.c.l.b16 %v4105
    %v5250 = vunpack.c.h.b16 %v4105
    %v5251 = vunpack.c.l.b16 %v4106
    %v5252 = vunpack.c.h.b16 %v4106
    %v5253 = vunpack.c.l.b16 %v4107
    %v5254 = vunpack.c.h.b16 %v4107
    %v5255 = vunpack.c.l.b16 %v4108
    %v5256 = vunpack.c.h.b16 %v4108
    %v5257 = vunpack.c.l.b16 %v4109
    %v5258 = vunpack.c.h.b16 %v4109
    %v5259 = vunpack.c.l.b16 %v4110
    %v5260 = vunpack.c.h.b16 %v4110
    %v5261 = vunpack.c.l.b16 %v4111
    %v5262 = vunpack.c.h.b16 %v4111
    %v5263 = vunpack.c.l.b16 %v4112
    %v5264 = vunpack.c.h.b16 %v4112
    %v5265 = vunpack.c.l.b16 %v4113
    %v5266 = vunpack.c.h.b16 %v4113
    %v5267 = vunpack.c.l.b16 %v4114
    %v5268 = vunpack.c.h.b16 %v4114
    %v5269 = vunpack.c.l.b16 %v4115
    %v5270 = vunpack.c.h.b16 %v4115
    %v5271 = vunpack.c.l.b16 %v4116
    %v5272 = vunpack.c.h.b16 %v4116
    %v5273 = vunpack.c.l.b16 %v4117
    %v5274 = vunpack.c.h.b16 %v4117
    %v5275 = vunpack.c.l.b16 %v4118
    %v5276 = vunpack.c.h.b16 %v4118
    %v5277 = vunpack.c.l.b16 %v4119
    %v5278 = vunpack.c.h.b16 %v4119
    %v5279 = vunpack.c.l.b16 %v4120
    %v5280 = vunpack.c.h.b16 %v4120
    %v5281 = vunpack.c.l.b16 %v4121
    %v5282 = vunpack.c.h.b16 %v4121
    %v5283 = vunpack.c.l.b16 %v4122
    %v5284 = vunpack.c.h.b16 %v4122
    %v5285 = vunpack.c.l.b16 %v4123
    %v5286 = vunpack.c.h.b16 %v4123
    %v5287 = vunpack.c.l.b16 %v4124
    %v5288 = vunpack.c.h.b16 %v4124
    %v5289 = vunpack.c.l.b16 %v4125
    %v5290 = vunpack.c.h.b16 %v4125
    %v5291 = vunpack.c.l.b16 %v4126
    %v5292 = vunpack.c.h.b16 %v4126
    %v5293 = vunpack.c.l.b16 %v4127
    %v5294 = vunpack.c.h.b16 %v4127
    %v5295 = vunpack.c.l.b16 %v4128
    %v5296 = vunpack.c.h.b16 %v4128
    %v5297 = vunpack.c.l.b16 %v4129
    %v5298 = vunpack.c.h.b16 %v4129
    %v5299 = vunpack.c.l.b16 %v4130
    %v5300 = vunpack.c.h.b16 %v4130
    %v5301 = vunpack.c.l.b16 %v4131
    %v5302 = vunpack.c.h.b16 %v4131
    %v5303 = vunpack.c.l.b16 %v4132
    %v5304 = vunpack.c.h.b16 %v4132
    %v5305 = vunpack.c.l.b16 %v4133
    %v5306 = vunpack.c.h.b16 %v4133
    %v5307 = vunpack.c.l.b16 %v4134
    %v5308 = vunpack.c.h.b16 %v4134
    %v5309 = vunpack.c.l.b16 %v4135
    %v5310 = vunpack.c.h.b16 %v4135
    %v5311 = vunpack.c.l.b16 %v4136
    %v5312 = vunpack.c.h.b16 %v4136
    %v5313 = vunpack.c.l.b16 %v4137
    %v5314 = vunpack.c.h.b16 %v4137
    %v5315 = vunpack.c.l.b16 %v4138
    %v5316 = vunpack.c.h.b16 %v4138
    %v5317 = vunpack.c.l.b16 %v4139
    %v5318 = vunpack.c.h.b16 %v4139
    %v5319 = vunpack.c.l.b16 %v4140
    %v5320 = vunpack.c.h.b16 %v4140
    %v5321 = vunpack.c.l.b16 %v4141
    %v5322 = vunpack.c.h.b16 %v4141
    %v5323 = vunpack.c.l.b16 %v4142
    %v5324 = vunpack.c.h.b16 %v4142
    %v5325 = vunpack.c.l.b16 %v4143
    %v5326 = vunpack.c.h.b16 %v4143
    %v5327 = vunpack.c.l.b16 %v4144
    %v5328 = vunpack.c.h.b16 %v4144
    %v5329 = vunpack.c.l.b16 %v4145
    %v5330 = vunpack.c.h.b16 %v4145
    %v5331 = vunpack.c.l.b16 %v4146
    %v5332 = vunpack.c.h.b16 %v4146
    %v5333 = vunpack.c.l.b16 %v4147
    %v5334 = vunpack.c.h.b16 %v4147
    %v5335 = vunpack.c.l.b16 %v4148
    %v5336 = vunpack.c.h.b16 %v4148
    %v5337 = vunpack.c.l.b16 %v4149
    %v5338 = vunpack.c.h.b16 %v4149
    %v5339 = vunpack.c.l.b16 %v4150
    %v5340 = vunpack.c.h.b16 %v4150
    %v5341 = vunpack.c.l.b16 %v4151
    %v5342 = vunpack.c.h.b16 %v4151
    %v5343 = vunpack.c.l.b16 %v4152
    %v5344 = vunpack.c.h.b16 %v4152
    %v5345 = vunpack.c.l.b16 %v4153
    %v5346 = vunpack.c.h.b16 %v4153
    %v5347 = vunpack.c.l.b16 %v4154
    %v5348 = vunpack.c.h.b16 %v4154
    %v5349 = vunpack.c.l.b16 %v4155
    %v5350 = vunpack.c.h.b16 %v4155
    %v5351 = vunpack.c.l.b16 %v4156
    %v5352 = vunpack.c.h.b16 %v4156
    %v5353 = vunpack.c.l.b16 %v4157
    %v5354 = vunpack.c.h.b16 %v4157
    %v5355 = vunpack.c.l.b16 %v4158
    %v5356 = vunpack.c.h.b16 %v4158
    %v5357 = vunpack.c.l.b16 %v4159
    %v5358 = vunpack.c.h.b16 %v4159
    %v5359 = vunpack.c.l.b16 %v4160
    %v5360 = vunpack.c.h.b16 %v4160
    %v5361 = vunpack.c.l.b16 %v4161
    %v5362 = vunpack.c.h.b16 %v4161
    %v5363 = vunpack.c.l.b16 %v4162
    %v5364 = vunpack.c.h.b16 %v4162
    %v5365 = vunpack.c.l.b16 %v4163
    %v5366 = vunpack.c.h.b16 %v4163
    %v5367 = vunpack.c.l.b16 %v4164
    %v5368 = vunpack.c.h.b16 %v4164
    %v5369 = vunpack.c.l.b16 %v4165
    %v5370 = vunpack.c.h.b16 %v4165
    %v5371 = vunpack.c.l.b16 %v4166
    %v5372 = vunpack.c.h.b16 %v4166
    %v5373 = vunpack.c.l.b16 %v4167
    %v5374 = vunpack.c.h.b16 %v4167
    %v5375 = vunpack.c.l.b16 %v4168
    %v5376 = vunpack.c.h.b16 %v4168
    %v5377 = vunpack.c.l.b16 %v4169
    %v5378 = vunpack.c.h.b16 %v4169
    %v5379 = vunpack.c.l.b16 %v4170
    %v5380 = vunpack.c.h.b16 %v4170
    %v5381 = vunpack.c.l.b16 %v4171
    %v5382 = vunpack.c.h.b16 %v4171
    %v5383 = vunpack.c.l.b16 %v4172
    %v5384 = vunpack.c.h.b16 %v4172
    %v5385 = vunpack.c.l.b16 %v4173
    %v5386 = vunpack.c.h.b16 %v4173
    %v5387 = vunpack.c.l.b16 %v4174
    %v5388 = vunpack.c.h.b16 %v4174
    %v5389 = vunpack.c.l.b16 %v4175
    %v5390 = vunpack.c.h.b16 %v4175
    %v5391 = vunpack.c.l.b16 %v4176
    %v5392 = vunpack.c.h.b16 %v4176
    %v5393 = vunpack.c.l.b16 %v4177
    %v5394 = vunpack.c.h.b16 %v4177
    %v5395 = vunpack.c.l.b16 %v4178
    %v5396 = vunpack.c.h.b16 %v4178
    %v5397 = vunpack.c.l.b16 %v4179
    %v5398 = vunpack.c.h.b16 %v4179
    %v5399 = vunpack.c.l.b16 %v4180
    %v5400 = vunpack.c.h.b16 %v4180
    %v5401 = vunpack.c.l.b16 %v4181
    %v5402 = vunpack.c.h.b16 %v4181
    %v5403 = vunpack.c.l.b16 %v4182
    %v5404 = vunpack.c.h.b16 %v4182
    %v5405 = vunpack.c.l.b16 %v4183
    %v5406 = vunpack.c.h.b16 %v4183
    %v5407 = vunpack.c.l.b16 %v4184
    %v5408 = vunpack.c.h.b16 %v4184
    %v5409 = vunpack.c.l.b16 %v4185
    %v5410 = vunpack.c.h.b16 %v4185
    %v5411 = vunpack.c.l.b16 %v4186
    %v5412 = vunpack.c.h.b16 %v4186
    %v5413 = vunpack.c.l.b16 %v4187
    %v5414 = vunpack.c.h.b16 %v4187
    %v5415 = vunpack.c.l.b16 %v4188
    %v5416 = vunpack.c.h.b16 %v4188
    %v5417 = vunpack.c.l.b16 %v4189
    %v5418 = vunpack.c.h.b16 %v4189
    %v5419 = vunpack.c.l.b16 %v4190
    %v5420 = vunpack.c.h.b16 %v4190
    %v5421 = vunpack.c.l.b16 %v4191
    %v5422 = vunpack.c.h.b16 %v4191
    %v5423 = vunpack.c.l.b16 %v4192
    %v5424 = vunpack.c.h.b16 %v4192
    %v5425 = vunpack.c.l.b16 %v4193
    %v5426 = vunpack.c.h.b16 %v4193
    %v5427 = vunpack.c.l.b16 %v4194
    %v5428 = vunpack.c.h.b16 %v4194
    %v5429 = vunpack.c.l.b16 %v4195
    %v5430 = vunpack.c.h.b16 %v4195
    %v5431 = vunpack.c.l.b16 %v4196
    %v5432 = vunpack.c.h.b16 %v4196
    %v5433 = vunpack.c.l.b16 %v4197
    %v5434 = vunpack.c.h.b16 %v4197
    %v5435 = vunpack.c.l.b16 %v4198
    %v5436 = vunpack.c.h.b16 %v4198
    %v5437 = vunpack.c.l.b16 %v4199
    %v5438 = vunpack.c.h.b16 %v4199
    %v5439 = vunpack.c.l.b16 %v4200
    %v5440 = vunpack.c.h.b16 %v4200
    %v5441 = vunpack.c.l.b16 %v4201
    %v5442 = vunpack.c.h.b16 %v4201
    %v5443 = vunpack.c.l.b16 %v4202
    %v5444 = vunpack.c.h.b16 %v4202
    %v5445 = vunpack.c.l.b16 %v4203
    %v5446 = vunpack.c.h.b16 %v4203
    %v5447 = vunpack.c.l.b16 %v4204
    %v5448 = vunpack.c.h.b16 %v4204
    %v5449 = vunpack.c.l.b16 %v4205
    %v5450 = vunpack.c.h.b16 %v4205
    %v5451 = vunpack.c.l.b16 %v4206
    %v5452 = vunpack.c.h.b16 %v4206
    %v5453 = vunpack.c.l.b16 %v4207
    %v5454 = vunpack.c.h.b16 %v4207
    %v5455 = vunpack.c.l.b16 %v4208
    %v5456 = vunpack.c.h.b16 %v4208
    %v5457 = vunpack.c.l.b16 %v4209
    %v5458 = vunpack.c.h.b16 %v4209
    %v5459 = vunpack.c.l.b16 %v4210
    %v5460 = vunpack.c.h.b16 %v4210
    %v5461 = vunpack.c.l.b16 %v4211
    %v5462 = vunpack.c.h.b16 %v4211
    %v5463 = vunpack.c.l.b16 %v4212
    %v5464 = vunpack.c.h.b16 %v4212
    %v5465 = vunpack.c.l.b16 %v4213
    %v5466 = vunpack.c.h.b16 %v4213
    %v5467 = vunpack.c.l.b16 %v4214
    %v5468 = vunpack.c.h.b16 %v4214
    %v5469 = vunpack.c.l.b16 %v4215
    %v5470 = vunpack.c.h.b16 %v4215
    %v5471 = vunpack.c.l.b16 %v4216
    %v5472 = vunpack.c.h.b16 %v4216
    %v5473 = vunpack.c.l.b16 %v4217
    %v5474 = vunpack.c.h.b16 %v4217
    %v5475 = vunpack.c.l.b16 %v4218
    %v5476 = vunpack.c.h.b16 %v4218
    %v5477 = vunpack.c.l.b16 %v4219
    %v5478 = vunpack.c.h.b16 %v4219
    %v5479 = vunpack.c.l.b16 %v4220
    %v5480 = vunpack.c.h.b16 %v4220
    %v5481 = vunpack.c.l.b16 %v4221
    %v5482 = vunpack.c.h.b16 %v4221
    %v5483 = vunpack.c.l.b16 %v4222
    %v5484 = vunpack.c.h.b16 %v4222
    %v5485 = vunpack.c.l.b16 %v4223
    %v5486 = vunpack.c.h.b16 %v4223
    %v5487 = vunpack.c.l.b16 %v4224
    %v5488 = vunpack.c.h.b16 %v4224
    %v5489 = vunpack.c.l.b16 %v4225
    %v5490 = vunpack.c.h.b16 %v4225
    %v5491 = vunpack.c.l.b16 %v4226
    %v5492 = vunpack.c.h.b16 %v4226
    %v5493 = vunpack.c.l.b16 %v4227
    %v5494 = vunpack.c.h.b16 %v4227
    %v5495 = vunpack.c.l.b16 %v4228
    %v5496 = vunpack.c.h.b16 %v4228
    %v5497 = vunpack.c.l.b16 %v4229
    %v5498 = vunpack.c.h.b16 %v4229
    %v5499 = vunpack.c.l.b16 %v4230
    %v5500 = vunpack.c.h.b16 %v4230
    %v5501 = vunpack.c.l.b16 %v4231
    %v5502 = vunpack.c.h.b16 %v4231
    %v5503 = vunpack.c.l.b16 %v4232
    %v5504 = vunpack.c.h.b16 %v4232
    %v5505 = vunpack.c.l.b16 %v4233
    %v5506 = vunpack.c.h.b16 %v4233
    %v5507 = vunpack.c.l.b16 %v4234
    %v5508 = vunpack.c.h.b16 %v4234
    %v5509 = vunpack.c.l.b16 %v4235
    %v5510 = vunpack.c.h.b16 %v4235
    %v5511 = vunpack.c.l.b16 %v4236
    %v5512 = vunpack.c.h.b16 %v4236
    %v5513 = vunpack.c.l.b16 %v4237
    %v5514 = vunpack.c.h.b16 %v4237
    %v5515 = vunpack.c.l.b16 %v4238
    %v5516 = vunpack.c.h.b16 %v4238
    %v5517 = vunpack.c.l.b16 %v4239
    %v5518 = vunpack.c.h.b16 %v4239
    %v5519 = vunpack.c.l.b16 %v4240
    %v5520 = vunpack.c.h.b16 %v4240
    %v5521 = vunpack.c.l.b16 %v4241
    %v5522 = vunpack.c.h.b16 %v4241
    %v5523 = vunpack.c.l.b16 %v4242
    %v5524 = vunpack.c.h.b16 %v4242
    %v5525 = vunpack.c.l.b16 %v4243
    %v5526 = vunpack.c.h.b16 %v4243
    %v5527 = vunpack.c.l.b16 %v4244
    %v5528 = vunpack.c.h.b16 %v4244
    %v5529 = vunpack.c.l.b16 %v4245
    %v5530 = vunpack.c.h.b16 %v4245
    %v5531 = vunpack.c.l.b16 %v4246
    %v5532 = vunpack.c.h.b16 %v4246
    %v5533 = vunpack.c.l.b16 %v4247
    %v5534 = vunpack.c.h.b16 %v4247
    %v5535 = vunpack.c.l.b16 %v4248
    %v5536 = vunpack.c.h.b16 %v4248
    %v5537 = vunpack.c.l.b16 %v4249
    %v5538 = vunpack.c.h.b16 %v4249
    %v5539 = vunpack.c.l.b16 %v4250
    %v5540 = vunpack.c.h.b16 %v4250
    %v5541 = vunpack.c.l.b16 %v4251
    %v5542 = vunpack.c.h.b16 %v4251
    %v5543 = vunpack.c.l.b16 %v4252
    %v5544 = vunpack.c.h.b16 %v4252
    %v5545 = vunpack.c.l.b16 %v4253
    %v5546 = vunpack.c.h.b16 %v4253
    %v5547 = vunpack.c.l.b16 %v4254
    %v5548 = vunpack.c.h.b16 %v4254
    %v5549 = vunpack.c.l.b16 %v4255
    %v5550 = vunpack.c.h.b16 %v4255
    %v5551 = vunpack.c.l.b16 %v4256
    %v5552 = vunpack.c.h.b16 %v4256
    %v5553 = vunpack.c.l.b16 %v4257
    %v5554 = vunpack.c.h.b16 %v4257
    %v5555 = vunpack.c.l.b16 %v4258
    %v5556 = vunpack.c.h.b16 %v4258
    %v5557 = vunpack.c.l.b16 %v4259
    %v5558 = vunpack.c.h.b16 %v4259
    %v5559 = vunpack.c.l.b16 %v4260
    %v5560 = vunpack.c.h.b16 %v4260
    %v5561 = vunpack.c.l.b16 %v4261
    %v5562 = vunpack.c.h.b16 %v4261
    %v5563 = vunpack.c.l.b16 %v4262
    %v5564 = vunpack.c.h.b16 %v4262
    %v5565 = vunpack.c.l.b16 %v4263
    %v5566 = vunpack.c.h.b16 %v4263
    %v5567 = vunpack.c.l.b16 %v4264
    %v5568 = vunpack.c.h.b16 %v4264
    %v5569 = vunpack.c.l.b16 %v4265
    %v5570 = vunpack.c.h.b16 %v4265
    %v5571 = vunpack.c.l.b16 %v4266
    %v5572 = vunpack.c.h.b16 %v4266
    %v5573 = vunpack.c.l.b16 %v4267
    %v5574 = vunpack.c.h.b16 %v4267
    %v5575 = vunpack.c.l.b16 %v4268
    %v5576 = vunpack.c.h.b16 %v4268
    %v5577 = vunpack.c.l.b16 %v4269
    %v5578 = vunpack.c.h.b16 %v4269
    %v5579 = vunpack.c.l.b16 %v4270
    %v5580 = vunpack.c.h.b16 %v4270
    %v5581 = vunpack.c.l.b16 %v4271
    %v5582 = vunpack.c.h.b16 %v4271
    %v5583 = vunpack.c.l.b16 %v4272
    %v5584 = vunpack.c.h.b16 %v4272
    %v5585 = vunpack.c.l.b16 %v4273
    %v5586 = vunpack.c.h.b16 %v4273
    %v5587 = vunpack.c.l.b16 %v4274
    %v5588 = vunpack.c.h.b16 %v4274
    %v5589 = vunpack.c.l.b16 %v4275
    %v5590 = vunpack.c.h.b16 %v4275
    %v5591 = vunpack.c.l.b16 %v4276
    %v5592 = vunpack.c.h.b16 %v4276
    %v5593 = vunpack.c.l.b16 %v4277
    %v5594 = vunpack.c.h.b16 %v4277
    %v5595 = vunpack.c.l.b16 %v4278
    %v5596 = vunpack.c.h.b16 %v4278
    %v5597 = vunpack.c.l.b16 %v4279
    %v5598 = vunpack.c.h.b16 %v4279
    %v5599 = vunpack.c.l.b16 %v4280
    %v5600 = vunpack.c.h.b16 %v4280
    %v5601 = vunpack.c.l.b16 %v4281
    %v5602 = vunpack.c.h.b16 %v4281
    %v5603 = vunpack.c.l.b16 %v4282
    %v5604 = vunpack.c.h.b16 %v4282
    %v5605 = vunpack.c.l.b16 %v4283
    %v5606 = vunpack.c.h.b16 %v4283
    %v5607 = vunpack.c.l.b16 %v4284
    %v5608 = vunpack.c.h.b16 %v4284
    %v5609 = vunpack.c.l.b16 %v4285
    %v5610 = vunpack.c.h.b16 %v4285
    %v5611 = vunpack.c.l.b16 %v4286
    %v5612 = vunpack.c.h.b16 %v4286
    %v5613 = vunpack.c.l.b16 %v4287
    %v5614 = vunpack.c.h.b16 %v4287
    %v5615 = vunpack.c.l.b16 %v4288
    %v5616 = vunpack.c.h.b16 %v4288
    %v5617 = vunpack.c.l.b16 %v4289
    %v5618 = vunpack.c.h.b16 %v4289
    %v5619 = vunpack.c.l.b16 %v4290
    %v5620 = vunpack.c.h.b16 %v4290
    %v5621 = vunpack.c.l.b16 %v4291
    %v5622 = vunpack.c.h.b16 %v4291
    %v5623 = vunpack.c.l.b16 %v4292
    %v5624 = vunpack.c.h.b16 %v4292
    %v5625 = vunpack.c.l.b16 %v4293
    %v5626 = vunpack.c.h.b16 %v4293
    %v5627 = vunpack.c.l.b16 %v4294
    %v5628 = vunpack.c.h.b16 %v4294
    %v5629 = vunpack.c.l.b16 %v4295
    %v5630 = vunpack.c.h.b16 %v4295
    %v5631 = vunpack.c.l.b16 %v4296
    %v5632 = vunpack.c.h.b16 %v4296
    %v5633 = vunpack.c.l.b16 %v4297
    %v5634 = vunpack.c.h.b16 %v4297
    %v5635 = vunpack.c.l.b16 %v4298
    %v5636 = vunpack.c.h.b16 %v4298
    %v5637 = vunpack.c.l.b16 %v4299
    %v5638 = vunpack.c.h.b16 %v4299
    %v5639 = vunpack.c.l.b16 %v4300
    %v5640 = vunpack.c.h.b16 %v4300
    %v5641 = vunpack.c.l.b16 %v4301
    %v5642 = vunpack.c.h.b16 %v4301
    %v5643 = vunpack.c.l.b16 %v4302
    %v5644 = vunpack.c.h.b16 %v4302
    %v5645 = vunpack.c.l.b16 %v4303
    %v5646 = vunpack.c.h.b16 %v4303
    %v5647 = vunpack.c.l.b16 %v4304
    %v5648 = vunpack.c.h.b16 %v4304
    %v5649 = vunpack.c.l.b16 %v4305
    %v5650 = vunpack.c.h.b16 %v4305
    %v5651 = vunpack.c.l.b16 %v4306
    %v5652 = vunpack.c.h.b16 %v4306
    %v5653 = vunpack.c.l.b16 %v4307
    %v5654 = vunpack.c.h.b16 %v4307
    %v5655 = vunpack.c.l.b16 %v4308
    %v5656 = vunpack.c.h.b16 %v4308
    %v5657 = vunpack.c.l.b16 %v4309
    %v5658 = vunpack.c.h.b16 %v4309
    %v5659 = vunpack.c.l.b16 %v4310
    %v5660 = vunpack.c.h.b16 %v4310
    %v5661 = vunpack.c.l.b16 %v4311
    %v5662 = vunpack.c.h.b16 %v4311
    %v5663 = vunpack.c.l.b16 %v4312
    %v5664 = vunpack.c.h.b16 %v4312
    %v5665 = vunpack.c.l.b16 %v4313
    %v5666 = vunpack.c.h.b16 %v4313
    %v5667 = vunpack.c.l.b16 %v4314
    %v5668 = vunpack.c.h.b16 %v4314
    %v5669 = vunpack.c.l.b16 %v4315
    %v5670 = vunpack.c.h.b16 %v4315
    %v5671 = vunpack.c.l.b16 %v4316
    %v5672 = vunpack.c.h.b16 %v4316
    %v5673 = vunpack.c.l.b16 %v4317
    %v5674 = vunpack.c.h.b16 %v4317
    %v5675 = vunpack.c.l.b16 %v4318
    %v5676 = vunpack.c.h.b16 %v4318
    %v5677 = vunpack.c.l.b16 %v4319
    %v5678 = vunpack.c.h.b16 %v4319
    %v5679 = vunpack.c.l.b16 %v4320
    %v5680 = vunpack.c.h.b16 %v4320
    %v5681 = vunpack.c.l.b16 %v4321
    %v5682 = vunpack.c.h.b16 %v4321
    %v5683 = vunpack.c.l.b16 %v4322
    %v5684 = vunpack.c.h.b16 %v4322
    %v5685 = vunpack.c.l.b16 %v4323
    %v5686 = vunpack.c.h.b16 %v4323
    %v5687 = vunpack.c.l.b16 %v4324
    %v5688 = vunpack.c.h.b16 %v4324
    %v5689 = vunpack.c.l.b16 %v4325
    %v5690 = vunpack.c.h.b16 %v4325
    %v5691 = vunpack.c.l.b16 %v4326
    %v5692 = vunpack.c.h.b16 %v4326
    %v5693 = vunpack.c.l.b16 %v4327
    %v5694 = vunpack.c.h.b16 %v4327
    %v5695 = vunpack.c.l.b16 %v4328
    %v5696 = vunpack.c.h.b16 %v4328
    %v5697 = vunpack.c.l.b16 %v4329
    %v5698 = vunpack.c.h.b16 %v4329
    %v5699 = vunpack.c.l.b16 %v4330
    %v5700 = vunpack.c.h.b16 %v4330
    %v5701 = vunpack.c.l.b16 %v4331
    %v5702 = vunpack.c.h.b16 %v4331
    %v5703 = vunpack.c.l.b16 %v4332
    %v5704 = vunpack.c.h.b16 %v4332
    %v5705 = vunpack.c.l.b16 %v4333
    %v5706 = vunpack.c.h.b16 %v4333
    %v5707 = vunpack.c.l.b16 %v4334
    %v5708 = vunpack.c.h.b16 %v4334
    %v5709 = vunpack.c.l.b16 %v4335
    %v5710 = vunpack.c.h.b16 %v4335
    %v5711 = vunpack.c.l.b16 %v4336
    %v5712 = vunpack.c.h.b16 %v4336
    %v5713 = vunpack.c.l.b16 %v4337
    %v5714 = vunpack.c.h.b16 %v4337
    %v5715 = vunpack.c.l.b16 %v4338
    %v5716 = vunpack.c.h.b16 %v4338
    %v5717 = vunpack.c.l.b16 %v4339
    %v5718 = vunpack.c.h.b16 %v4339
    %v5719 = vunpack.c.l.b16 %v4340
    %v5720 = vunpack.c.h.b16 %v4340
    %v5721 = vunpack.c.l.b16 %v4341
    %v5722 = vunpack.c.h.b16 %v4341
    %v5723 = vunpack.c.l.b16 %v4342
    %v5724 = vunpack.c.h.b16 %v4342
    %v5725 = vunpack.c.l.b16 %v4343
    %v5726 = vunpack.c.h.b16 %v4343
    %v5727 = vunpack.c.l.b16 %v4344
    %v5728 = vunpack.c.h.b16 %v4344
    %v5729 = vunpack.c.l.b16 %v4345
    %v5730 = vunpack.c.h.b16 %v4345
    %v5731 = vunpack.c.l.b16 %v4346
    %v5732 = vunpack.c.h.b16 %v4346
    %v5733 = vpack.c.b16 %v4845, %v4837
    %v5734 = vpack.c.b16 %v4846, %v4838
    %v5735 = vpack.c.b16 %v4847, %v4839
    %v5736 = vpack.c.b16 %v4848, %v4840
    %v5737 = vpack.c.b16 %v4849, %v4841
    %v5738 = vpack.c.b16 %v4850, %v4842
    %v5739 = vpack.c.b16 %v4851, %v4843
    %v5740 = vpack.c.b16 %v4852, %v4844
    %v5741 = vpack.c.b16 %v4861, %v4853
    %v5742 = vpack.c.b16 %v4862, %v4854
    %v5743 = vpack.c.b16 %v4863, %v4855
    %v5744 = vpack.c.b16 %v4864, %v4856
    %v5745 = vpack.c.b16 %v4865, %v4857
    %v5746 = vpack.c.b16 %v4866, %v4858
    %v5747 = vpack.c.b16 %v4867, %v4859
    %v5748 = vpack.c.b16 %v4868, %v4860
    %v5749 = vpack.c.b16 %v4877, %v4869
    %v5750 = vpack.c.b16 %v4878, %v4870
    %v5751 = vpack.c.b16 %v4879, %v4871
    %v5752 = vpack.c.b16 %v4880, %v4872
    %v5753 = vpack.c.b16 %v4881, %v4873
    %v5754 = vpack.c.b16 %v4882, %v4874
    %v5755 = vpack.c.b16 %v4883, %v4875
    %v5756 = vpack.c.b16 %v4884, %v4876
    %v5757 = vpack.c.b16 %v4893, %v4885
    %v5758 = vpack.c.b16 %v4894, %v4886
    %v5759 = vpack.c.b16 %v4895, %v4887
    %v5760 = vpack.c.b16 %v4896, %v4888
    %v5761 = vpack.c.b16 %v4897, %v4889
    %v5762 = vpack.c.b16 %v4898, %v4890
    %v5763 = vpack.c.b16 %v4899, %v4891
    %v5764 = vpack.c.b16 %v4900, %v4892
    %v5765 = vpack.c.b16 %v4909, %v4901
    %v5766 = vpack.c.b16 %v4910, %v4902
    %v5767 = vpack.c.b16 %v4911, %v4903
    %v5768 = vpack.c.b16 %v4912, %v4904
    %v5769 = vpack.c.b16 %v4913, %v4905
    %v5770 = vpack.c.b16 %v4914, %v4906
    %v5771 = vpack.c.b16 %v4915, %v4907
    %v5772 = vpack.c.b16 %v4916, %v4908
    %v5773 = vpack.c.b16 %v4925, %v4917
    %v5774 = vpack.c.b16 %v4926, %v4918
    %v5775 = vpack.c.b16 %v4927, %v4919
    %v5776 = vpack.c.b16 %v4928, %v4920
    %v5777 = vpack.c.b16 %v4929, %v4921
    %v5778 = vpack.c.b16 %v4930, %v4922
    %v5779 = vpack.c.b16 %v4931, %v4923
    %v5780 = vpack.c.b16 %v4932, %v4924
    %v5781 = vpack.c.b16 %v4941, %v4933
    %v5782 = vpack.c.b16 %v4942, %v4934
    %v5783 = vpack.c.b16 %v4943, %v4935
    %v5784 = vpack.c.b16 %v4944, %v4936
    %v5785 = vpack.c.b16 %v4945, %v4937
    %v5786 = vpack.c.b16 %v4946, %v4938
    %v5787 = vpack.c.b16 %v4947, %v4939
    %v5788 = vpack.c.b16 %v4948, %v4940
    %v5789 = vpack.c.b16 %v4957, %v4949
    %v5790 = vpack.c.b16 %v4958, %v4950
    %v5791 = vpack.c.b16 %v4959, %v4951
    %v5792 = vpack.c.b16 %v4960, %v4952
    %v5793 = vpack.c.b16 %v4961, %v4953
    %v5794 = vpack.c.b16 %v4962, %v4954
    %v5795 = vpack.c.b16 %v4963, %v4955
    %v5796 = vpack.c.b16 %v4964, %v4956
    %v5797 = vpack.c.b16 %v4973, %v4965
    %v5798 = vpack.c.b16 %v4974, %v4966
    %v5799 = vpack.c.b16 %v4975, %v4967
    %v5800 = vpack.c.b16 %v4976, %v4968
    %v5801 = vpack.c.b16 %v4977, %v4969
    %v5802 = vpack.c.b16 %v4978, %v4970
    %v5803 = vpack.c.b16 %v4979, %v4971
    %v5804 = vpack.c.b16 %v4980, %v4972
    %v5805 = vpack.c.b16 %v4989, %v4981
    %v5806 = vpack.c.b16 %v4990, %v4982
    %v5807 = vpack.c.b16 %v4991, %v4983
    %v5808 = vpack.c.b16 %v4992, %v4984
    %v5809 = vpack.c.b16 %v4993, %v4985
    %v5810 = vpack.c.b16 %v4994, %v4986
    %v5811 = vpack.c.b16 %v4995, %v4987
    %v5812 = vpack.c.b16 %v4996, %v4988
    %v5813 = vpack.c.b16 %v5005, %v4997
    %v5814 = vpack.c.b16 %v5006, %v4998
    %v5815 = vpack.c.b16 %v5007, %v4999
    %v5816 = vpack.c.b16 %v5008, %v5000
    %v5817 = vpack.c.b16 %v5009, %v5001
    %v5818 = vpack.c.b16 %v5010, %v5002
    %v5819 = vpack.c.b16 %v5011, %v5003
    %v5820 = vpack.c.b16 %v5012, %v5004
    %v5821 = vpack.c.b16 %v5021, %v5013
    %v5822 = vpack.c.b16 %v5022, %v5014
    %v5823 = vpack.c.b16 %v5023, %v5015
    %v5824 = vpack.c.b16 %v5024, %v5016
    %v5825 = vpack.c.b16 %v5025, %v5017
    %v5826 = vpack.c.b16 %v5026, %v5018
    %v5827 = vpack.c.b16 %v5027, %v5019
    %v5828 = vpack.c.b16 %v5028, %v5020
    %v5829 = vpack.c.b16 %v5037, %v5029
    %v5830 = vpack.c.b16 %v5038, %v5030
    %v5831 = vpack.c.b16 %v5039, %v5031
    %v5832 = vpack.c.b16 %v5040, %v5032
    %v5833 = vpack.c.b16 %v5041, %v5033
    %v5834 = vpack.c.b16 %v5042, %v5034
    %v5835 = vpack.c.b16 %v5043, %v5035
    %v5836 = vpack.c.b16 %v5044, %v5036
    %v5837 = vpack.c.b16 %v5053, %v5045
    %v5838 = vpack.c.b16 %v5054, %v5046
    %v5839 = vpack.c.b16 %v5055, %v5047
    %v5840 = vpack.c.b16 %v5056, %v5048
    %v5841 = vpack.c.b16 %v5057, %v5049
    %v5842 = vpack.c.b16 %v5058, %v5050
    %v5843 = vpack.c.b16 %v5059, %v5051
    %v5844 = vpack.c.b16 %v5060, %v5052
    %v5845 = vpack.c.b16 %v5069, %v5061
    %v5846 = vpack.c.b16 %v5070, %v5062
    %v5847 = vpack.c.b16 %v5071, %v5063
    %v5848 = vpack.c.b16 %v5072, %v5064
    %v5849 = vpack.c.b16 %v5073, %v5065
    %v5850 = vpack.c.b16 %v5074, %v5066
    %v5851 = vpack.c.b16 %v5075, %v5067
    %v5852 = vpack.c.b16 %v5076, %v5068
    %v5853 = vpack.c.b16 %v5085, %v5077
    %v5854 = vpack.c.b16 %v5086, %v5078
    %v5855 = vpack.c.b16 %v5087, %v5079
    %v5856 = vpack.c.b16 %v5088, %v5080
    %v5857 = vpack.c.b16 %v5089, %v5081
    %v5858 = vpack.c.b16 %v5090, %v5082
    %v5859 = vpack.c.b16 %v5091, %v5083
    %v5860 = vpack.c.b16 %v5092, %v5084
    %v5861 = vpack.c.b16 %v5101, %v5093
    %v5862 = vpack.c.b16 %v5102, %v5094
    %v5863 = vpack.c.b16 %v5103, %v5095
    %v5864 = vpack.c.b16 %v5104, %v5096
    %v5865 = vpack.c.b16 %v5105, %v5097
    %v5866 = vpack.c.b16 %v5106, %v5098
    %v5867 = vpack.c.b16 %v5107, %v5099
    %v5868 = vpack.c.b16 %v5108, %v5100
    %v5869 = vpack.c.b16 %v5117, %v5109
    %v5870 = vpack.c.b16 %v5118, %v5110
    %v5871 = vpack.c.b16 %v5119, %v5111
    %v5872 = vpack.c.b16 %v5120, %v5112
    %v5873 = vpack.c.b16 %v5121, %v5113
    %v5874 = vpack.c.b16 %v5122, %v5114
    %v5875 = vpack.c.b16 %v5123, %v5115
    %v5876 = vpack.c.b16 %v5124, %v5116
    %v5877 = vpack.c.b16 %v5133, %v5125
    %v5878 = vpack.c.b16 %v5134, %v5126
    %v5879 = vpack.c.b16 %v5135, %v5127
    %v5880 = vpack.c.b16 %v5136, %v5128
    %v5881 = vpack.c.b16 %v5137, %v5129
    %v5882 = vpack.c.b16 %v5138, %v5130
    %v5883 = vpack.c.b16 %v5139, %v5131
    %v5884 = vpack.c.b16 %v5140, %v5132
    %v5885 = vpack.c.b16 %v5149, %v5141
    %v5886 = vpack.c.b16 %v5150, %v5142
    %v5887 = vpack.c.b16 %v5151, %v5143
    %v5888 = vpack.c.b16 %v5152, %v5144
    %v5889 = vpack.c.b16 %v5153, %v5145
    %v5890 = vpack.c.b16 %v5154, %v5146
    %v5891 = vpack.c.b16 %v5155, %v5147
    %v5892 = vpack.c.b16 %v5156, %v5148
    %v5893 = vpack.c.b16 %v5165, %v5157
    %v5894 = vpack.c.b16 %v5166, %v5158
    %v5895 = vpack.c.b16 %v5167, %v5159
    %v5896 = vpack.c.b16 %v5168, %v5160
    %v5897 = vpack.c.b16 %v5169, %v5161
    %v5898 = vpack.c.b16 %v5170, %v5162
    %v5899 = vpack.c.b16 %v5171, %v5163
    %v5900 = vpack.c.b16 %v5172, %v5164
    %v5901 = vpack.c.b16 %v5181, %v5173
    %v5902 = vpack.c.b16 %v5182, %v5174
    %v5903 = vpack.c.b16 %v5183, %v5175
    %v5904 = vpack.c.b16 %v5184, %v5176
    %v5905 = vpack.c.b16 %v5185, %v5177
    %v5906 = vpack.c.b16 %v5186, %v5178
    %v5907 = vpack.c.b16 %v5187, %v5179
    %v5908 = vpack.c.b16 %v5188, %v5180
    %v5909 = vpack.c.b16 %v5197, %v5189
    %v5910 = vpack.c.b16 %v5198, %v5190
    %v5911 = vpack.c.b16 %v5199, %v5191
    %v5912 = vpack.c.b16 %v5200, %v5192
    %v5913 = vpack.c.b16 %v5201, %v5193
    %v5914 = vpack.c.b16 %v5202, %v5194
    %v5915 = vpack.c.b16 %v5203, %v5195
    %v5916 = vpack.c.b16 %v5204, %v5196
    %v5917 = vpack.c.b16 %v5213, %v5205
    %v5918 = vpack.c.b16 %v5214, %v5206
    %v5919 = vpack.c.b16 %v5215, %v5207
    %v5920 = vpack.c.b16 %v5216, %v5208
    %v5921 = vpack.c.b16 %v5217, %v5209
    %v5922 = vpack.c.b16 %v5218, %v5210
    %v5923 = vpack.c.b16 %v5219, %v5211
    %v5924 = vpack.c.b16 %v5220, %v5212
    %v5925 = vpack.c.b16 %v5229, %v5221
    %v5926 = vpack.c.b16 %v5230, %v5222
    %v5927 = vpack.c.b16 %v5231, %v5223
    %v5928 = vpack.c.b16 %v5232, %v5224
    %v5929 = vpack.c.b16 %v5233, %v5225
    %v5930 = vpack.c.b16 %v5234, %v5226
    %v5931 = vpack.c.b16 %v5235, %v5227
    %v5932 = vpack.c.b16 %v5236, %v5228
    %v5933 = vpack.c.b16 %v5245, %v5237
    %v5934 = vpack.c.b16 %v5246, %v5238
    %v5935 = vpack.c.b16 %v5247, %v5239
    %v5936 = vpack.c.b16 %v5248, %v5240
    %v5937 = vpack.c.b16 %v5249, %v5241
    %v5938 = vpack.c.b16 %v5250, %v5242
    %v5939 = vpack.c.b16 %v5251, %v5243
    %v5940 = vpack.c.b16 %v5252, %v5244
    %v5941 = vpack.c.b16 %v5261, %v5253
    %v5942 = vpack.c.b16 %v5262, %v5254
    %v5943 = vpack.c.b16 %v5263, %v5255
    %v5944 = vpack.c.b16 %v5264, %v5256
    %v5945 = vpack.c.b16 %v5265, %v5257
    %v5946 = vpack.c.b16 %v5266, %v5258
    %v5947 = vpack.c.b16 %v5267, %v5259
    %v5948 = vpack.c.b16 %v5268, %v5260
    %v5949 = vpack.c.b16 %v5277, %v5269
    %v5950 = vpack.c.b16 %v5278, %v5270
    %v5951 = vpack.c.b16 %v5279, %v5271
    %v5952 = vpack.c.b16 %v5280, %v5272
    %v5953 = vpack.c.b16 %v5281, %v5273
    %v5954 = vpack.c.b16 %v5282, %v5274
    %v5955 = vpack.c.b16 %v5283, %v5275
    %v5956 = vpack.c.b16 %v5284, %v5276
    %v5957 = vpack.c.b16 %v5293, %v5285
    %v5958 = vpack.c.b16 %v5294, %v5286
    %v5959 = vpack.c.b16 %v5295, %v5287
    %v5960 = vpack.c.b16 %v5296, %v5288
    %v5961 = vpack.c.b16 %v5297, %v5289
    %v5962 = vpack.c.b16 %v5298, %v5290
    %v5963 = vpack.c.b16 %v5299, %v5291
    %v5964 = vpack.c.b16 %v5300, %v5292
    %v5965 = vpack.c.b16 %v5309, %v5301
    %v5966 = vpack.c.b16 %v5310, %v5302
    %v5967 = vpack.c.b16 %v5311, %v5303
    %v5968 = vpack.c.b16 %v5312, %v5304
    %v5969 = vpack.c.b16 %v5313, %v5305
    %v5970 = vpack.c.b16 %v5314, %v5306
    %v5971 = vpack.c.b16 %v5315, %v5307
    %v5972 = vpack.c.b16 %v5316, %v5308
    %v5973 = vpack.c.b16 %v5325, %v5317
    %v5974 = vpack.c.b16 %v5326, %v5318
    %v5975 = vpack.c.b16 %v5327, %v5319
    %v5976 = vpack.c.b16 %v5328, %v5320
    %v5977 = vpack.c.b16 %v5329, %v5321
    %v5978 = vpack.c.b16 %v5330, %v5322
    %v5979 = vpack.c.b16 %v5331, %v5323
    %v5980 = vpack.c.b16 %v5332, %v5324
    %v5981 = vpack.c.b16 %v5341, %v5333
    %v5982 = vpack.c.b16 %v5342, %v5334
    %v5983 = vpack.c.b16 %v5343, %v5335
    %v5984 = vpack.c.b16 %v5344, %v5336
    %v5985 = vpack.c.b16 %v5345, %v5337
    %v5986 = vpack.c.b16 %v5346, %v5338
    %v5987 = vpack.c.b16 %v5347, %v5339
    %v5988 = vpack.c.b16 %v5348, %v5340
    %v5989 = vpack.c.b16 %v5357, %v5349
    %v5990 = vpack.c.b16 %v5358, %v5350
    %v5991 = vpack.c.b16 %v5359, %v5351
    %v5992 = vpack.c.b16 %v5360, %v5352
    %v5993 = vpack.c.b16 %v5361, %v5353
    %v5994 = vpack.c.b16 %v5362, %v5354
    %v5995 = vpack.c.b16 %v5363, %v5355
    %v5996 = vpack.c.b16 %v5364, %v5356
    %v5997 = vpack.c.b16 %v5373, %v5365
    %v5998 = vpack.c.b16 %v5374, %v5366
    %v5999 = vpack.c.b16 %v5375, %v5367
    %v6000 = vpack.c.b16 %v5376, %v5368
    %v6001 = vpack.c.b16 %v5377, %v5369
    %v6002 = vpack.c.b16 %v5378, %v5370
    %v6003 = vpack.c.b16 %v5379, %v5371
    %v6004 = vpack.c.b16 %v5380, %v5372
    %v6005 = vpack.c.b16 %v5389, %v5381
    %v6006 = vpack.c.b16 %v5390, %v5382
    %v6007 = vpack.c.b16 %v5391, %v5383
    %v6008 = vpack.c.b16 %v5392, %v5384
    %v6009 = vpack.c.b16 %v5393, %v5385
    %v6010 = vpack.c.b16 %v5394, %v5386
    %v6011 = vpack.c.b16 %v5395, %v5387
    %v6012 = vpack.c.b16 %v5396, %v5388
    %v6013 = vpack.c.b16 %v5405, %v5397
    %v6014 = vpack.c.b16 %v5406, %v5398
    %v6015 = vpack.c.b16 %v5407, %v5399
    %v6016 = vpack.c.b16 %v5408, %v5400
    %v6017 = vpack.c.b16 %v5409, %v5401
    %v6018 = vpack.c.b16 %v5410, %v5402
    %v6019 = vpack.c.b16 %v5411, %v5403
    %v6020 = vpack.c.b16 %v5412, %v5404
    %v6021 = vpack.c.b16 %v5421, %v5413
    %v6022 = vpack.c.b16 %v5422, %v5414
    %v6023 = vpack.c.b16 %v5423, %v5415
    %v6024 = vpack.c.b16 %v5424, %v5416
    %v6025 = vpack.c.b16 %v5425, %v5417
    %v6026 = vpack.c.b16 %v5426, %v5418
    %v6027 = vpack.c.b16 %v5427, %v5419
    %v6028 = vpack.c.b16 %v5428, %v5420
    %v6029 = vpack.c.b16 %v5437, %v5429
    %v6030 = vpack.c.b16 %v5438, %v5430
    %v6031 = vpack.c.b16 %v5439, %v5431
    %v6032 = vpack.c.b16 %v5440, %v5432
    %v6033 = vpack.c.b16 %v5441, %v5433
    %v6034 = vpack.c.b16 %v5442, %v5434
    %v6035 = vpack.c.b16 %v5443, %v5435
    %v6036 = vpack.c.b16 %v5444, %v5436
    %v6037 = vpack.c.b16 %v5453, %v5445
    %v6038 = vpack.c.b16 %v5454, %v5446
    %v6039 = vpack.c.b16 %v5455, %v5447
    %v6040 = vpack.c.b16 %v5456, %v5448
    %v6041 = vpack.c.b16 %v5457, %v5449
    %v6042 = vpack.c.b16 %v5458, %v5450
    %v6043 = vpack.c.b16 %v5459, %v5451
    %v6044 = vpack.c.b16 %v5460, %v5452
    %v6045 = vpack.c.b16 %v5469, %v5461
    %v6046 = vpack.c.b16 %v5470, %v5462
    %v6047 = vpack.c.b16 %v5471, %v5463
    %v6048 = vpack.c.b16 %v5472, %v5464
    %v6049 = vpack.c.b16 %v5473, %v5465
    %v6050 = vpack.c.b16 %v5474, %v5466
    %v6051 = vpack.c.b16 %v5475, %v5467
    %v6052 = vpack.c.b16 %v5476, %v5468
    %v6053 = vpack.c.b16 %v5485, %v5477
    %v6054 = vpack.c.b16 %v5486, %v5478
    %v6055 = vpack.c.b16 %v5487, %v5479
    %v6056 = vpack.c.b16 %v5488, %v5480
    %v6057 = vpack.c.b16 %v5489, %v5481
    %v6058 = vpack.c.b16 %v5490, %v5482
    %v6059 = vpack.c.b16 %v5491, %v5483
    %v6060 = vpack.c.b16 %v5492, %v5484
    %v6061 = vpack.c.b16 %v5501, %v5493
    %v6062 = vpack.c.b16 %v5502, %v5494
    %v6063 = vpack.c.b16 %v5503, %v5495
    %v6064 = vpack.c.b16 %v5504, %v5496
    %v6065 = vpack.c.b16 %v5505, %v5497
    %v6066 = vpack.c.b16 %v5506, %v5498
    %v6067 = vpack.c.b16 %v5507, %v5499
    %v6068 = vpack.c.b16 %v5508, %v5500
    %v6069 = vpack.c.b16 %v5517, %v5509
    %v6070 = vpack.c.b16 %v5518, %v5510
    %v6071 = vpack.c.b16 %v5519, %v5511
    %v6072 = vpack.c.b16 %v5520, %v5512
    %v6073 = vpack.c.b16 %v5521, %v5513
    %v6074 = vpack.c.b16 %v5522, %v5514
    %v6075 = vpack.c.b16 %v5523, %v5515
    %v6076 = vpack.c.b16 %v5524, %v5516
    %v6077 = vpack.c.b16 %v5533, %v5525
    %v6078 = vpack.c.b16 %v5534, %v5526
    %v6079 = vpack.c.b16 %v5535, %v5527
    %v6080 = vpack.c.b16 %v5536, %v5528
    %v6081 = vpack.c.b16 %v5537, %v5529
    %v6082 = vpack.c.b16 %v5538, %v5530
    %v6083 = vpack.c.b16 %v5539, %v5531
    %v6084 = vpack.c.b16 %v5540, %v5532
    %v6085 = vpack.c.b16 %v5549, %v5541
    %v6086 = vpack.c.b16 %v5550, %v5542
    %v6087 = vpack.c.b16 %v5551, %v5543
    %v6088 = vpack.c.b16 %v5552, %v5544
    %v6089 = vpack.c.b16 %v5553, %v5545
    %v6090 = vpack.c.b16 %v5554, %v5546
    %v6091 = vpack.c.b16 %v5555, %v5547
    %v6092 = vpack.c.b16 %v5556, %v5548
    %v6093 = vpack.c.b16 %v5565, %v5557
    %v6094 = vpack.c.b16 %v5566, %v5558
    %v6095 = vpack.c.b16 %v5567, %v5559
    %v6096 = vpack.c.b16 %v5568, %v5560
    %v6097 = vpack.c.b16 %v5569, %v5561
    %v6098 = vpack.c.b16 %v5570, %v5562
    %v6099 = vpack.c.b16 %v5571, %v5563
    %v6100 = vpack.c.b16 %v5572, %v5564
    %v6101 = vpack.c.b16 %v5581, %v5573
    %v6102 = vpack.c.b16 %v5582, %v5574
    %v6103 = vpack.c.b16 %v5583, %v5575
    %v6104 = vpack.c.b16 %v5584, %v5576
    %v6105 = vpack.c.b16 %v5585, %v5577
    %v6106 = vpack.c.b16 %v5586, %v5578
    %v6107 = vpack.c.b16 %v5587, %v5579
    %v6108 = vpack.c.b16 %v5588, %v5580
    %v6109 = vpack.c.b16 %v5597, %v5589
    %v6110 = vpack.c.b16 %v5598, %v5590
    %v6111 = vpack.c.b16 %v5599, %v5591
    %v6112 = vpack.c.b16 %v5600, %v5592
    %v6113 = vpack.c.b16 %v5601, %v5593
    %v6114 = vpack.c.b16 %v5602, %v5594
    %v6115 = vpack.c.b16 %v5603, %v5595
    %v6116 = vpack.c.b16 %v5604, %v5596
    %v6117 = vpack.c.b16 %v5613, %v5605
    %v6118 = vpack.c.b16 %v5614, %v5606
    %v6119 = vpack.c.b16 %v5615, %v5607
    %v6120 = vpack.c.b16 %v5616, %v5608
    %v6121 = vpack.c.b16 %v5617, %v5609
    %v6122 = vpack.c.b16 %v5618, %v5610
    %v6123 = vpack.c.b16 %v5619, %v5611
    %v6124 = vpack.c.b16 %v5620, %v5612
    %v6125 = vpack.c.b16 %v5629, %v5621
    %v6126 = vpack.c.b16 %v5630, %v5622
    %v6127 = vpack.c.b16 %v5631, %v5623
    %v6128 = vpack.c.b16 %v5632, %v5624
    %v6129 = vpack.c.b16 %v5633, %v5625
    %v6130 = vpack.c.b16 %v5634, %v5626
    %v6131 = vpack.c.b16 %v5635, %v5627
    %v6132 = vpack.c.b16 %v5636, %v5628
    %v6133 = vpack.c.b16 %v5645, %v5637
    %v6134 = vpack.c.b16 %v5646, %v5638
    %v6135 = vpack.c.b16 %v5647, %v5639
    %v6136 = vpack.c.b16 %v5648, %v5640
    %v6137 = vpack.c.b16 %v5649, %v5641
    %v6138 = vpack.c.b16 %v5650, %v5642
    %v6139 = vpack.c.b16 %v5651, %v5643
    %v6140 = vpack.c.b16 %v5652, %v5644
    %v6141 = vpack.c.b16 %v5661, %v5653
    %v6142 = vpack.c.b16 %v5662, %v5654
    %v6143 = vpack.c.b16 %v5663, %v5655
    %v6144 = vpack.c.b16 %v5664, %v5656
    %v6145 = vpack.c.b16 %v5665, %v5657
    %v6146 = vpack.c.b16 %v5666, %v5658
    %v6147 = vpack.c.b16 %v5667, %v5659
    %v6148 = vpack.c.b16 %v5668, %v5660
    %v6149 = vpack.c.b16 %v5677, %v5669
    %v6150 = vpack.c.b16 %v5678, %v5670
    %v6151 = vpack.c.b16 %v5679, %v5671
    %v6152 = vpack.c.b16 %v5680, %v5672
    %v6153 = vpack.c.b16 %v5681, %v5673
    %v6154 = vpack.c.b16 %v5682, %v5674
    %v6155 = vpack.c.b16 %v5683, %v5675
    %v6156 = vpack.c.b16 %v5684, %v5676
    %v6157 = vpack.c.b16 %v5693, %v5685
    %v6158 = vpack.c.b16 %v5694, %v5686
    %v6159 = vpack.c.b16 %v5695, %v5687
    %v6160 = vpack.c.b16 %v5696, %v5688
    %v6161 = vpack.c.b16 %v5697, %v5689
    %v6162 = vpack.c.b16 %v5698, %v5690
    %v6163 = vpack.c.b16 %v5699, %v5691
    %v6164 = vpack.c.b16 %v5700, %v5692
    %v6165 = vpack.c.b16 %v5709, %v5701
    %v6166 = vpack.c.b16 %v5710, %v5702
    %v6167 = vpack.c.b16 %v5711, %v5703
    %v6168 = vpack.c.b16 %v5712, %v5704
    %v6169 = vpack.c.b16 %v5713, %v5705
    %v6170 = vpack.c.b16 %v5714, %v5706
    %v6171 = vpack.c.b16 %v5715, %v5707
    %v6172 = vpack.c.b16 %v5716, %v5708
    %v6173 = vpack.c.b16 %v5725, %v5717
    %v6174 = vpack.c.b16 %v5726, %v5718
    %v6175 = vpack.c.b16 %v5727, %v5719
    %v6176 = vpack.c.b16 %v5728, %v5720
    %v6177 = vpack.c.b16 %v5729, %v5721
    %v6178 = vpack.c.b16 %v5730, %v5722
    %v6179 = vpack.c.b16 %v5731, %v5723
    %v6180 = vpack.c.b16 %v5732, %v5724
    %6629 = vmatprep.subr.bf16.mxu0 %v5790
    %6630 = vmatpush1.bf16.msra.mxu0 %v5789
    %6631 = vmatprep.subr.bf16.mxu0 %v5782
    %6632 = vmatpush1.bf16.msra.mxu0 %v5781
    %6633 = vmatprep.subr.bf16.mxu0 %v5774
    %6634 = vmatpush1.bf16.msra.mxu0 %v5773
    %6635 = vmatprep.subr.bf16.mxu0 %v5766
    %6636 = vmatpush1.bf16.msra.mxu0 %v5765
    %6637 = vmatprep.subr.bf16.mxu0 %v5758
    %6638 = vmatpush1.bf16.msra.mxu0 %v5757
    %6639 = vmatprep.subr.bf16.mxu0 %v5750
    %6640 = vmatpush1.bf16.msra.mxu0 %v5749
    %6641 = vmatprep.subr.bf16.mxu0 %v5742
    %6642 = vmatpush1.bf16.msra.mxu0 %v5741
    %6643 = vmatprep.subr.bf16.mxu0 %v5734
    %6644 = vmatpush1.bf16.msra.mxu0 %v5733
    %6645 = vmatprep.subr.bf16.mxu0 %v5854
    %6646 = vmatpush2.bf16.msra.mxu0 %v5853
    %6647 = vmatprep.subr.bf16.mxu0 %v5846
    %6648 = vmatpush2.bf16.msra.mxu0 %v5845
    %6649 = vmatprep.subr.bf16.mxu0 %v5838
    %6650 = vmatpush2.bf16.msra.mxu0 %v5837
    %6651 = vmatprep.subr.bf16.mxu0 %v5830
    %6652 = vmatpush2.bf16.msra.mxu0 %v5829
    %6653 = vmatprep.subr.bf16.mxu0 %v5822
    %6654 = vmatpush2.bf16.msra.mxu0 %v5821
    %6655 = vmatprep.subr.bf16.mxu0 %v5814
    %6656 = vmatpush2.bf16.msra.mxu0 %v5813
    %6657 = vmatprep.subr.bf16.mxu0 %v5806
    %6658 = vmatpush2.bf16.msra.mxu0 %v5805
    %6659 = vmatprep.subr.bf16.mxu0 %v5798
    %6660 = vmatpush2.bf16.msra.mxu0 %v5797
    %6661 = vmatprep.mubr.bf16.mxu0 %v3893
    %6662 = vmatmul.mubr.bf16.gmra.mxu0 %v3892
    %v6663 = vpop.f32.mrf.mxu0
    %v6664 = vadd.f32 %v4352, %v6663
    %v6665 = vpop.f32.mrf.mxu0
    %v6666 = vadd.f32 %v4356, %v6665
    %v6667 = vpop.f32.mrf.mxu0
    %v6668 = vpop.f32.mrf.mxu0
    %6669 = vdwg.mxu0
    %6670 = vmatprep.subr.bf16.mxu0 %v5918
    %6671 = vmatpush1.bf16.msra.mxu0 %v5917
    %6672 = vmatprep.subr.bf16.mxu0 %v5910
    %6673 = vmatpush1.bf16.msra.mxu0 %v5909
    %6674 = vmatprep.subr.bf16.mxu0 %v5902
    %6675 = vmatpush1.bf16.msra.mxu0 %v5901
    %6676 = vmatprep.subr.bf16.mxu0 %v5894
    %6677 = vmatpush1.bf16.msra.mxu0 %v5893
    %6678 = vmatprep.subr.bf16.mxu0 %v5886
    %6679 = vmatpush1.bf16.msra.mxu0 %v5885
    %6680 = vmatprep.subr.bf16.mxu0 %v5878
    %6681 = vmatpush1.bf16.msra.mxu0 %v5877
    %6682 = vmatprep.subr.bf16.mxu0 %v5870
    %6683 = vmatpush1.bf16.msra.mxu0 %v5869
    %6684 = vmatprep.subr.bf16.mxu0 %v5862
    %6685 = vmatpush1.bf16.msra.mxu0 %v5861
    %6686 = vmatprep.subr.bf16.mxu0 %v5982
    %6687 = vmatpush2.bf16.msra.mxu0 %v5981
    %6688 = vmatprep.subr.bf16.mxu0 %v5974
    %6689 = vmatpush2.bf16.msra.mxu0 %v5973
    %6690 = vmatprep.subr.bf16.mxu0 %v5966
    %6691 = vmatpush2.bf16.msra.mxu0 %v5965
    %6692 = vmatprep.subr.bf16.mxu0 %v5958
    %6693 = vmatpush2.bf16.msra.mxu0 %v5957
    %6694 = vmatprep.subr.bf16.mxu0 %v5950
    %6695 = vmatpush2.bf16.msra.mxu0 %v5949
    %6696 = vmatprep.subr.bf16.mxu0 %v5942
    %6697 = vmatpush2.bf16.msra.mxu0 %v5941
    %6698 = vmatprep.subr.bf16.mxu0 %v5934
    %6699 = vmatpush2.bf16.msra.mxu0 %v5933
    %6700 = vmatprep.subr.bf16.mxu0 %v5926
    %6701 = vmatpush2.bf16.msra.mxu0 %v5925
    %6702 = vmatprep.mubr.bf16.mxu0 %v3895
    %6703 = vmatmul.mubr.bf16.gmra.mxu0 %v3894
    %v6704 = vpop.f32.mrf.mxu0
    %v6705 = vadd.f32 %v6664, %v6704
    %v6706 = vpop.f32.mrf.mxu0
    %v6707 = vadd.f32 %v6666, %v6706
    %v6708 = vpop.f32.mrf.mxu0
    %v6709 = vpop.f32.mrf.mxu0
    %6710 = vdwg.mxu0
    %6711 = vmatprep.subr.bf16.mxu0 %v6046
    %6712 = vmatpush1.bf16.msra.mxu0 %v6045
    %6713 = vmatprep.subr.bf16.mxu0 %v6038
    %6714 = vmatpush1.bf16.msra.mxu0 %v6037
    %6715 = vmatprep.subr.bf16.mxu0 %v6030
    %6716 = vmatpush1.bf16.msra.mxu0 %v6029
    %6717 = vmatprep.subr.bf16.mxu0 %v6022
    %6718 = vmatpush1.bf16.msra.mxu0 %v6021
    %6719 = vmatprep.subr.bf16.mxu0 %v6014
    %6720 = vmatpush1.bf16.msra.mxu0 %v6013
    %6721 = vmatprep.subr.bf16.mxu0 %v6006
    %6722 = vmatpush1.bf16.msra.mxu0 %v6005
    %6723 = vmatprep.subr.bf16.mxu0 %v5998
    %6724 = vmatpush1.bf16.msra.mxu0 %v5997
    %6725 = vmatprep.subr.bf16.mxu0 %v5990
    %6726 = vmatpush1.bf16.msra.mxu0 %v5989
    %6727 = vmatprep.subr.bf16.mxu0 %v6110
    %6728 = vmatpush2.bf16.msra.mxu0 %v6109
    %6729 = vmatprep.subr.bf16.mxu0 %v6102
    %6730 = vmatpush2.bf16.msra.mxu0 %v6101
    %6731 = vmatprep.subr.bf16.mxu0 %v6094
    %6732 = vmatpush2.bf16.msra.mxu0 %v6093
    %6733 = vmatprep.subr.bf16.mxu0 %v6086
    %6734 = vmatpush2.bf16.msra.mxu0 %v6085
    %6735 = vmatprep.subr.bf16.mxu0 %v6078
    %6736 = vmatpush2.bf16.msra.mxu0 %v6077
    %6737 = vmatprep.subr.bf16.mxu0 %v6070
    %6738 = vmatpush2.bf16.msra.mxu0 %v6069
    %6739 = vmatprep.subr.bf16.mxu0 %v6062
    %6740 = vmatpush2.bf16.msra.mxu0 %v6061
    %6741 = vmatprep.subr.bf16.mxu0 %v6054
    %6742 = vmatpush2.bf16.msra.mxu0 %v6053
    %6743 = vmatprep.mubr.bf16.mxu0 %v3897
    %6744 = vmatmul.mubr.bf16.gmra.mxu0 %v3896
    %v6745 = vpop.f32.mrf.mxu0
    %v6746 = vadd.f32 %v6705, %v6745
    %v6747 = vpop.f32.mrf.mxu0
    %v6748 = vadd.f32 %v6707, %v6747
    %v6749 = vpop.f32.mrf.mxu0
    %v6750 = vpop.f32.mrf.mxu0
    %6751 = vdwg.mxu0
    %6752 = vmatprep.subr.bf16.mxu0 %v6174
    %6753 = vmatpush1.bf16.msra.mxu0 %v6173
    %6754 = vmatprep.subr.bf16.mxu0 %v6166
    %6755 = vmatpush1.bf16.msra.mxu0 %v6165
    %6756 = vmatprep.subr.bf16.mxu0 %v6158
    %6757 = vmatpush1.bf16.msra.mxu0 %v6157
    %6758 = vmatprep.subr.bf16.mxu0 %v6150
    %6759 = vmatpush1.bf16.msra.mxu0 %v6149
    %6760 = vmatprep.subr.bf16.mxu0 %v6142
    %6761 = vmatpush1.bf16.msra.mxu0 %v6141
    %6762 = vmatprep.subr.bf16.mxu0 %v6134
    %6763 = vmatpush1.bf16.msra.mxu0 %v6133
    %6764 = vmatprep.subr.bf16.mxu0 %v6126
    %6765 = vmatpush1.bf16.msra.mxu0 %v6125
    %6766 = vmatprep.subr.bf16.mxu0 %v6118
    %6767 = vmatpush1.bf16.msra.mxu0 %v6117
    %6768 = vmatprep.subr.bf16.mxu0 0
    %6769 = vmatpush2.bf16.msra.mxu0 0
    %6770 = vmatprep.subr.bf16.mxu0 0
    %6771 = vmatpush2.bf16.msra.mxu0 0
    %6772 = vmatprep.subr.bf16.mxu0 0
    %6773 = vmatpush2.bf16.msra.mxu0 0
    %6774 = vmatprep.subr.bf16.mxu0 0
    %6775 = vmatpush2.bf16.msra.mxu0 0
    %6776 = vmatprep.subr.bf16.mxu0 0
    %6777 = vmatpush2.bf16.msra.mxu0 0
    %6778 = vmatprep.subr.bf16.mxu0 0
    %6779 = vmatpush2.bf16.msra.mxu0 0
    %6780 = vmatprep.subr.bf16.mxu0 0
    %6781 = vmatpush2.bf16.msra.mxu0 0
    %6782 = vmatprep.subr.bf16.mxu0 0
    %6783 = vmatpush2.bf16.msra.mxu0 0
    %6784 = vmatprep.mubr.bf16.mxu0 0
    %6785 = vmatmul.mubr.bf16.gmra.mxu0 %v3898
    %v6786 = vpop.f32.mrf.mxu0
    %v6787 = vadd.f32 %v6746, %v6786
    %v6788 = vpop.f32.mrf.mxu0
    %v6789 = vadd.f32 %v6748, %v6788
    %v6790 = vpop.f32.mrf.mxu0
    %v6791 = vpop.f32.mrf.mxu0
    %6792 = vdwg.mxu0
    %6793 = vmatprep.subr.bf16.mxu0 %v5792
    %6794 = vmatpush1.bf16.msra.mxu0 %v5791
    %6795 = vmatprep.subr.bf16.mxu0 %v5784
    %6796 = vmatpush1.bf16.msra.mxu0 %v5783
    %6797 = vmatprep.subr.bf16.mxu0 %v5776
    %6798 = vmatpush1.bf16.msra.mxu0 %v5775
    %6799 = vmatprep.subr.bf16.mxu0 %v5768
    %6800 = vmatpush1.bf16.msra.mxu0 %v5767
    %6801 = vmatprep.subr.bf16.mxu0 %v5760
    %6802 = vmatpush1.bf16.msra.mxu0 %v5759
    %6803 = vmatprep.subr.bf16.mxu0 %v5752
    %6804 = vmatpush1.bf16.msra.mxu0 %v5751
    %6805 = vmatprep.subr.bf16.mxu0 %v5744
    %6806 = vmatpush1.bf16.msra.mxu0 %v5743
    %6807 = vmatprep.subr.bf16.mxu0 %v5736
    %6808 = vmatpush1.bf16.msra.mxu0 %v5735
    %6809 = vmatprep.subr.bf16.mxu0 %v5856
    %6810 = vmatpush2.bf16.msra.mxu0 %v5855
    %6811 = vmatprep.subr.bf16.mxu0 %v5848
    %6812 = vmatpush2.bf16.msra.mxu0 %v5847
    %6813 = vmatprep.subr.bf16.mxu0 %v5840
    %6814 = vmatpush2.bf16.msra.mxu0 %v5839
    %6815 = vmatprep.subr.bf16.mxu0 %v5832
    %6816 = vmatpush2.bf16.msra.mxu0 %v5831
    %6817 = vmatprep.subr.bf16.mxu0 %v5824
    %6818 = vmatpush2.bf16.msra.mxu0 %v5823
    %6819 = vmatprep.subr.bf16.mxu0 %v5816
    %6820 = vmatpush2.bf16.msra.mxu0 %v5815
    %6821 = vmatprep.subr.bf16.mxu0 %v5808
    %6822 = vmatpush2.bf16.msra.mxu0 %v5807
    %6823 = vmatprep.subr.bf16.mxu0 %v5800
    %6824 = vmatpush2.bf16.msra.mxu0 %v5799
    %6825 = vmatprep.mubr.bf16.mxu0 %v3893
    %6826 = vmatmul.mubr.bf16.gmra.mxu0 %v3892
    %v6827 = vpop.f32.mrf.mxu0
    %v6828 = vadd.f32 %v4360, %v6827
    %v6829 = vpop.f32.mrf.mxu0
    %v6830 = vadd.f32 %v4364, %v6829
    %v6831 = vpop.f32.mrf.mxu0
    %v6832 = vpop.f32.mrf.mxu0
    %6833 = vdwg.mxu0
    %6834 = vmatprep.subr.bf16.mxu0 %v5920
    %6835 = vmatpush1.bf16.msra.mxu0 %v5919
    %6836 = vmatprep.subr.bf16.mxu0 %v5912
    %6837 = vmatpush1.bf16.msra.mxu0 %v5911
    %6838 = vmatprep.subr.bf16.mxu0 %v5904
    %6839 = vmatpush1.bf16.msra.mxu0 %v5903
    %6840 = vmatprep.subr.bf16.mxu0 %v5896
    %6841 = vmatpush1.bf16.msra.mxu0 %v5895
    %6842 = vmatprep.subr.bf16.mxu0 %v5888
    %6843 = vmatpush1.bf16.msra.mxu0 %v5887
    %6844 = vmatprep.subr.bf16.mxu0 %v5880
    %6845 = vmatpush1.bf16.msra.mxu0 %v5879
    %6846 = vmatprep.subr.bf16.mxu0 %v5872
    %6847 = vmatpush1.bf16.msra.mxu0 %v5871
    %6848 = vmatprep.subr.bf16.mxu0 %v5864
    %6849 = vmatpush1.bf16.msra.mxu0 %v5863
    %6850 = vmatprep.subr.bf16.mxu0 %v5984
    %6851 = vmatpush2.bf16.msra.mxu0 %v5983
    %6852 = vmatprep.subr.bf16.mxu0 %v5976
    %6853 = vmatpush2.bf16.msra.mxu0 %v5975
    %6854 = vmatprep.subr.bf16.mxu0 %v5968
    %6855 = vmatpush2.bf16.msra.mxu0 %v5967
    %6856 = vmatprep.subr.bf16.mxu0 %v5960
    %6857 = vmatpush2.bf16.msra.mxu0 %v5959
    %6858 = vmatprep.subr.bf16.mxu0 %v5952
    %6859 = vmatpush2.bf16.msra.mxu0 %v5951
    %6860 = vmatprep.subr.bf16.mxu0 %v5944
    %6861 = vmatpush2.bf16.msra.mxu0 %v5943
    %6862 = vmatprep.subr.bf16.mxu0 %v5936
    %6863 = vmatpush2.bf16.msra.mxu0 %v5935
    %6864 = vmatprep.subr.bf16.mxu0 %v5928
    %6865 = vmatpush2.bf16.msra.mxu0 %v5927
    %6866 = vmatprep.mubr.bf16.mxu0 %v3895
    %6867 = vmatmul.mubr.bf16.gmra.mxu0 %v3894
    %v6868 = vpop.f32.mrf.mxu0
    %v6869 = vadd.f32 %v6828, %v6868
    %v6870 = vpop.f32.mrf.mxu0
    %v6871 = vadd.f32 %v6830, %v6870
    %v6872 = vpop.f32.mrf.mxu0
    %v6873 = vpop.f32.mrf.mxu0
    %6874 = vdwg.mxu0
    %6875 = vmatprep.subr.bf16.mxu0 %v6048
    %6876 = vmatpush1.bf16.msra.mxu0 %v6047
    %6877 = vmatprep.subr.bf16.mxu0 %v6040
    %6878 = vmatpush1.bf16.msra.mxu0 %v6039
    %6879 = vmatprep.subr.bf16.mxu0 %v6032
    %6880 = vmatpush1.bf16.msra.mxu0 %v6031
    %6881 = vmatprep.subr.bf16.mxu0 %v6024
    %6882 = vmatpush1.bf16.msra.mxu0 %v6023
    %6883 = vmatprep.subr.bf16.mxu0 %v6016
    %6884 = vmatpush1.bf16.msra.mxu0 %v6015
    %6885 = vmatprep.subr.bf16.mxu0 %v6008
    %6886 = vmatpush1.bf16.msra.mxu0 %v6007
    %6887 = vmatprep.subr.bf16.mxu0 %v6000
    %6888 = vmatpush1.bf16.msra.mxu0 %v5999
    %6889 = vmatprep.subr.bf16.mxu0 %v5992
    %6890 = vmatpush1.bf16.msra.mxu0 %v5991
    %6891 = vmatprep.subr.bf16.mxu0 %v6112
    %6892 = vmatpush2.bf16.msra.mxu0 %v6111
    %6893 = vmatprep.subr.bf16.mxu0 %v6104
    %6894 = vmatpush2.bf16.msra.mxu0 %v6103
    %6895 = vmatprep.subr.bf16.mxu0 %v6096
    %6896 = vmatpush2.bf16.msra.mxu0 %v6095
    %6897 = vmatprep.subr.bf16.mxu0 %v6088
    %6898 = vmatpush2.bf16.msra.mxu0 %v6087
    %6899 = vmatprep.subr.bf16.mxu0 %v6080
    %6900 = vmatpush2.bf16.msra.mxu0 %v6079
    %6901 = vmatprep.subr.bf16.mxu0 %v6072
    %6902 = vmatpush2.bf16.msra.mxu0 %v6071
    %6903 = vmatprep.subr.bf16.mxu0 %v6064
    %6904 = vmatpush2.bf16.msra.mxu0 %v6063
    %6905 = vmatprep.subr.bf16.mxu0 %v6056
    %6906 = vmatpush2.bf16.msra.mxu0 %v6055
    %6907 = vmatprep.mubr.bf16.mxu0 %v3897
    %6908 = vmatmul.mubr.bf16.gmra.mxu0 %v3896
    %v6909 = vpop.f32.mrf.mxu0
    %v6910 = vadd.f32 %v6869, %v6909
    %v6911 = vpop.f32.mrf.mxu0
    %v6912 = vadd.f32 %v6871, %v6911
    %v6913 = vpop.f32.mrf.mxu0
    %v6914 = vpop.f32.mrf.mxu0
    %6915 = vdwg.mxu0
    %6916 = vmatprep.subr.bf16.mxu0 %v6176
    %6917 = vmatpush1.bf16.msra.mxu0 %v6175
    %6918 = vmatprep.subr.bf16.mxu0 %v6168
    %6919 = vmatpush1.bf16.msra.mxu0 %v6167
    %6920 = vmatprep.subr.bf16.mxu0 %v6160
    %6921 = vmatpush1.bf16.msra.mxu0 %v6159
    %6922 = vmatprep.subr.bf16.mxu0 %v6152
    %6923 = vmatpush1.bf16.msra.mxu0 %v6151
    %6924 = vmatprep.subr.bf16.mxu0 %v6144
    %6925 = vmatpush1.bf16.msra.mxu0 %v6143
    %6926 = vmatprep.subr.bf16.mxu0 %v6136
    %6927 = vmatpush1.bf16.msra.mxu0 %v6135
    %6928 = vmatprep.subr.bf16.mxu0 %v6128
    %6929 = vmatpush1.bf16.msra.mxu0 %v6127
    %6930 = vmatprep.subr.bf16.mxu0 %v6120
    %6931 = vmatpush1.bf16.msra.mxu0 %v6119
    %6932 = vmatprep.subr.bf16.mxu0 0
    %6933 = vmatpush2.bf16.msra.mxu0 0
    %6934 = vmatprep.subr.bf16.mxu0 0
    %6935 = vmatpush2.bf16.msra.mxu0 0
    %6936 = vmatprep.subr.bf16.mxu0 0
    %6937 = vmatpush2.bf16.msra.mxu0 0
    %6938 = vmatprep.subr.bf16.mxu0 0
    %6939 = vmatpush2.bf16.msra.mxu0 0
    %6940 = vmatprep.subr.bf16.mxu0 0
    %6941 = vmatpush2.bf16.msra.mxu0 0
    %6942 = vmatprep.subr.bf16.mxu0 0
    %6943 = vmatpush2.bf16.msra.mxu0 0
    %6944 = vmatprep.subr.bf16.mxu0 0
    %6945 = vmatpush2.bf16.msra.mxu0 0
    %6946 = vmatprep.subr.bf16.mxu0 0
    %6947 = vmatpush2.bf16.msra.mxu0 0
    %6948 = vmatprep.mubr.bf16.mxu0 0
    %6949 = vmatmul.mubr.bf16.gmra.mxu0 %v3898
    %v6950 = vpop.f32.mrf.mxu0
    %v6951 = vadd.f32 %v6910, %v6950
    %v6952 = vpop.f32.mrf.mxu0
    %v6953 = vadd.f32 %v6912, %v6952
    %v6954 = vpop.f32.mrf.mxu0
    %v6955 = vpop.f32.mrf.mxu0
    %6956 = vdwg.mxu0
    %6957 = vmatprep.subr.bf16.mxu0 %v5794
    %6958 = vmatpush1.bf16.msra.mxu0 %v5793
    %6959 = vmatprep.subr.bf16.mxu0 %v5786
    %6960 = vmatpush1.bf16.msra.mxu0 %v5785
    %6961 = vmatprep.subr.bf16.mxu0 %v5778
    %6962 = vmatpush1.bf16.msra.mxu0 %v5777
    %6963 = vmatprep.subr.bf16.mxu0 %v5770
    %6964 = vmatpush1.bf16.msra.mxu0 %v5769
    %6965 = vmatprep.subr.bf16.mxu0 %v5762
    %6966 = vmatpush1.bf16.msra.mxu0 %v5761
    %6967 = vmatprep.subr.bf16.mxu0 %v5754
    %6968 = vmatpush1.bf16.msra.mxu0 %v5753
    %6969 = vmatprep.subr.bf16.mxu0 %v5746
    %6970 = vmatpush1.bf16.msra.mxu0 %v5745
    %6971 = vmatprep.subr.bf16.mxu0 %v5738
    %6972 = vmatpush1.bf16.msra.mxu0 %v5737
    %6973 = vmatprep.subr.bf16.mxu0 %v5858
    %6974 = vmatpush2.bf16.msra.mxu0 %v5857
    %6975 = vmatprep.subr.bf16.mxu0 %v5850
    %6976 = vmatpush2.bf16.msra.mxu0 %v5849
    %6977 = vmatprep.subr.bf16.mxu0 %v5842
    %6978 = vmatpush2.bf16.msra.mxu0 %v5841
    %6979 = vmatprep.subr.bf16.mxu0 %v5834
    %6980 = vmatpush2.bf16.msra.mxu0 %v5833
    %6981 = vmatprep.subr.bf16.mxu0 %v5826
    %6982 = vmatpush2.bf16.msra.mxu0 %v5825
    %6983 = vmatprep.subr.bf16.mxu0 %v5818
    %6984 = vmatpush2.bf16.msra.mxu0 %v5817
    %6985 = vmatprep.subr.bf16.mxu0 %v5810
    %6986 = vmatpush2.bf16.msra.mxu0 %v5809
    %6987 = vmatprep.subr.bf16.mxu0 %v5802
    %6988 = vmatpush2.bf16.msra.mxu0 %v5801
    %6989 = vmatprep.mubr.bf16.mxu0 %v3893
    %6990 = vmatmul.mubr.bf16.gmra.mxu0 %v3892
    %v6991 = vpop.f32.mrf.mxu0
    %v6992 = vadd.f32 %v4368, %v6991
    %v6993 = vpop.f32.mrf.mxu0
    %v6994 = vadd.f32 %v4372, %v6993
    %v6995 = vpop.f32.mrf.mxu0
    %v6996 = vpop.f32.mrf.mxu0
    %6997 = vdwg.mxu0
    %6998 = vmatprep.subr.bf16.mxu0 %v5922
    %6999 = vmatpush1.bf16.msra.mxu0 %v5921
    %7000 = vmatprep.subr.bf16.mxu0 %v5914
    %7001 = vmatpush1.bf16.msra.mxu0 %v5913
    %7002 = vmatprep.subr.bf16.mxu0 %v5906
    %7003 = vmatpush1.bf16.msra.mxu0 %v5905
    %7004 = vmatprep.subr.bf16.mxu0 %v5898
    %7005 = vmatpush1.bf16.msra.mxu0 %v5897
    %7006 = vmatprep.subr.bf16.mxu0 %v5890
    %7007 = vmatpush1.bf16.msra.mxu0 %v5889
    %7008 = vmatprep.subr.bf16.mxu0 %v5882
    %7009 = vmatpush1.bf16.msra.mxu0 %v5881
    %7010 = vmatprep.subr.bf16.mxu0 %v5874
    %7011 = vmatpush1.bf16.msra.mxu0 %v5873
    %7012 = vmatprep.subr.bf16.mxu0 %v5866
    %7013 = vmatpush1.bf16.msra.mxu0 %v5865
    %7014 = vmatprep.subr.bf16.mxu0 %v5986
    %7015 = vmatpush2.bf16.msra.mxu0 %v5985
    %7016 = vmatprep.subr.bf16.mxu0 %v5978
    %7017 = vmatpush2.bf16.msra.mxu0 %v5977
    %7018 = vmatprep.subr.bf16.mxu0 %v5970
    %7019 = vmatpush2.bf16.msra.mxu0 %v5969
    %7020 = vmatprep.subr.bf16.mxu0 %v5962
    %7021 = vmatpush2.bf16.msra.mxu0 %v5961
    %7022 = vmatprep.subr.bf16.mxu0 %v5954
    %7023 = vmatpush2.bf16.msra.mxu0 %v5953
    %7024 = vmatprep.subr.bf16.mxu0 %v5946
    %7025 = vmatpush2.bf16.msra.mxu0 %v5945
    %7026 = vmatprep.subr.bf16.mxu0 %v5938
    %7027 = vmatpush2.bf16.msra.mxu0 %v5937
    %7028 = vmatprep.subr.bf16.mxu0 %v5930
    %7029 = vmatpush2.bf16.msra.mxu0 %v5929
    %7030 = vmatprep.mubr.bf16.mxu0 %v3895
    %7031 = vmatmul.mubr.bf16.gmra.mxu0 %v3894
    %v7032 = vpop.f32.mrf.mxu0
    %v7033 = vadd.f32 %v6992, %v7032
    %v7034 = vpop.f32.mrf.mxu0
    %v7035 = vadd.f32 %v6994, %v7034
    %v7036 = vpop.f32.mrf.mxu0
    %v7037 = vpop.f32.mrf.mxu0
    %7038 = vdwg.mxu0
    %7039 = vmatprep.subr.bf16.mxu0 %v6050
    %7040 = vmatpush1.bf16.msra.mxu0 %v6049
    %7041 = vmatprep.subr.bf16.mxu0 %v6042
    %7042 = vmatpush1.bf16.msra.mxu0 %v6041
    %7043 = vmatprep.subr.bf16.mxu0 %v6034
    %7044 = vmatpush1.bf16.msra.mxu0 %v6033
    %7045 = vmatprep.subr.bf16.mxu0 %v6026
    %7046 = vmatpush1.bf16.msra.mxu0 %v6025
    %7047 = vmatprep.subr.bf16.mxu0 %v6018
    %7048 = vmatpush1.bf16.msra.mxu0 %v6017
    %7049 = vmatprep.subr.bf16.mxu0 %v6010
    %7050 = vmatpush1.bf16.msra.mxu0 %v6009
    %7051 = vmatprep.subr.bf16.mxu0 %v6002
    %7052 = vmatpush1.bf16.msra.mxu0 %v6001
    %7053 = vmatprep.subr.bf16.mxu0 %v5994
    %7054 = vmatpush1.bf16.msra.mxu0 %v5993
    %7055 = vmatprep.subr.bf16.mxu0 %v6114
    %7056 = vmatpush2.bf16.msra.mxu0 %v6113
    %7057 = vmatprep.subr.bf16.mxu0 %v6106
    %7058 = vmatpush2.bf16.msra.mxu0 %v6105
    %7059 = vmatprep.subr.bf16.mxu0 %v6098
    %7060 = vmatpush2.bf16.msra.mxu0 %v6097
    %7061 = vmatprep.subr.bf16.mxu0 %v6090
    %7062 = vmatpush2.bf16.msra.mxu0 %v6089
    %7063 = vmatprep.subr.bf16.mxu0 %v6082
    %7064 = vmatpush2.bf16.msra.mxu0 %v6081
    %7065 = vmatprep.subr.bf16.mxu0 %v6074
    %7066 = vmatpush2.bf16.msra.mxu0 %v6073
    %7067 = vmatprep.subr.bf16.mxu0 %v6066
    %7068 = vmatpush2.bf16.msra.mxu0 %v6065
    %7069 = vmatprep.subr.bf16.mxu0 %v6058
    %7070 = vmatpush2.bf16.msra.mxu0 %v6057
    %7071 = vmatprep.mubr.bf16.mxu0 %v3897
    %7072 = vmatmul.mubr.bf16.gmra.mxu0 %v3896
    %v7073 = vpop.f32.mrf.mxu0
    %v7074 = vadd.f32 %v7033, %v7073
    %v7075 = vpop.f32.mrf.mxu0
    %v7076 = vadd.f32 %v7035, %v7075
    %v7077 = vpop.f32.mrf.mxu0
    %v7078 = vpop.f32.mrf.mxu0
    %7079 = vdwg.mxu0
    %7080 = vmatprep.subr.bf16.mxu0 %v6178
    %7081 = vmatpush1.bf16.msra.mxu0 %v6177
    %7082 = vmatprep.subr.bf16.mxu0 %v6170
    %7083 = vmatpush1.bf16.msra.mxu0 %v6169
    %7084 = vmatprep.subr.bf16.mxu0 %v6162
    %7085 = vmatpush1.bf16.msra.mxu0 %v6161
    %7086 = vmatprep.subr.bf16.mxu0 %v6154
    %7087 = vmatpush1.bf16.msra.mxu0 %v6153
    %7088 = vmatprep.subr.bf16.mxu0 %v6146
    %7089 = vmatpush1.bf16.msra.mxu0 %v6145
    %7090 = vmatprep.subr.bf16.mxu0 %v6138
    %7091 = vmatpush1.bf16.msra.mxu0 %v6137
    %7092 = vmatprep.subr.bf16.mxu0 %v6130
    %7093 = vmatpush1.bf16.msra.mxu0 %v6129
    %7094 = vmatprep.subr.bf16.mxu0 %v6122
    %7095 = vmatpush1.bf16.msra.mxu0 %v6121
    %7096 = vmatprep.subr.bf16.mxu0 0
    %7097 = vmatpush2.bf16.msra.mxu0 0
    %7098 = vmatprep.subr.bf16.mxu0 0
    %7099 = vmatpush2.bf16.msra.mxu0 0
    %7100 = vmatprep.subr.bf16.mxu0 0
    %7101 = vmatpush2.bf16.msra.mxu0 0
    %7102 = vmatprep.subr.bf16.mxu0 0
    %7103 = vmatpush2.bf16.msra.mxu0 0
    %7104 = vmatprep.subr.bf16.mxu0 0
    %7105 = vmatpush2.bf16.msra.mxu0 0
    %7106 = vmatprep.subr.bf16.mxu0 0
    %7107 = vmatpush2.bf16.msra.mxu0 0
    %7108 = vmatprep.subr.bf16.mxu0 0
    %7109 = vmatpush2.bf16.msra.mxu0 0
    %7110 = vmatprep.subr.bf16.mxu0 0
    %7111 = vmatpush2.bf16.msra.mxu0 0
    %7112 = vmatprep.mubr.bf16.mxu0 0
    %7113 = vmatmul.mubr.bf16.gmra.mxu0 %v3898
    %v7114 = vpop.f32.mrf.mxu0
    %v7115 = vadd.f32 %v7074, %v7114
    %v7116 = vpop.f32.mrf.mxu0
    %v7117 = vadd.f32 %v7076, %v7116
    %v7118 = vpop.f32.mrf.mxu0
    %v7119 = vpop.f32.mrf.mxu0
    %7120 = vdwg.mxu0
    %7121 = vmatprep.subr.bf16.mxu0 %v5796
    %7122 = vmatpush1.bf16.msra.mxu0 %v5795
    %7123 = vmatprep.subr.bf16.mxu0 %v5788
    %7124 = vmatpush1.bf16.msra.mxu0 %v5787
    %7125 = vmatprep.subr.bf16.mxu0 %v5780
    %7126 = vmatpush1.bf16.msra.mxu0 %v5779
    %7127 = vmatprep.subr.bf16.mxu0 %v5772
    %7128 = vmatpush1.bf16.msra.mxu0 %v5771
    %7129 = vmatprep.subr.bf16.mxu0 %v5764
    %7130 = vmatpush1.bf16.msra.mxu0 %v5763
    %7131 = vmatprep.subr.bf16.mxu0 %v5756
    %7132 = vmatpush1.bf16.msra.mxu0 %v5755
    %7133 = vmatprep.subr.bf16.mxu0 %v5748
    %7134 = vmatpush1.bf16.msra.mxu0 %v5747
    %7135 = vmatprep.subr.bf16.mxu0 %v5740
    %7136 = vmatpush1.bf16.msra.mxu0 %v5739
    %7137 = vmatprep.subr.bf16.mxu0 %v5860
    %7138 = vmatpush2.bf16.msra.mxu0 %v5859
    %7139 = vmatprep.subr.bf16.mxu0 %v5852
    %7140 = vmatpush2.bf16.msra.mxu0 %v5851
    %7141 = vmatprep.subr.bf16.mxu0 %v5844
    %7142 = vmatpush2.bf16.msra.mxu0 %v5843
    %7143 = vmatprep.subr.bf16.mxu0 %v5836
    %7144 = vmatpush2.bf16.msra.mxu0 %v5835
    %7145 = vmatprep.subr.bf16.mxu0 %v5828
    %7146 = vmatpush2.bf16.msra.mxu0 %v5827
    %7147 = vmatprep.subr.bf16.mxu0 %v5820
    %7148 = vmatpush2.bf16.msra.mxu0 %v5819
    %7149 = vmatprep.subr.bf16.mxu0 %v5812
    %7150 = vmatpush2.bf16.msra.mxu0 %v5811
    %7151 = vmatprep.subr.bf16.mxu0 %v5804
    %7152 = vmatpush2.bf16.msra.mxu0 %v5803
    %7153 = vmatprep.mubr.bf16.mxu0 %v3893
    %7154 = vmatmul.mubr.bf16.gmra.mxu0 %v3892
    %v7155 = vpop.f32.mrf.mxu0
    %v7156 = vadd.f32 %v4376, %v7155
    %v7157 = vpop.f32.mrf.mxu0
    %v7158 = vadd.f32 %v4380, %v7157
    %v7159 = vpop.f32.mrf.mxu0
    %v7160 = vpop.f32.mrf.mxu0
    %7161 = vdwg.mxu0
    %7162 = vmatprep.subr.bf16.mxu0 %v5924
    %7163 = vmatpush1.bf16.msra.mxu0 %v5923
    %7164 = vmatprep.subr.bf16.mxu0 %v5916
    %7165 = vmatpush1.bf16.msra.mxu0 %v5915
    %7166 = vmatprep.subr.bf16.mxu0 %v5908
    %7167 = vmatpush1.bf16.msra.mxu0 %v5907
    %7168 = vmatprep.subr.bf16.mxu0 %v5900
    %7169 = vmatpush1.bf16.msra.mxu0 %v5899
    %7170 = vmatprep.subr.bf16.mxu0 %v5892
    %7171 = vmatpush1.bf16.msra.mxu0 %v5891
    %7172 = vmatprep.subr.bf16.mxu0 %v5884
    %7173 = vmatpush1.bf16.msra.mxu0 %v5883
    %7174 = vmatprep.subr.bf16.mxu0 %v5876
    %7175 = vmatpush1.bf16.msra.mxu0 %v5875
    %7176 = vmatprep.subr.bf16.mxu0 %v5868
    %7177 = vmatpush1.bf16.msra.mxu0 %v5867
    %7178 = vmatprep.subr.bf16.mxu0 %v5988
    %7179 = vmatpush2.bf16.msra.mxu0 %v5987
    %7180 = vmatprep.subr.bf16.mxu0 %v5980
    %7181 = vmatpush2.bf16.msra.mxu0 %v5979
    %7182 = vmatprep.subr.bf16.mxu0 %v5972
    %7183 = vmatpush2.bf16.msra.mxu0 %v5971
    %7184 = vmatprep.subr.bf16.mxu0 %v5964
    %7185 = vmatpush2.bf16.msra.mxu0 %v5963
    %7186 = vmatprep.subr.bf16.mxu0 %v5956
    %7187 = vmatpush2.bf16.msra.mxu0 %v5955
    %7188 = vmatprep.subr.bf16.mxu0 %v5948
    %7189 = vmatpush2.bf16.msra.mxu0 %v5947
    %7190 = vmatprep.subr.bf16.mxu0 %v5940
    %7191 = vmatpush2.bf16.msra.mxu0 %v5939
    %7192 = vmatprep.subr.bf16.mxu0 %v5932
    %7193 = vmatpush2.bf16.msra.mxu0 %v5931
    %7194 = vmatprep.mubr.bf16.mxu0 %v3895
    %7195 = vmatmul.mubr.bf16.gmra.mxu0 %v3894
    %v7196 = vpop.f32.mrf.mxu0
    %v7197 = vadd.f32 %v7156, %v7196
    %v7198 = vpop.f32.mrf.mxu0
    %v7199 = vadd.f32 %v7158, %v7198
    %v7200 = vpop.f32.mrf.mxu0
    %v7201 = vpop.f32.mrf.mxu0
    %7202 = vdwg.mxu0
    %7203 = vmatprep.subr.bf16.mxu0 %v6052
    %7204 = vmatpush1.bf16.msra.mxu0 %v6051
    %7205 = vmatprep.subr.bf16.mxu0 %v6044
    %7206 = vmatpush1.bf16.msra.mxu0 %v6043
    %7207 = vmatprep.subr.bf16.mxu0 %v6036
    %7208 = vmatpush1.bf16.msra.mxu0 %v6035
    %7209 = vmatprep.subr.bf16.mxu0 %v6028
    %7210 = vmatpush1.bf16.msra.mxu0 %v6027
    %7211 = vmatprep.subr.bf16.mxu0 %v6020
    %7212 = vmatpush1.bf16.msra.mxu0 %v6019
    %7213 = vmatprep.subr.bf16.mxu0 %v6012
    %7214 = vmatpush1.bf16.msra.mxu0 %v6011
    %7215 = vmatprep.subr.bf16.mxu0 %v6004
    %7216 = vmatpush1.bf16.msra.mxu0 %v6003
    %7217 = vmatprep.subr.bf16.mxu0 %v5996
    %7218 = vmatpush1.bf16.msra.mxu0 %v5995
    %7219 = vmatprep.subr.bf16.mxu0 %v6116
    %7220 = vmatpush2.bf16.msra.mxu0 %v6115
    %7221 = vmatprep.subr.bf16.mxu0 %v6108
    %7222 = vmatpush2.bf16.msra.mxu0 %v6107
    %7223 = vmatprep.subr.bf16.mxu0 %v6100
    %7224 = vmatpush2.bf16.msra.mxu0 %v6099
    %7225 = vmatprep.subr.bf16.mxu0 %v6092
    %7226 = vmatpush2.bf16.msra.mxu0 %v6091
    %7227 = vmatprep.subr.bf16.mxu0 %v6084
    %7228 = vmatpush2.bf16.msra.mxu0 %v6083
    %7229 = vmatprep.subr.bf16.mxu0 %v6076
    %7230 = vmatpush2.bf16.msra.mxu0 %v6075
    %7231 = vmatprep.subr.bf16.mxu0 %v6068
    %7232 = vmatpush2.bf16.msra.mxu0 %v6067
    %7233 = vmatprep.subr.bf16.mxu0 %v6060
    %7234 = vmatpush2.bf16.msra.mxu0 %v6059
    %7235 = vmatprep.mubr.bf16.mxu0 %v3897
    %7236 = vmatmul.mubr.bf16.gmra.mxu0 %v3896
    %v7237 = vpop.f32.mrf.mxu0
    %v7238 = vadd.f32 %v7197, %v7237
    %v7239 = vpop.f32.mrf.mxu0
    %v7240 = vadd.f32 %v7199, %v7239
    %v7241 = vpop.f32.mrf.mxu0
    %v7242 = vpop.f32.mrf.mxu0
    %7243 = vdwg.mxu0
    %7244 = vmatprep.subr.bf16.mxu0 %v6180
    %7245 = vmatpush1.bf16.msra.mxu0 %v6179
    %7246 = vmatprep.subr.bf16.mxu0 %v6172
    %7247 = vmatpush1.bf16.msra.mxu0 %v6171
    %7248 = vmatprep.subr.bf16.mxu0 %v6164
    %7249 = vmatpush1.bf16.msra.mxu0 %v6163
    %7250 = vmatprep.subr.bf16.mxu0 %v6156
    %7251 = vmatpush1.bf16.msra.mxu0 %v6155
    %7252 = vmatprep.subr.bf16.mxu0 %v6148
    %7253 = vmatpush1.bf16.msra.mxu0 %v6147
    %7254 = vmatprep.subr.bf16.mxu0 %v6140
    %7255 = vmatpush1.bf16.msra.mxu0 %v6139
    %7256 = vmatprep.subr.bf16.mxu0 %v6132
    %7257 = vmatpush1.bf16.msra.mxu0 %v6131
    %7258 = vmatprep.subr.bf16.mxu0 %v6124
    %7259 = vmatpush1.bf16.msra.mxu0 %v6123
    %7260 = vmatprep.subr.bf16.mxu0 0
    %7261 = vmatpush2.bf16.msra.mxu0 0
    %7262 = vmatprep.subr.bf16.mxu0 0
    %7263 = vmatpush2.bf16.msra.mxu0 0
    %7264 = vmatprep.subr.bf16.mxu0 0
    %7265 = vmatpush2.bf16.msra.mxu0 0
    %7266 = vmatprep.subr.bf16.mxu0 0
    %7267 = vmatpush2.bf16.msra.mxu0 0
    %7268 = vmatprep.subr.bf16.mxu0 0
    %7269 = vmatpush2.bf16.msra.mxu0 0
    %7270 = vmatprep.subr.bf16.mxu0 0
    %7271 = vmatpush2.bf16.msra.mxu0 0
    %7272 = vmatprep.subr.bf16.mxu0 0
    %7273 = vmatpush2.bf16.msra.mxu0 0
    %7274 = vmatprep.subr.bf16.mxu0 0
    %7275 = vmatpush2.bf16.msra.mxu0 0
    %7276 = vmatprep.mubr.bf16.mxu0 0
    %7277 = vmatmul.mubr.bf16.gmra.mxu0 %v3898
    %v7278 = vpop.f32.mrf.mxu0
    %v7279 = vadd.f32 %v7238, %v7278
    %v7280 = vpop.f32.mrf.mxu0
    %v7281 = vadd.f32 %v7240, %v7280
    %v7282 = vpop.f32.mrf.mxu0
    %v7283 = vpop.f32.mrf.mxu0
    %7284 = vdwg.mxu0
    %v7285 = vmax.f32 %v6787, 0.0
    %v7286 = vmax.f32 %v6789, 0.0
    %v7287 = vmax.f32 %v6951, 0.0
    %v7288 = vmax.f32 %v6953, 0.0
    %v7289 = vmax.f32 %v7115, 0.0
    %v7290 = vmax.f32 %v7117, 0.0
    %v7291 = vmax.f32 %v7279, 0.0
    %v7292 = vmax.f32 %v7281, 0.0
    %v7293 = vpack.c.bf16 %v7285, %v7285
    %v7294 = vpack.c.bf16 %v7286, %v7286
    %v7295 = vpack.c.bf16 %v7287, %v7287
    %v7296 = vpack.c.bf16 %v7288, %v7288
    %v7297 = vpack.c.bf16 %v7289, %v7289
    %v7298 = vpack.c.bf16 %v7290, %v7290
    %v7299 = vpack.c.bf16 %v7291, %v7291
    %v7300 = vpack.c.bf16 %v7292, %v7292
    %v7301 = vld [vmem:[#allocation12] sm:$0xff]
    %v7302 = vld [vmem:[#allocation12 + $0x8] sm:$0xff]
    %v7303 = vld [vmem:[#allocation12 + $0x10] sm:$0xff]
    %v7304 = vld [vmem:[#allocation12 + $0x18] sm:$0xff]
    %v7305 = vld [vmem:[#allocation12 + $0x20] sm:$0xff]
    %v7306 = vld [vmem:[#allocation12 + $0x28] sm:$0xff]
    %v7307 = vld [vmem:[#allocation12 + $0x30] sm:$0xff]
    %v7308 = vld [vmem:[#allocation12 + $0x38] sm:$0xff]
    %v7309 = vld [vmem:[#allocation12 + $0x40] sm:$0xff]
    %v7310 = vld [vmem:[#allocation12 + $0x48] sm:$0xff]
    %v7311 = vld [vmem:[#allocation12 + $0x50] sm:$0xff]
    %v7312 = vld [vmem:[#allocation12 + $0x58] sm:$0xff]
    %v7313 = vld [vmem:[#allocation12 + $0x60] sm:$0xff]
    %v7314 = vld [vmem:[#allocation12 + $0x68] sm:$0xff]
    %v7315 = vld [vmem:[#allocation12 + $0x70] sm:$0xff]
    %v7316 = vld [vmem:[#allocation12 + $0x78] sm:$0xff]
    %v7317 = vld [vmem:[#allocation12 + $0x80] sm:$0xff]
    %v7318 = vld [vmem:[#allocation12 + $0x88] sm:$0xff]
    %v7319 = vld [vmem:[#allocation12 + $0x90] sm:$0xff]
    %v7320 = vld [vmem:[#allocation12 + $0x98] sm:$0xff]
    %v7321 = vld [vmem:[#allocation12 + $0xa0] sm:$0xff]
    %v7322 = vld [vmem:[#allocation12 + $0xa8] sm:$0xff]
    %v7323 = vld [vmem:[#allocation12 + $0xb0] sm:$0xff]
    %v7324 = vld [vmem:[#allocation12 + $0xb8] sm:$0xff]
    %v7325 = vld [vmem:[#allocation12 + $0xc0] sm:$0xff]
    %v7326 = vld [vmem:[#allocation12 + $0xc8] sm:$0xff]
    %v7327 = vld [vmem:[#allocation12 + $0xd0] sm:$0xff]
    %v7328 = vld [vmem:[#allocation12 + $0xd8] sm:$0xff]
    %v7329 = vld [vmem:[#allocation12 + $0xe0] sm:$0xff]
    %v7330 = vld [vmem:[#allocation12 + $0xe8] sm:$0xff]
    %v7331 = vld [vmem:[#allocation12 + $0xf0] sm:$0xff]
    %v7332 = vld [vmem:[#allocation12 + $0xf8] sm:$0xff]
    %v7333 = vld [vmem:[#allocation12 + $0x100] sm:$0xff]
    %v7334 = vld [vmem:[#allocation12 + $0x108] sm:$0xff]
    %v7335 = vld [vmem:[#allocation12 + $0x110] sm:$0xff]
    %v7336 = vld [vmem:[#allocation12 + $0x118] sm:$0xff]
    %v7337 = vld [vmem:[#allocation12 + $0x120] sm:$0xff]
    %v7338 = vld [vmem:[#allocation12 + $0x128] sm:$0xff]
    %v7339 = vld [vmem:[#allocation12 + $0x130] sm:$0xff]
    %v7340 = vld [vmem:[#allocation12 + $0x138] sm:$0xff]
    %v7341 = vld [vmem:[#allocation12 + $0x140] sm:$0xff]
    %v7342 = vld [vmem:[#allocation12 + $0x148] sm:$0xff]
    %v7343 = vld [vmem:[#allocation12 + $0x150] sm:$0xff]
    %v7344 = vld [vmem:[#allocation12 + $0x158] sm:$0xff]
    %v7345 = vld [vmem:[#allocation12 + $0x160] sm:$0xff]
    %v7346 = vld [vmem:[#allocation12 + $0x168] sm:$0xff]
    %v7347 = vld [vmem:[#allocation12 + $0x170] sm:$0xff]
    %v7348 = vld [vmem:[#allocation12 + $0x178] sm:$0xff]
    %v7349 = vld [vmem:[#allocation12 + $0x180] sm:$0xff]
    %v7350 = vld [vmem:[#allocation12 + $0x188] sm:$0xff]
    %v7351 = vld [vmem:[#allocation12 + $0x190] sm:$0xff]
    %v7352 = vld [vmem:[#allocation12 + $0x198] sm:$0xff]
    %v7353 = vld [vmem:[#allocation12 + $0x1a0] sm:$0xff]
    %v7354 = vld [vmem:[#allocation12 + $0x1a8] sm:$0xff]
    %v7355 = vld [vmem:[#allocation12 + $0x1b0] sm:$0xff]
    %v7356 = vld [vmem:[#allocation12 + $0x1b8] sm:$0xff]
    %v7357 = vld [vmem:[#allocation12 + $0x1c0] sm:$0xff]
    %v7358 = vld [vmem:[#allocation12 + $0x1c8] sm:$0xff]
    %v7359 = vld [vmem:[#allocation12 + $0x1d0] sm:$0xff]
    %v7360 = vld [vmem:[#allocation12 + $0x1d8] sm:$0xff]
    %v7361 = vld [vmem:[#allocation12 + $0x1e0] sm:$0xff]
    %v7362 = vld [vmem:[#allocation12 + $0x1e8] sm:$0xff]
    %v7363 = vld [vmem:[#allocation12 + $0x1f0] sm:$0xff]
    %v7364 = vld [vmem:[#allocation12 + $0x1f8] sm:$0xff]
    %v7365 = vld [vmem:[#allocation12 + $0x200] sm:$0xff]
    %v7366 = vld [vmem:[#allocation12 + $0x208] sm:$0xff]
    %v7367 = vld [vmem:[#allocation12 + $0x210] sm:$0xff]
    %v7368 = vld [vmem:[#allocation12 + $0x218] sm:$0xff]
    %v7369 = vld [vmem:[#allocation12 + $0x220] sm:$0xff]
    %v7370 = vld [vmem:[#allocation12 + $0x228] sm:$0xff]
    %v7371 = vld [vmem:[#allocation12 + $0x230] sm:$0xff]
    %v7372 = vld [vmem:[#allocation12 + $0x238] sm:$0xff]
    %v7373 = vld [vmem:[#allocation12 + $0x240] sm:$0xff]
    %v7374 = vld [vmem:[#allocation12 + $0x248] sm:$0xff]
    %v7375 = vld [vmem:[#allocation12 + $0x250] sm:$0xff]
    %v7376 = vld [vmem:[#allocation12 + $0x258] sm:$0xff]
    %v7377 = vld [vmem:[#allocation12 + $0x260] sm:$0xff]
    %v7378 = vld [vmem:[#allocation12 + $0x268] sm:$0xff]
    %v7379 = vld [vmem:[#allocation12 + $0x270] sm:$0xff]
    %v7380 = vld [vmem:[#allocation12 + $0x278] sm:$0xff]
    %v7381 = vld [vmem:[#allocation12 + $0x280] sm:$0xff]
    %v7382 = vld [vmem:[#allocation12 + $0x288] sm:$0xff]
    %v7383 = vld [vmem:[#allocation12 + $0x290] sm:$0xff]
    %v7384 = vld [vmem:[#allocation12 + $0x298] sm:$0xff]
    %v7385 = vld [vmem:[#allocation12 + $0x2a0] sm:$0xff]
    %v7386 = vld [vmem:[#allocation12 + $0x2a8] sm:$0xff]
    %v7387 = vld [vmem:[#allocation12 + $0x2b0] sm:$0xff]
    %v7388 = vld [vmem:[#allocation12 + $0x2b8] sm:$0xff]
    %v7389 = vld [vmem:[#allocation12 + $0x2c0] sm:$0xff]
    %v7390 = vld [vmem:[#allocation12 + $0x2c8] sm:$0xff]
    %v7391 = vld [vmem:[#allocation12 + $0x2d0] sm:$0xff]
    %v7392 = vld [vmem:[#allocation12 + $0x2d8] sm:$0xff]
    %v7393 = vld [vmem:[#allocation12 + $0x2e0] sm:$0xff]
    %v7394 = vld [vmem:[#allocation12 + $0x2e8] sm:$0xff]
    %v7395 = vld [vmem:[#allocation12 + $0x2f0] sm:$0xff]
    %v7396 = vld [vmem:[#allocation12 + $0x2f8] sm:$0xff]
    %v7397 = vld [vmem:[#allocation12 + $0x300] sm:$0xff]
    %v7398 = vld [vmem:[#allocation12 + $0x308] sm:$0xff]
    %v7399 = vld [vmem:[#allocation12 + $0x310] sm:$0xff]
    %v7400 = vld [vmem:[#allocation12 + $0x318] sm:$0xff]
    %v7401 = vld [vmem:[#allocation12 + $0x320] sm:$0xff]
    %v7402 = vld [vmem:[#allocation12 + $0x328] sm:$0xff]
    %v7403 = vld [vmem:[#allocation12 + $0x330] sm:$0xff]
    %v7404 = vld [vmem:[#allocation12 + $0x338] sm:$0xff]
    %v7405 = vld [vmem:[#allocation12 + $0x340] sm:$0xff]
    %v7406 = vld [vmem:[#allocation12 + $0x348] sm:$0xff]
    %v7407 = vld [vmem:[#allocation12 + $0x350] sm:$0xff]
    %v7408 = vld [vmem:[#allocation12 + $0x358] sm:$0xff]
    %v7409 = vld [vmem:[#allocation12 + $0x360] sm:$0xff]
    %v7410 = vld [vmem:[#allocation12 + $0x368] sm:$0xff]
    %v7411 = vld [vmem:[#allocation12 + $0x370] sm:$0xff]
    %v7412 = vld [vmem:[#allocation12 + $0x378] sm:$0xff]
    %v7413 = vld [vmem:[#allocation12 + $0x380] sm:$0xff]
    %v7414 = vld [vmem:[#allocation12 + $0x388] sm:$0xff]
    %v7415 = vld [vmem:[#allocation12 + $0x390] sm:$0xff]
    %v7416 = vld [vmem:[#allocation12 + $0x398] sm:$0xff]
    %v7417 = vld [vmem:[#allocation12 + $0x3a0] sm:$0xff]
    %v7418 = vld [vmem:[#allocation12 + $0x3a8] sm:$0xff]
    %v7419 = vld [vmem:[#allocation12 + $0x3b0] sm:$0xff]
    %v7420 = vld [vmem:[#allocation12 + $0x3b8] sm:$0xff]
    %v7421 = vld [vmem:[#allocation12 + $0x3c0] sm:$0xff]
    %v7422 = vld [vmem:[#allocation12 + $0x3c8] sm:$0xff]
    %v7423 = vld [vmem:[#allocation12 + $0x3d0] sm:$0xff]
    %v7424 = vld [vmem:[#allocation12 + $0x3d8] sm:$0xff]
    %v7425 = vld [vmem:[#allocation12 + $0x3e0] sm:$0xff]
    %v7426 = vld [vmem:[#allocation12 + $0x3e8] sm:$0xff]
    %v7427 = vld [vmem:[#allocation12 + $0x3f0] sm:$0xff]
    %v7428 = vld [vmem:[#allocation12 + $0x3f8] sm:$0xff]
    %v7429 = vld [vmem:[#allocation12 + $0x400] sm:$0xff]
    %v7430 = vld [vmem:[#allocation12 + $0x408] sm:$0xff]
    %v7431 = vld [vmem:[#allocation12 + $0x410] sm:$0xff]
    %v7432 = vld [vmem:[#allocation12 + $0x418] sm:$0xff]
    %v7433 = vld [vmem:[#allocation12 + $0x420] sm:$0xff]
    %v7434 = vld [vmem:[#allocation12 + $0x428] sm:$0xff]
    %v7435 = vld [vmem:[#allocation12 + $0x430] sm:$0xff]
    %v7436 = vld [vmem:[#allocation12 + $0x438] sm:$0xff]
    %v7437 = vld [vmem:[#allocation12 + $0x440] sm:$0xff]
    %v7438 = vld [vmem:[#allocation12 + $0x448] sm:$0xff]
    %v7439 = vld [vmem:[#allocation12 + $0x450] sm:$0xff]
    %v7440 = vld [vmem:[#allocation12 + $0x458] sm:$0xff]
    %v7441 = vld [vmem:[#allocation12 + $0x460] sm:$0xff]
    %v7442 = vld [vmem:[#allocation12 + $0x468] sm:$0xff]
    %v7443 = vld [vmem:[#allocation12 + $0x470] sm:$0xff]
    %v7444 = vld [vmem:[#allocation12 + $0x478] sm:$0xff]
    %v7445 = vld [vmem:[#allocation12 + $0x480] sm:$0xff]
    %v7446 = vld [vmem:[#allocation12 + $0x488] sm:$0xff]
    %v7447 = vld [vmem:[#allocation12 + $0x490] sm:$0xff]
    %v7448 = vld [vmem:[#allocation12 + $0x498] sm:$0xff]
    %v7449 = vld [vmem:[#allocation12 + $0x4a0] sm:$0xff]
    %v7450 = vld [vmem:[#allocation12 + $0x4a8] sm:$0xff]
    %v7451 = vld [vmem:[#allocation12 + $0x4b0] sm:$0xff]
    %v7452 = vld [vmem:[#allocation12 + $0x4b8] sm:$0xff]
    %v7453 = vld [vmem:[#allocation12 + $0x4c0] sm:$0xff]
    %v7454 = vld [vmem:[#allocation12 + $0x4c8] sm:$0xff]
    %v7455 = vld [vmem:[#allocation12 + $0x4d0] sm:$0xff]
    %v7456 = vld [vmem:[#allocation12 + $0x4d8] sm:$0xff]
    %v7457 = vld [vmem:[#allocation12 + $0x4e0] sm:$0xff]
    %v7458 = vld [vmem:[#allocation12 + $0x4e8] sm:$0xff]
    %v7459 = vld [vmem:[#allocation12 + $0x4f0] sm:$0xff]
    %v7460 = vld [vmem:[#allocation12 + $0x4f8] sm:$0xff]
    %v7461 = vld [vmem:[#allocation12 + $0x500] sm:$0xff]
    %v7462 = vld [vmem:[#allocation12 + $0x508] sm:$0xff]
    %v7463 = vld [vmem:[#allocation12 + $0x510] sm:$0xff]
    %v7464 = vld [vmem:[#allocation12 + $0x518] sm:$0xff]
    %v7465 = vld [vmem:[#allocation12 + $0x520] sm:$0xff]
    %v7466 = vld [vmem:[#allocation12 + $0x528] sm:$0xff]
    %v7467 = vld [vmem:[#allocation12 + $0x530] sm:$0xff]
    %v7468 = vld [vmem:[#allocation12 + $0x538] sm:$0xff]
    %v7469 = vld [vmem:[#allocation12 + $0x540] sm:$0xff]
    %v7470 = vld [vmem:[#allocation12 + $0x548] sm:$0xff]
    %v7471 = vld [vmem:[#allocation12 + $0x550] sm:$0xff]
    %v7472 = vld [vmem:[#allocation12 + $0x558] sm:$0xff]
    %v7473 = vld [vmem:[#allocation12 + $0x560] sm:$0xff]
    %v7474 = vld [vmem:[#allocation12 + $0x568] sm:$0xff]
    %v7475 = vld [vmem:[#allocation12 + $0x570] sm:$0xff]
    %v7476 = vld [vmem:[#allocation12 + $0x578] sm:$0xff]
    %v7477 = vld [vmem:[#allocation12 + $0x580] sm:$0xff]
    %v7478 = vld [vmem:[#allocation12 + $0x588] sm:$0xff]
    %v7479 = vld [vmem:[#allocation12 + $0x590] sm:$0xff]
    %v7480 = vld [vmem:[#allocation12 + $0x598] sm:$0xff]
    %v7481 = vld [vmem:[#allocation12 + $0x5a0] sm:$0xff]
    %v7482 = vld [vmem:[#allocation12 + $0x5a8] sm:$0xff]
    %v7483 = vld [vmem:[#allocation12 + $0x5b0] sm:$0xff]
    %v7484 = vld [vmem:[#allocation12 + $0x5b8] sm:$0xff]
    %v7485 = vld [vmem:[#allocation12 + $0x5c0] sm:$0xff]
    %v7486 = vld [vmem:[#allocation12 + $0x5c8] sm:$0xff]
    %v7487 = vld [vmem:[#allocation12 + $0x5d0] sm:$0xff]
    %v7488 = vld [vmem:[#allocation12 + $0x5d8] sm:$0xff]
    %v7489 = vld [vmem:[#allocation12 + $0x5e0] sm:$0xff]
    %v7490 = vld [vmem:[#allocation12 + $0x5e8] sm:$0xff]
    %v7491 = vld [vmem:[#allocation12 + $0x5f0] sm:$0xff]
    %v7492 = vld [vmem:[#allocation12 + $0x5f8] sm:$0xff]
    %v7493 = vld [vmem:[#allocation12 + $0x600] sm:$0xff]
    %v7494 = vld [vmem:[#allocation12 + $0x608] sm:$0xff]
    %v7495 = vld [vmem:[#allocation12 + $0x610] sm:$0xff]
    %v7496 = vld [vmem:[#allocation12 + $0x618] sm:$0xff]
    %v7497 = vld [vmem:[#allocation12 + $0x620] sm:$0xff]
    %v7498 = vld [vmem:[#allocation12 + $0x628] sm:$0xff]
    %v7499 = vld [vmem:[#allocation12 + $0x630] sm:$0xff]
    %v7500 = vld [vmem:[#allocation12 + $0x638] sm:$0xff]
    %v7501 = vld [vmem:[#allocation12 + $0x640] sm:$0xff]
    %v7502 = vld [vmem:[#allocation12 + $0x648] sm:$0xff]
    %v7503 = vld [vmem:[#allocation12 + $0x650] sm:$0xff]
    %v7504 = vld [vmem:[#allocation12 + $0x658] sm:$0xff]
    %v7505 = vld [vmem:[#allocation12 + $0x660] sm:$0xff]
    %v7506 = vld [vmem:[#allocation12 + $0x668] sm:$0xff]
    %v7507 = vld [vmem:[#allocation12 + $0x670] sm:$0xff]
    %v7508 = vld [vmem:[#allocation12 + $0x678] sm:$0xff]
    %v7509 = vld [vmem:[#allocation12 + $0x680] sm:$0xff]
    %v7510 = vld [vmem:[#allocation12 + $0x688] sm:$0xff]
    %v7511 = vld [vmem:[#allocation12 + $0x690] sm:$0xff]
    %v7512 = vld [vmem:[#allocation12 + $0x698] sm:$0xff]
    %v7513 = vld [vmem:[#allocation12 + $0x6a0] sm:$0xff]
    %v7514 = vld [vmem:[#allocation12 + $0x6a8] sm:$0xff]
    %v7515 = vld [vmem:[#allocation12 + $0x6b0] sm:$0xff]
    %v7516 = vld [vmem:[#allocation12 + $0x6b8] sm:$0xff]
    %v7517 = vld [vmem:[#allocation12 + $0x6c0] sm:$0xff]
    %v7518 = vld [vmem:[#allocation12 + $0x6c8] sm:$0xff]
    %v7519 = vld [vmem:[#allocation12 + $0x6d0] sm:$0xff]
    %v7520 = vld [vmem:[#allocation12 + $0x6d8] sm:$0xff]
    %v7521 = vld [vmem:[#allocation12 + $0x6e0] sm:$0xff]
    %v7522 = vld [vmem:[#allocation12 + $0x6e8] sm:$0xff]
    %v7523 = vld [vmem:[#allocation12 + $0x6f0] sm:$0xff]
    %v7524 = vld [vmem:[#allocation12 + $0x6f8] sm:$0xff]
    %v7525 = vld [vmem:[#allocation12 + $0x700] sm:$0xff]
    %v7526 = vld [vmem:[#allocation12 + $0x708] sm:$0xff]
    %v7527 = vld [vmem:[#allocation12 + $0x710] sm:$0xff]
    %v7528 = vld [vmem:[#allocation12 + $0x718] sm:$0xff]
    %v7529 = vld [vmem:[#allocation12 + $0x720] sm:$0xff]
    %v7530 = vld [vmem:[#allocation12 + $0x728] sm:$0xff]
    %v7531 = vld [vmem:[#allocation12 + $0x730] sm:$0xff]
    %v7532 = vld [vmem:[#allocation12 + $0x738] sm:$0xff]
    %v7533 = vld [vmem:[#allocation12 + $0x740] sm:$0xff]
    %v7534 = vld [vmem:[#allocation12 + $0x748] sm:$0xff]
    %v7535 = vld [vmem:[#allocation12 + $0x750] sm:$0xff]
    %v7536 = vld [vmem:[#allocation12 + $0x758] sm:$0xff]
    %v7537 = vld [vmem:[#allocation12 + $0x760] sm:$0xff]
    %v7538 = vld [vmem:[#allocation12 + $0x768] sm:$0xff]
    %v7539 = vld [vmem:[#allocation12 + $0x770] sm:$0xff]
    %v7540 = vld [vmem:[#allocation12 + $0x778] sm:$0xff]
    %v7541 = vld [vmem:[#allocation12 + $0x780] sm:$0xff]
    %v7542 = vld [vmem:[#allocation12 + $0x788] sm:$0xff]
    %v7543 = vld [vmem:[#allocation12 + $0x790] sm:$0xff]
    %v7544 = vld [vmem:[#allocation12 + $0x798] sm:$0xff]
    %v7545 = vld [vmem:[#allocation12 + $0x7a0] sm:$0xff]
    %v7546 = vld [vmem:[#allocation12 + $0x7a8] sm:$0xff]
    %v7547 = vld [vmem:[#allocation12 + $0x7b0] sm:$0xff]
    %v7548 = vld [vmem:[#allocation12 + $0x7b8] sm:$0xff]
    %v7549 = vld [vmem:[#allocation12 + $0x7c0] sm:$0xff]
    %v7550 = vld [vmem:[#allocation12 + $0x7c8] sm:$0xff]
    %v7551 = vld [vmem:[#allocation12 + $0x7d0] sm:$0xff]
    %v7552 = vld [vmem:[#allocation12 + $0x7d8] sm:$0xff]
    %v7553 = vld [vmem:[#allocation12 + $0x7e0] sm:$0xff]
    %v7554 = vld [vmem:[#allocation12 + $0x7e8] sm:$0xff]
    %v7555 = vld [vmem:[#allocation12 + $0x7f0] sm:$0xff]
    %v7556 = vld [vmem:[#allocation12 + $0x7f8] sm:$0xff]
    %v7557 = vld [vmem:[#allocation13] sm:$0xf]
    %v7559 = vlaneseq
    %v7560 = vshrl.u32 %v7559, 7
    %v7561 = vsub.s32 0, %v7560
    %v7562 = vrot.slane %v7557, %v7561
    %v7563 = vlaneseq
    %v7564 = vshrl.u32 %v7563, 7
    %v7565 = vsub.s32 1, %v7564
    %v7566 = vrot.slane %v7557, %v7565
    %v7567 = vlaneseq
    %v7568 = vshrl.u32 %v7567, 7
    %v7569 = vsub.s32 2, %v7568
    %v7570 = vrot.slane %v7557, %v7569
    %v7571 = vlaneseq
    %v7572 = vshrl.u32 %v7571, 7
    %v7573 = vsub.s32 3, %v7572
    %v7574 = vrot.slane %v7557, %v7573
    %v7835 = vunpack.c.l.b16 %v7301
    %v7836 = vunpack.c.h.b16 %v7301
    %v7837 = vunpack.c.l.b16 %v7302
    %v7838 = vunpack.c.h.b16 %v7302
    %v7839 = vunpack.c.l.b16 %v7303
    %v7840 = vunpack.c.h.b16 %v7303
    %v7841 = vunpack.c.l.b16 %v7304
    %v7842 = vunpack.c.h.b16 %v7304
    %v7843 = vunpack.c.l.b16 %v7305
    %v7844 = vunpack.c.h.b16 %v7305
    %v7845 = vunpack.c.l.b16 %v7306
    %v7846 = vunpack.c.h.b16 %v7306
    %v7847 = vunpack.c.l.b16 %v7307
    %v7848 = vunpack.c.h.b16 %v7307
    %v7849 = vunpack.c.l.b16 %v7308
    %v7850 = vunpack.c.h.b16 %v7308
    %v7851 = vunpack.c.l.b16 %v7309
    %v7852 = vunpack.c.h.b16 %v7309
    %v7853 = vunpack.c.l.b16 %v7310
    %v7854 = vunpack.c.h.b16 %v7310
    %v7855 = vunpack.c.l.b16 %v7311
    %v7856 = vunpack.c.h.b16 %v7311
    %v7857 = vunpack.c.l.b16 %v7312
    %v7858 = vunpack.c.h.b16 %v7312
    %v7859 = vunpack.c.l.b16 %v7313
    %v7860 = vunpack.c.h.b16 %v7313
    %v7861 = vunpack.c.l.b16 %v7314
    %v7862 = vunpack.c.h.b16 %v7314
    %v7863 = vunpack.c.l.b16 %v7315
    %v7864 = vunpack.c.h.b16 %v7315
    %v7865 = vunpack.c.l.b16 %v7316
    %v7866 = vunpack.c.h.b16 %v7316
    %v7867 = vunpack.c.l.b16 %v7317
    %v7868 = vunpack.c.h.b16 %v7317
    %v7869 = vunpack.c.l.b16 %v7318
    %v7870 = vunpack.c.h.b16 %v7318
    %v7871 = vunpack.c.l.b16 %v7319
    %v7872 = vunpack.c.h.b16 %v7319
    %v7873 = vunpack.c.l.b16 %v7320
    %v7874 = vunpack.c.h.b16 %v7320
    %v7875 = vunpack.c.l.b16 %v7321
    %v7876 = vunpack.c.h.b16 %v7321
    %v7877 = vunpack.c.l.b16 %v7322
    %v7878 = vunpack.c.h.b16 %v7322
    %v7879 = vunpack.c.l.b16 %v7323
    %v7880 = vunpack.c.h.b16 %v7323
    %v7881 = vunpack.c.l.b16 %v7324
    %v7882 = vunpack.c.h.b16 %v7324
    %v7883 = vunpack.c.l.b16 %v7325
    %v7884 = vunpack.c.h.b16 %v7325
    %v7885 = vunpack.c.l.b16 %v7326
    %v7886 = vunpack.c.h.b16 %v7326
    %v7887 = vunpack.c.l.b16 %v7327
    %v7888 = vunpack.c.h.b16 %v7327
    %v7889 = vunpack.c.l.b16 %v7328
    %v7890 = vunpack.c.h.b16 %v7328
    %v7891 = vunpack.c.l.b16 %v7329
    %v7892 = vunpack.c.h.b16 %v7329
    %v7893 = vunpack.c.l.b16 %v7330
    %v7894 = vunpack.c.h.b16 %v7330
    %v7895 = vunpack.c.l.b16 %v7331
    %v7896 = vunpack.c.h.b16 %v7331
    %v7897 = vunpack.c.l.b16 %v7332
    %v7898 = vunpack.c.h.b16 %v7332
    %v7899 = vunpack.c.l.b16 %v7333
    %v7900 = vunpack.c.h.b16 %v7333
    %v7901 = vunpack.c.l.b16 %v7334
    %v7902 = vunpack.c.h.b16 %v7334
    %v7903 = vunpack.c.l.b16 %v7335
    %v7904 = vunpack.c.h.b16 %v7335
    %v7905 = vunpack.c.l.b16 %v7336
    %v7906 = vunpack.c.h.b16 %v7336
    %v7907 = vunpack.c.l.b16 %v7337
    %v7908 = vunpack.c.h.b16 %v7337
    %v7909 = vunpack.c.l.b16 %v7338
    %v7910 = vunpack.c.h.b16 %v7338
    %v7911 = vunpack.c.l.b16 %v7339
    %v7912 = vunpack.c.h.b16 %v7339
    %v7913 = vunpack.c.l.b16 %v7340
    %v7914 = vunpack.c.h.b16 %v7340
    %v7915 = vunpack.c.l.b16 %v7341
    %v7916 = vunpack.c.h.b16 %v7341
    %v7917 = vunpack.c.l.b16 %v7342
    %v7918 = vunpack.c.h.b16 %v7342
    %v7919 = vunpack.c.l.b16 %v7343
    %v7920 = vunpack.c.h.b16 %v7343
    %v7921 = vunpack.c.l.b16 %v7344
    %v7922 = vunpack.c.h.b16 %v7344
    %v7923 = vunpack.c.l.b16 %v7345
    %v7924 = vunpack.c.h.b16 %v7345
    %v7925 = vunpack.c.l.b16 %v7346
    %v7926 = vunpack.c.h.b16 %v7346
    %v7927 = vunpack.c.l.b16 %v7347
    %v7928 = vunpack.c.h.b16 %v7347
    %v7929 = vunpack.c.l.b16 %v7348
    %v7930 = vunpack.c.h.b16 %v7348
    %v7931 = vunpack.c.l.b16 %v7349
    %v7932 = vunpack.c.h.b16 %v7349
    %v7933 = vunpack.c.l.b16 %v7350
    %v7934 = vunpack.c.h.b16 %v7350
    %v7935 = vunpack.c.l.b16 %v7351
    %v7936 = vunpack.c.h.b16 %v7351
    %v7937 = vunpack.c.l.b16 %v7352
    %v7938 = vunpack.c.h.b16 %v7352
    %v7939 = vunpack.c.l.b16 %v7353
    %v7940 = vunpack.c.h.b16 %v7353
    %v7941 = vunpack.c.l.b16 %v7354
    %v7942 = vunpack.c.h.b16 %v7354
    %v7943 = vunpack.c.l.b16 %v7355
    %v7944 = vunpack.c.h.b16 %v7355
    %v7945 = vunpack.c.l.b16 %v7356
    %v7946 = vunpack.c.h.b16 %v7356
    %v7947 = vunpack.c.l.b16 %v7357
    %v7948 = vunpack.c.h.b16 %v7357
    %v7949 = vunpack.c.l.b16 %v7358
    %v7950 = vunpack.c.h.b16 %v7358
    %v7951 = vunpack.c.l.b16 %v7359
    %v7952 = vunpack.c.h.b16 %v7359
    %v7953 = vunpack.c.l.b16 %v7360
    %v7954 = vunpack.c.h.b16 %v7360
    %v7955 = vunpack.c.l.b16 %v7361
    %v7956 = vunpack.c.h.b16 %v7361
    %v7957 = vunpack.c.l.b16 %v7362
    %v7958 = vunpack.c.h.b16 %v7362
    %v7959 = vunpack.c.l.b16 %v7363
    %v7960 = vunpack.c.h.b16 %v7363
    %v7961 = vunpack.c.l.b16 %v7364
    %v7962 = vunpack.c.h.b16 %v7364
    %v7963 = vunpack.c.l.b16 %v7365
    %v7964 = vunpack.c.h.b16 %v7365
    %v7965 = vunpack.c.l.b16 %v7366
    %v7966 = vunpack.c.h.b16 %v7366
    %v7967 = vunpack.c.l.b16 %v7367
    %v7968 = vunpack.c.h.b16 %v7367
    %v7969 = vunpack.c.l.b16 %v7368
    %v7970 = vunpack.c.h.b16 %v7368
    %v7971 = vunpack.c.l.b16 %v7369
    %v7972 = vunpack.c.h.b16 %v7369
    %v7973 = vunpack.c.l.b16 %v7370
    %v7974 = vunpack.c.h.b16 %v7370
    %v7975 = vunpack.c.l.b16 %v7371
    %v7976 = vunpack.c.h.b16 %v7371
    %v7977 = vunpack.c.l.b16 %v7372
    %v7978 = vunpack.c.h.b16 %v7372
    %v7979 = vunpack.c.l.b16 %v7373
    %v7980 = vunpack.c.h.b16 %v7373
    %v7981 = vunpack.c.l.b16 %v7374
    %v7982 = vunpack.c.h.b16 %v7374
    %v7983 = vunpack.c.l.b16 %v7375
    %v7984 = vunpack.c.h.b16 %v7375
    %v7985 = vunpack.c.l.b16 %v7376
    %v7986 = vunpack.c.h.b16 %v7376
    %v7987 = vunpack.c.l.b16 %v7377
    %v7988 = vunpack.c.h.b16 %v7377
    %v7989 = vunpack.c.l.b16 %v7378
    %v7990 = vunpack.c.h.b16 %v7378
    %v7991 = vunpack.c.l.b16 %v7379
    %v7992 = vunpack.c.h.b16 %v7379
    %v7993 = vunpack.c.l.b16 %v7380
    %v7994 = vunpack.c.h.b16 %v7380
    %v7995 = vunpack.c.l.b16 %v7381
    %v7996 = vunpack.c.h.b16 %v7381
    %v7997 = vunpack.c.l.b16 %v7382
    %v7998 = vunpack.c.h.b16 %v7382
    %v7999 = vunpack.c.l.b16 %v7383
    %v8000 = vunpack.c.h.b16 %v7383
    %v8001 = vunpack.c.l.b16 %v7384
    %v8002 = vunpack.c.h.b16 %v7384
    %v8003 = vunpack.c.l.b16 %v7385
    %v8004 = vunpack.c.h.b16 %v7385
    %v8005 = vunpack.c.l.b16 %v7386
    %v8006 = vunpack.c.h.b16 %v7386
    %v8007 = vunpack.c.l.b16 %v7387
    %v8008 = vunpack.c.h.b16 %v7387
    %v8009 = vunpack.c.l.b16 %v7388
    %v8010 = vunpack.c.h.b16 %v7388
    %v8011 = vunpack.c.l.b16 %v7389
    %v8012 = vunpack.c.h.b16 %v7389
    %v8013 = vunpack.c.l.b16 %v7390
    %v8014 = vunpack.c.h.b16 %v7390
    %v8015 = vunpack.c.l.b16 %v7391
    %v8016 = vunpack.c.h.b16 %v7391
    %v8017 = vunpack.c.l.b16 %v7392
    %v8018 = vunpack.c.h.b16 %v7392
    %v8019 = vunpack.c.l.b16 %v7393
    %v8020 = vunpack.c.h.b16 %v7393
    %v8021 = vunpack.c.l.b16 %v7394
    %v8022 = vunpack.c.h.b16 %v7394
    %v8023 = vunpack.c.l.b16 %v7395
    %v8024 = vunpack.c.h.b16 %v7395
    %v8025 = vunpack.c.l.b16 %v7396
    %v8026 = vunpack.c.h.b16 %v7396
    %v8027 = vunpack.c.l.b16 %v7397
    %v8028 = vunpack.c.h.b16 %v7397
    %v8029 = vunpack.c.l.b16 %v7398
    %v8030 = vunpack.c.h.b16 %v7398
    %v8031 = vunpack.c.l.b16 %v7399
    %v8032 = vunpack.c.h.b16 %v7399
    %v8033 = vunpack.c.l.b16 %v7400
    %v8034 = vunpack.c.h.b16 %v7400
    %v8035 = vunpack.c.l.b16 %v7401
    %v8036 = vunpack.c.h.b16 %v7401
    %v8037 = vunpack.c.l.b16 %v7402
    %v8038 = vunpack.c.h.b16 %v7402
    %v8039 = vunpack.c.l.b16 %v7403
    %v8040 = vunpack.c.h.b16 %v7403
    %v8041 = vunpack.c.l.b16 %v7404
    %v8042 = vunpack.c.h.b16 %v7404
    %v8043 = vunpack.c.l.b16 %v7405
    %v8044 = vunpack.c.h.b16 %v7405
    %v8045 = vunpack.c.l.b16 %v7406
    %v8046 = vunpack.c.h.b16 %v7406
    %v8047 = vunpack.c.l.b16 %v7407
    %v8048 = vunpack.c.h.b16 %v7407
    %v8049 = vunpack.c.l.b16 %v7408
    %v8050 = vunpack.c.h.b16 %v7408
    %v8051 = vunpack.c.l.b16 %v7409
    %v8052 = vunpack.c.h.b16 %v7409
    %v8053 = vunpack.c.l.b16 %v7410
    %v8054 = vunpack.c.h.b16 %v7410
    %v8055 = vunpack.c.l.b16 %v7411
    %v8056 = vunpack.c.h.b16 %v7411
    %v8057 = vunpack.c.l.b16 %v7412
    %v8058 = vunpack.c.h.b16 %v7412
    %v8059 = vunpack.c.l.b16 %v7413
    %v8060 = vunpack.c.h.b16 %v7413
    %v8061 = vunpack.c.l.b16 %v7414
    %v8062 = vunpack.c.h.b16 %v7414
    %v8063 = vunpack.c.l.b16 %v7415
    %v8064 = vunpack.c.h.b16 %v7415
    %v8065 = vunpack.c.l.b16 %v7416
    %v8066 = vunpack.c.h.b16 %v7416
    %v8067 = vunpack.c.l.b16 %v7417
    %v8068 = vunpack.c.h.b16 %v7417
    %v8069 = vunpack.c.l.b16 %v7418
    %v8070 = vunpack.c.h.b16 %v7418
    %v8071 = vunpack.c.l.b16 %v7419
    %v8072 = vunpack.c.h.b16 %v7419
    %v8073 = vunpack.c.l.b16 %v7420
    %v8074 = vunpack.c.h.b16 %v7420
    %v8075 = vunpack.c.l.b16 %v7421
    %v8076 = vunpack.c.h.b16 %v7421
    %v8077 = vunpack.c.l.b16 %v7422
    %v8078 = vunpack.c.h.b16 %v7422
    %v8079 = vunpack.c.l.b16 %v7423
    %v8080 = vunpack.c.h.b16 %v7423
    %v8081 = vunpack.c.l.b16 %v7424
    %v8082 = vunpack.c.h.b16 %v7424
    %v8083 = vunpack.c.l.b16 %v7425
    %v8084 = vunpack.c.h.b16 %v7425
    %v8085 = vunpack.c.l.b16 %v7426
    %v8086 = vunpack.c.h.b16 %v7426
    %v8087 = vunpack.c.l.b16 %v7427
    %v8088 = vunpack.c.h.b16 %v7427
    %v8089 = vunpack.c.l.b16 %v7428
    %v8090 = vunpack.c.h.b16 %v7428
    %v8091 = vunpack.c.l.b16 %v7429
    %v8092 = vunpack.c.h.b16 %v7429
    %v8093 = vunpack.c.l.b16 %v7430
    %v8094 = vunpack.c.h.b16 %v7430
    %v8095 = vunpack.c.l.b16 %v7431
    %v8096 = vunpack.c.h.b16 %v7431
    %v8097 = vunpack.c.l.b16 %v7432
    %v8098 = vunpack.c.h.b16 %v7432
    %v8099 = vunpack.c.l.b16 %v7433
    %v8100 = vunpack.c.h.b16 %v7433
    %v8101 = vunpack.c.l.b16 %v7434
    %v8102 = vunpack.c.h.b16 %v7434
    %v8103 = vunpack.c.l.b16 %v7435
    %v8104 = vunpack.c.h.b16 %v7435
    %v8105 = vunpack.c.l.b16 %v7436
    %v8106 = vunpack.c.h.b16 %v7436
    %v8107 = vunpack.c.l.b16 %v7437
    %v8108 = vunpack.c.h.b16 %v7437
    %v8109 = vunpack.c.l.b16 %v7438
    %v8110 = vunpack.c.h.b16 %v7438
    %v8111 = vunpack.c.l.b16 %v7439
    %v8112 = vunpack.c.h.b16 %v7439
    %v8113 = vunpack.c.l.b16 %v7440
    %v8114 = vunpack.c.h.b16 %v7440
    %v8115 = vunpack.c.l.b16 %v7441
    %v8116 = vunpack.c.h.b16 %v7441
    %v8117 = vunpack.c.l.b16 %v7442
    %v8118 = vunpack.c.h.b16 %v7442
    %v8119 = vunpack.c.l.b16 %v7443
    %v8120 = vunpack.c.h.b16 %v7443
    %v8121 = vunpack.c.l.b16 %v7444
    %v8122 = vunpack.c.h.b16 %v7444
    %v8123 = vunpack.c.l.b16 %v7445
    %v8124 = vunpack.c.h.b16 %v7445
    %v8125 = vunpack.c.l.b16 %v7446
    %v8126 = vunpack.c.h.b16 %v7446
    %v8127 = vunpack.c.l.b16 %v7447
    %v8128 = vunpack.c.h.b16 %v7447
    %v8129 = vunpack.c.l.b16 %v7448
    %v8130 = vunpack.c.h.b16 %v7448
    %v8131 = vunpack.c.l.b16 %v7449
    %v8132 = vunpack.c.h.b16 %v7449
    %v8133 = vunpack.c.l.b16 %v7450
    %v8134 = vunpack.c.h.b16 %v7450
    %v8135 = vunpack.c.l.b16 %v7451
    %v8136 = vunpack.c.h.b16 %v7451
    %v8137 = vunpack.c.l.b16 %v7452
    %v8138 = vunpack.c.h.b16 %v7452
    %v8139 = vunpack.c.l.b16 %v7453
    %v8140 = vunpack.c.h.b16 %v7453
    %v8141 = vunpack.c.l.b16 %v7454
    %v8142 = vunpack.c.h.b16 %v7454
    %v8143 = vunpack.c.l.b16 %v7455
    %v8144 = vunpack.c.h.b16 %v7455
    %v8145 = vunpack.c.l.b16 %v7456
    %v8146 = vunpack.c.h.b16 %v7456
    %v8147 = vunpack.c.l.b16 %v7457
    %v8148 = vunpack.c.h.b16 %v7457
    %v8149 = vunpack.c.l.b16 %v7458
    %v8150 = vunpack.c.h.b16 %v7458
    %v8151 = vunpack.c.l.b16 %v7459
    %v8152 = vunpack.c.h.b16 %v7459
    %v8153 = vunpack.c.l.b16 %v7460
    %v8154 = vunpack.c.h.b16 %v7460
    %v8155 = vunpack.c.l.b16 %v7461
    %v8156 = vunpack.c.h.b16 %v7461
    %v8157 = vunpack.c.l.b16 %v7462
    %v8158 = vunpack.c.h.b16 %v7462
    %v8159 = vunpack.c.l.b16 %v7463
    %v8160 = vunpack.c.h.b16 %v7463
    %v8161 = vunpack.c.l.b16 %v7464
    %v8162 = vunpack.c.h.b16 %v7464
    %v8163 = vunpack.c.l.b16 %v7465
    %v8164 = vunpack.c.h.b16 %v7465
    %v8165 = vunpack.c.l.b16 %v7466
    %v8166 = vunpack.c.h.b16 %v7466
    %v8167 = vunpack.c.l.b16 %v7467
    %v8168 = vunpack.c.h.b16 %v7467
    %v8169 = vunpack.c.l.b16 %v7468
    %v8170 = vunpack.c.h.b16 %v7468
    %v8171 = vunpack.c.l.b16 %v7469
    %v8172 = vunpack.c.h.b16 %v7469
    %v8173 = vunpack.c.l.b16 %v7470
    %v8174 = vunpack.c.h.b16 %v7470
    %v8175 = vunpack.c.l.b16 %v7471
    %v8176 = vunpack.c.h.b16 %v7471
    %v8177 = vunpack.c.l.b16 %v7472
    %v8178 = vunpack.c.h.b16 %v7472
    %v8179 = vunpack.c.l.b16 %v7473
    %v8180 = vunpack.c.h.b16 %v7473
    %v8181 = vunpack.c.l.b16 %v7474
    %v8182 = vunpack.c.h.b16 %v7474
    %v8183 = vunpack.c.l.b16 %v7475
    %v8184 = vunpack.c.h.b16 %v7475
    %v8185 = vunpack.c.l.b16 %v7476
    %v8186 = vunpack.c.h.b16 %v7476
    %v8187 = vunpack.c.l.b16 %v7477
    %v8188 = vunpack.c.h.b16 %v7477
    %v8189 = vunpack.c.l.b16 %v7478
    %v8190 = vunpack.c.h.b16 %v7478
    %v8191 = vunpack.c.l.b16 %v7479
    %v8192 = vunpack.c.h.b16 %v7479
    %v8193 = vunpack.c.l.b16 %v7480
    %v8194 = vunpack.c.h.b16 %v7480
    %v8195 = vunpack.c.l.b16 %v7481
    %v8196 = vunpack.c.h.b16 %v7481
    %v8197 = vunpack.c.l.b16 %v7482
    %v8198 = vunpack.c.h.b16 %v7482
    %v8199 = vunpack.c.l.b16 %v7483
    %v8200 = vunpack.c.h.b16 %v7483
    %v8201 = vunpack.c.l.b16 %v7484
    %v8202 = vunpack.c.h.b16 %v7484
    %v8203 = vunpack.c.l.b16 %v7485
    %v8204 = vunpack.c.h.b16 %v7485
    %v8205 = vunpack.c.l.b16 %v7486
    %v8206 = vunpack.c.h.b16 %v7486
    %v8207 = vunpack.c.l.b16 %v7487
    %v8208 = vunpack.c.h.b16 %v7487
    %v8209 = vunpack.c.l.b16 %v7488
    %v8210 = vunpack.c.h.b16 %v7488
    %v8211 = vunpack.c.l.b16 %v7489
    %v8212 = vunpack.c.h.b16 %v7489
    %v8213 = vunpack.c.l.b16 %v7490
    %v8214 = vunpack.c.h.b16 %v7490
    %v8215 = vunpack.c.l.b16 %v7491
    %v8216 = vunpack.c.h.b16 %v7491
    %v8217 = vunpack.c.l.b16 %v7492
    %v8218 = vunpack.c.h.b16 %v7492
    %v8219 = vunpack.c.l.b16 %v7493
    %v8220 = vunpack.c.h.b16 %v7493
    %v8221 = vunpack.c.l.b16 %v7494
    %v8222 = vunpack.c.h.b16 %v7494
    %v8223 = vunpack.c.l.b16 %v7495
    %v8224 = vunpack.c.h.b16 %v7495
    %v8225 = vunpack.c.l.b16 %v7496
    %v8226 = vunpack.c.h.b16 %v7496
    %v8227 = vunpack.c.l.b16 %v7497
    %v8228 = vunpack.c.h.b16 %v7497
    %v8229 = vunpack.c.l.b16 %v7498
    %v8230 = vunpack.c.h.b16 %v7498
    %v8231 = vunpack.c.l.b16 %v7499
    %v8232 = vunpack.c.h.b16 %v7499
    %v8233 = vunpack.c.l.b16 %v7500
    %v8234 = vunpack.c.h.b16 %v7500
    %v8235 = vunpack.c.l.b16 %v7501
    %v8236 = vunpack.c.h.b16 %v7501
    %v8237 = vunpack.c.l.b16 %v7502
    %v8238 = vunpack.c.h.b16 %v7502
    %v8239 = vunpack.c.l.b16 %v7503
    %v8240 = vunpack.c.h.b16 %v7503
    %v8241 = vunpack.c.l.b16 %v7504
    %v8242 = vunpack.c.h.b16 %v7504
    %v8243 = vunpack.c.l.b16 %v7505
    %v8244 = vunpack.c.h.b16 %v7505
    %v8245 = vunpack.c.l.b16 %v7506
    %v8246 = vunpack.c.h.b16 %v7506
    %v8247 = vunpack.c.l.b16 %v7507
    %v8248 = vunpack.c.h.b16 %v7507
    %v8249 = vunpack.c.l.b16 %v7508
    %v8250 = vunpack.c.h.b16 %v7508
    %v8251 = vunpack.c.l.b16 %v7509
    %v8252 = vunpack.c.h.b16 %v7509
    %v8253 = vunpack.c.l.b16 %v7510
    %v8254 = vunpack.c.h.b16 %v7510
    %v8255 = vunpack.c.l.b16 %v7511
    %v8256 = vunpack.c.h.b16 %v7511
    %v8257 = vunpack.c.l.b16 %v7512
    %v8258 = vunpack.c.h.b16 %v7512
    %v8259 = vunpack.c.l.b16 %v7513
    %v8260 = vunpack.c.h.b16 %v7513
    %v8261 = vunpack.c.l.b16 %v7514
    %v8262 = vunpack.c.h.b16 %v7514
    %v8263 = vunpack.c.l.b16 %v7515
    %v8264 = vunpack.c.h.b16 %v7515
    %v8265 = vunpack.c.l.b16 %v7516
    %v8266 = vunpack.c.h.b16 %v7516
    %v8267 = vunpack.c.l.b16 %v7517
    %v8268 = vunpack.c.h.b16 %v7517
    %v8269 = vunpack.c.l.b16 %v7518
    %v8270 = vunpack.c.h.b16 %v7518
    %v8271 = vunpack.c.l.b16 %v7519
    %v8272 = vunpack.c.h.b16 %v7519
    %v8273 = vunpack.c.l.b16 %v7520
    %v8274 = vunpack.c.h.b16 %v7520
    %v8275 = vunpack.c.l.b16 %v7521
    %v8276 = vunpack.c.h.b16 %v7521
    %v8277 = vunpack.c.l.b16 %v7522
    %v8278 = vunpack.c.h.b16 %v7522
    %v8279 = vunpack.c.l.b16 %v7523
    %v8280 = vunpack.c.h.b16 %v7523
    %v8281 = vunpack.c.l.b16 %v7524
    %v8282 = vunpack.c.h.b16 %v7524
    %v8283 = vunpack.c.l.b16 %v7525
    %v8284 = vunpack.c.h.b16 %v7525
    %v8285 = vunpack.c.l.b16 %v7526
    %v8286 = vunpack.c.h.b16 %v7526
    %v8287 = vunpack.c.l.b16 %v7527
    %v8288 = vunpack.c.h.b16 %v7527
    %v8289 = vunpack.c.l.b16 %v7528
    %v8290 = vunpack.c.h.b16 %v7528
    %v8291 = vunpack.c.l.b16 %v7529
    %v8292 = vunpack.c.h.b16 %v7529
    %v8293 = vunpack.c.l.b16 %v7530
    %v8294 = vunpack.c.h.b16 %v7530
    %v8295 = vunpack.c.l.b16 %v7531
    %v8296 = vunpack.c.h.b16 %v7531
    %v8297 = vunpack.c.l.b16 %v7532
    %v8298 = vunpack.c.h.b16 %v7532
    %v8299 = vunpack.c.l.b16 %v7533
    %v8300 = vunpack.c.h.b16 %v7533
    %v8301 = vunpack.c.l.b16 %v7534
    %v8302 = vunpack.c.h.b16 %v7534
    %v8303 = vunpack.c.l.b16 %v7535
    %v8304 = vunpack.c.h.b16 %v7535
    %v8305 = vunpack.c.l.b16 %v7536
    %v8306 = vunpack.c.h.b16 %v7536
    %v8307 = vunpack.c.l.b16 %v7537
    %v8308 = vunpack.c.h.b16 %v7537
    %v8309 = vunpack.c.l.b16 %v7538
    %v8310 = vunpack.c.h.b16 %v7538
    %v8311 = vunpack.c.l.b16 %v7539
    %v8312 = vunpack.c.h.b16 %v7539
    %v8313 = vunpack.c.l.b16 %v7540
    %v8314 = vunpack.c.h.b16 %v7540
    %v8315 = vunpack.c.l.b16 %v7541
    %v8316 = vunpack.c.h.b16 %v7541
    %v8317 = vunpack.c.l.b16 %v7542
    %v8318 = vunpack.c.h.b16 %v7542
    %v8319 = vunpack.c.l.b16 %v7543
    %v8320 = vunpack.c.h.b16 %v7543
    %v8321 = vunpack.c.l.b16 %v7544
    %v8322 = vunpack.c.h.b16 %v7544
    %v8323 = vunpack.c.l.b16 %v7545
    %v8324 = vunpack.c.h.b16 %v7545
    %v8325 = vunpack.c.l.b16 %v7546
    %v8326 = vunpack.c.h.b16 %v7546
    %v8327 = vunpack.c.l.b16 %v7547
    %v8328 = vunpack.c.h.b16 %v7547
    %v8329 = vunpack.c.l.b16 %v7548
    %v8330 = vunpack.c.h.b16 %v7548
    %v8331 = vunpack.c.l.b16 %v7549
    %v8332 = vunpack.c.h.b16 %v7549
    %v8333 = vunpack.c.l.b16 %v7550
    %v8334 = vunpack.c.h.b16 %v7550
    %v8335 = vunpack.c.l.b16 %v7551
    %v8336 = vunpack.c.h.b16 %v7551
    %v8337 = vunpack.c.l.b16 %v7552
    %v8338 = vunpack.c.h.b16 %v7552
    %v8339 = vunpack.c.l.b16 %v7553
    %v8340 = vunpack.c.h.b16 %v7553
    %v8341 = vunpack.c.l.b16 %v7554
    %v8342 = vunpack.c.h.b16 %v7554
    %v8343 = vunpack.c.l.b16 %v7555
    %v8344 = vunpack.c.h.b16 %v7555
    %v8345 = vunpack.c.l.b16 %v7556
    %v8346 = vunpack.c.h.b16 %v7556
    %v8347 = vpack.c.b16 %v7839, %v7835
    %v8348 = vpack.c.b16 %v7840, %v7836
    %v8349 = vpack.c.b16 %v7841, %v7837
    %v8350 = vpack.c.b16 %v7842, %v7838
    %v8351 = vpack.c.b16 %v7847, %v7843
    %v8352 = vpack.c.b16 %v7848, %v7844
    %v8353 = vpack.c.b16 %v7849, %v7845
    %v8354 = vpack.c.b16 %v7850, %v7846
    %v8355 = vpack.c.b16 %v7855, %v7851
    %v8356 = vpack.c.b16 %v7856, %v7852
    %v8357 = vpack.c.b16 %v7857, %v7853
    %v8358 = vpack.c.b16 %v7858, %v7854
    %v8359 = vpack.c.b16 %v7863, %v7859
    %v8360 = vpack.c.b16 %v7864, %v7860
    %v8361 = vpack.c.b16 %v7865, %v7861
    %v8362 = vpack.c.b16 %v7866, %v7862
    %v8363 = vpack.c.b16 %v7871, %v7867
    %v8364 = vpack.c.b16 %v7872, %v7868
    %v8365 = vpack.c.b16 %v7873, %v7869
    %v8366 = vpack.c.b16 %v7874, %v7870
    %v8367 = vpack.c.b16 %v7879, %v7875
    %v8368 = vpack.c.b16 %v7880, %v7876
    %v8369 = vpack.c.b16 %v7881, %v7877
    %v8370 = vpack.c.b16 %v7882, %v7878
    %v8371 = vpack.c.b16 %v7887, %v7883
    %v8372 = vpack.c.b16 %v7888, %v7884
    %v8373 = vpack.c.b16 %v7889, %v7885
    %v8374 = vpack.c.b16 %v7890, %v7886
    %v8375 = vpack.c.b16 %v7895, %v7891
    %v8376 = vpack.c.b16 %v7896, %v7892
    %v8377 = vpack.c.b16 %v7897, %v7893
    %v8378 = vpack.c.b16 %v7898, %v7894
    %v8379 = vpack.c.b16 %v7903, %v7899
    %v8380 = vpack.c.b16 %v7904, %v7900
    %v8381 = vpack.c.b16 %v7905, %v7901
    %v8382 = vpack.c.b16 %v7906, %v7902
    %v8383 = vpack.c.b16 %v7911, %v7907
    %v8384 = vpack.c.b16 %v7912, %v7908
    %v8385 = vpack.c.b16 %v7913, %v7909
    %v8386 = vpack.c.b16 %v7914, %v7910
    %v8387 = vpack.c.b16 %v7919, %v7915
    %v8388 = vpack.c.b16 %v7920, %v7916
    %v8389 = vpack.c.b16 %v7921, %v7917
    %v8390 = vpack.c.b16 %v7922, %v7918
    %v8391 = vpack.c.b16 %v7927, %v7923
    %v8392 = vpack.c.b16 %v7928, %v7924
    %v8393 = vpack.c.b16 %v7929, %v7925
    %v8394 = vpack.c.b16 %v7930, %v7926
    %v8395 = vpack.c.b16 %v7935, %v7931
    %v8396 = vpack.c.b16 %v7936, %v7932
    %v8397 = vpack.c.b16 %v7937, %v7933
    %v8398 = vpack.c.b16 %v7938, %v7934
    %v8399 = vpack.c.b16 %v7943, %v7939
    %v8400 = vpack.c.b16 %v7944, %v7940
    %v8401 = vpack.c.b16 %v7945, %v7941
    %v8402 = vpack.c.b16 %v7946, %v7942
    %v8403 = vpack.c.b16 %v7951, %v7947
    %v8404 = vpack.c.b16 %v7952, %v7948
    %v8405 = vpack.c.b16 %v7953, %v7949
    %v8406 = vpack.c.b16 %v7954, %v7950
    %v8407 = vpack.c.b16 %v7959, %v7955
    %v8408 = vpack.c.b16 %v7960, %v7956
    %v8409 = vpack.c.b16 %v7961, %v7957
    %v8410 = vpack.c.b16 %v7962, %v7958
    %v8411 = vpack.c.b16 %v7967, %v7963
    %v8412 = vpack.c.b16 %v7968, %v7964
    %v8413 = vpack.c.b16 %v7969, %v7965
    %v8414 = vpack.c.b16 %v7970, %v7966
    %v8415 = vpack.c.b16 %v7975, %v7971
    %v8416 = vpack.c.b16 %v7976, %v7972
    %v8417 = vpack.c.b16 %v7977, %v7973
    %v8418 = vpack.c.b16 %v7978, %v7974
    %v8419 = vpack.c.b16 %v7983, %v7979
    %v8420 = vpack.c.b16 %v7984, %v7980
    %v8421 = vpack.c.b16 %v7985, %v7981
    %v8422 = vpack.c.b16 %v7986, %v7982
    %v8423 = vpack.c.b16 %v7991, %v7987
    %v8424 = vpack.c.b16 %v7992, %v7988
    %v8425 = vpack.c.b16 %v7993, %v7989
    %v8426 = vpack.c.b16 %v7994, %v7990
    %v8427 = vpack.c.b16 %v7999, %v7995
    %v8428 = vpack.c.b16 %v8000, %v7996
    %v8429 = vpack.c.b16 %v8001, %v7997
    %v8430 = vpack.c.b16 %v8002, %v7998
    %v8431 = vpack.c.b16 %v8007, %v8003
    %v8432 = vpack.c.b16 %v8008, %v8004
    %v8433 = vpack.c.b16 %v8009, %v8005
    %v8434 = vpack.c.b16 %v8010, %v8006
    %v8435 = vpack.c.b16 %v8015, %v8011
    %v8436 = vpack.c.b16 %v8016, %v8012
    %v8437 = vpack.c.b16 %v8017, %v8013
    %v8438 = vpack.c.b16 %v8018, %v8014
    %v8439 = vpack.c.b16 %v8023, %v8019
    %v8440 = vpack.c.b16 %v8024, %v8020
    %v8441 = vpack.c.b16 %v8025, %v8021
    %v8442 = vpack.c.b16 %v8026, %v8022
    %v8443 = vpack.c.b16 %v8031, %v8027
    %v8444 = vpack.c.b16 %v8032, %v8028
    %v8445 = vpack.c.b16 %v8033, %v8029
    %v8446 = vpack.c.b16 %v8034, %v8030
    %v8447 = vpack.c.b16 %v8039, %v8035
    %v8448 = vpack.c.b16 %v8040, %v8036
    %v8449 = vpack.c.b16 %v8041, %v8037
    %v8450 = vpack.c.b16 %v8042, %v8038
    %v8451 = vpack.c.b16 %v8047, %v8043
    %v8452 = vpack.c.b16 %v8048, %v8044
    %v8453 = vpack.c.b16 %v8049, %v8045
    %v8454 = vpack.c.b16 %v8050, %v8046
    %v8455 = vpack.c.b16 %v8055, %v8051
    %v8456 = vpack.c.b16 %v8056, %v8052
    %v8457 = vpack.c.b16 %v8057, %v8053
    %v8458 = vpack.c.b16 %v8058, %v8054
    %v8459 = vpack.c.b16 %v8063, %v8059
    %v8460 = vpack.c.b16 %v8064, %v8060
    %v8461 = vpack.c.b16 %v8065, %v8061
    %v8462 = vpack.c.b16 %v8066, %v8062
    %v8463 = vpack.c.b16 %v8071, %v8067
    %v8464 = vpack.c.b16 %v8072, %v8068
    %v8465 = vpack.c.b16 %v8073, %v8069
    %v8466 = vpack.c.b16 %v8074, %v8070
    %v8467 = vpack.c.b16 %v8079, %v8075
    %v8468 = vpack.c.b16 %v8080, %v8076
    %v8469 = vpack.c.b16 %v8081, %v8077
    %v8470 = vpack.c.b16 %v8082, %v8078
    %v8471 = vpack.c.b16 %v8087, %v8083
    %v8472 = vpack.c.b16 %v8088, %v8084
    %v8473 = vpack.c.b16 %v8089, %v8085
    %v8474 = vpack.c.b16 %v8090, %v8086
    %v8475 = vpack.c.b16 %v8095, %v8091
    %v8476 = vpack.c.b16 %v8096, %v8092
    %v8477 = vpack.c.b16 %v8097, %v8093
    %v8478 = vpack.c.b16 %v8098, %v8094
    %v8479 = vpack.c.b16 %v8103, %v8099
    %v8480 = vpack.c.b16 %v8104, %v8100
    %v8481 = vpack.c.b16 %v8105, %v8101
    %v8482 = vpack.c.b16 %v8106, %v8102
    %v8483 = vpack.c.b16 %v8111, %v8107
    %v8484 = vpack.c.b16 %v8112, %v8108
    %v8485 = vpack.c.b16 %v8113, %v8109
    %v8486 = vpack.c.b16 %v8114, %v8110
    %v8487 = vpack.c.b16 %v8119, %v8115
    %v8488 = vpack.c.b16 %v8120, %v8116
    %v8489 = vpack.c.b16 %v8121, %v8117
    %v8490 = vpack.c.b16 %v8122, %v8118
    %v8491 = vpack.c.b16 %v8127, %v8123
    %v8492 = vpack.c.b16 %v8128, %v8124
    %v8493 = vpack.c.b16 %v8129, %v8125
    %v8494 = vpack.c.b16 %v8130, %v8126
    %v8495 = vpack.c.b16 %v8135, %v8131
    %v8496 = vpack.c.b16 %v8136, %v8132
    %v8497 = vpack.c.b16 %v8137, %v8133
    %v8498 = vpack.c.b16 %v8138, %v8134
    %v8499 = vpack.c.b16 %v8143, %v8139
    %v8500 = vpack.c.b16 %v8144, %v8140
    %v8501 = vpack.c.b16 %v8145, %v8141
    %v8502 = vpack.c.b16 %v8146, %v8142
    %v8503 = vpack.c.b16 %v8151, %v8147
    %v8504 = vpack.c.b16 %v8152, %v8148
    %v8505 = vpack.c.b16 %v8153, %v8149
    %v8506 = vpack.c.b16 %v8154, %v8150
    %v8507 = vpack.c.b16 %v8159, %v8155
    %v8508 = vpack.c.b16 %v8160, %v8156
    %v8509 = vpack.c.b16 %v8161, %v8157
    %v8510 = vpack.c.b16 %v8162, %v8158
    %v8511 = vpack.c.b16 %v8167, %v8163
    %v8512 = vpack.c.b16 %v8168, %v8164
    %v8513 = vpack.c.b16 %v8169, %v8165
    %v8514 = vpack.c.b16 %v8170, %v8166
    %v8515 = vpack.c.b16 %v8175, %v8171
    %v8516 = vpack.c.b16 %v8176, %v8172
    %v8517 = vpack.c.b16 %v8177, %v8173
    %v8518 = vpack.c.b16 %v8178, %v8174
    %v8519 = vpack.c.b16 %v8183, %v8179
    %v8520 = vpack.c.b16 %v8184, %v8180
    %v8521 = vpack.c.b16 %v8185, %v8181
    %v8522 = vpack.c.b16 %v8186, %v8182
    %v8523 = vpack.c.b16 %v8191, %v8187
    %v8524 = vpack.c.b16 %v8192, %v8188
    %v8525 = vpack.c.b16 %v8193, %v8189
    %v8526 = vpack.c.b16 %v8194, %v8190
    %v8527 = vpack.c.b16 %v8199, %v8195
    %v8528 = vpack.c.b16 %v8200, %v8196
    %v8529 = vpack.c.b16 %v8201, %v8197
    %v8530 = vpack.c.b16 %v8202, %v8198
    %v8531 = vpack.c.b16 %v8207, %v8203
    %v8532 = vpack.c.b16 %v8208, %v8204
    %v8533 = vpack.c.b16 %v8209, %v8205
    %v8534 = vpack.c.b16 %v8210, %v8206
    %v8535 = vpack.c.b16 %v8215, %v8211
    %v8536 = vpack.c.b16 %v8216, %v8212
    %v8537 = vpack.c.b16 %v8217, %v8213
    %v8538 = vpack.c.b16 %v8218, %v8214
    %v8539 = vpack.c.b16 %v8223, %v8219
    %v8540 = vpack.c.b16 %v8224, %v8220
    %v8541 = vpack.c.b16 %v8225, %v8221
    %v8542 = vpack.c.b16 %v8226, %v8222
    %v8543 = vpack.c.b16 %v8231, %v8227
    %v8544 = vpack.c.b16 %v8232, %v8228
    %v8545 = vpack.c.b16 %v8233, %v8229
    %v8546 = vpack.c.b16 %v8234, %v8230
    %v8547 = vpack.c.b16 %v8239, %v8235
    %v8548 = vpack.c.b16 %v8240, %v8236
    %v8549 = vpack.c.b16 %v8241, %v8237
    %v8550 = vpack.c.b16 %v8242, %v8238
    %v8551 = vpack.c.b16 %v8247, %v8243
    %v8552 = vpack.c.b16 %v8248, %v8244
    %v8553 = vpack.c.b16 %v8249, %v8245
    %v8554 = vpack.c.b16 %v8250, %v8246
    %v8555 = vpack.c.b16 %v8255, %v8251
    %v8556 = vpack.c.b16 %v8256, %v8252
    %v8557 = vpack.c.b16 %v8257, %v8253
    %v8558 = vpack.c.b16 %v8258, %v8254
    %v8559 = vpack.c.b16 %v8263, %v8259
    %v8560 = vpack.c.b16 %v8264, %v8260
    %v8561 = vpack.c.b16 %v8265, %v8261
    %v8562 = vpack.c.b16 %v8266, %v8262
    %v8563 = vpack.c.b16 %v8271, %v8267
    %v8564 = vpack.c.b16 %v8272, %v8268
    %v8565 = vpack.c.b16 %v8273, %v8269
    %v8566 = vpack.c.b16 %v8274, %v8270
    %v8567 = vpack.c.b16 %v8279, %v8275
    %v8568 = vpack.c.b16 %v8280, %v8276
    %v8569 = vpack.c.b16 %v8281, %v8277
    %v8570 = vpack.c.b16 %v8282, %v8278
    %v8571 = vpack.c.b16 %v8287, %v8283
    %v8572 = vpack.c.b16 %v8288, %v8284
    %v8573 = vpack.c.b16 %v8289, %v8285
    %v8574 = vpack.c.b16 %v8290, %v8286
    %v8575 = vpack.c.b16 %v8295, %v8291
    %v8576 = vpack.c.b16 %v8296, %v8292
    %v8577 = vpack.c.b16 %v8297, %v8293
    %v8578 = vpack.c.b16 %v8298, %v8294
    %v8579 = vpack.c.b16 %v8303, %v8299
    %v8580 = vpack.c.b16 %v8304, %v8300
    %v8581 = vpack.c.b16 %v8305, %v8301
    %v8582 = vpack.c.b16 %v8306, %v8302
    %v8583 = vpack.c.b16 %v8311, %v8307
    %v8584 = vpack.c.b16 %v8312, %v8308
    %v8585 = vpack.c.b16 %v8313, %v8309
    %v8586 = vpack.c.b16 %v8314, %v8310
    %v8587 = vpack.c.b16 %v8319, %v8315
    %v8588 = vpack.c.b16 %v8320, %v8316
    %v8589 = vpack.c.b16 %v8321, %v8317
    %v8590 = vpack.c.b16 %v8322, %v8318
    %v8591 = vpack.c.b16 %v8327, %v8323
    %v8592 = vpack.c.b16 %v8328, %v8324
    %v8593 = vpack.c.b16 %v8329, %v8325
    %v8594 = vpack.c.b16 %v8330, %v8326
    %v8595 = vpack.c.b16 %v8335, %v8331
    %v8596 = vpack.c.b16 %v8336, %v8332
    %v8597 = vpack.c.b16 %v8337, %v8333
    %v8598 = vpack.c.b16 %v8338, %v8334
    %v8599 = vpack.c.b16 %v8343, %v8339
    %v8600 = vpack.c.b16 %v8344, %v8340
    %v8601 = vpack.c.b16 %v8345, %v8341
    %v8602 = vpack.c.b16 %v8346, %v8342
    %8859 = vmatprep.subr.bf16.mxu0 %v8376
    %8860 = vmatpush1.bf16.msra.mxu0 %v8375
    %8861 = vmatprep.subr.bf16.mxu0 %v8372
    %8862 = vmatpush1.bf16.msra.mxu0 %v8371
    %8863 = vmatprep.subr.bf16.mxu0 %v8368
    %8864 = vmatpush1.bf16.msra.mxu0 %v8367
    %8865 = vmatprep.subr.bf16.mxu0 %v8364
    %8866 = vmatpush1.bf16.msra.mxu0 %v8363
    %8867 = vmatprep.subr.bf16.mxu0 %v8360
    %8868 = vmatpush1.bf16.msra.mxu0 %v8359
    %8869 = vmatprep.subr.bf16.mxu0 %v8356
    %8870 = vmatpush1.bf16.msra.mxu0 %v8355
    %8871 = vmatprep.subr.bf16.mxu0 %v8352
    %8872 = vmatpush1.bf16.msra.mxu0 %v8351
    %8873 = vmatprep.subr.bf16.mxu0 %v8348
    %8874 = vmatpush1.bf16.msra.mxu0 %v8347
    %8875 = vmatprep.subr.bf16.mxu0 %v8408
    %8876 = vmatpush2.bf16.msra.mxu0 %v8407
    %8877 = vmatprep.subr.bf16.mxu0 %v8404
    %8878 = vmatpush2.bf16.msra.mxu0 %v8403
    %8879 = vmatprep.subr.bf16.mxu0 %v8400
    %8880 = vmatpush2.bf16.msra.mxu0 %v8399
    %8881 = vmatprep.subr.bf16.mxu0 %v8396
    %8882 = vmatpush2.bf16.msra.mxu0 %v8395
    %8883 = vmatprep.subr.bf16.mxu0 %v8392
    %8884 = vmatpush2.bf16.msra.mxu0 %v8391
    %8885 = vmatprep.subr.bf16.mxu0 %v8388
    %8886 = vmatpush2.bf16.msra.mxu0 %v8387
    %8887 = vmatprep.subr.bf16.mxu0 %v8384
    %8888 = vmatpush2.bf16.msra.mxu0 %v8383
    %8889 = vmatprep.subr.bf16.mxu0 %v8380
    %8890 = vmatpush2.bf16.msra.mxu0 %v8379
    %8891 = vmatprep.mubr.bf16.mxu0 %v7294
    %8892 = vmatmul.mubr.bf16.gmra.mxu0 %v7293
    %v8893 = vpop.f32.mrf.mxu0
    %v8894 = vadd.f32 %v7562, %v8893
    %v8895 = vpop.f32.mrf.mxu0
    %v8896 = vadd.f32 %v7566, %v8895
    %v8897 = vpop.f32.mrf.mxu0
    %v8898 = vpop.f32.mrf.mxu0
    %8899 = vdwg.mxu0
    %8900 = vmatprep.subr.bf16.mxu0 %v8440
    %8901 = vmatpush1.bf16.msra.mxu0 %v8439
    %8902 = vmatprep.subr.bf16.mxu0 %v8436
    %8903 = vmatpush1.bf16.msra.mxu0 %v8435
    %8904 = vmatprep.subr.bf16.mxu0 %v8432
    %8905 = vmatpush1.bf16.msra.mxu0 %v8431
    %8906 = vmatprep.subr.bf16.mxu0 %v8428
    %8907 = vmatpush1.bf16.msra.mxu0 %v8427
    %8908 = vmatprep.subr.bf16.mxu0 %v8424
    %8909 = vmatpush1.bf16.msra.mxu0 %v8423
    %8910 = vmatprep.subr.bf16.mxu0 %v8420
    %8911 = vmatpush1.bf16.msra.mxu0 %v8419
    %8912 = vmatprep.subr.bf16.mxu0 %v8416
    %8913 = vmatpush1.bf16.msra.mxu0 %v8415
    %8914 = vmatprep.subr.bf16.mxu0 %v8412
    %8915 = vmatpush1.bf16.msra.mxu0 %v8411
    %8916 = vmatprep.subr.bf16.mxu0 %v8472
    %8917 = vmatpush2.bf16.msra.mxu0 %v8471
    %8918 = vmatprep.subr.bf16.mxu0 %v8468
    %8919 = vmatpush2.bf16.msra.mxu0 %v8467
    %8920 = vmatprep.subr.bf16.mxu0 %v8464
    %8921 = vmatpush2.bf16.msra.mxu0 %v8463
    %8922 = vmatprep.subr.bf16.mxu0 %v8460
    %8923 = vmatpush2.bf16.msra.mxu0 %v8459
    %8924 = vmatprep.subr.bf16.mxu0 %v8456
    %8925 = vmatpush2.bf16.msra.mxu0 %v8455
    %8926 = vmatprep.subr.bf16.mxu0 %v8452
    %8927 = vmatpush2.bf16.msra.mxu0 %v8451
    %8928 = vmatprep.subr.bf16.mxu0 %v8448
    %8929 = vmatpush2.bf16.msra.mxu0 %v8447
    %8930 = vmatprep.subr.bf16.mxu0 %v8444
    %8931 = vmatpush2.bf16.msra.mxu0 %v8443
    %8932 = vmatprep.mubr.bf16.mxu0 %v7296
    %8933 = vmatmul.mubr.bf16.gmra.mxu0 %v7295
    %v8934 = vpop.f32.mrf.mxu0
    %v8935 = vadd.f32 %v8894, %v8934
    %v8936 = vpop.f32.mrf.mxu0
    %v8937 = vadd.f32 %v8896, %v8936
    %v8938 = vpop.f32.mrf.mxu0
    %v8939 = vpop.f32.mrf.mxu0
    %8940 = vdwg.mxu0
    %8941 = vmatprep.subr.bf16.mxu0 %v8504
    %8942 = vmatpush1.bf16.msra.mxu0 %v8503
    %8943 = vmatprep.subr.bf16.mxu0 %v8500
    %8944 = vmatpush1.bf16.msra.mxu0 %v8499
    %8945 = vmatprep.subr.bf16.mxu0 %v8496
    %8946 = vmatpush1.bf16.msra.mxu0 %v8495
    %8947 = vmatprep.subr.bf16.mxu0 %v8492
    %8948 = vmatpush1.bf16.msra.mxu0 %v8491
    %8949 = vmatprep.subr.bf16.mxu0 %v8488
    %8950 = vmatpush1.bf16.msra.mxu0 %v8487
    %8951 = vmatprep.subr.bf16.mxu0 %v8484
    %8952 = vmatpush1.bf16.msra.mxu0 %v8483
    %8953 = vmatprep.subr.bf16.mxu0 %v8480
    %8954 = vmatpush1.bf16.msra.mxu0 %v8479
    %8955 = vmatprep.subr.bf16.mxu0 %v8476
    %8956 = vmatpush1.bf16.msra.mxu0 %v8475
    %8957 = vmatprep.subr.bf16.mxu0 %v8536
    %8958 = vmatpush2.bf16.msra.mxu0 %v8535
    %8959 = vmatprep.subr.bf16.mxu0 %v8532
    %8960 = vmatpush2.bf16.msra.mxu0 %v8531
    %8961 = vmatprep.subr.bf16.mxu0 %v8528
    %8962 = vmatpush2.bf16.msra.mxu0 %v8527
    %8963 = vmatprep.subr.bf16.mxu0 %v8524
    %8964 = vmatpush2.bf16.msra.mxu0 %v8523
    %8965 = vmatprep.subr.bf16.mxu0 %v8520
    %8966 = vmatpush2.bf16.msra.mxu0 %v8519
    %8967 = vmatprep.subr.bf16.mxu0 %v8516
    %8968 = vmatpush2.bf16.msra.mxu0 %v8515
    %8969 = vmatprep.subr.bf16.mxu0 %v8512
    %8970 = vmatpush2.bf16.msra.mxu0 %v8511
    %8971 = vmatprep.subr.bf16.mxu0 %v8508
    %8972 = vmatpush2.bf16.msra.mxu0 %v8507
    %8973 = vmatprep.mubr.bf16.mxu0 %v7298
    %8974 = vmatmul.mubr.bf16.gmra.mxu0 %v7297
    %v8975 = vpop.f32.mrf.mxu0
    %v8976 = vadd.f32 %v8935, %v8975
    %v8977 = vpop.f32.mrf.mxu0
    %v8978 = vadd.f32 %v8937, %v8977
    %v8979 = vpop.f32.mrf.mxu0
    %v8980 = vpop.f32.mrf.mxu0
    %8981 = vdwg.mxu0
    %8982 = vmatprep.subr.bf16.mxu0 %v8568
    %8983 = vmatpush1.bf16.msra.mxu0 %v8567
    %8984 = vmatprep.subr.bf16.mxu0 %v8564
    %8985 = vmatpush1.bf16.msra.mxu0 %v8563
    %8986 = vmatprep.subr.bf16.mxu0 %v8560
    %8987 = vmatpush1.bf16.msra.mxu0 %v8559
    %8988 = vmatprep.subr.bf16.mxu0 %v8556
    %8989 = vmatpush1.bf16.msra.mxu0 %v8555
    %8990 = vmatprep.subr.bf16.mxu0 %v8552
    %8991 = vmatpush1.bf16.msra.mxu0 %v8551
    %8992 = vmatprep.subr.bf16.mxu0 %v8548
    %8993 = vmatpush1.bf16.msra.mxu0 %v8547
    %8994 = vmatprep.subr.bf16.mxu0 %v8544
    %8995 = vmatpush1.bf16.msra.mxu0 %v8543
    %8996 = vmatprep.subr.bf16.mxu0 %v8540
    %8997 = vmatpush1.bf16.msra.mxu0 %v8539
    %8998 = vmatprep.subr.bf16.mxu0 %v8600
    %8999 = vmatpush2.bf16.msra.mxu0 %v8599
    %9000 = vmatprep.subr.bf16.mxu0 %v8596
    %9001 = vmatpush2.bf16.msra.mxu0 %v8595
    %9002 = vmatprep.subr.bf16.mxu0 %v8592
    %9003 = vmatpush2.bf16.msra.mxu0 %v8591
    %9004 = vmatprep.subr.bf16.mxu0 %v8588
    %9005 = vmatpush2.bf16.msra.mxu0 %v8587
    %9006 = vmatprep.subr.bf16.mxu0 %v8584
    %9007 = vmatpush2.bf16.msra.mxu0 %v8583
    %9008 = vmatprep.subr.bf16.mxu0 %v8580
    %9009 = vmatpush2.bf16.msra.mxu0 %v8579
    %9010 = vmatprep.subr.bf16.mxu0 %v8576
    %9011 = vmatpush2.bf16.msra.mxu0 %v8575
    %9012 = vmatprep.subr.bf16.mxu0 %v8572
    %9013 = vmatpush2.bf16.msra.mxu0 %v8571
    %9014 = vmatprep.mubr.bf16.mxu0 %v7300
    %9015 = vmatmul.mubr.bf16.gmra.mxu0 %v7299
    %v9016 = vpop.f32.mrf.mxu0
    %v9017 = vadd.f32 %v8976, %v9016
    %v9018 = vpop.f32.mrf.mxu0
    %v9019 = vadd.f32 %v8978, %v9018
    %v9020 = vpop.f32.mrf.mxu0
    %v9021 = vpop.f32.mrf.mxu0
    %9022 = vdwg.mxu0
    %9023 = vmatprep.subr.bf16.mxu0 %v8378
    %9024 = vmatpush1.bf16.msra.mxu0 %v8377
    %9025 = vmatprep.subr.bf16.mxu0 %v8374
    %9026 = vmatpush1.bf16.msra.mxu0 %v8373
    %9027 = vmatprep.subr.bf16.mxu0 %v8370
    %9028 = vmatpush1.bf16.msra.mxu0 %v8369
    %9029 = vmatprep.subr.bf16.mxu0 %v8366
    %9030 = vmatpush1.bf16.msra.mxu0 %v8365
    %9031 = vmatprep.subr.bf16.mxu0 %v8362
    %9032 = vmatpush1.bf16.msra.mxu0 %v8361
    %9033 = vmatprep.subr.bf16.mxu0 %v8358
    %9034 = vmatpush1.bf16.msra.mxu0 %v8357
    %9035 = vmatprep.subr.bf16.mxu0 %v8354
    %9036 = vmatpush1.bf16.msra.mxu0 %v8353
    %9037 = vmatprep.subr.bf16.mxu0 %v8350
    %9038 = vmatpush1.bf16.msra.mxu0 %v8349
    %9039 = vmatprep.subr.bf16.mxu0 %v8410
    %9040 = vmatpush2.bf16.msra.mxu0 %v8409
    %9041 = vmatprep.subr.bf16.mxu0 %v8406
    %9042 = vmatpush2.bf16.msra.mxu0 %v8405
    %9043 = vmatprep.subr.bf16.mxu0 %v8402
    %9044 = vmatpush2.bf16.msra.mxu0 %v8401
    %9045 = vmatprep.subr.bf16.mxu0 %v8398
    %9046 = vmatpush2.bf16.msra.mxu0 %v8397
    %9047 = vmatprep.subr.bf16.mxu0 %v8394
    %9048 = vmatpush2.bf16.msra.mxu0 %v8393
    %9049 = vmatprep.subr.bf16.mxu0 %v8390
    %9050 = vmatpush2.bf16.msra.mxu0 %v8389
    %9051 = vmatprep.subr.bf16.mxu0 %v8386
    %9052 = vmatpush2.bf16.msra.mxu0 %v8385
    %9053 = vmatprep.subr.bf16.mxu0 %v8382
    %9054 = vmatpush2.bf16.msra.mxu0 %v8381
    %9055 = vmatprep.mubr.bf16.mxu0 %v7294
    %9056 = vmatmul.mubr.bf16.gmra.mxu0 %v7293
    %v9057 = vpop.f32.mrf.mxu0
    %v9058 = vadd.f32 %v7570, %v9057
    %v9059 = vpop.f32.mrf.mxu0
    %v9060 = vadd.f32 %v7574, %v9059
    %v9061 = vpop.f32.mrf.mxu0
    %v9062 = vpop.f32.mrf.mxu0
    %9063 = vdwg.mxu0
    %9064 = vmatprep.subr.bf16.mxu0 %v8442
    %9065 = vmatpush1.bf16.msra.mxu0 %v8441
    %9066 = vmatprep.subr.bf16.mxu0 %v8438
    %9067 = vmatpush1.bf16.msra.mxu0 %v8437
    %9068 = vmatprep.subr.bf16.mxu0 %v8434
    %9069 = vmatpush1.bf16.msra.mxu0 %v8433
    %9070 = vmatprep.subr.bf16.mxu0 %v8430
    %9071 = vmatpush1.bf16.msra.mxu0 %v8429
    %9072 = vmatprep.subr.bf16.mxu0 %v8426
    %9073 = vmatpush1.bf16.msra.mxu0 %v8425
    %9074 = vmatprep.subr.bf16.mxu0 %v8422
    %9075 = vmatpush1.bf16.msra.mxu0 %v8421
    %9076 = vmatprep.subr.bf16.mxu0 %v8418
    %9077 = vmatpush1.bf16.msra.mxu0 %v8417
    %9078 = vmatprep.subr.bf16.mxu0 %v8414
    %9079 = vmatpush1.bf16.msra.mxu0 %v8413
    %9080 = vmatprep.subr.bf16.mxu0 %v8474
    %9081 = vmatpush2.bf16.msra.mxu0 %v8473
    %9082 = vmatprep.subr.bf16.mxu0 %v8470
    %9083 = vmatpush2.bf16.msra.mxu0 %v8469
    %9084 = vmatprep.subr.bf16.mxu0 %v8466
    %9085 = vmatpush2.bf16.msra.mxu0 %v8465
    %9086 = vmatprep.subr.bf16.mxu0 %v8462
    %9087 = vmatpush2.bf16.msra.mxu0 %v8461
    %9088 = vmatprep.subr.bf16.mxu0 %v8458
    %9089 = vmatpush2.bf16.msra.mxu0 %v8457
    %9090 = vmatprep.subr.bf16.mxu0 %v8454
    %9091 = vmatpush2.bf16.msra.mxu0 %v8453
    %9092 = vmatprep.subr.bf16.mxu0 %v8450
    %9093 = vmatpush2.bf16.msra.mxu0 %v8449
    %9094 = vmatprep.subr.bf16.mxu0 %v8446
    %9095 = vmatpush2.bf16.msra.mxu0 %v8445
    %9096 = vmatprep.mubr.bf16.mxu0 %v7296
    %9097 = vmatmul.mubr.bf16.gmra.mxu0 %v7295
    %v9098 = vpop.f32.mrf.mxu0
    %v9099 = vadd.f32 %v9058, %v9098
    %v9100 = vpop.f32.mrf.mxu0
    %v9101 = vadd.f32 %v9060, %v9100
    %v9102 = vpop.f32.mrf.mxu0
    %v9103 = vpop.f32.mrf.mxu0
    %9104 = vdwg.mxu0
    %9105 = vmatprep.subr.bf16.mxu0 %v8506
    %9106 = vmatpush1.bf16.msra.mxu0 %v8505
    %9107 = vmatprep.subr.bf16.mxu0 %v8502
    %9108 = vmatpush1.bf16.msra.mxu0 %v8501
    %9109 = vmatprep.subr.bf16.mxu0 %v8498
    %9110 = vmatpush1.bf16.msra.mxu0 %v8497
    %9111 = vmatprep.subr.bf16.mxu0 %v8494
    %9112 = vmatpush1.bf16.msra.mxu0 %v8493
    %9113 = vmatprep.subr.bf16.mxu0 %v8490
    %9114 = vmatpush1.bf16.msra.mxu0 %v8489
    %9115 = vmatprep.subr.bf16.mxu0 %v8486
    %9116 = vmatpush1.bf16.msra.mxu0 %v8485
    %9117 = vmatprep.subr.bf16.mxu0 %v8482
    %9118 = vmatpush1.bf16.msra.mxu0 %v8481
    %9119 = vmatprep.subr.bf16.mxu0 %v8478
    %9120 = vmatpush1.bf16.msra.mxu0 %v8477
    %9121 = vmatprep.subr.bf16.mxu0 %v8538
    %9122 = vmatpush2.bf16.msra.mxu0 %v8537
    %9123 = vmatprep.subr.bf16.mxu0 %v8534
    %9124 = vmatpush2.bf16.msra.mxu0 %v8533
    %9125 = vmatprep.subr.bf16.mxu0 %v8530
    %9126 = vmatpush2.bf16.msra.mxu0 %v8529
    %9127 = vmatprep.subr.bf16.mxu0 %v8526
    %9128 = vmatpush2.bf16.msra.mxu0 %v8525
    %9129 = vmatprep.subr.bf16.mxu0 %v8522
    %9130 = vmatpush2.bf16.msra.mxu0 %v8521
    %9131 = vmatprep.subr.bf16.mxu0 %v8518
    %9132 = vmatpush2.bf16.msra.mxu0 %v8517
    %9133 = vmatprep.subr.bf16.mxu0 %v8514
    %9134 = vmatpush2.bf16.msra.mxu0 %v8513
    %9135 = vmatprep.subr.bf16.mxu0 %v8510
    %9136 = vmatpush2.bf16.msra.mxu0 %v8509
    %9137 = vmatprep.mubr.bf16.mxu0 %v7298
    %9138 = vmatmul.mubr.bf16.gmra.mxu0 %v7297
    %v9139 = vpop.f32.mrf.mxu0
    %v9140 = vadd.f32 %v9099, %v9139
    %v9141 = vpop.f32.mrf.mxu0
    %v9142 = vadd.f32 %v9101, %v9141
    %v9143 = vpop.f32.mrf.mxu0
    %v9144 = vpop.f32.mrf.mxu0
    %9145 = vdwg.mxu0
    %9146 = vmatprep.subr.bf16.mxu0 %v8570
    %9147 = vmatpush1.bf16.msra.mxu0 %v8569
    %9148 = vmatprep.subr.bf16.mxu0 %v8566
    %9149 = vmatpush1.bf16.msra.mxu0 %v8565
    %9150 = vmatprep.subr.bf16.mxu0 %v8562
    %9151 = vmatpush1.bf16.msra.mxu0 %v8561
    %9152 = vmatprep.subr.bf16.mxu0 %v8558
    %9153 = vmatpush1.bf16.msra.mxu0 %v8557
    %9154 = vmatprep.subr.bf16.mxu0 %v8554
    %9155 = vmatpush1.bf16.msra.mxu0 %v8553
    %9156 = vmatprep.subr.bf16.mxu0 %v8550
    %9157 = vmatpush1.bf16.msra.mxu0 %v8549
    %9158 = vmatprep.subr.bf16.mxu0 %v8546
    %9159 = vmatpush1.bf16.msra.mxu0 %v8545
    %9160 = vmatprep.subr.bf16.mxu0 %v8542
    %9161 = vmatpush1.bf16.msra.mxu0 %v8541
    %9162 = vmatprep.subr.bf16.mxu0 %v8602
    %9163 = vmatpush2.bf16.msra.mxu0 %v8601
    %9164 = vmatprep.subr.bf16.mxu0 %v8598
    %9165 = vmatpush2.bf16.msra.mxu0 %v8597
    %9166 = vmatprep.subr.bf16.mxu0 %v8594
    %9167 = vmatpush2.bf16.msra.mxu0 %v8593
    %9168 = vmatprep.subr.bf16.mxu0 %v8590
    %9169 = vmatpush2.bf16.msra.mxu0 %v8589
    %9170 = vmatprep.subr.bf16.mxu0 %v8586
    %9171 = vmatpush2.bf16.msra.mxu0 %v8585
    %9172 = vmatprep.subr.bf16.mxu0 %v8582
    %9173 = vmatpush2.bf16.msra.mxu0 %v8581
    %9174 = vmatprep.subr.bf16.mxu0 %v8578
    %9175 = vmatpush2.bf16.msra.mxu0 %v8577
    %9176 = vmatprep.subr.bf16.mxu0 %v8574
    %9177 = vmatpush2.bf16.msra.mxu0 %v8573
    %9178 = vmatprep.mubr.bf16.mxu0 %v7300
    %9179 = vmatmul.mubr.bf16.gmra.mxu0 %v7299
    %v9180 = vpop.f32.mrf.mxu0
    %v9181 = vadd.f32 %v9140, %v9180
    %v9182 = vpop.f32.mrf.mxu0
    %v9183 = vadd.f32 %v9142, %v9182
    %v9184 = vpop.f32.mrf.mxu0
    %v9185 = vpop.f32.mrf.mxu0
    %9186 = vdwg.mxu0
    %v9187 = vmax.f32 %v9017, 0.0
    %v9188 = vmax.f32 %v9019, 0.0
    %v9189 = vmax.f32 %v9181, 0.0
    %v9190 = vmax.f32 %v9183, 0.0
    %v9191 = vpack.c.bf16 %v9187, %v9187
    %v9192 = vpack.c.bf16 %v9188, %v9188
    %v9193 = vpack.c.bf16 %v9189, %v9189
    %v9194 = vpack.c.bf16 %v9190, %v9190
    %v9195 = vld [vmem:[#allocation15] sm:$0xff]
    %v9196 = vld [vmem:[#allocation15 + $0x8] sm:$0xff]
    %v9197 = vld [vmem:[#allocation15 + $0x10] sm:$0xff]
    %v9198 = vld [vmem:[#allocation15 + $0x18] sm:$0xff]
    %v9199 = vld [vmem:[#allocation15 + $0x20] sm:$0xff]
    %v9200 = vld [vmem:[#allocation15 + $0x28] sm:$0xff]
    %v9201 = vld [vmem:[#allocation15 + $0x30] sm:$0xff]
    %v9202 = vld [vmem:[#allocation15 + $0x38] sm:$0xff]
    %v9203 = vld [vmem:[#allocation15 + $0x40] sm:$0xff]
    %v9204 = vld [vmem:[#allocation15 + $0x48] sm:$0xff]
    %v9205 = vld [vmem:[#allocation15 + $0x50] sm:$0xff]
    %v9206 = vld [vmem:[#allocation15 + $0x58] sm:$0xff]
    %v9207 = vld [vmem:[#allocation15 + $0x60] sm:$0xff]
    %v9208 = vld [vmem:[#allocation15 + $0x68] sm:$0xff]
    %v9209 = vld [vmem:[#allocation15 + $0x70] sm:$0xff]
    %v9210 = vld [vmem:[#allocation15 + $0x78] sm:$0xff]
    %v9211 = vld [vmem:[#allocation15 + $0x80] sm:$0xff]
    %v9212 = vld [vmem:[#allocation15 + $0x88] sm:$0xff]
    %v9213 = vld [vmem:[#allocation15 + $0x90] sm:$0xff]
    %v9214 = vld [vmem:[#allocation15 + $0x98] sm:$0xff]
    %v9215 = vld [vmem:[#allocation15 + $0xa0] sm:$0xff]
    %v9216 = vld [vmem:[#allocation15 + $0xa8] sm:$0xff]
    %v9217 = vld [vmem:[#allocation15 + $0xb0] sm:$0xff]
    %v9218 = vld [vmem:[#allocation15 + $0xb8] sm:$0xff]
    %v9219 = vld [vmem:[#allocation15 + $0xc0] sm:$0xff]
    %v9220 = vld [vmem:[#allocation15 + $0xc8] sm:$0xff]
    %v9221 = vld [vmem:[#allocation15 + $0xd0] sm:$0xff]
    %v9222 = vld [vmem:[#allocation15 + $0xd8] sm:$0xff]
    %v9223 = vld [vmem:[#allocation15 + $0xe0] sm:$0xff]
    %v9224 = vld [vmem:[#allocation15 + $0xe8] sm:$0xff]
    %v9225 = vld [vmem:[#allocation15 + $0xf0] sm:$0xff]
    %v9226 = vld [vmem:[#allocation15 + $0xf8] sm:$0xff]
    %v9227 = vld [vmem:[#allocation15 + $0x100] sm:$0xff]
    %v9228 = vld [vmem:[#allocation15 + $0x108] sm:$0xff]
    %v9229 = vld [vmem:[#allocation15 + $0x110] sm:$0xff]
    %v9230 = vld [vmem:[#allocation15 + $0x118] sm:$0xff]
    %v9231 = vld [vmem:[#allocation15 + $0x120] sm:$0xff]
    %v9232 = vld [vmem:[#allocation15 + $0x128] sm:$0xff]
    %v9233 = vld [vmem:[#allocation15 + $0x130] sm:$0xff]
    %v9234 = vld [vmem:[#allocation15 + $0x138] sm:$0xff]
    %v9235 = vld [vmem:[#allocation15 + $0x140] sm:$0xff]
    %v9236 = vld [vmem:[#allocation15 + $0x148] sm:$0xff]
    %v9237 = vld [vmem:[#allocation15 + $0x150] sm:$0xff]
    %v9238 = vld [vmem:[#allocation15 + $0x158] sm:$0xff]
    %v9239 = vld [vmem:[#allocation15 + $0x160] sm:$0xff]
    %v9240 = vld [vmem:[#allocation15 + $0x168] sm:$0xff]
    %v9241 = vld [vmem:[#allocation15 + $0x170] sm:$0xff]
    %v9242 = vld [vmem:[#allocation15 + $0x178] sm:$0xff]
    %v9243 = vld [vmem:[#allocation15 + $0x180] sm:$0xff]
    %v9244 = vld [vmem:[#allocation15 + $0x188] sm:$0xff]
    %v9245 = vld [vmem:[#allocation15 + $0x190] sm:$0xff]
    %v9246 = vld [vmem:[#allocation15 + $0x198] sm:$0xff]
    %v9247 = vld [vmem:[#allocation15 + $0x1a0] sm:$0xff]
    %v9248 = vld [vmem:[#allocation15 + $0x1a8] sm:$0xff]
    %v9249 = vld [vmem:[#allocation15 + $0x1b0] sm:$0xff]
    %v9250 = vld [vmem:[#allocation15 + $0x1b8] sm:$0xff]
    %v9251 = vld [vmem:[#allocation15 + $0x1c0] sm:$0xff]
    %v9252 = vld [vmem:[#allocation15 + $0x1c8] sm:$0xff]
    %v9253 = vld [vmem:[#allocation15 + $0x1d0] sm:$0xff]
    %v9254 = vld [vmem:[#allocation15 + $0x1d8] sm:$0xff]
    %v9255 = vld [vmem:[#allocation15 + $0x1e0] sm:$0xff]
    %v9256 = vld [vmem:[#allocation15 + $0x1e8] sm:$0xff]
    %v9257 = vld [vmem:[#allocation15 + $0x1f0] sm:$0xff]
    %v9258 = vld [vmem:[#allocation15 + $0x1f8] sm:$0xff]
    %v9259 = vld [vmem:[#allocation16] sm:$0x3]
    %v9261 = vlaneseq
    %v9262 = vshrl.u32 %v9261, 7
    %v9263 = vsub.s32 0, %v9262
    %v9264 = vrot.slane %v9259, %v9263
    %v9265 = vlaneseq
    %v9266 = vshrl.u32 %v9265, 7
    %v9267 = vsub.s32 1, %v9266
    %v9268 = vrot.slane %v9259, %v9267
    %v9335 = vunpack.c.l.b16 %v9195
    %v9336 = vunpack.c.h.b16 %v9195
    %v9337 = vunpack.c.l.b16 %v9196
    %v9338 = vunpack.c.h.b16 %v9196
    %v9339 = vunpack.c.l.b16 %v9197
    %v9340 = vunpack.c.h.b16 %v9197
    %v9341 = vunpack.c.l.b16 %v9198
    %v9342 = vunpack.c.h.b16 %v9198
    %v9343 = vunpack.c.l.b16 %v9199
    %v9344 = vunpack.c.h.b16 %v9199
    %v9345 = vunpack.c.l.b16 %v9200
    %v9346 = vunpack.c.h.b16 %v9200
    %v9347 = vunpack.c.l.b16 %v9201
    %v9348 = vunpack.c.h.b16 %v9201
    %v9349 = vunpack.c.l.b16 %v9202
    %v9350 = vunpack.c.h.b16 %v9202
    %v9351 = vunpack.c.l.b16 %v9203
    %v9352 = vunpack.c.h.b16 %v9203
    %v9353 = vunpack.c.l.b16 %v9204
    %v9354 = vunpack.c.h.b16 %v9204
    %v9355 = vunpack.c.l.b16 %v9205
    %v9356 = vunpack.c.h.b16 %v9205
    %v9357 = vunpack.c.l.b16 %v9206
    %v9358 = vunpack.c.h.b16 %v9206
    %v9359 = vunpack.c.l.b16 %v9207
    %v9360 = vunpack.c.h.b16 %v9207
    %v9361 = vunpack.c.l.b16 %v9208
    %v9362 = vunpack.c.h.b16 %v9208
    %v9363 = vunpack.c.l.b16 %v9209
    %v9364 = vunpack.c.h.b16 %v9209
    %v9365 = vunpack.c.l.b16 %v9210
    %v9366 = vunpack.c.h.b16 %v9210
    %v9367 = vunpack.c.l.b16 %v9211
    %v9368 = vunpack.c.h.b16 %v9211
    %v9369 = vunpack.c.l.b16 %v9212
    %v9370 = vunpack.c.h.b16 %v9212
    %v9371 = vunpack.c.l.b16 %v9213
    %v9372 = vunpack.c.h.b16 %v9213
    %v9373 = vunpack.c.l.b16 %v9214
    %v9374 = vunpack.c.h.b16 %v9214
    %v9375 = vunpack.c.l.b16 %v9215
    %v9376 = vunpack.c.h.b16 %v9215
    %v9377 = vunpack.c.l.b16 %v9216
    %v9378 = vunpack.c.h.b16 %v9216
    %v9379 = vunpack.c.l.b16 %v9217
    %v9380 = vunpack.c.h.b16 %v9217
    %v9381 = vunpack.c.l.b16 %v9218
    %v9382 = vunpack.c.h.b16 %v9218
    %v9383 = vunpack.c.l.b16 %v9219
    %v9384 = vunpack.c.h.b16 %v9219
    %v9385 = vunpack.c.l.b16 %v9220
    %v9386 = vunpack.c.h.b16 %v9220
    %v9387 = vunpack.c.l.b16 %v9221
    %v9388 = vunpack.c.h.b16 %v9221
    %v9389 = vunpack.c.l.b16 %v9222
    %v9390 = vunpack.c.h.b16 %v9222
    %v9391 = vunpack.c.l.b16 %v9223
    %v9392 = vunpack.c.h.b16 %v9223
    %v9393 = vunpack.c.l.b16 %v9224
    %v9394 = vunpack.c.h.b16 %v9224
    %v9395 = vunpack.c.l.b16 %v9225
    %v9396 = vunpack.c.h.b16 %v9225
    %v9397 = vunpack.c.l.b16 %v9226
    %v9398 = vunpack.c.h.b16 %v9226
    %v9399 = vunpack.c.l.b16 %v9227
    %v9400 = vunpack.c.h.b16 %v9227
    %v9401 = vunpack.c.l.b16 %v9228
    %v9402 = vunpack.c.h.b16 %v9228
    %v9403 = vunpack.c.l.b16 %v9229
    %v9404 = vunpack.c.h.b16 %v9229
    %v9405 = vunpack.c.l.b16 %v9230
    %v9406 = vunpack.c.h.b16 %v9230
    %v9407 = vunpack.c.l.b16 %v9231
    %v9408 = vunpack.c.h.b16 %v9231
    %v9409 = vunpack.c.l.b16 %v9232
    %v9410 = vunpack.c.h.b16 %v9232
    %v9411 = vunpack.c.l.b16 %v9233
    %v9412 = vunpack.c.h.b16 %v9233
    %v9413 = vunpack.c.l.b16 %v9234
    %v9414 = vunpack.c.h.b16 %v9234
    %v9415 = vunpack.c.l.b16 %v9235
    %v9416 = vunpack.c.h.b16 %v9235
    %v9417 = vunpack.c.l.b16 %v9236
    %v9418 = vunpack.c.h.b16 %v9236
    %v9419 = vunpack.c.l.b16 %v9237
    %v9420 = vunpack.c.h.b16 %v9237
    %v9421 = vunpack.c.l.b16 %v9238
    %v9422 = vunpack.c.h.b16 %v9238
    %v9423 = vunpack.c.l.b16 %v9239
    %v9424 = vunpack.c.h.b16 %v9239
    %v9425 = vunpack.c.l.b16 %v9240
    %v9426 = vunpack.c.h.b16 %v9240
    %v9427 = vunpack.c.l.b16 %v9241
    %v9428 = vunpack.c.h.b16 %v9241
    %v9429 = vunpack.c.l.b16 %v9242
    %v9430 = vunpack.c.h.b16 %v9242
    %v9431 = vunpack.c.l.b16 %v9243
    %v9432 = vunpack.c.h.b16 %v9243
    %v9433 = vunpack.c.l.b16 %v9244
    %v9434 = vunpack.c.h.b16 %v9244
    %v9435 = vunpack.c.l.b16 %v9245
    %v9436 = vunpack.c.h.b16 %v9245
    %v9437 = vunpack.c.l.b16 %v9246
    %v9438 = vunpack.c.h.b16 %v9246
    %v9439 = vunpack.c.l.b16 %v9247
    %v9440 = vunpack.c.h.b16 %v9247
    %v9441 = vunpack.c.l.b16 %v9248
    %v9442 = vunpack.c.h.b16 %v9248
    %v9443 = vunpack.c.l.b16 %v9249
    %v9444 = vunpack.c.h.b16 %v9249
    %v9445 = vunpack.c.l.b16 %v9250
    %v9446 = vunpack.c.h.b16 %v9250
    %v9447 = vunpack.c.l.b16 %v9251
    %v9448 = vunpack.c.h.b16 %v9251
    %v9449 = vunpack.c.l.b16 %v9252
    %v9450 = vunpack.c.h.b16 %v9252
    %v9451 = vunpack.c.l.b16 %v9253
    %v9452 = vunpack.c.h.b16 %v9253
    %v9453 = vunpack.c.l.b16 %v9254
    %v9454 = vunpack.c.h.b16 %v9254
    %v9455 = vunpack.c.l.b16 %v9255
    %v9456 = vunpack.c.h.b16 %v9255
    %v9457 = vunpack.c.l.b16 %v9256
    %v9458 = vunpack.c.h.b16 %v9256
    %v9459 = vunpack.c.l.b16 %v9257
    %v9460 = vunpack.c.h.b16 %v9257
    %v9461 = vunpack.c.l.b16 %v9258
    %v9462 = vunpack.c.h.b16 %v9258
    %v9463 = vpack.c.b16 %v9337, %v9335
    %v9464 = vpack.c.b16 %v9338, %v9336
    %v9465 = vpack.c.b16 %v9341, %v9339
    %v9466 = vpack.c.b16 %v9342, %v9340
    %v9467 = vpack.c.b16 %v9345, %v9343
    %v9468 = vpack.c.b16 %v9346, %v9344
    %v9469 = vpack.c.b16 %v9349, %v9347
    %v9470 = vpack.c.b16 %v9350, %v9348
    %v9471 = vpack.c.b16 %v9353, %v9351
    %v9472 = vpack.c.b16 %v9354, %v9352
    %v9473 = vpack.c.b16 %v9357, %v9355
    %v9474 = vpack.c.b16 %v9358, %v9356
    %v9475 = vpack.c.b16 %v9361, %v9359
    %v9476 = vpack.c.b16 %v9362, %v9360
    %v9477 = vpack.c.b16 %v9365, %v9363
    %v9478 = vpack.c.b16 %v9366, %v9364
    %v9479 = vpack.c.b16 %v9369, %v9367
    %v9480 = vpack.c.b16 %v9370, %v9368
    %v9481 = vpack.c.b16 %v9373, %v9371
    %v9482 = vpack.c.b16 %v9374, %v9372
    %v9483 = vpack.c.b16 %v9377, %v9375
    %v9484 = vpack.c.b16 %v9378, %v9376
    %v9485 = vpack.c.b16 %v9381, %v9379
    %v9486 = vpack.c.b16 %v9382, %v9380
    %v9487 = vpack.c.b16 %v9385, %v9383
    %v9488 = vpack.c.b16 %v9386, %v9384
    %v9489 = vpack.c.b16 %v9389, %v9387
    %v9490 = vpack.c.b16 %v9390, %v9388
    %v9491 = vpack.c.b16 %v9393, %v9391
    %v9492 = vpack.c.b16 %v9394, %v9392
    %v9493 = vpack.c.b16 %v9397, %v9395
    %v9494 = vpack.c.b16 %v9398, %v9396
    %v9495 = vpack.c.b16 %v9401, %v9399
    %v9496 = vpack.c.b16 %v9402, %v9400
    %v9497 = vpack.c.b16 %v9405, %v9403
    %v9498 = vpack.c.b16 %v9406, %v9404
    %v9499 = vpack.c.b16 %v9409, %v9407
    %v9500 = vpack.c.b16 %v9410, %v9408
    %v9501 = vpack.c.b16 %v9413, %v9411
    %v9502 = vpack.c.b16 %v9414, %v9412
    %v9503 = vpack.c.b16 %v9417, %v9415
    %v9504 = vpack.c.b16 %v9418, %v9416
    %v9505 = vpack.c.b16 %v9421, %v9419
    %v9506 = vpack.c.b16 %v9422, %v9420
    %v9507 = vpack.c.b16 %v9425, %v9423
    %v9508 = vpack.c.b16 %v9426, %v9424
    %v9509 = vpack.c.b16 %v9429, %v9427
    %v9510 = vpack.c.b16 %v9430, %v9428
    %v9511 = vpack.c.b16 %v9433, %v9431
    %v9512 = vpack.c.b16 %v9434, %v9432
    %v9513 = vpack.c.b16 %v9437, %v9435
    %v9514 = vpack.c.b16 %v9438, %v9436
    %v9515 = vpack.c.b16 %v9441, %v9439
    %v9516 = vpack.c.b16 %v9442, %v9440
    %v9517 = vpack.c.b16 %v9445, %v9443
    %v9518 = vpack.c.b16 %v9446, %v9444
    %v9519 = vpack.c.b16 %v9449, %v9447
    %v9520 = vpack.c.b16 %v9450, %v9448
    %v9521 = vpack.c.b16 %v9453, %v9451
    %v9522 = vpack.c.b16 %v9454, %v9452
    %v9523 = vpack.c.b16 %v9457, %v9455
    %v9524 = vpack.c.b16 %v9458, %v9456
    %v9525 = vpack.c.b16 %v9461, %v9459
    %v9526 = vpack.c.b16 %v9462, %v9460
    %9591 = vmatprep.subr.bf16.mxu0 %v9478
    %9592 = vmatpush1.bf16.msra.mxu0 %v9477
    %9593 = vmatprep.subr.bf16.mxu0 %v9476
    %9594 = vmatpush1.bf16.msra.mxu0 %v9475
    %9595 = vmatprep.subr.bf16.mxu0 %v9474
    %9596 = vmatpush1.bf16.msra.mxu0 %v9473
    %9597 = vmatprep.subr.bf16.mxu0 %v9472
    %9598 = vmatpush1.bf16.msra.mxu0 %v9471
    %9599 = vmatprep.subr.bf16.mxu0 %v9470
    %9600 = vmatpush1.bf16.msra.mxu0 %v9469
    %9601 = vmatprep.subr.bf16.mxu0 %v9468
    %9602 = vmatpush1.bf16.msra.mxu0 %v9467
    %9603 = vmatprep.subr.bf16.mxu0 %v9466
    %9604 = vmatpush1.bf16.msra.mxu0 %v9465
    %9605 = vmatprep.subr.bf16.mxu0 %v9464
    %9606 = vmatpush1.bf16.msra.mxu0 %v9463
    %9607 = vmatprep.subr.bf16.mxu0 %v9494
    %9608 = vmatpush2.bf16.msra.mxu0 %v9493
    %9609 = vmatprep.subr.bf16.mxu0 %v9492
    %9610 = vmatpush2.bf16.msra.mxu0 %v9491
    %9611 = vmatprep.subr.bf16.mxu0 %v9490
    %9612 = vmatpush2.bf16.msra.mxu0 %v9489
    %9613 = vmatprep.subr.bf16.mxu0 %v9488
    %9614 = vmatpush2.bf16.msra.mxu0 %v9487
    %9615 = vmatprep.subr.bf16.mxu0 %v9486
    %9616 = vmatpush2.bf16.msra.mxu0 %v9485
    %9617 = vmatprep.subr.bf16.mxu0 %v9484
    %9618 = vmatpush2.bf16.msra.mxu0 %v9483
    %9619 = vmatprep.subr.bf16.mxu0 %v9482
    %9620 = vmatpush2.bf16.msra.mxu0 %v9481
    %9621 = vmatprep.subr.bf16.mxu0 %v9480
    %9622 = vmatpush2.bf16.msra.mxu0 %v9479
    %9623 = vmatprep.mubr.bf16.mxu0 %v9192
    %9624 = vmatmul.mubr.bf16.gmra.mxu0 %v9191
    %v9625 = vpop.f32.mrf.mxu0
    %v9626 = vadd.f32 %v9264, %v9625
    %v9627 = vpop.f32.mrf.mxu0
    %v9628 = vadd.f32 %v9268, %v9627
    %v9629 = vpop.f32.mrf.mxu0
    %v9630 = vpop.f32.mrf.mxu0
    %9631 = vdwg.mxu0
    %9632 = vmatprep.subr.bf16.mxu0 %v9510
    %9633 = vmatpush1.bf16.msra.mxu0 %v9509
    %9634 = vmatprep.subr.bf16.mxu0 %v9508
    %9635 = vmatpush1.bf16.msra.mxu0 %v9507
    %9636 = vmatprep.subr.bf16.mxu0 %v9506
    %9637 = vmatpush1.bf16.msra.mxu0 %v9505
    %9638 = vmatprep.subr.bf16.mxu0 %v9504
    %9639 = vmatpush1.bf16.msra.mxu0 %v9503
    %9640 = vmatprep.subr.bf16.mxu0 %v9502
    %9641 = vmatpush1.bf16.msra.mxu0 %v9501
    %9642 = vmatprep.subr.bf16.mxu0 %v9500
    %9643 = vmatpush1.bf16.msra.mxu0 %v9499
    %9644 = vmatprep.subr.bf16.mxu0 %v9498
    %9645 = vmatpush1.bf16.msra.mxu0 %v9497
    %9646 = vmatprep.subr.bf16.mxu0 %v9496
    %9647 = vmatpush1.bf16.msra.mxu0 %v9495
    %9648 = vmatprep.subr.bf16.mxu0 %v9526
    %9649 = vmatpush2.bf16.msra.mxu0 %v9525
    %9650 = vmatprep.subr.bf16.mxu0 %v9524
    %9651 = vmatpush2.bf16.msra.mxu0 %v9523
    %9652 = vmatprep.subr.bf16.mxu0 %v9522
    %9653 = vmatpush2.bf16.msra.mxu0 %v9521
    %9654 = vmatprep.subr.bf16.mxu0 %v9520
    %9655 = vmatpush2.bf16.msra.mxu0 %v9519
    %9656 = vmatprep.subr.bf16.mxu0 %v9518
    %9657 = vmatpush2.bf16.msra.mxu0 %v9517
    %9658 = vmatprep.subr.bf16.mxu0 %v9516
    %9659 = vmatpush2.bf16.msra.mxu0 %v9515
    %9660 = vmatprep.subr.bf16.mxu0 %v9514
    %9661 = vmatpush2.bf16.msra.mxu0 %v9513
    %9662 = vmatprep.subr.bf16.mxu0 %v9512
    %9663 = vmatpush2.bf16.msra.mxu0 %v9511
    %9664 = vmatprep.mubr.bf16.mxu0 %v9194
    %9665 = vmatmul.mubr.bf16.gmra.mxu0 %v9193
    %v9666 = vpop.f32.mrf.mxu0
    %v9667 = vadd.f32 %v9626, %v9666
    %v9668 = vpop.f32.mrf.mxu0
    %v9669 = vadd.f32 %v9628, %v9668
    %v9670 = vpop.f32.mrf.mxu0
    %v9671 = vpop.f32.mrf.mxu0
    %9672 = vdwg.mxu0
    %9673 = vmax.xlane.f32.xlu0 %v9667
    %v9674 = vpop.xlane.xlu0 %9673
    %v9675 = vsub.f32 %v9667, %v9674
    %v9676 = vmul.f32 %v9675, 1.442695
    %v9677 = vpow.pop %v9676
    %9678 = vadd.xlane.f32.xlu0 %v9677
    %v9679 = vpop.xlane.xlu0 %9678
    %v9680 = vlog2.pop %v9679
    %v9681 = vmul.f32 %v9680, 0.6931472
    %v9682 = vsub.f32 %v9675, %v9681
    %9683 = vst [vmem:[%s11] sm:$0xff] %v9682
    %v9684 = vtanh.pop %v9669
    %9685 = vst [vmem:[%s11 + $0x8] sm:$0xff] %v9684
    // Predicated region
    $region86: #{santorini_forward.1} parent=1 // pred_check
      _
    $region87: #{santorini_forward.1} parent=1 // pred_check_branch
      %9687 = sbr.rel (0) target = $region89
    $region88: #{santorini_forward.1} parent=1 // pred_region
      _
    $region89: #{santorini_forward.1} parent=1 // pred_fallthru
      _
    // Predicated region
    $region90: #{santorini_forward.1} parent=1 // pred_check
      _
    $region91: #{santorini_forward.1} parent=1 // pred_check_branch
      %9689 = sbr.rel (0) target = $region93
    $region92: #{santorini_forward.1} parent=1 // pred_region
      _
    $region93: #{santorini_forward.1} parent=1 // pred_fallthru
      _
    %9690 = vsyncpa [#allocation3], 1
    %9691 = vsyncpa [#allocation5], 1
    %9692 = vsyncpa [#allocation8], 1
    %9693 = vsyncpa [#allocation11], 1
    %9694 = vsyncpa [#allocation14], 1
    %9695 = vsyncpa [#allocation17], 1

</llo_original>
